<compile_context>
chip_gen: v7x
topology: tpu7x:2x2x1
jax: 0.10.0
libtpu: 0.0.40
codegen_flags: <defaults>
</compile_context>

<pallas_src>
import jax
import jax.numpy as jnp
from jax.experimental import pallas as pl
from jax.experimental.pallas import tpu as pltpu

_LANE = 128  # lane-tile width; left halo rounded to this keeps stores aligned


def _make_kernel(B, L, Cin, Co, K, L_out, odd, pad, eps):
    halo = _LANE                  # left halo (>= pad), tile aligned
    Lp = halo + L + pad           # staged, padded sequence length
    inv_n = 1.0 / float(B * L)    # BatchNorm normalizer (batch * length)

    def kernel(x_ref, w_ref, b_ref, g_ref, be_ref, pool_ref, res_ref, xp_ref):
        # ---- in-kernel 'same' padding: zero halo + tile-aligned copy of x ---
        xp_ref[...] = jnp.zeros((B, Cin, Lp), jnp.float32)
        xp_ref[:, :, halo:halo + L] = x_ref[...]

        # ---- Conv1d as VPU broadcast-FMA (L on lanes) -----------------------
        # accs[co]: (B, L) accumulator for output channel co.
        accs = [jnp.zeros((B, L), jnp.float32) for _ in range(Co)]
        for cin in range(Cin):
            for k in range(K):
                off = halo + k - pad
                win = xp_ref[:, cin, off:off + L]          # (B, L), loaded once
                for co in range(Co):
                    w_s = w_ref[(co * Cin + cin) * K + k]  # scalar tap (SMEM)
                    accs[co] = accs[co] + w_s * win

        # ---- max-pool decimation matrices (built once, shared by channels) --
        li = jax.lax.broadcasted_iota(jnp.int32, (L, L_out), 0)   # input pos
        ji = jax.lax.broadcasted_iota(jnp.int32, (L, L_out), 1)   # output pos
        sel_a = jnp.where(li == 2 * ji, 1.0, 0.0).astype(jnp.float32)
        if odd:
            # ConstantPad1d(1): window j pairs y[2j-1] with y[2j]; column 0 of
            # sel_b is all-zero so the zero pad shows up as max(y[0], 0).
            sel_b = jnp.where(li == 2 * ji - 1, 1.0, 0.0).astype(jnp.float32)
        else:
            # window j pairs y[2j] with y[2j+1]
            sel_b = jnp.where(li == 2 * ji + 1, 1.0, 0.0).astype(jnp.float32)

        # ---- per output channel: bias + ELU + BatchNorm + store + pool ------
        for co in range(Co):
            h = accs[co] + b_ref[co]                               # conv bias
            # ELU(alpha=1); exp(min(h,0)) cannot overflow in the dead branch
            h = jnp.where(h > 0.0, h, jnp.exp(jnp.minimum(h, 0.0)) - 1.0)
            # BatchNorm1d (training mode): biased batch stats over (B, L)
            mean = jnp.sum(h) * inv_n
            cent = h - mean
            var = jnp.sum(cent * cent) * inv_n
            y = cent * (g_ref[co] * jax.lax.rsqrt(var + eps)) + be_ref[co]
            res_ref[:, co, :] = y                                  # residual
            # (pad-1 iff odd) + MaxPool1d(2, 2): even/odd pick on the MXU
            p_even = jnp.dot(y, sel_a, preferred_element_type=jnp.float32,
                             precision=jax.lax.Precision.HIGHEST)
            p_odd = jnp.dot(y, sel_b, preferred_element_type=jnp.float32,
                            precision=jax.lax.Precision.HIGHEST)
            pool_ref[:, co, :] = jnp.maximum(p_even, p_odd)

    return kernel


def encoder_block_forward(x, w, b, gamma, beta, *, downsample=2, eps=1e-5):
    """Pallas forward of _EncoderBlock.

    x:          (B, C_in, L)     PyTorch NCL input
    w:          (C_out, C_in, K) Conv1d weight,   b: (C_out,) Conv1d bias
    gamma/beta: (C_out,)         BatchNorm1d affine parameters
    returns (pooled, residual) in NCL layout, matching torch's (x, residual).
    """
    assert downsample == 2, "kernel implements the module default downsample=2"
    B, Cin, L = x.shape
    Co, Cin2, K = w.shape
    assert Cin2 == Cin
    assert K % 2 == 1, "'same' padding implemented for odd kernel_size"
    pad = (K - 1) // 2
    odd = bool(L % 2)
    L_out = (L + 1) // 2           # = L//2 when even, (L+1)//2 when odd (pad 1)

    x32 = x.astype(jnp.float32)                              # NCL, no transpose
    w_flat = w.astype(jnp.float32).reshape(Co * Cin * K)     # scalar taps -> SMEM
    b32 = b.astype(jnp.float32)
    g32 = gamma.astype(jnp.float32)
    be32 = beta.astype(jnp.float32)

    smem = pl.BlockSpec(memory_space=pltpu.MemorySpace.SMEM)
    vmem = pl.BlockSpec(memory_space=pltpu.MemorySpace.VMEM)
    kernel = _make_kernel(B, L, Cin, Co, K, L_out, odd, pad, eps)
    pooled, residual = pl.pallas_call(
        kernel,
        out_shape=(
            jax.ShapeDtypeStruct((B, Co, L_out), jnp.float32),   # maxpooled
            jax.ShapeDtypeStruct((B, Co, L), jnp.float32),       # residual
        ),
        in_specs=[vmem, smem, smem, smem, smem],
        out_specs=(vmem, vmem),
        scratch_shapes=[pltpu.VMEM((B, Cin, _LANE + L + pad), jnp.float32)],
    )(x32, w_flat, b32, g32, be32)
    return pooled, residual


def ref_forward(x, w, b, gamma, beta, eps=1e-5):
    """Pure-JAX reference matching the torch module (training-mode BN)."""
    B, Cin, L = x.shape
    Co, _, K = w.shape
    pad = (K - 1) // 2
    xp = jnp.pad(x, ((0, 0), (0, 0), (pad, pad)))
    y = jnp.zeros((B, Co, L), jnp.float32)
    for k in range(K):
        y = y + jnp.einsum('oc,bcl->bol', w[:, :, k], xp[:, :, k:k + L],
                           precision=jax.lax.Precision.HIGHEST)
    y = y + b[None, :, None]
    y = jnp.where(y > 0, y, jnp.exp(jnp.minimum(y, 0.0)) - 1.0)      # ELU
    mean = jnp.mean(y, axis=(0, 2), keepdims=True)
    var = jnp.mean((y - mean) ** 2, axis=(0, 2), keepdims=True)
    y = (y - mean) / jnp.sqrt(var + eps) * gamma[None, :, None] + beta[None, :, None]
    residual = y
    if L % 2:
        y = jnp.pad(y, ((0, 0), (0, 0), (1, 1)))
    Lo = y.shape[-1] // 2
    pooled = jnp.maximum(y[:, :, 0:2 * Lo:2], y[:, :, 1:2 * Lo:2])
    return pooled, residual


if __name__ == "__main__":
    # Small shapes consistent with the module: batch=2, in/out channels=4,
    # kernel_size=9, downsample=2; sequence lengths 16 (even) and 15 (odd)
    # to exercise both pooling branches.
    B, Cin, Co, K = 2, 4, 4, 9
    key = jax.random.PRNGKey(0)
    k1, k2, k3, k4, k5 = jax.random.split(key, 5)
    w = 0.2 * jax.random.normal(k2, (Co, Cin, K), jnp.float32)       # Conv1d.weight
    bias = 0.1 * jax.random.normal(k3, (Co,), jnp.float32)           # Conv1d.bias
    gamma = 1.0 + 0.1 * jax.random.normal(k4, (Co,), jnp.float32)    # BN.weight
    beta = 0.1 * jax.random.normal(k5, (Co,), jnp.float32)           # BN.bias

    for L in (16, 15):
        x = jax.random.normal(jax.random.fold_in(k1, L), (B, Cin, L), jnp.float32)
        pooled, residual = encoder_block_forward(x, w, bias, gamma, beta)
        jax.block_until_ready((pooled, residual))

        pooled_ref, residual_ref = ref_forward(x, w, bias, gamma, beta)
        L_out = (L + 1) // 2
        assert residual.shape == (B, Co, L), residual.shape
        assert pooled.shape == (B, Co, L_out), pooled.shape
        assert bool(jnp.allclose(residual, residual_ref, atol=1e-4, rtol=1e-4)), \
            f"residual mismatch (L={L})"
        assert bool(jnp.allclose(pooled, pooled_ref, atol=1e-4, rtol=1e-4)), \
            f"pooled mismatch (L={L})"

    print("KERNEL_OK")
</pallas_src>

<mosaic_0001>
module attributes {stable_mosaic.version = 11 : i64} {
  func.func @kernel(%arg0: memref<2x4x16xf32, #tpu.memory_space<vmem>>, %arg1: memref<144xf32, #tpu.memory_space<smem>>, %arg2: memref<4xf32, #tpu.memory_space<smem>>, %arg3: memref<4xf32, #tpu.memory_space<smem>>, %arg4: memref<4xf32, #tpu.memory_space<smem>>, %arg5: memref<2x4x8xf32, #tpu.memory_space<vmem>>, %arg6: memref<2x4x16xf32, #tpu.memory_space<vmem>>, %arg7: memref<2x4x148xf32, #tpu.memory_space<vmem>>) attributes {dimension_semantics = [], scalar_prefetch = 0 : i64, scratch_operands = 1 : i64, tpu.core_type = #tpu.core_type<tc>} {
    %cst = arith.constant 0.000000e+00 : f32
    %0 = vector.broadcast %cst : f32 to vector<2x4x148xf32>
    %c0 = arith.constant 0 : index
    %c0_0 = arith.constant 0 : index
    %c0_1 = arith.constant 0 : index
    %1 = vector.load %arg7[%c0, %c0_0, %c0_1] : memref<2x4x148xf32, #tpu.memory_space<vmem>>, vector<2x4x148xf32>
    tpu.vector_store %arg7[%c0, %c0_0, %c0_1], %0 {strides = array<i32>} : memref<2x4x148xf32, #tpu.memory_space<vmem>>, vector<2x4x148xf32>,
    %c0_2 = arith.constant 0 : index
    %c0_3 = arith.constant 0 : index
    %c0_4 = arith.constant 0 : index
    %2 = vector.load %arg0[%c0_2, %c0_3, %c0_4] : memref<2x4x16xf32, #tpu.memory_space<vmem>>, vector<2x4x16xf32>
    %c0_5 = arith.constant 0 : index
    %c0_6 = arith.constant 0 : index
    %c128 = arith.constant 128 : index
    %3 = vector.load %arg7[%c0_5, %c0_6, %c128] : memref<2x4x148xf32, #tpu.memory_space<vmem>>, vector<2x4x16xf32>
    tpu.vector_store %arg7[%c0_5, %c0_6, %c128], %2 {strides = array<i32>} : memref<2x4x148xf32, #tpu.memory_space<vmem>>, vector<2x4x16xf32>,
    %cst_7 = arith.constant 0.000000e+00 : f32
    %4 = vector.broadcast %cst_7 : f32 to vector<2x16xf32>
    %cst_8 = arith.constant 0.000000e+00 : f32
    %5 = vector.broadcast %cst_8 : f32 to vector<2x16xf32>
    %cst_9 = arith.constant 0.000000e+00 : f32
    %6 = vector.broadcast %cst_9 : f32 to vector<2x16xf32>
    %cst_10 = arith.constant 0.000000e+00 : f32
    %7 = vector.broadcast %cst_10 : f32 to vector<2x16xf32>
    %c0_11 = arith.constant 0 : index
    %c0_12 = arith.constant 0 : index
    %c124 = arith.constant 124 : index
    %8 = vector.load %arg7[%c0_11, %c0_12, %c124] : memref<2x4x148xf32, #tpu.memory_space<vmem>>, vector<2x1x16xf32>
    %9 = vector.shape_cast %8 : vector<2x1x16xf32> to vector<2x16xf32>
    %c0_13 = arith.constant 0 : index
    %10 = memref.load %arg1[%c0_13] : memref<144xf32, #tpu.memory_space<smem>>
    %11 = vector.broadcast %10 : f32 to vector<2x16xf32>
    %12 = arith.mulf %11, %9 : vector<2x16xf32>
    %13 = arith.addf %4, %12 : vector<2x16xf32>
    %c36 = arith.constant 36 : index
    %14 = memref.load %arg1[%c36] : memref<144xf32, #tpu.memory_space<smem>>
    %15 = vector.broadcast %14 : f32 to vector<2x16xf32>
    %16 = arith.mulf %15, %9 : vector<2x16xf32>
    %17 = arith.addf %5, %16 : vector<2x16xf32>
    %c72 = arith.constant 72 : index
    %18 = memref.load %arg1[%c72] : memref<144xf32, #tpu.memory_space<smem>>
    %19 = vector.broadcast %18 : f32 to vector<2x16xf32>
    %20 = arith.mulf %19, %9 : vector<2x16xf32>
    %21 = arith.addf %6, %20 : vector<2x16xf32>
    %c108 = arith.constant 108 : index
    %22 = memref.load %arg1[%c108] : memref<144xf32, #tpu.memory_space<smem>>
    %23 = vector.broadcast %22 : f32 to vector<2x16xf32>
    %24 = arith.mulf %23, %9 : vector<2x16xf32>
    %25 = arith.addf %7, %24 : vector<2x16xf32>
    %c0_14 = arith.constant 0 : index
    %c0_15 = arith.constant 0 : index
    %c125 = arith.constant 125 : index
    %26 = vector.load %arg7[%c0_14, %c0_15, %c125] : memref<2x4x148xf32, #tpu.memory_space<vmem>>, vector<2x1x16xf32>
    %27 = vector.shape_cast %26 : vector<2x1x16xf32> to vector<2x16xf32>
    %c1 = arith.constant 1 : index
    %28 = memref.load %arg1[%c1] : memref<144xf32, #tpu.memory_space<smem>>
    %29 = vector.broadcast %28 : f32 to vector<2x16xf32>
    %30 = arith.mulf %29, %27 : vector<2x16xf32>
    %31 = arith.addf %13, %30 : vector<2x16xf32>
    %c37 = arith.constant 37 : index
    %32 = memref.load %arg1[%c37] : memref<144xf32, #tpu.memory_space<smem>>
    %33 = vector.broadcast %32 : f32 to vector<2x16xf32>
    %34 = arith.mulf %33, %27 : vector<2x16xf32>
    %35 = arith.addf %17, %34 : vector<2x16xf32>
    %c73 = arith.constant 73 : index
    %36 = memref.load %arg1[%c73] : memref<144xf32, #tpu.memory_space<smem>>
    %37 = vector.broadcast %36 : f32 to vector<2x16xf32>
    %38 = arith.mulf %37, %27 : vector<2x16xf32>
    %39 = arith.addf %21, %38 : vector<2x16xf32>
    %c109 = arith.constant 109 : index
    %40 = memref.load %arg1[%c109] : memref<144xf32, #tpu.memory_space<smem>>
    %41 = vector.broadcast %40 : f32 to vector<2x16xf32>
    %42 = arith.mulf %41, %27 : vector<2x16xf32>
    %43 = arith.addf %25, %42 : vector<2x16xf32>
    %c0_16 = arith.constant 0 : index
    %c0_17 = arith.constant 0 : index
    %c126 = arith.constant 126 : index
    %44 = vector.load %arg7[%c0_16, %c0_17, %c126] : memref<2x4x148xf32, #tpu.memory_space<vmem>>, vector<2x1x16xf32>
    %45 = vector.shape_cast %44 : vector<2x1x16xf32> to vector<2x16xf32>
    %c2 = arith.constant 2 : index
    %46 = memref.load %arg1[%c2] : memref<144xf32, #tpu.memory_space<smem>>
    %47 = vector.broadcast %46 : f32 to vector<2x16xf32>
    %48 = arith.mulf %47, %45 : vector<2x16xf32>
    %49 = arith.addf %31, %48 : vector<2x16xf32>
    %c38 = arith.constant 38 : index
    %50 = memref.load %arg1[%c38] : memref<144xf32, #tpu.memory_space<smem>>
    %51 = vector.broadcast %50 : f32 to vector<2x16xf32>
    %52 = arith.mulf %51, %45 : vector<2x16xf32>
    %53 = arith.addf %35, %52 : vector<2x16xf32>
    %c74 = arith.constant 74 : index
    %54 = memref.load %arg1[%c74] : memref<144xf32, #tpu.memory_space<smem>>
    %55 = vector.broadcast %54 : f32 to vector<2x16xf32>
    %56 = arith.mulf %55, %45 : vector<2x16xf32>
    %57 = arith.addf %39, %56 : vector<2x16xf32>
    %c110 = arith.constant 110 : index
    %58 = memref.load %arg1[%c110] : memref<144xf32, #tpu.memory_space<smem>>
    %59 = vector.broadcast %58 : f32 to vector<2x16xf32>
    %60 = arith.mulf %59, %45 : vector<2x16xf32>
    %61 = arith.addf %43, %60 : vector<2x16xf32>
    %c0_18 = arith.constant 0 : index
    %c0_19 = arith.constant 0 : index
    %c127 = arith.constant 127 : index
    %62 = vector.load %arg7[%c0_18, %c0_19, %c127] : memref<2x4x148xf32, #tpu.memory_space<vmem>>, vector<2x1x16xf32>
    %63 = vector.shape_cast %62 : vector<2x1x16xf32> to vector<2x16xf32>
    %c3 = arith.constant 3 : index
    %64 = memref.load %arg1[%c3] : memref<144xf32, #tpu.memory_space<smem>>
    %65 = vector.broadcast %64 : f32 to vector<2x16xf32>
    %66 = arith.mulf %65, %63 : vector<2x16xf32>
    %67 = arith.addf %49, %66 : vector<2x16xf32>
    %c39 = arith.constant 39 : index
    %68 = memref.load %arg1[%c39] : memref<144xf32, #tpu.memory_space<smem>>
    %69 = vector.broadcast %68 : f32 to vector<2x16xf32>
    %70 = arith.mulf %69, %63 : vector<2x16xf32>
    %71 = arith.addf %53, %70 : vector<2x16xf32>
    %c75 = arith.constant 75 : index
    %72 = memref.load %arg1[%c75] : memref<144xf32, #tpu.memory_space<smem>>
    %73 = vector.broadcast %72 : f32 to vector<2x16xf32>
    %74 = arith.mulf %73, %63 : vector<2x16xf32>
    %75 = arith.addf %57, %74 : vector<2x16xf32>
    %c111 = arith.constant 111 : index
    %76 = memref.load %arg1[%c111] : memref<144xf32, #tpu.memory_space<smem>>
    %77 = vector.broadcast %76 : f32 to vector<2x16xf32>
    %78 = arith.mulf %77, %63 : vector<2x16xf32>
    %79 = arith.addf %61, %78 : vector<2x16xf32>
    %c0_20 = arith.constant 0 : index
    %c0_21 = arith.constant 0 : index
    %c128_22 = arith.constant 128 : index
    %80 = vector.load %arg7[%c0_20, %c0_21, %c128_22] : memref<2x4x148xf32, #tpu.memory_space<vmem>>, vector<2x1x16xf32>
    %81 = vector.shape_cast %80 : vector<2x1x16xf32> to vector<2x16xf32>
    %c4 = arith.constant 4 : index
    %82 = memref.load %arg1[%c4] : memref<144xf32, #tpu.memory_space<smem>>
    %83 = vector.broadcast %82 : f32 to vector<2x16xf32>
    %84 = arith.mulf %83, %81 : vector<2x16xf32>
    %85 = arith.addf %67, %84 : vector<2x16xf32>
    %c40 = arith.constant 40 : index
    %86 = memref.load %arg1[%c40] : memref<144xf32, #tpu.memory_space<smem>>
    %87 = vector.broadcast %86 : f32 to vector<2x16xf32>
    %88 = arith.mulf %87, %81 : vector<2x16xf32>
    %89 = arith.addf %71, %88 : vector<2x16xf32>
    %c76 = arith.constant 76 : index
    %90 = memref.load %arg1[%c76] : memref<144xf32, #tpu.memory_space<smem>>
    %91 = vector.broadcast %90 : f32 to vector<2x16xf32>
    %92 = arith.mulf %91, %81 : vector<2x16xf32>
    %93 = arith.addf %75, %92 : vector<2x16xf32>
    %c112 = arith.constant 112 : index
    %94 = memref.load %arg1[%c112] : memref<144xf32, #tpu.memory_space<smem>>
    %95 = vector.broadcast %94 : f32 to vector<2x16xf32>
    %96 = arith.mulf %95, %81 : vector<2x16xf32>
    %97 = arith.addf %79, %96 : vector<2x16xf32>
    %c0_23 = arith.constant 0 : index
    %c0_24 = arith.constant 0 : index
    %c129 = arith.constant 129 : index
    %98 = vector.load %arg7[%c0_23, %c0_24, %c129] : memref<2x4x148xf32, #tpu.memory_space<vmem>>, vector<2x1x16xf32>
    %99 = vector.shape_cast %98 : vector<2x1x16xf32> to vector<2x16xf32>
    %c5 = arith.constant 5 : index
    %100 = memref.load %arg1[%c5] : memref<144xf32, #tpu.memory_space<smem>>
    %101 = vector.broadcast %100 : f32 to vector<2x16xf32>
    %102 = arith.mulf %101, %99 : vector<2x16xf32>
    %103 = arith.addf %85, %102 : vector<2x16xf32>
    %c41 = arith.constant 41 : index
    %104 = memref.load %arg1[%c41] : memref<144xf32, #tpu.memory_space<smem>>
    %105 = vector.broadcast %104 : f32 to vector<2x16xf32>
    %106 = arith.mulf %105, %99 : vector<2x16xf32>
    %107 = arith.addf %89, %106 : vector<2x16xf32>
    %c77 = arith.constant 77 : index
    %108 = memref.load %arg1[%c77] : memref<144xf32, #tpu.memory_space<smem>>
    %109 = vector.broadcast %108 : f32 to vector<2x16xf32>
    %110 = arith.mulf %109, %99 : vector<2x16xf32>
    %111 = arith.addf %93, %110 : vector<2x16xf32>
    %c113 = arith.constant 113 : index
    %112 = memref.load %arg1[%c113] : memref<144xf32, #tpu.memory_space<smem>>
    %113 = vector.broadcast %112 : f32 to vector<2x16xf32>
    %114 = arith.mulf %113, %99 : vector<2x16xf32>
    %115 = arith.addf %97, %114 : vector<2x16xf32>
    %c0_25 = arith.constant 0 : index
    %c0_26 = arith.constant 0 : index
    %c130 = arith.constant 130 : index
    %116 = vector.load %arg7[%c0_25, %c0_26, %c130] : memref<2x4x148xf32, #tpu.memory_space<vmem>>, vector<2x1x16xf32>
    %117 = vector.shape_cast %116 : vector<2x1x16xf32> to vector<2x16xf32>
    %c6 = arith.constant 6 : index
    %118 = memref.load %arg1[%c6] : memref<144xf32, #tpu.memory_space<smem>>
    %119 = vector.broadcast %118 : f32 to vector<2x16xf32>
    %120 = arith.mulf %119, %117 : vector<2x16xf32>
    %121 = arith.addf %103, %120 : vector<2x16xf32>
    %c42 = arith.constant 42 : index
    %122 = memref.load %arg1[%c42] : memref<144xf32, #tpu.memory_space<smem>>
    %123 = vector.broadcast %122 : f32 to vector<2x16xf32>
    %124 = arith.mulf %123, %117 : vector<2x16xf32>
    %125 = arith.addf %107, %124 : vector<2x16xf32>
    %c78 = arith.constant 78 : index
    %126 = memref.load %arg1[%c78] : memref<144xf32, #tpu.memory_space<smem>>
    %127 = vector.broadcast %126 : f32 to vector<2x16xf32>
    %128 = arith.mulf %127, %117 : vector<2x16xf32>
    %129 = arith.addf %111, %128 : vector<2x16xf32>
    %c114 = arith.constant 114 : index
    %130 = memref.load %arg1[%c114] : memref<144xf32, #tpu.memory_space<smem>>
    %131 = vector.broadcast %130 : f32 to vector<2x16xf32>
    %132 = arith.mulf %131, %117 : vector<2x16xf32>
    %133 = arith.addf %115, %132 : vector<2x16xf32>
    %c0_27 = arith.constant 0 : index
    %c0_28 = arith.constant 0 : index
    %c131 = arith.constant 131 : index
    %134 = vector.load %arg7[%c0_27, %c0_28, %c131] : memref<2x4x148xf32, #tpu.memory_space<vmem>>, vector<2x1x16xf32>
    %135 = vector.shape_cast %134 : vector<2x1x16xf32> to vector<2x16xf32>
    %c7 = arith.constant 7 : index
    %136 = memref.load %arg1[%c7] : memref<144xf32, #tpu.memory_space<smem>>
    %137 = vector.broadcast %136 : f32 to vector<2x16xf32>
    %138 = arith.mulf %137, %135 : vector<2x16xf32>
    %139 = arith.addf %121, %138 : vector<2x16xf32>
    %c43 = arith.constant 43 : index
    %140 = memref.load %arg1[%c43] : memref<144xf32, #tpu.memory_space<smem>>
    %141 = vector.broadcast %140 : f32 to vector<2x16xf32>
    %142 = arith.mulf %141, %135 : vector<2x16xf32>
    %143 = arith.addf %125, %142 : vector<2x16xf32>
    %c79 = arith.constant 79 : index
    %144 = memref.load %arg1[%c79] : memref<144xf32, #tpu.memory_space<smem>>
    %145 = vector.broadcast %144 : f32 to vector<2x16xf32>
    %146 = arith.mulf %145, %135 : vector<2x16xf32>
    %147 = arith.addf %129, %146 : vector<2x16xf32>
    %c115 = arith.constant 115 : index
    %148 = memref.load %arg1[%c115] : memref<144xf32, #tpu.memory_space<smem>>
    %149 = vector.broadcast %148 : f32 to vector<2x16xf32>
    %150 = arith.mulf %149, %135 : vector<2x16xf32>
    %151 = arith.addf %133, %150 : vector<2x16xf32>
    %c0_29 = arith.constant 0 : index
    %c0_30 = arith.constant 0 : index
    %c132 = arith.constant 132 : index
    %152 = vector.load %arg7[%c0_29, %c0_30, %c132] : memref<2x4x148xf32, #tpu.memory_space<vmem>>, vector<2x1x16xf32>
    %153 = vector.shape_cast %152 : vector<2x1x16xf32> to vector<2x16xf32>
    %c8 = arith.constant 8 : index
    %154 = memref.load %arg1[%c8] : memref<144xf32, #tpu.memory_space<smem>>
    %155 = vector.broadcast %154 : f32 to vector<2x16xf32>
    %156 = arith.mulf %155, %153 : vector<2x16xf32>
    %157 = arith.addf %139, %156 : vector<2x16xf32>
    %c44 = arith.constant 44 : index
    %158 = memref.load %arg1[%c44] : memref<144xf32, #tpu.memory_space<smem>>
    %159 = vector.broadcast %158 : f32 to vector<2x16xf32>
    %160 = arith.mulf %159, %153 : vector<2x16xf32>
    %161 = arith.addf %143, %160 : vector<2x16xf32>
    %c80 = arith.constant 80 : index
    %162 = memref.load %arg1[%c80] : memref<144xf32, #tpu.memory_space<smem>>
    %163 = vector.broadcast %162 : f32 to vector<2x16xf32>
    %164 = arith.mulf %163, %153 : vector<2x16xf32>
    %165 = arith.addf %147, %164 : vector<2x16xf32>
    %c116 = arith.constant 116 : index
    %166 = memref.load %arg1[%c116] : memref<144xf32, #tpu.memory_space<smem>>
    %167 = vector.broadcast %166 : f32 to vector<2x16xf32>
    %168 = arith.mulf %167, %153 : vector<2x16xf32>
    %169 = arith.addf %151, %168 : vector<2x16xf32>
    %c0_31 = arith.constant 0 : index
    %c1_32 = arith.constant 1 : index
    %c124_33 = arith.constant 124 : index
    %170 = vector.load %arg7[%c0_31, %c1_32, %c124_33] : memref<2x4x148xf32, #tpu.memory_space<vmem>>, vector<2x1x16xf32>
    %171 = vector.shape_cast %170 : vector<2x1x16xf32> to vector<2x16xf32>
    %c9 = arith.constant 9 : index
    %172 = memref.load %arg1[%c9] : memref<144xf32, #tpu.memory_space<smem>>
    %173 = vector.broadcast %172 : f32 to vector<2x16xf32>
    %174 = arith.mulf %173, %171 : vector<2x16xf32>
    %175 = arith.addf %157, %174 : vector<2x16xf32>
    %c45 = arith.constant 45 : index
    %176 = memref.load %arg1[%c45] : memref<144xf32, #tpu.memory_space<smem>>
    %177 = vector.broadcast %176 : f32 to vector<2x16xf32>
    %178 = arith.mulf %177, %171 : vector<2x16xf32>
    %179 = arith.addf %161, %178 : vector<2x16xf32>
    %c81 = arith.constant 81 : index
    %180 = memref.load %arg1[%c81] : memref<144xf32, #tpu.memory_space<smem>>
    %181 = vector.broadcast %180 : f32 to vector<2x16xf32>
    %182 = arith.mulf %181, %171 : vector<2x16xf32>
    %183 = arith.addf %165, %182 : vector<2x16xf32>
    %c117 = arith.constant 117 : index
    %184 = memref.load %arg1[%c117] : memref<144xf32, #tpu.memory_space<smem>>
    %185 = vector.broadcast %184 : f32 to vector<2x16xf32>
    %186 = arith.mulf %185, %171 : vector<2x16xf32>
    %187 = arith.addf %169, %186 : vector<2x16xf32>
    %c0_34 = arith.constant 0 : index
    %c1_35 = arith.constant 1 : index
    %c125_36 = arith.constant 125 : index
    %188 = vector.load %arg7[%c0_34, %c1_35, %c125_36] : memref<2x4x148xf32, #tpu.memory_space<vmem>>, vector<2x1x16xf32>
    %189 = vector.shape_cast %188 : vector<2x1x16xf32> to vector<2x16xf32>
    %c10 = arith.constant 10 : index
    %190 = memref.load %arg1[%c10] : memref<144xf32, #tpu.memory_space<smem>>
    %191 = vector.broadcast %190 : f32 to vector<2x16xf32>
    %192 = arith.mulf %191, %189 : vector<2x16xf32>
    %193 = arith.addf %175, %192 : vector<2x16xf32>
    %c46 = arith.constant 46 : index
    %194 = memref.load %arg1[%c46] : memref<144xf32, #tpu.memory_space<smem>>
    %195 = vector.broadcast %194 : f32 to vector<2x16xf32>
    %196 = arith.mulf %195, %189 : vector<2x16xf32>
    %197 = arith.addf %179, %196 : vector<2x16xf32>
    %c82 = arith.constant 82 : index
    %198 = memref.load %arg1[%c82] : memref<144xf32, #tpu.memory_space<smem>>
    %199 = vector.broadcast %198 : f32 to vector<2x16xf32>
    %200 = arith.mulf %199, %189 : vector<2x16xf32>
    %201 = arith.addf %183, %200 : vector<2x16xf32>
    %c118 = arith.constant 118 : index
    %202 = memref.load %arg1[%c118] : memref<144xf32, #tpu.memory_space<smem>>
    %203 = vector.broadcast %202 : f32 to vector<2x16xf32>
    %204 = arith.mulf %203, %189 : vector<2x16xf32>
    %205 = arith.addf %187, %204 : vector<2x16xf32>
    %c0_37 = arith.constant 0 : index
    %c1_38 = arith.constant 1 : index
    %c126_39 = arith.constant 126 : index
    %206 = vector.load %arg7[%c0_37, %c1_38, %c126_39] : memref<2x4x148xf32, #tpu.memory_space<vmem>>, vector<2x1x16xf32>
    %207 = vector.shape_cast %206 : vector<2x1x16xf32> to vector<2x16xf32>
    %c11 = arith.constant 11 : index
    %208 = memref.load %arg1[%c11] : memref<144xf32, #tpu.memory_space<smem>>
    %209 = vector.broadcast %208 : f32 to vector<2x16xf32>
    %210 = arith.mulf %209, %207 : vector<2x16xf32>
    %211 = arith.addf %193, %210 : vector<2x16xf32>
    %c47 = arith.constant 47 : index
    %212 = memref.load %arg1[%c47] : memref<144xf32, #tpu.memory_space<smem>>
    %213 = vector.broadcast %212 : f32 to vector<2x16xf32>
    %214 = arith.mulf %213, %207 : vector<2x16xf32>
    %215 = arith.addf %197, %214 : vector<2x16xf32>
    %c83 = arith.constant 83 : index
    %216 = memref.load %arg1[%c83] : memref<144xf32, #tpu.memory_space<smem>>
    %217 = vector.broadcast %216 : f32 to vector<2x16xf32>
    %218 = arith.mulf %217, %207 : vector<2x16xf32>
    %219 = arith.addf %201, %218 : vector<2x16xf32>
    %c119 = arith.constant 119 : index
    %220 = memref.load %arg1[%c119] : memref<144xf32, #tpu.memory_space<smem>>
    %221 = vector.broadcast %220 : f32 to vector<2x16xf32>
    %222 = arith.mulf %221, %207 : vector<2x16xf32>
    %223 = arith.addf %205, %222 : vector<2x16xf32>
    %c0_40 = arith.constant 0 : index
    %c1_41 = arith.constant 1 : index
    %c127_42 = arith.constant 127 : index
    %224 = vector.load %arg7[%c0_40, %c1_41, %c127_42] : memref<2x4x148xf32, #tpu.memory_space<vmem>>, vector<2x1x16xf32>
    %225 = vector.shape_cast %224 : vector<2x1x16xf32> to vector<2x16xf32>
    %c12 = arith.constant 12 : index
    %226 = memref.load %arg1[%c12] : memref<144xf32, #tpu.memory_space<smem>>
    %227 = vector.broadcast %226 : f32 to vector<2x16xf32>
    %228 = arith.mulf %227, %225 : vector<2x16xf32>
    %229 = arith.addf %211, %228 : vector<2x16xf32>
    %c48 = arith.constant 48 : index
    %230 = memref.load %arg1[%c48] : memref<144xf32, #tpu.memory_space<smem>>
    %231 = vector.broadcast %230 : f32 to vector<2x16xf32>
    %232 = arith.mulf %231, %225 : vector<2x16xf32>
    %233 = arith.addf %215, %232 : vector<2x16xf32>
    %c84 = arith.constant 84 : index
    %234 = memref.load %arg1[%c84] : memref<144xf32, #tpu.memory_space<smem>>
    %235 = vector.broadcast %234 : f32 to vector<2x16xf32>
    %236 = arith.mulf %235, %225 : vector<2x16xf32>
    %237 = arith.addf %219, %236 : vector<2x16xf32>
    %c120 = arith.constant 120 : index
    %238 = memref.load %arg1[%c120] : memref<144xf32, #tpu.memory_space<smem>>
    %239 = vector.broadcast %238 : f32 to vector<2x16xf32>
    %240 = arith.mulf %239, %225 : vector<2x16xf32>
    %241 = arith.addf %223, %240 : vector<2x16xf32>
    %c0_43 = arith.constant 0 : index
    %c1_44 = arith.constant 1 : index
    %c128_45 = arith.constant 128 : index
    %242 = vector.load %arg7[%c0_43, %c1_44, %c128_45] : memref<2x4x148xf32, #tpu.memory_space<vmem>>, vector<2x1x16xf32>
    %243 = vector.shape_cast %242 : vector<2x1x16xf32> to vector<2x16xf32>
    %c13 = arith.constant 13 : index
    %244 = memref.load %arg1[%c13] : memref<144xf32, #tpu.memory_space<smem>>
    %245 = vector.broadcast %244 : f32 to vector<2x16xf32>
    %246 = arith.mulf %245, %243 : vector<2x16xf32>
    %247 = arith.addf %229, %246 : vector<2x16xf32>
    %c49 = arith.constant 49 : index
    %248 = memref.load %arg1[%c49] : memref<144xf32, #tpu.memory_space<smem>>
    %249 = vector.broadcast %248 : f32 to vector<2x16xf32>
    %250 = arith.mulf %249, %243 : vector<2x16xf32>
    %251 = arith.addf %233, %250 : vector<2x16xf32>
    %c85 = arith.constant 85 : index
    %252 = memref.load %arg1[%c85] : memref<144xf32, #tpu.memory_space<smem>>
    %253 = vector.broadcast %252 : f32 to vector<2x16xf32>
    %254 = arith.mulf %253, %243 : vector<2x16xf32>
    %255 = arith.addf %237, %254 : vector<2x16xf32>
    %c121 = arith.constant 121 : index
    %256 = memref.load %arg1[%c121] : memref<144xf32, #tpu.memory_space<smem>>
    %257 = vector.broadcast %256 : f32 to vector<2x16xf32>
    %258 = arith.mulf %257, %243 : vector<2x16xf32>
    %259 = arith.addf %241, %258 : vector<2x16xf32>
    %c0_46 = arith.constant 0 : index
    %c1_47 = arith.constant 1 : index
    %c129_48 = arith.constant 129 : index
    %260 = vector.load %arg7[%c0_46, %c1_47, %c129_48] : memref<2x4x148xf32, #tpu.memory_space<vmem>>, vector<2x1x16xf32>
    %261 = vector.shape_cast %260 : vector<2x1x16xf32> to vector<2x16xf32>
    %c14 = arith.constant 14 : index
    %262 = memref.load %arg1[%c14] : memref<144xf32, #tpu.memory_space<smem>>
    %263 = vector.broadcast %262 : f32 to vector<2x16xf32>
    %264 = arith.mulf %263, %261 : vector<2x16xf32>
    %265 = arith.addf %247, %264 : vector<2x16xf32>
    %c50 = arith.constant 50 : index
    %266 = memref.load %arg1[%c50] : memref<144xf32, #tpu.memory_space<smem>>
    %267 = vector.broadcast %266 : f32 to vector<2x16xf32>
    %268 = arith.mulf %267, %261 : vector<2x16xf32>
    %269 = arith.addf %251, %268 : vector<2x16xf32>
    %c86 = arith.constant 86 : index
    %270 = memref.load %arg1[%c86] : memref<144xf32, #tpu.memory_space<smem>>
    %271 = vector.broadcast %270 : f32 to vector<2x16xf32>
    %272 = arith.mulf %271, %261 : vector<2x16xf32>
    %273 = arith.addf %255, %272 : vector<2x16xf32>
    %c122 = arith.constant 122 : index
    %274 = memref.load %arg1[%c122] : memref<144xf32, #tpu.memory_space<smem>>
    %275 = vector.broadcast %274 : f32 to vector<2x16xf32>
    %276 = arith.mulf %275, %261 : vector<2x16xf32>
    %277 = arith.addf %259, %276 : vector<2x16xf32>
    %c0_49 = arith.constant 0 : index
    %c1_50 = arith.constant 1 : index
    %c130_51 = arith.constant 130 : index
    %278 = vector.load %arg7[%c0_49, %c1_50, %c130_51] : memref<2x4x148xf32, #tpu.memory_space<vmem>>, vector<2x1x16xf32>
    %279 = vector.shape_cast %278 : vector<2x1x16xf32> to vector<2x16xf32>
    %c15 = arith.constant 15 : index
    %280 = memref.load %arg1[%c15] : memref<144xf32, #tpu.memory_space<smem>>
    %281 = vector.broadcast %280 : f32 to vector<2x16xf32>
    %282 = arith.mulf %281, %279 : vector<2x16xf32>
    %283 = arith.addf %265, %282 : vector<2x16xf32>
    %c51 = arith.constant 51 : index
    %284 = memref.load %arg1[%c51] : memref<144xf32, #tpu.memory_space<smem>>
    %285 = vector.broadcast %284 : f32 to vector<2x16xf32>
    %286 = arith.mulf %285, %279 : vector<2x16xf32>
    %287 = arith.addf %269, %286 : vector<2x16xf32>
    %c87 = arith.constant 87 : index
    %288 = memref.load %arg1[%c87] : memref<144xf32, #tpu.memory_space<smem>>
    %289 = vector.broadcast %288 : f32 to vector<2x16xf32>
    %290 = arith.mulf %289, %279 : vector<2x16xf32>
    %291 = arith.addf %273, %290 : vector<2x16xf32>
    %c123 = arith.constant 123 : index
    %292 = memref.load %arg1[%c123] : memref<144xf32, #tpu.memory_space<smem>>
    %293 = vector.broadcast %292 : f32 to vector<2x16xf32>
    %294 = arith.mulf %293, %279 : vector<2x16xf32>
    %295 = arith.addf %277, %294 : vector<2x16xf32>
    %c0_52 = arith.constant 0 : index
    %c1_53 = arith.constant 1 : index
    %c131_54 = arith.constant 131 : index
    %296 = vector.load %arg7[%c0_52, %c1_53, %c131_54] : memref<2x4x148xf32, #tpu.memory_space<vmem>>, vector<2x1x16xf32>
    %297 = vector.shape_cast %296 : vector<2x1x16xf32> to vector<2x16xf32>
    %c16 = arith.constant 16 : index
    %298 = memref.load %arg1[%c16] : memref<144xf32, #tpu.memory_space<smem>>
    %299 = vector.broadcast %298 : f32 to vector<2x16xf32>
    %300 = arith.mulf %299, %297 : vector<2x16xf32>
    %301 = arith.addf %283, %300 : vector<2x16xf32>
    %c52 = arith.constant 52 : index
    %302 = memref.load %arg1[%c52] : memref<144xf32, #tpu.memory_space<smem>>
    %303 = vector.broadcast %302 : f32 to vector<2x16xf32>
    %304 = arith.mulf %303, %297 : vector<2x16xf32>
    %305 = arith.addf %287, %304 : vector<2x16xf32>
    %c88 = arith.constant 88 : index
    %306 = memref.load %arg1[%c88] : memref<144xf32, #tpu.memory_space<smem>>
    %307 = vector.broadcast %306 : f32 to vector<2x16xf32>
    %308 = arith.mulf %307, %297 : vector<2x16xf32>
    %309 = arith.addf %291, %308 : vector<2x16xf32>
    %c124_55 = arith.constant 124 : index
    %310 = memref.load %arg1[%c124_55] : memref<144xf32, #tpu.memory_space<smem>>
    %311 = vector.broadcast %310 : f32 to vector<2x16xf32>
    %312 = arith.mulf %311, %297 : vector<2x16xf32>
    %313 = arith.addf %295, %312 : vector<2x16xf32>
    %c0_56 = arith.constant 0 : index
    %c1_57 = arith.constant 1 : index
    %c132_58 = arith.constant 132 : index
    %314 = vector.load %arg7[%c0_56, %c1_57, %c132_58] : memref<2x4x148xf32, #tpu.memory_space<vmem>>, vector<2x1x16xf32>
    %315 = vector.shape_cast %314 : vector<2x1x16xf32> to vector<2x16xf32>
    %c17 = arith.constant 17 : index
    %316 = memref.load %arg1[%c17] : memref<144xf32, #tpu.memory_space<smem>>
    %317 = vector.broadcast %316 : f32 to vector<2x16xf32>
    %318 = arith.mulf %317, %315 : vector<2x16xf32>
    %319 = arith.addf %301, %318 : vector<2x16xf32>
    %c53 = arith.constant 53 : index
    %320 = memref.load %arg1[%c53] : memref<144xf32, #tpu.memory_space<smem>>
    %321 = vector.broadcast %320 : f32 to vector<2x16xf32>
    %322 = arith.mulf %321, %315 : vector<2x16xf32>
    %323 = arith.addf %305, %322 : vector<2x16xf32>
    %c89 = arith.constant 89 : index
    %324 = memref.load %arg1[%c89] : memref<144xf32, #tpu.memory_space<smem>>
    %325 = vector.broadcast %324 : f32 to vector<2x16xf32>
    %326 = arith.mulf %325, %315 : vector<2x16xf32>
    %327 = arith.addf %309, %326 : vector<2x16xf32>
    %c125_59 = arith.constant 125 : index
    %328 = memref.load %arg1[%c125_59] : memref<144xf32, #tpu.memory_space<smem>>
    %329 = vector.broadcast %328 : f32 to vector<2x16xf32>
    %330 = arith.mulf %329, %315 : vector<2x16xf32>
    %331 = arith.addf %313, %330 : vector<2x16xf32>
    %c0_60 = arith.constant 0 : index
    %c2_61 = arith.constant 2 : index
    %c124_62 = arith.constant 124 : index
    %332 = vector.load %arg7[%c0_60, %c2_61, %c124_62] : memref<2x4x148xf32, #tpu.memory_space<vmem>>, vector<2x1x16xf32>
    %333 = vector.shape_cast %332 : vector<2x1x16xf32> to vector<2x16xf32>
    %c18 = arith.constant 18 : index
    %334 = memref.load %arg1[%c18] : memref<144xf32, #tpu.memory_space<smem>>
    %335 = vector.broadcast %334 : f32 to vector<2x16xf32>
    %336 = arith.mulf %335, %333 : vector<2x16xf32>
    %337 = arith.addf %319, %336 : vector<2x16xf32>
    %c54 = arith.constant 54 : index
    %338 = memref.load %arg1[%c54] : memref<144xf32, #tpu.memory_space<smem>>
    %339 = vector.broadcast %338 : f32 to vector<2x16xf32>
    %340 = arith.mulf %339, %333 : vector<2x16xf32>
    %341 = arith.addf %323, %340 : vector<2x16xf32>
    %c90 = arith.constant 90 : index
    %342 = memref.load %arg1[%c90] : memref<144xf32, #tpu.memory_space<smem>>
    %343 = vector.broadcast %342 : f32 to vector<2x16xf32>
    %344 = arith.mulf %343, %333 : vector<2x16xf32>
    %345 = arith.addf %327, %344 : vector<2x16xf32>
    %c126_63 = arith.constant 126 : index
    %346 = memref.load %arg1[%c126_63] : memref<144xf32, #tpu.memory_space<smem>>
    %347 = vector.broadcast %346 : f32 to vector<2x16xf32>
    %348 = arith.mulf %347, %333 : vector<2x16xf32>
    %349 = arith.addf %331, %348 : vector<2x16xf32>
    %c0_64 = arith.constant 0 : index
    %c2_65 = arith.constant 2 : index
    %c125_66 = arith.constant 125 : index
    %350 = vector.load %arg7[%c0_64, %c2_65, %c125_66] : memref<2x4x148xf32, #tpu.memory_space<vmem>>, vector<2x1x16xf32>
    %351 = vector.shape_cast %350 : vector<2x1x16xf32> to vector<2x16xf32>
    %c19 = arith.constant 19 : index
    %352 = memref.load %arg1[%c19] : memref<144xf32, #tpu.memory_space<smem>>
    %353 = vector.broadcast %352 : f32 to vector<2x16xf32>
    %354 = arith.mulf %353, %351 : vector<2x16xf32>
    %355 = arith.addf %337, %354 : vector<2x16xf32>
    %c55 = arith.constant 55 : index
    %356 = memref.load %arg1[%c55] : memref<144xf32, #tpu.memory_space<smem>>
    %357 = vector.broadcast %356 : f32 to vector<2x16xf32>
    %358 = arith.mulf %357, %351 : vector<2x16xf32>
    %359 = arith.addf %341, %358 : vector<2x16xf32>
    %c91 = arith.constant 91 : index
    %360 = memref.load %arg1[%c91] : memref<144xf32, #tpu.memory_space<smem>>
    %361 = vector.broadcast %360 : f32 to vector<2x16xf32>
    %362 = arith.mulf %361, %351 : vector<2x16xf32>
    %363 = arith.addf %345, %362 : vector<2x16xf32>
    %c127_67 = arith.constant 127 : index
    %364 = memref.load %arg1[%c127_67] : memref<144xf32, #tpu.memory_space<smem>>
    %365 = vector.broadcast %364 : f32 to vector<2x16xf32>
    %366 = arith.mulf %365, %351 : vector<2x16xf32>
    %367 = arith.addf %349, %366 : vector<2x16xf32>
    %c0_68 = arith.constant 0 : index
    %c2_69 = arith.constant 2 : index
    %c126_70 = arith.constant 126 : index
    %368 = vector.load %arg7[%c0_68, %c2_69, %c126_70] : memref<2x4x148xf32, #tpu.memory_space<vmem>>, vector<2x1x16xf32>
    %369 = vector.shape_cast %368 : vector<2x1x16xf32> to vector<2x16xf32>
    %c20 = arith.constant 20 : index
    %370 = memref.load %arg1[%c20] : memref<144xf32, #tpu.memory_space<smem>>
    %371 = vector.broadcast %370 : f32 to vector<2x16xf32>
    %372 = arith.mulf %371, %369 : vector<2x16xf32>
    %373 = arith.addf %355, %372 : vector<2x16xf32>
    %c56 = arith.constant 56 : index
    %374 = memref.load %arg1[%c56] : memref<144xf32, #tpu.memory_space<smem>>
    %375 = vector.broadcast %374 : f32 to vector<2x16xf32>
    %376 = arith.mulf %375, %369 : vector<2x16xf32>
    %377 = arith.addf %359, %376 : vector<2x16xf32>
    %c92 = arith.constant 92 : index
    %378 = memref.load %arg1[%c92] : memref<144xf32, #tpu.memory_space<smem>>
    %379 = vector.broadcast %378 : f32 to vector<2x16xf32>
    %380 = arith.mulf %379, %369 : vector<2x16xf32>
    %381 = arith.addf %363, %380 : vector<2x16xf32>
    %c128_71 = arith.constant 128 : index
    %382 = memref.load %arg1[%c128_71] : memref<144xf32, #tpu.memory_space<smem>>
    %383 = vector.broadcast %382 : f32 to vector<2x16xf32>
    %384 = arith.mulf %383, %369 : vector<2x16xf32>
    %385 = arith.addf %367, %384 : vector<2x16xf32>
    %c0_72 = arith.constant 0 : index
    %c2_73 = arith.constant 2 : index
    %c127_74 = arith.constant 127 : index
    %386 = vector.load %arg7[%c0_72, %c2_73, %c127_74] : memref<2x4x148xf32, #tpu.memory_space<vmem>>, vector<2x1x16xf32>
    %387 = vector.shape_cast %386 : vector<2x1x16xf32> to vector<2x16xf32>
    %c21 = arith.constant 21 : index
    %388 = memref.load %arg1[%c21] : memref<144xf32, #tpu.memory_space<smem>>
    %389 = vector.broadcast %388 : f32 to vector<2x16xf32>
    %390 = arith.mulf %389, %387 : vector<2x16xf32>
    %391 = arith.addf %373, %390 : vector<2x16xf32>
    %c57 = arith.constant 57 : index
    %392 = memref.load %arg1[%c57] : memref<144xf32, #tpu.memory_space<smem>>
    %393 = vector.broadcast %392 : f32 to vector<2x16xf32>
    %394 = arith.mulf %393, %387 : vector<2x16xf32>
    %395 = arith.addf %377, %394 : vector<2x16xf32>
    %c93 = arith.constant 93 : index
    %396 = memref.load %arg1[%c93] : memref<144xf32, #tpu.memory_space<smem>>
    %397 = vector.broadcast %396 : f32 to vector<2x16xf32>
    %398 = arith.mulf %397, %387 : vector<2x16xf32>
    %399 = arith.addf %381, %398 : vector<2x16xf32>
    %c129_75 = arith.constant 129 : index
    %400 = memref.load %arg1[%c129_75] : memref<144xf32, #tpu.memory_space<smem>>
    %401 = vector.broadcast %400 : f32 to vector<2x16xf32>
    %402 = arith.mulf %401, %387 : vector<2x16xf32>
    %403 = arith.addf %385, %402 : vector<2x16xf32>
    %c0_76 = arith.constant 0 : index
    %c2_77 = arith.constant 2 : index
    %c128_78 = arith.constant 128 : index
    %404 = vector.load %arg7[%c0_76, %c2_77, %c128_78] : memref<2x4x148xf32, #tpu.memory_space<vmem>>, vector<2x1x16xf32>
    %405 = vector.shape_cast %404 : vector<2x1x16xf32> to vector<2x16xf32>
    %c22 = arith.constant 22 : index
    %406 = memref.load %arg1[%c22] : memref<144xf32, #tpu.memory_space<smem>>
    %407 = vector.broadcast %406 : f32 to vector<2x16xf32>
    %408 = arith.mulf %407, %405 : vector<2x16xf32>
    %409 = arith.addf %391, %408 : vector<2x16xf32>
    %c58 = arith.constant 58 : index
    %410 = memref.load %arg1[%c58] : memref<144xf32, #tpu.memory_space<smem>>
    %411 = vector.broadcast %410 : f32 to vector<2x16xf32>
    %412 = arith.mulf %411, %405 : vector<2x16xf32>
    %413 = arith.addf %395, %412 : vector<2x16xf32>
    %c94 = arith.constant 94 : index
    %414 = memref.load %arg1[%c94] : memref<144xf32, #tpu.memory_space<smem>>
    %415 = vector.broadcast %414 : f32 to vector<2x16xf32>
    %416 = arith.mulf %415, %405 : vector<2x16xf32>
    %417 = arith.addf %399, %416 : vector<2x16xf32>
    %c130_79 = arith.constant 130 : index
    %418 = memref.load %arg1[%c130_79] : memref<144xf32, #tpu.memory_space<smem>>
    %419 = vector.broadcast %418 : f32 to vector<2x16xf32>
    %420 = arith.mulf %419, %405 : vector<2x16xf32>
    %421 = arith.addf %403, %420 : vector<2x16xf32>
    %c0_80 = arith.constant 0 : index
    %c2_81 = arith.constant 2 : index
    %c129_82 = arith.constant 129 : index
    %422 = vector.load %arg7[%c0_80, %c2_81, %c129_82] : memref<2x4x148xf32, #tpu.memory_space<vmem>>, vector<2x1x16xf32>
    %423 = vector.shape_cast %422 : vector<2x1x16xf32> to vector<2x16xf32>
    %c23 = arith.constant 23 : index
    %424 = memref.load %arg1[%c23] : memref<144xf32, #tpu.memory_space<smem>>
    %425 = vector.broadcast %424 : f32 to vector<2x16xf32>
    %426 = arith.mulf %425, %423 : vector<2x16xf32>
    %427 = arith.addf %409, %426 : vector<2x16xf32>
    %c59 = arith.constant 59 : index
    %428 = memref.load %arg1[%c59] : memref<144xf32, #tpu.memory_space<smem>>
    %429 = vector.broadcast %428 : f32 to vector<2x16xf32>
    %430 = arith.mulf %429, %423 : vector<2x16xf32>
    %431 = arith.addf %413, %430 : vector<2x16xf32>
    %c95 = arith.constant 95 : index
    %432 = memref.load %arg1[%c95] : memref<144xf32, #tpu.memory_space<smem>>
    %433 = vector.broadcast %432 : f32 to vector<2x16xf32>
    %434 = arith.mulf %433, %423 : vector<2x16xf32>
    %435 = arith.addf %417, %434 : vector<2x16xf32>
    %c131_83 = arith.constant 131 : index
    %436 = memref.load %arg1[%c131_83] : memref<144xf32, #tpu.memory_space<smem>>
    %437 = vector.broadcast %436 : f32 to vector<2x16xf32>
    %438 = arith.mulf %437, %423 : vector<2x16xf32>
    %439 = arith.addf %421, %438 : vector<2x16xf32>
    %c0_84 = arith.constant 0 : index
    %c2_85 = arith.constant 2 : index
    %c130_86 = arith.constant 130 : index
    %440 = vector.load %arg7[%c0_84, %c2_85, %c130_86] : memref<2x4x148xf32, #tpu.memory_space<vmem>>, vector<2x1x16xf32>
    %441 = vector.shape_cast %440 : vector<2x1x16xf32> to vector<2x16xf32>
    %c24 = arith.constant 24 : index
    %442 = memref.load %arg1[%c24] : memref<144xf32, #tpu.memory_space<smem>>
    %443 = vector.broadcast %442 : f32 to vector<2x16xf32>
    %444 = arith.mulf %443, %441 : vector<2x16xf32>
    %445 = arith.addf %427, %444 : vector<2x16xf32>
    %c60 = arith.constant 60 : index
    %446 = memref.load %arg1[%c60] : memref<144xf32, #tpu.memory_space<smem>>
    %447 = vector.broadcast %446 : f32 to vector<2x16xf32>
    %448 = arith.mulf %447, %441 : vector<2x16xf32>
    %449 = arith.addf %431, %448 : vector<2x16xf32>
    %c96 = arith.constant 96 : index
    %450 = memref.load %arg1[%c96] : memref<144xf32, #tpu.memory_space<smem>>
    %451 = vector.broadcast %450 : f32 to vector<2x16xf32>
    %452 = arith.mulf %451, %441 : vector<2x16xf32>
    %453 = arith.addf %435, %452 : vector<2x16xf32>
    %c132_87 = arith.constant 132 : index
    %454 = memref.load %arg1[%c132_87] : memref<144xf32, #tpu.memory_space<smem>>
    %455 = vector.broadcast %454 : f32 to vector<2x16xf32>
    %456 = arith.mulf %455, %441 : vector<2x16xf32>
    %457 = arith.addf %439, %456 : vector<2x16xf32>
    %c0_88 = arith.constant 0 : index
    %c2_89 = arith.constant 2 : index
    %c131_90 = arith.constant 131 : index
    %458 = vector.load %arg7[%c0_88, %c2_89, %c131_90] : memref<2x4x148xf32, #tpu.memory_space<vmem>>, vector<2x1x16xf32>
    %459 = vector.shape_cast %458 : vector<2x1x16xf32> to vector<2x16xf32>
    %c25 = arith.constant 25 : index
    %460 = memref.load %arg1[%c25] : memref<144xf32, #tpu.memory_space<smem>>
    %461 = vector.broadcast %460 : f32 to vector<2x16xf32>
    %462 = arith.mulf %461, %459 : vector<2x16xf32>
    %463 = arith.addf %445, %462 : vector<2x16xf32>
    %c61 = arith.constant 61 : index
    %464 = memref.load %arg1[%c61] : memref<144xf32, #tpu.memory_space<smem>>
    %465 = vector.broadcast %464 : f32 to vector<2x16xf32>
    %466 = arith.mulf %465, %459 : vector<2x16xf32>
    %467 = arith.addf %449, %466 : vector<2x16xf32>
    %c97 = arith.constant 97 : index
    %468 = memref.load %arg1[%c97] : memref<144xf32, #tpu.memory_space<smem>>
    %469 = vector.broadcast %468 : f32 to vector<2x16xf32>
    %470 = arith.mulf %469, %459 : vector<2x16xf32>
    %471 = arith.addf %453, %470 : vector<2x16xf32>
    %c133 = arith.constant 133 : index
    %472 = memref.load %arg1[%c133] : memref<144xf32, #tpu.memory_space<smem>>
    %473 = vector.broadcast %472 : f32 to vector<2x16xf32>
    %474 = arith.mulf %473, %459 : vector<2x16xf32>
    %475 = arith.addf %457, %474 : vector<2x16xf32>
    %c0_91 = arith.constant 0 : index
    %c2_92 = arith.constant 2 : index
    %c132_93 = arith.constant 132 : index
    %476 = vector.load %arg7[%c0_91, %c2_92, %c132_93] : memref<2x4x148xf32, #tpu.memory_space<vmem>>, vector<2x1x16xf32>
    %477 = vector.shape_cast %476 : vector<2x1x16xf32> to vector<2x16xf32>
    %c26 = arith.constant 26 : index
    %478 = memref.load %arg1[%c26] : memref<144xf32, #tpu.memory_space<smem>>
    %479 = vector.broadcast %478 : f32 to vector<2x16xf32>
    %480 = arith.mulf %479, %477 : vector<2x16xf32>
    %481 = arith.addf %463, %480 : vector<2x16xf32>
    %c62 = arith.constant 62 : index
    %482 = memref.load %arg1[%c62] : memref<144xf32, #tpu.memory_space<smem>>
    %483 = vector.broadcast %482 : f32 to vector<2x16xf32>
    %484 = arith.mulf %483, %477 : vector<2x16xf32>
    %485 = arith.addf %467, %484 : vector<2x16xf32>
    %c98 = arith.constant 98 : index
    %486 = memref.load %arg1[%c98] : memref<144xf32, #tpu.memory_space<smem>>
    %487 = vector.broadcast %486 : f32 to vector<2x16xf32>
    %488 = arith.mulf %487, %477 : vector<2x16xf32>
    %489 = arith.addf %471, %488 : vector<2x16xf32>
    %c134 = arith.constant 134 : index
    %490 = memref.load %arg1[%c134] : memref<144xf32, #tpu.memory_space<smem>>
    %491 = vector.broadcast %490 : f32 to vector<2x16xf32>
    %492 = arith.mulf %491, %477 : vector<2x16xf32>
    %493 = arith.addf %475, %492 : vector<2x16xf32>
    %c0_94 = arith.constant 0 : index
    %c3_95 = arith.constant 3 : index
    %c124_96 = arith.constant 124 : index
    %494 = vector.load %arg7[%c0_94, %c3_95, %c124_96] : memref<2x4x148xf32, #tpu.memory_space<vmem>>, vector<2x1x16xf32>
    %495 = vector.shape_cast %494 : vector<2x1x16xf32> to vector<2x16xf32>
    %c27 = arith.constant 27 : index
    %496 = memref.load %arg1[%c27] : memref<144xf32, #tpu.memory_space<smem>>
    %497 = vector.broadcast %496 : f32 to vector<2x16xf32>
    %498 = arith.mulf %497, %495 : vector<2x16xf32>
    %499 = arith.addf %481, %498 : vector<2x16xf32>
    %c63 = arith.constant 63 : index
    %500 = memref.load %arg1[%c63] : memref<144xf32, #tpu.memory_space<smem>>
    %501 = vector.broadcast %500 : f32 to vector<2x16xf32>
    %502 = arith.mulf %501, %495 : vector<2x16xf32>
    %503 = arith.addf %485, %502 : vector<2x16xf32>
    %c99 = arith.constant 99 : index
    %504 = memref.load %arg1[%c99] : memref<144xf32, #tpu.memory_space<smem>>
    %505 = vector.broadcast %504 : f32 to vector<2x16xf32>
    %506 = arith.mulf %505, %495 : vector<2x16xf32>
    %507 = arith.addf %489, %506 : vector<2x16xf32>
    %c135 = arith.constant 135 : index
    %508 = memref.load %arg1[%c135] : memref<144xf32, #tpu.memory_space<smem>>
    %509 = vector.broadcast %508 : f32 to vector<2x16xf32>
    %510 = arith.mulf %509, %495 : vector<2x16xf32>
    %511 = arith.addf %493, %510 : vector<2x16xf32>
    %c0_97 = arith.constant 0 : index
    %c3_98 = arith.constant 3 : index
    %c125_99 = arith.constant 125 : index
    %512 = vector.load %arg7[%c0_97, %c3_98, %c125_99] : memref<2x4x148xf32, #tpu.memory_space<vmem>>, vector<2x1x16xf32>
    %513 = vector.shape_cast %512 : vector<2x1x16xf32> to vector<2x16xf32>
    %c28 = arith.constant 28 : index
    %514 = memref.load %arg1[%c28] : memref<144xf32, #tpu.memory_space<smem>>
    %515 = vector.broadcast %514 : f32 to vector<2x16xf32>
    %516 = arith.mulf %515, %513 : vector<2x16xf32>
    %517 = arith.addf %499, %516 : vector<2x16xf32>
    %c64 = arith.constant 64 : index
    %518 = memref.load %arg1[%c64] : memref<144xf32, #tpu.memory_space<smem>>
    %519 = vector.broadcast %518 : f32 to vector<2x16xf32>
    %520 = arith.mulf %519, %513 : vector<2x16xf32>
    %521 = arith.addf %503, %520 : vector<2x16xf32>
    %c100 = arith.constant 100 : index
    %522 = memref.load %arg1[%c100] : memref<144xf32, #tpu.memory_space<smem>>
    %523 = vector.broadcast %522 : f32 to vector<2x16xf32>
    %524 = arith.mulf %523, %513 : vector<2x16xf32>
    %525 = arith.addf %507, %524 : vector<2x16xf32>
    %c136 = arith.constant 136 : index
    %526 = memref.load %arg1[%c136] : memref<144xf32, #tpu.memory_space<smem>>
    %527 = vector.broadcast %526 : f32 to vector<2x16xf32>
    %528 = arith.mulf %527, %513 : vector<2x16xf32>
    %529 = arith.addf %511, %528 : vector<2x16xf32>
    %c0_100 = arith.constant 0 : index
    %c3_101 = arith.constant 3 : index
    %c126_102 = arith.constant 126 : index
    %530 = vector.load %arg7[%c0_100, %c3_101, %c126_102] : memref<2x4x148xf32, #tpu.memory_space<vmem>>, vector<2x1x16xf32>
    %531 = vector.shape_cast %530 : vector<2x1x16xf32> to vector<2x16xf32>
    %c29 = arith.constant 29 : index
    %532 = memref.load %arg1[%c29] : memref<144xf32, #tpu.memory_space<smem>>
    %533 = vector.broadcast %532 : f32 to vector<2x16xf32>
    %534 = arith.mulf %533, %531 : vector<2x16xf32>
    %535 = arith.addf %517, %534 : vector<2x16xf32>
    %c65 = arith.constant 65 : index
    %536 = memref.load %arg1[%c65] : memref<144xf32, #tpu.memory_space<smem>>
    %537 = vector.broadcast %536 : f32 to vector<2x16xf32>
    %538 = arith.mulf %537, %531 : vector<2x16xf32>
    %539 = arith.addf %521, %538 : vector<2x16xf32>
    %c101 = arith.constant 101 : index
    %540 = memref.load %arg1[%c101] : memref<144xf32, #tpu.memory_space<smem>>
    %541 = vector.broadcast %540 : f32 to vector<2x16xf32>
    %542 = arith.mulf %541, %531 : vector<2x16xf32>
    %543 = arith.addf %525, %542 : vector<2x16xf32>
    %c137 = arith.constant 137 : index
    %544 = memref.load %arg1[%c137] : memref<144xf32, #tpu.memory_space<smem>>
    %545 = vector.broadcast %544 : f32 to vector<2x16xf32>
    %546 = arith.mulf %545, %531 : vector<2x16xf32>
    %547 = arith.addf %529, %546 : vector<2x16xf32>
    %c0_103 = arith.constant 0 : index
    %c3_104 = arith.constant 3 : index
    %c127_105 = arith.constant 127 : index
    %548 = vector.load %arg7[%c0_103, %c3_104, %c127_105] : memref<2x4x148xf32, #tpu.memory_space<vmem>>, vector<2x1x16xf32>
    %549 = vector.shape_cast %548 : vector<2x1x16xf32> to vector<2x16xf32>
    %c30 = arith.constant 30 : index
    %550 = memref.load %arg1[%c30] : memref<144xf32, #tpu.memory_space<smem>>
    %551 = vector.broadcast %550 : f32 to vector<2x16xf32>
    %552 = arith.mulf %551, %549 : vector<2x16xf32>
    %553 = arith.addf %535, %552 : vector<2x16xf32>
    %c66 = arith.constant 66 : index
    %554 = memref.load %arg1[%c66] : memref<144xf32, #tpu.memory_space<smem>>
    %555 = vector.broadcast %554 : f32 to vector<2x16xf32>
    %556 = arith.mulf %555, %549 : vector<2x16xf32>
    %557 = arith.addf %539, %556 : vector<2x16xf32>
    %c102 = arith.constant 102 : index
    %558 = memref.load %arg1[%c102] : memref<144xf32, #tpu.memory_space<smem>>
    %559 = vector.broadcast %558 : f32 to vector<2x16xf32>
    %560 = arith.mulf %559, %549 : vector<2x16xf32>
    %561 = arith.addf %543, %560 : vector<2x16xf32>
    %c138 = arith.constant 138 : index
    %562 = memref.load %arg1[%c138] : memref<144xf32, #tpu.memory_space<smem>>
    %563 = vector.broadcast %562 : f32 to vector<2x16xf32>
    %564 = arith.mulf %563, %549 : vector<2x16xf32>
    %565 = arith.addf %547, %564 : vector<2x16xf32>
    %c0_106 = arith.constant 0 : index
    %c3_107 = arith.constant 3 : index
    %c128_108 = arith.constant 128 : index
    %566 = vector.load %arg7[%c0_106, %c3_107, %c128_108] : memref<2x4x148xf32, #tpu.memory_space<vmem>>, vector<2x1x16xf32>
    %567 = vector.shape_cast %566 : vector<2x1x16xf32> to vector<2x16xf32>
    %c31 = arith.constant 31 : index
    %568 = memref.load %arg1[%c31] : memref<144xf32, #tpu.memory_space<smem>>
    %569 = vector.broadcast %568 : f32 to vector<2x16xf32>
    %570 = arith.mulf %569, %567 : vector<2x16xf32>
    %571 = arith.addf %553, %570 : vector<2x16xf32>
    %c67 = arith.constant 67 : index
    %572 = memref.load %arg1[%c67] : memref<144xf32, #tpu.memory_space<smem>>
    %573 = vector.broadcast %572 : f32 to vector<2x16xf32>
    %574 = arith.mulf %573, %567 : vector<2x16xf32>
    %575 = arith.addf %557, %574 : vector<2x16xf32>
    %c103 = arith.constant 103 : index
    %576 = memref.load %arg1[%c103] : memref<144xf32, #tpu.memory_space<smem>>
    %577 = vector.broadcast %576 : f32 to vector<2x16xf32>
    %578 = arith.mulf %577, %567 : vector<2x16xf32>
    %579 = arith.addf %561, %578 : vector<2x16xf32>
    %c139 = arith.constant 139 : index
    %580 = memref.load %arg1[%c139] : memref<144xf32, #tpu.memory_space<smem>>
    %581 = vector.broadcast %580 : f32 to vector<2x16xf32>
    %582 = arith.mulf %581, %567 : vector<2x16xf32>
    %583 = arith.addf %565, %582 : vector<2x16xf32>
    %c0_109 = arith.constant 0 : index
    %c3_110 = arith.constant 3 : index
    %c129_111 = arith.constant 129 : index
    %584 = vector.load %arg7[%c0_109, %c3_110, %c129_111] : memref<2x4x148xf32, #tpu.memory_space<vmem>>, vector<2x1x16xf32>
    %585 = vector.shape_cast %584 : vector<2x1x16xf32> to vector<2x16xf32>
    %c32 = arith.constant 32 : index
    %586 = memref.load %arg1[%c32] : memref<144xf32, #tpu.memory_space<smem>>
    %587 = vector.broadcast %586 : f32 to vector<2x16xf32>
    %588 = arith.mulf %587, %585 : vector<2x16xf32>
    %589 = arith.addf %571, %588 : vector<2x16xf32>
    %c68 = arith.constant 68 : index
    %590 = memref.load %arg1[%c68] : memref<144xf32, #tpu.memory_space<smem>>
    %591 = vector.broadcast %590 : f32 to vector<2x16xf32>
    %592 = arith.mulf %591, %585 : vector<2x16xf32>
    %593 = arith.addf %575, %592 : vector<2x16xf32>
    %c104 = arith.constant 104 : index
    %594 = memref.load %arg1[%c104] : memref<144xf32, #tpu.memory_space<smem>>
    %595 = vector.broadcast %594 : f32 to vector<2x16xf32>
    %596 = arith.mulf %595, %585 : vector<2x16xf32>
    %597 = arith.addf %579, %596 : vector<2x16xf32>
    %c140 = arith.constant 140 : index
    %598 = memref.load %arg1[%c140] : memref<144xf32, #tpu.memory_space<smem>>
    %599 = vector.broadcast %598 : f32 to vector<2x16xf32>
    %600 = arith.mulf %599, %585 : vector<2x16xf32>
    %601 = arith.addf %583, %600 : vector<2x16xf32>
    %c0_112 = arith.constant 0 : index
    %c3_113 = arith.constant 3 : index
    %c130_114 = arith.constant 130 : index
    %602 = vector.load %arg7[%c0_112, %c3_113, %c130_114] : memref<2x4x148xf32, #tpu.memory_space<vmem>>, vector<2x1x16xf32>
    %603 = vector.shape_cast %602 : vector<2x1x16xf32> to vector<2x16xf32>
    %c33 = arith.constant 33 : index
    %604 = memref.load %arg1[%c33] : memref<144xf32, #tpu.memory_space<smem>>
    %605 = vector.broadcast %604 : f32 to vector<2x16xf32>
    %606 = arith.mulf %605, %603 : vector<2x16xf32>
    %607 = arith.addf %589, %606 : vector<2x16xf32>
    %c69 = arith.constant 69 : index
    %608 = memref.load %arg1[%c69] : memref<144xf32, #tpu.memory_space<smem>>
    %609 = vector.broadcast %608 : f32 to vector<2x16xf32>
    %610 = arith.mulf %609, %603 : vector<2x16xf32>
    %611 = arith.addf %593, %610 : vector<2x16xf32>
    %c105 = arith.constant 105 : index
    %612 = memref.load %arg1[%c105] : memref<144xf32, #tpu.memory_space<smem>>
    %613 = vector.broadcast %612 : f32 to vector<2x16xf32>
    %614 = arith.mulf %613, %603 : vector<2x16xf32>
    %615 = arith.addf %597, %614 : vector<2x16xf32>
    %c141 = arith.constant 141 : index
    %616 = memref.load %arg1[%c141] : memref<144xf32, #tpu.memory_space<smem>>
    %617 = vector.broadcast %616 : f32 to vector<2x16xf32>
    %618 = arith.mulf %617, %603 : vector<2x16xf32>
    %619 = arith.addf %601, %618 : vector<2x16xf32>
    %c0_115 = arith.constant 0 : index
    %c3_116 = arith.constant 3 : index
    %c131_117 = arith.constant 131 : index
    %620 = vector.load %arg7[%c0_115, %c3_116, %c131_117] : memref<2x4x148xf32, #tpu.memory_space<vmem>>, vector<2x1x16xf32>
    %621 = vector.shape_cast %620 : vector<2x1x16xf32> to vector<2x16xf32>
    %c34 = arith.constant 34 : index
    %622 = memref.load %arg1[%c34] : memref<144xf32, #tpu.memory_space<smem>>
    %623 = vector.broadcast %622 : f32 to vector<2x16xf32>
    %624 = arith.mulf %623, %621 : vector<2x16xf32>
    %625 = arith.addf %607, %624 : vector<2x16xf32>
    %c70 = arith.constant 70 : index
    %626 = memref.load %arg1[%c70] : memref<144xf32, #tpu.memory_space<smem>>
    %627 = vector.broadcast %626 : f32 to vector<2x16xf32>
    %628 = arith.mulf %627, %621 : vector<2x16xf32>
    %629 = arith.addf %611, %628 : vector<2x16xf32>
    %c106 = arith.constant 106 : index
    %630 = memref.load %arg1[%c106] : memref<144xf32, #tpu.memory_space<smem>>
    %631 = vector.broadcast %630 : f32 to vector<2x16xf32>
    %632 = arith.mulf %631, %621 : vector<2x16xf32>
    %633 = arith.addf %615, %632 : vector<2x16xf32>
    %c142 = arith.constant 142 : index
    %634 = memref.load %arg1[%c142] : memref<144xf32, #tpu.memory_space<smem>>
    %635 = vector.broadcast %634 : f32 to vector<2x16xf32>
    %636 = arith.mulf %635, %621 : vector<2x16xf32>
    %637 = arith.addf %619, %636 : vector<2x16xf32>
    %c0_118 = arith.constant 0 : index
    %c3_119 = arith.constant 3 : index
    %c132_120 = arith.constant 132 : index
    %638 = vector.load %arg7[%c0_118, %c3_119, %c132_120] : memref<2x4x148xf32, #tpu.memory_space<vmem>>, vector<2x1x16xf32>
    %639 = vector.shape_cast %638 : vector<2x1x16xf32> to vector<2x16xf32>
    %c35 = arith.constant 35 : index
    %640 = memref.load %arg1[%c35] : memref<144xf32, #tpu.memory_space<smem>>
    %641 = vector.broadcast %640 : f32 to vector<2x16xf32>
    %642 = arith.mulf %641, %639 : vector<2x16xf32>
    %643 = arith.addf %625, %642 : vector<2x16xf32>
    %c71 = arith.constant 71 : index
    %644 = memref.load %arg1[%c71] : memref<144xf32, #tpu.memory_space<smem>>
    %645 = vector.broadcast %644 : f32 to vector<2x16xf32>
    %646 = arith.mulf %645, %639 : vector<2x16xf32>
    %647 = arith.addf %629, %646 : vector<2x16xf32>
    %c107 = arith.constant 107 : index
    %648 = memref.load %arg1[%c107] : memref<144xf32, #tpu.memory_space<smem>>
    %649 = vector.broadcast %648 : f32 to vector<2x16xf32>
    %650 = arith.mulf %649, %639 : vector<2x16xf32>
    %651 = arith.addf %633, %650 : vector<2x16xf32>
    %c143 = arith.constant 143 : index
    %652 = memref.load %arg1[%c143] : memref<144xf32, #tpu.memory_space<smem>>
    %653 = vector.broadcast %652 : f32 to vector<2x16xf32>
    %654 = arith.mulf %653, %639 : vector<2x16xf32>
    %655 = arith.addf %637, %654 : vector<2x16xf32>
    %656 = tpu.iota {dimensions = array<i32: 0>} : vector<16x8xi32>
    %657 = tpu.iota {dimensions = array<i32: 1>} : vector<16x8xi32>
    %c2_i32 = arith.constant 2 : i32
    %658 = vector.broadcast %c2_i32 : i32 to vector<16x8xi32>
    %659 = arith.muli %658, %657 : vector<16x8xi32>
    %660 = arith.cmpi eq, %656, %659 : vector<16x8xi32>
    %cst_121 = arith.constant 1.000000e+00 : f32
    %cst_122 = arith.constant 0.000000e+00 : f32
    %661 = vector.broadcast %cst_121 : f32 to vector<16x8xf32>
    %662 = vector.broadcast %cst_122 : f32 to vector<16x8xf32>
    %663 = arith.select %660, %661, %662 : vector<16x8xi1>, vector<16x8xf32>
    %c2_i32_123 = arith.constant 2 : i32
    %664 = vector.broadcast %c2_i32_123 : i32 to vector<16x8xi32>
    %665 = arith.muli %664, %657 : vector<16x8xi32>
    %c1_i32 = arith.constant 1 : i32
    %666 = vector.broadcast %c1_i32 : i32 to vector<16x8xi32>
    %667 = arith.addi %665, %666 : vector<16x8xi32>
    %668 = arith.cmpi eq, %656, %667 : vector<16x8xi32>
    %cst_124 = arith.constant 1.000000e+00 : f32
    %cst_125 = arith.constant 0.000000e+00 : f32
    %669 = vector.broadcast %cst_124 : f32 to vector<16x8xf32>
    %670 = vector.broadcast %cst_125 : f32 to vector<16x8xf32>
    %671 = arith.select %668, %669, %670 : vector<16x8xi1>, vector<16x8xf32>
    %c0_126 = arith.constant 0 : index
    %672 = memref.load %arg2[%c0_126] : memref<4xf32, #tpu.memory_space<smem>>
    %673 = vector.broadcast %672 : f32 to vector<2x16xf32>
    %674 = arith.addf %643, %673 : vector<2x16xf32>
    %cst_127 = arith.constant 0.000000e+00 : f32
    %675 = vector.broadcast %cst_127 : f32 to vector<2x16xf32>
    %676 = arith.cmpf ogt, %674, %675 : vector<2x16xf32>
    %cst_128 = arith.constant 0.000000e+00 : f32
    %677 = vector.broadcast %cst_128 : f32 to vector<2x16xf32>
    %678 = arith.minimumf %674, %677 : vector<2x16xf32>
    %679 = math.exp %678 : vector<2x16xf32>
    %cst_129 = arith.constant 1.000000e+00 : f32
    %680 = vector.broadcast %cst_129 : f32 to vector<2x16xf32>
    %681 = arith.subf %679, %680 : vector<2x16xf32>
    %682 = arith.select %676, %674, %681 : vector<2x16xi1>, vector<2x16xf32>
    %683 = vector.shape_cast %682 : vector<2x16xf32> to vector<1x2x16xf32>
    %cst_130 = arith.constant dense<0.000000e+00> : vector<1xf32>
    %684 = vector.multi_reduction <add>, %683, %cst_130 [1, 2] : vector<1x2x16xf32> to vector<1xf32>
    %685 = vector.shape_cast %684 : vector<1xf32> to vector<1x1x1xf32>
    %686 = vector.extract %685[0, 0, 0] : f32 from vector<1x1x1xf32>
    %cst_131 = arith.constant 3.125000e-02 : f32
    %687 = arith.mulf %686, %cst_131 : f32
    %688 = vector.broadcast %687 : f32 to vector<2x16xf32>
    %689 = arith.subf %682, %688 : vector<2x16xf32>
    %690 = arith.mulf %689, %689 : vector<2x16xf32>
    %691 = vector.shape_cast %690 : vector<2x16xf32> to vector<1x2x16xf32>
    %cst_132 = arith.constant dense<0.000000e+00> : vector<1xf32>
    %692 = vector.multi_reduction <add>, %691, %cst_132 [1, 2] : vector<1x2x16xf32> to vector<1xf32>
    %693 = vector.shape_cast %692 : vector<1xf32> to vector<1x1x1xf32>
    %694 = vector.extract %693[0, 0, 0] : f32 from vector<1x1x1xf32>
    %cst_133 = arith.constant 3.125000e-02 : f32
    %695 = arith.mulf %694, %cst_133 : f32
    %c0_134 = arith.constant 0 : index
    %696 = memref.load %arg3[%c0_134] : memref<4xf32, #tpu.memory_space<smem>>
    %cst_135 = arith.constant 9.99999974E-6 : f32
    %697 = arith.addf %695, %cst_135 : f32
    %698 = math.rsqrt %697 : f32
    %699 = arith.mulf %696, %698 : f32
    %700 = vector.broadcast %699 : f32 to vector<2x16xf32>
    %701 = arith.mulf %689, %700 : vector<2x16xf32>
    %c0_136 = arith.constant 0 : index
    %702 = memref.load %arg4[%c0_136] : memref<4xf32, #tpu.memory_space<smem>>
    %703 = vector.broadcast %702 : f32 to vector<2x16xf32>
    %704 = arith.addf %701, %703 : vector<2x16xf32>
    %c0_137 = arith.constant 0 : index
    %c0_138 = arith.constant 0 : index
    %c0_139 = arith.constant 0 : index
    %705 = vector.load %arg6[%c0_137, %c0_138, %c0_139] : memref<2x4x16xf32, #tpu.memory_space<vmem>>, vector<2x1x16xf32>
    %706 = vector.shape_cast %705 : vector<2x1x16xf32> to vector<2x16xf32>
    %707 = vector.shape_cast %704 : vector<2x16xf32> to vector<2x1x16xf32>
    tpu.vector_store %arg6[%c0_137, %c0_138, %c0_139], %707 {strides = array<i32>} : memref<2x4x16xf32, #tpu.memory_space<vmem>>, vector<2x1x16xf32>,
    %cst_140 = arith.constant dense<0.000000e+00> : vector<2x8xf32>
    %708 = tpu.matmul %704, %663, %cst_140 {dimension_numbers = #tpu.dot_dimension_numbers<[1], [0], [0], [1], [0, 0, 1, 1], [], []>, precision = #tpu.contract_precision<fp32>} : vector<2x16xf32>, vector<16x8xf32>, vector<2x8xf32> -> vector<2x8xf32>
    %cst_141 = arith.constant dense<0.000000e+00> : vector<2x8xf32>
    %709 = tpu.matmul %704, %671, %cst_141 {dimension_numbers = #tpu.dot_dimension_numbers<[1], [0], [0], [1], [0, 0, 1, 1], [], []>, precision = #tpu.contract_precision<fp32>} : vector<2x16xf32>, vector<16x8xf32>, vector<2x8xf32> -> vector<2x8xf32>
    %710 = arith.maximumf %708, %709 : vector<2x8xf32>
    %c0_142 = arith.constant 0 : index
    %c0_143 = arith.constant 0 : index
    %c0_144 = arith.constant 0 : index
    %711 = vector.load %arg5[%c0_142, %c0_143, %c0_144] : memref<2x4x8xf32, #tpu.memory_space<vmem>>, vector<2x1x8xf32>
    %712 = vector.shape_cast %711 : vector<2x1x8xf32> to vector<2x8xf32>
    %713 = vector.shape_cast %710 : vector<2x8xf32> to vector<2x1x8xf32>
    tpu.vector_store %arg5[%c0_142, %c0_143, %c0_144], %713 {strides = array<i32>} : memref<2x4x8xf32, #tpu.memory_space<vmem>>, vector<2x1x8xf32>,
    %c1_145 = arith.constant 1 : index
    %714 = memref.load %arg2[%c1_145] : memref<4xf32, #tpu.memory_space<smem>>
    %715 = vector.broadcast %714 : f32 to vector<2x16xf32>
    %716 = arith.addf %647, %715 : vector<2x16xf32>
    %cst_146 = arith.constant 0.000000e+00 : f32
    %717 = vector.broadcast %cst_146 : f32 to vector<2x16xf32>
    %718 = arith.cmpf ogt, %716, %717 : vector<2x16xf32>
    %cst_147 = arith.constant 0.000000e+00 : f32
    %719 = vector.broadcast %cst_147 : f32 to vector<2x16xf32>
    %720 = arith.minimumf %716, %719 : vector<2x16xf32>
    %721 = math.exp %720 : vector<2x16xf32>
    %cst_148 = arith.constant 1.000000e+00 : f32
    %722 = vector.broadcast %cst_148 : f32 to vector<2x16xf32>
    %723 = arith.subf %721, %722 : vector<2x16xf32>
    %724 = arith.select %718, %716, %723 : vector<2x16xi1>, vector<2x16xf32>
    %725 = vector.shape_cast %724 : vector<2x16xf32> to vector<1x2x16xf32>
    %cst_149 = arith.constant dense<0.000000e+00> : vector<1xf32>
    %726 = vector.multi_reduction <add>, %725, %cst_149 [1, 2] : vector<1x2x16xf32> to vector<1xf32>
    %727 = vector.shape_cast %726 : vector<1xf32> to vector<1x1x1xf32>
    %728 = vector.extract %727[0, 0, 0] : f32 from vector<1x1x1xf32>
    %cst_150 = arith.constant 3.125000e-02 : f32
    %729 = arith.mulf %728, %cst_150 : f32
    %730 = vector.broadcast %729 : f32 to vector<2x16xf32>
    %731 = arith.subf %724, %730 : vector<2x16xf32>
    %732 = arith.mulf %731, %731 : vector<2x16xf32>
    %733 = vector.shape_cast %732 : vector<2x16xf32> to vector<1x2x16xf32>
    %cst_151 = arith.constant dense<0.000000e+00> : vector<1xf32>
    %734 = vector.multi_reduction <add>, %733, %cst_151 [1, 2] : vector<1x2x16xf32> to vector<1xf32>
    %735 = vector.shape_cast %734 : vector<1xf32> to vector<1x1x1xf32>
    %736 = vector.extract %735[0, 0, 0] : f32 from vector<1x1x1xf32>
    %cst_152 = arith.constant 3.125000e-02 : f32
    %737 = arith.mulf %736, %cst_152 : f32
    %c1_153 = arith.constant 1 : index
    %738 = memref.load %arg3[%c1_153] : memref<4xf32, #tpu.memory_space<smem>>
    %cst_154 = arith.constant 9.99999974E-6 : f32
    %739 = arith.addf %737, %cst_154 : f32
    %740 = math.rsqrt %739 : f32
    %741 = arith.mulf %738, %740 : f32
    %742 = vector.broadcast %741 : f32 to vector<2x16xf32>
    %743 = arith.mulf %731, %742 : vector<2x16xf32>
    %c1_155 = arith.constant 1 : index
    %744 = memref.load %arg4[%c1_155] : memref<4xf32, #tpu.memory_space<smem>>
    %745 = vector.broadcast %744 : f32 to vector<2x16xf32>
    %746 = arith.addf %743, %745 : vector<2x16xf32>
    %c0_156 = arith.constant 0 : index
    %c1_157 = arith.constant 1 : index
    %c0_158 = arith.constant 0 : index
    %747 = vector.load %arg6[%c0_156, %c1_157, %c0_158] : memref<2x4x16xf32, #tpu.memory_space<vmem>>, vector<2x1x16xf32>
    %748 = vector.shape_cast %747 : vector<2x1x16xf32> to vector<2x16xf32>
    %749 = vector.shape_cast %746 : vector<2x16xf32> to vector<2x1x16xf32>
    tpu.vector_store %arg6[%c0_156, %c1_157, %c0_158], %749 {strides = array<i32>} : memref<2x4x16xf32, #tpu.memory_space<vmem>>, vector<2x1x16xf32>,
    %cst_159 = arith.constant dense<0.000000e+00> : vector<2x8xf32>
    %750 = tpu.matmul %746, %663, %cst_159 {dimension_numbers = #tpu.dot_dimension_numbers<[1], [0], [0], [1], [0, 0, 1, 1], [], []>, precision = #tpu.contract_precision<fp32>} : vector<2x16xf32>, vector<16x8xf32>, vector<2x8xf32> -> vector<2x8xf32>
    %cst_160 = arith.constant dense<0.000000e+00> : vector<2x8xf32>
    %751 = tpu.matmul %746, %671, %cst_160 {dimension_numbers = #tpu.dot_dimension_numbers<[1], [0], [0], [1], [0, 0, 1, 1], [], []>, precision = #tpu.contract_precision<fp32>} : vector<2x16xf32>, vector<16x8xf32>, vector<2x8xf32> -> vector<2x8xf32>
    %752 = arith.maximumf %750, %751 : vector<2x8xf32>
    %c0_161 = arith.constant 0 : index
    %c1_162 = arith.constant 1 : index
    %c0_163 = arith.constant 0 : index
    %753 = vector.load %arg5[%c0_161, %c1_162, %c0_163] : memref<2x4x8xf32, #tpu.memory_space<vmem>>, vector<2x1x8xf32>
    %754 = vector.shape_cast %753 : vector<2x1x8xf32> to vector<2x8xf32>
    %755 = vector.shape_cast %752 : vector<2x8xf32> to vector<2x1x8xf32>
    tpu.vector_store %arg5[%c0_161, %c1_162, %c0_163], %755 {strides = array<i32>} : memref<2x4x8xf32, #tpu.memory_space<vmem>>, vector<2x1x8xf32>,
    %c2_164 = arith.constant 2 : index
    %756 = memref.load %arg2[%c2_164] : memref<4xf32, #tpu.memory_space<smem>>
    %757 = vector.broadcast %756 : f32 to vector<2x16xf32>
    %758 = arith.addf %651, %757 : vector<2x16xf32>
    %cst_165 = arith.constant 0.000000e+00 : f32
    %759 = vector.broadcast %cst_165 : f32 to vector<2x16xf32>
    %760 = arith.cmpf ogt, %758, %759 : vector<2x16xf32>
    %cst_166 = arith.constant 0.000000e+00 : f32
    %761 = vector.broadcast %cst_166 : f32 to vector<2x16xf32>
    %762 = arith.minimumf %758, %761 : vector<2x16xf32>
    %763 = math.exp %762 : vector<2x16xf32>
    %cst_167 = arith.constant 1.000000e+00 : f32
    %764 = vector.broadcast %cst_167 : f32 to vector<2x16xf32>
    %765 = arith.subf %763, %764 : vector<2x16xf32>
    %766 = arith.select %760, %758, %765 : vector<2x16xi1>, vector<2x16xf32>
    %767 = vector.shape_cast %766 : vector<2x16xf32> to vector<1x2x16xf32>
    %cst_168 = arith.constant dense<0.000000e+00> : vector<1xf32>
    %768 = vector.multi_reduction <add>, %767, %cst_168 [1, 2] : vector<1x2x16xf32> to vector<1xf32>
    %769 = vector.shape_cast %768 : vector<1xf32> to vector<1x1x1xf32>
    %770 = vector.extract %769[0, 0, 0] : f32 from vector<1x1x1xf32>
    %cst_169 = arith.constant 3.125000e-02 : f32
    %771 = arith.mulf %770, %cst_169 : f32
    %772 = vector.broadcast %771 : f32 to vector<2x16xf32>
    %773 = arith.subf %766, %772 : vector<2x16xf32>
    %774 = arith.mulf %773, %773 : vector<2x16xf32>
    %775 = vector.shape_cast %774 : vector<2x16xf32> to vector<1x2x16xf32>
    %cst_170 = arith.constant dense<0.000000e+00> : vector<1xf32>
    %776 = vector.multi_reduction <add>, %775, %cst_170 [1, 2] : vector<1x2x16xf32> to vector<1xf32>
    %777 = vector.shape_cast %776 : vector<1xf32> to vector<1x1x1xf32>
    %778 = vector.extract %777[0, 0, 0] : f32 from vector<1x1x1xf32>
    %cst_171 = arith.constant 3.125000e-02 : f32
    %779 = arith.mulf %778, %cst_171 : f32
    %c2_172 = arith.constant 2 : index
    %780 = memref.load %arg3[%c2_172] : memref<4xf32, #tpu.memory_space<smem>>
    %cst_173 = arith.constant 9.99999974E-6 : f32
    %781 = arith.addf %779, %cst_173 : f32
    %782 = math.rsqrt %781 : f32
    %783 = arith.mulf %780, %782 : f32
    %784 = vector.broadcast %783 : f32 to vector<2x16xf32>
    %785 = arith.mulf %773, %784 : vector<2x16xf32>
    %c2_174 = arith.constant 2 : index
    %786 = memref.load %arg4[%c2_174] : memref<4xf32, #tpu.memory_space<smem>>
    %787 = vector.broadcast %786 : f32 to vector<2x16xf32>
    %788 = arith.addf %785, %787 : vector<2x16xf32>
    %c0_175 = arith.constant 0 : index
    %c2_176 = arith.constant 2 : index
    %c0_177 = arith.constant 0 : index
    %789 = vector.load %arg6[%c0_175, %c2_176, %c0_177] : memref<2x4x16xf32, #tpu.memory_space<vmem>>, vector<2x1x16xf32>
    %790 = vector.shape_cast %789 : vector<2x1x16xf32> to vector<2x16xf32>
    %791 = vector.shape_cast %788 : vector<2x16xf32> to vector<2x1x16xf32>
    tpu.vector_store %arg6[%c0_175, %c2_176, %c0_177], %791 {strides = array<i32>} : memref<2x4x16xf32, #tpu.memory_space<vmem>>, vector<2x1x16xf32>,
    %cst_178 = arith.constant dense<0.000000e+00> : vector<2x8xf32>
    %792 = tpu.matmul %788, %663, %cst_178 {dimension_numbers = #tpu.dot_dimension_numbers<[1], [0], [0], [1], [0, 0, 1, 1], [], []>, precision = #tpu.contract_precision<fp32>} : vector<2x16xf32>, vector<16x8xf32>, vector<2x8xf32> -> vector<2x8xf32>
    %cst_179 = arith.constant dense<0.000000e+00> : vector<2x8xf32>
    %793 = tpu.matmul %788, %671, %cst_179 {dimension_numbers = #tpu.dot_dimension_numbers<[1], [0], [0], [1], [0, 0, 1, 1], [], []>, precision = #tpu.contract_precision<fp32>} : vector<2x16xf32>, vector<16x8xf32>, vector<2x8xf32> -> vector<2x8xf32>
    %794 = arith.maximumf %792, %793 : vector<2x8xf32>
    %c0_180 = arith.constant 0 : index
    %c2_181 = arith.constant 2 : index
    %c0_182 = arith.constant 0 : index
    %795 = vector.load %arg5[%c0_180, %c2_181, %c0_182] : memref<2x4x8xf32, #tpu.memory_space<vmem>>, vector<2x1x8xf32>
    %796 = vector.shape_cast %795 : vector<2x1x8xf32> to vector<2x8xf32>
    %797 = vector.shape_cast %794 : vector<2x8xf32> to vector<2x1x8xf32>
    tpu.vector_store %arg5[%c0_180, %c2_181, %c0_182], %797 {strides = array<i32>} : memref<2x4x8xf32, #tpu.memory_space<vmem>>, vector<2x1x8xf32>,
    %c3_183 = arith.constant 3 : index
    %798 = memref.load %arg2[%c3_183] : memref<4xf32, #tpu.memory_space<smem>>
    %799 = vector.broadcast %798 : f32 to vector<2x16xf32>
    %800 = arith.addf %655, %799 : vector<2x16xf32>
    %cst_184 = arith.constant 0.000000e+00 : f32
    %801 = vector.broadcast %cst_184 : f32 to vector<2x16xf32>
    %802 = arith.cmpf ogt, %800, %801 : vector<2x16xf32>
    %cst_185 = arith.constant 0.000000e+00 : f32
    %803 = vector.broadcast %cst_185 : f32 to vector<2x16xf32>
    %804 = arith.minimumf %800, %803 : vector<2x16xf32>
    %805 = math.exp %804 : vector<2x16xf32>
    %cst_186 = arith.constant 1.000000e+00 : f32
    %806 = vector.broadcast %cst_186 : f32 to vector<2x16xf32>
    %807 = arith.subf %805, %806 : vector<2x16xf32>
    %808 = arith.select %802, %800, %807 : vector<2x16xi1>, vector<2x16xf32>
    %809 = vector.shape_cast %808 : vector<2x16xf32> to vector<1x2x16xf32>
    %cst_187 = arith.constant dense<0.000000e+00> : vector<1xf32>
    %810 = vector.multi_reduction <add>, %809, %cst_187 [1, 2] : vector<1x2x16xf32> to vector<1xf32>
    %811 = vector.shape_cast %810 : vector<1xf32> to vector<1x1x1xf32>
    %812 = vector.extract %811[0, 0, 0] : f32 from vector<1x1x1xf32>
    %cst_188 = arith.constant 3.125000e-02 : f32
    %813 = arith.mulf %812, %cst_188 : f32
    %814 = vector.broadcast %813 : f32 to vector<2x16xf32>
    %815 = arith.subf %808, %814 : vector<2x16xf32>
    %816 = arith.mulf %815, %815 : vector<2x16xf32>
    %817 = vector.shape_cast %816 : vector<2x16xf32> to vector<1x2x16xf32>
    %cst_189 = arith.constant dense<0.000000e+00> : vector<1xf32>
    %818 = vector.multi_reduction <add>, %817, %cst_189 [1, 2] : vector<1x2x16xf32> to vector<1xf32>
    %819 = vector.shape_cast %818 : vector<1xf32> to vector<1x1x1xf32>
    %820 = vector.extract %819[0, 0, 0] : f32 from vector<1x1x1xf32>
    %cst_190 = arith.constant 3.125000e-02 : f32
    %821 = arith.mulf %820, %cst_190 : f32
    %c3_191 = arith.constant 3 : index
    %822 = memref.load %arg3[%c3_191] : memref<4xf32, #tpu.memory_space<smem>>
    %cst_192 = arith.constant 9.99999974E-6 : f32
    %823 = arith.addf %821, %cst_192 : f32
    %824 = math.rsqrt %823 : f32
    %825 = arith.mulf %822, %824 : f32
    %826 = vector.broadcast %825 : f32 to vector<2x16xf32>
    %827 = arith.mulf %815, %826 : vector<2x16xf32>
    %c3_193 = arith.constant 3 : index
    %828 = memref.load %arg4[%c3_193] : memref<4xf32, #tpu.memory_space<smem>>
    %829 = vector.broadcast %828 : f32 to vector<2x16xf32>
    %830 = arith.addf %827, %829 : vector<2x16xf32>
    %c0_194 = arith.constant 0 : index
    %c3_195 = arith.constant 3 : index
    %c0_196 = arith.constant 0 : index
    %831 = vector.load %arg6[%c0_194, %c3_195, %c0_196] : memref<2x4x16xf32, #tpu.memory_space<vmem>>, vector<2x1x16xf32>
    %832 = vector.shape_cast %831 : vector<2x1x16xf32> to vector<2x16xf32>
    %833 = vector.shape_cast %830 : vector<2x16xf32> to vector<2x1x16xf32>
    tpu.vector_store %arg6[%c0_194, %c3_195, %c0_196], %833 {strides = array<i32>} : memref<2x4x16xf32, #tpu.memory_space<vmem>>, vector<2x1x16xf32>,
    %cst_197 = arith.constant dense<0.000000e+00> : vector<2x8xf32>
    %834 = tpu.matmul %830, %663, %cst_197 {dimension_numbers = #tpu.dot_dimension_numbers<[1], [0], [0], [1], [0, 0, 1, 1], [], []>, precision = #tpu.contract_precision<fp32>} : vector<2x16xf32>, vector<16x8xf32>, vector<2x8xf32> -> vector<2x8xf32>
    %cst_198 = arith.constant dense<0.000000e+00> : vector<2x8xf32>
    %835 = tpu.matmul %830, %671, %cst_198 {dimension_numbers = #tpu.dot_dimension_numbers<[1], [0], [0], [1], [0, 0, 1, 1], [], []>, precision = #tpu.contract_precision<fp32>} : vector<2x16xf32>, vector<16x8xf32>, vector<2x8xf32> -> vector<2x8xf32>
    %836 = arith.maximumf %834, %835 : vector<2x8xf32>
    %c0_199 = arith.constant 0 : index
    %c3_200 = arith.constant 3 : index
    %c0_201 = arith.constant 0 : index
    %837 = vector.load %arg5[%c0_199, %c3_200, %c0_201] : memref<2x4x8xf32, #tpu.memory_space<vmem>>, vector<2x1x8xf32>
    %838 = vector.shape_cast %837 : vector<2x1x8xf32> to vector<2x8xf32>
    %839 = vector.shape_cast %836 : vector<2x8xf32> to vector<2x1x8xf32>
    tpu.vector_store %arg5[%c0_199, %c3_200, %c0_201], %839 {strides = array<i32>} : memref<2x4x8xf32, #tpu.memory_space<vmem>>, vector<2x1x8xf32>,
    return
  }
}

</mosaic_0001>

<llo_original>
// kernel: tpu_custom_call.1
$region0: #{tpu_custom_call.1}
  #allocation0 [shape = 'u32[]', space=smem, size = 0x4, offset = 0x4, fixed_abs, tag = 'smem constant byte address 0x4 - core index']
  #allocation1 [shape = 'u32[144,128]{1,0:T(1,128)}', space=vmem, size = 0x12000, scoped, tag = 'internal scratch']
  #allocation2 [shape = 'f32[2,4,148]{2,1,0:T(4,128)}', space=vmem, size = 0x2000, scoped, tag = 'scratch operand']
  %s0 = inlined_call_operand.hbm [shape: f32[2,4,16], index: 0, kind: input, shape index: {}]
  %s1 = inlined_call_operand.vmem [shape: f32[144], index: 1, kind: input, shape index: {}]
  %s2 = inlined_call_operand.vmem [shape: f32[4], index: 2, kind: input, shape index: {}]
  %s3 = inlined_call_operand.vmem [shape: f32[4], index: 3, kind: input, shape index: {}]
  %s4 = inlined_call_operand.vmem [shape: f32[4], index: 4, kind: input, shape index: {}]
  %s5 = inlined_call_operand.hbm [shape: f32[2,4,8], index: 5, kind: output, shape index: {0}]
  %s6 = inlined_call_operand.hbm [shape: f32[2,4,16], index: 6, kind: output, shape index: {1}]
  %7 = xla_tuple %s5, %s6
  %s8 = sld [smem:[#allocation0]]
  $region58: #{tpu_custom_call.1} parent=0
    _
  %s10 = ssub.s32 1, %s8
  %s11 = scalar_select 0, %s10, %s8
  $region1: #{tpu_custom_call.1} parent=0
    #allocation3 [shape = 'u8[4096]{0}', space=vmem, size = 0x1000, scoped, tag = 'input window, operand 0, single buffered']
    #allocation4 [shape = 's32[1]{0}', space=sflag, size = 0x4, scoped, tag = 'scoped memory for tpu_custom_call.1']
    #allocation5 [shape = 's32[1]{0}', space=sflag, size = 0x4, scoped, tag = 'scoped memory for tpu_custom_call.1']
    #allocation6 [shape = 's32[1]{0}', space=sflag, size = 0x4, scoped, tag = 'scoped memory for tpu_custom_call.1']
    #allocation7 [shape = 'u8[1024]{0}', space=smem, size = 0x400, scoped, tag = 'input window, operand 1, single buffered']
    #allocation8 [shape = 'u8[512]{0}', space=smem, size = 0x200, scoped, tag = 'input window, operand 2, single buffered']
    #allocation9 [shape = 's32[1]{0}', space=sflag, size = 0x4, scoped, tag = 'scoped memory for tpu_custom_call.1']
    #allocation10 [shape = 'u8[512]{0}', space=smem, size = 0x200, scoped, tag = 'input window, operand 3, single buffered']
    #allocation11 [shape = 'u8[512]{0}', space=smem, size = 0x200, scoped, tag = 'input window, operand 4, single buffered']
    #allocation12 [shape = 's32[1]{0}', space=sflag, size = 0x4, scoped, tag = 'scoped memory for tpu_custom_call.1']
    #allocation13 [shape = 'u8[4096]{0}', space=vmem, size = 0x1000, scoped, tag = 'output window, operand 0, single buffered']
    #allocation14 [shape = 'u8[4096]{0}', space=vmem, size = 0x1000, scoped, tag = 'output window, operand 1, single buffered']
    #allocation15 [shape = 's32[1]{0}', space=sflag, size = 0x4, scoped, tag = 'scoped memory for tpu_custom_call.1']
    %12 = vsyncpa [#allocation4], 0
    %13 = vsyncpa [#allocation6], 0
    %14 = vsyncpa [#allocation9], 0
    %15 = vsyncpa [#allocation12], 0
    %16 = vsyncpa [#allocation5], 0
    %17 = vsyncpa [#allocation15], 0
    // Predicated region
    $region2: #{tpu_custom_call.1} parent=1 // pred_check
      _
    $region3: #{tpu_custom_call.1} parent=1 // pred_check_branch
      %19 = sbr.rel (0) target = $region5
    $region4: #{tpu_custom_call.1} parent=1 // pred_region
      %s21 = ssub.s32 128, 128
      %22 = vsyncadd [#allocation4], %s21
      %s23 = sshll.u32 [#allocation3], 4
      %s24 = int_to_ptr.vmem [resolvable:$true] %s23
      %29 = dma.hbm_to_vmem [thread:$0]  %s0, 128, %s24, [#allocation4], 64, 64, 4
    $region5: #{tpu_custom_call.1} parent=1 // pred_fallthru
      _
    // Predicated region
    $region6: #{tpu_custom_call.1} parent=1 // pred_check
      _
    $region7: #{tpu_custom_call.1} parent=1 // pred_check_branch
      %31 = sbr.rel (0) target = $region9
    $region8: #{tpu_custom_call.1} parent=1 // pred_region
      %s33 = ssub.s32 32, 32
      %34 = vsyncadd [#allocation6], %s33
      %s36 = sshll.u32 %s1, 4
      %s37 = int_to_ptr.vmem [resolvable:$true] %s36
      %39 = dma.vmem_to_smem %s37, 32, [#allocation7], [#allocation6]
    $region9: #{tpu_custom_call.1} parent=1 // pred_fallthru
      _
    // Predicated region
    $region10: #{tpu_custom_call.1} parent=1 // pred_check
      _
    $region11: #{tpu_custom_call.1} parent=1 // pred_check_branch
      %41 = sbr.rel (0) target = $region13
    $region12: #{tpu_custom_call.1} parent=1 // pred_region
      %s43 = ssub.s32 16, 16
      %44 = vsyncadd [#allocation9], %s43
      %s46 = sshll.u32 %s2, 4
      %s47 = int_to_ptr.vmem [resolvable:$true] %s46
      %49 = dma.vmem_to_smem %s47, 16, [#allocation8], [#allocation9]
    $region13: #{tpu_custom_call.1} parent=1 // pred_fallthru
      _
    // Predicated region
    $region14: #{tpu_custom_call.1} parent=1 // pred_check
      _
    $region15: #{tpu_custom_call.1} parent=1 // pred_check_branch
      %51 = sbr.rel (0) target = $region17
    $region16: #{tpu_custom_call.1} parent=1 // pred_region
      %s53 = ssub.s32 16, 16
      %54 = vsyncadd [#allocation9], %s53
      %s56 = sshll.u32 %s3, 4
      %s57 = int_to_ptr.vmem [resolvable:$true] %s56
      %59 = dma.vmem_to_smem %s57, 16, [#allocation10], [#allocation9]
    $region17: #{tpu_custom_call.1} parent=1 // pred_fallthru
      _
    // Predicated region
    $region18: #{tpu_custom_call.1} parent=1 // pred_check
      _
    $region19: #{tpu_custom_call.1} parent=1 // pred_check_branch
      %61 = sbr.rel (0) target = $region21
    $region20: #{tpu_custom_call.1} parent=1 // pred_region
      %s63 = ssub.s32 16, 16
      %64 = vsyncadd [#allocation12], %s63
      %s66 = sshll.u32 %s4, 4
      %s67 = int_to_ptr.vmem [resolvable:$true] %s66
      %69 = dma.vmem_to_smem %s67, 16, [#allocation11], [#allocation12]
    $region21: #{tpu_custom_call.1} parent=1 // pred_fallthru
      _
    // Predicated region
    $region22: #{tpu_custom_call.1} parent=1 // pred_check
      _
    $region23: #{tpu_custom_call.1} parent=1 // pred_check_branch
      %71 = sbr.rel (0) target = $region25
    $region24: #{tpu_custom_call.1} parent=1 // pred_region
      %72 = dma.done [#allocation4], 128
    $region25: #{tpu_custom_call.1} parent=1 // pred_fallthru
      _
    // Predicated region
    $region26: #{tpu_custom_call.1} parent=1 // pred_check
      _
    $region27: #{tpu_custom_call.1} parent=1 // pred_check_branch
      %74 = sbr.rel (0) target = $region29
    $region28: #{tpu_custom_call.1} parent=1 // pred_region
      %75 = dma.done [#allocation6], 32
    $region29: #{tpu_custom_call.1} parent=1 // pred_fallthru
      _
    // Predicated region
    $region30: #{tpu_custom_call.1} parent=1 // pred_check
      _
    $region31: #{tpu_custom_call.1} parent=1 // pred_check_branch
      %77 = sbr.rel (0) target = $region33
    $region32: #{tpu_custom_call.1} parent=1 // pred_region
      %78 = dma.done [#allocation9], 16
    $region33: #{tpu_custom_call.1} parent=1 // pred_fallthru
      _
    // Predicated region
    $region34: #{tpu_custom_call.1} parent=1 // pred_check
      _
    $region35: #{tpu_custom_call.1} parent=1 // pred_check_branch
      %80 = sbr.rel (0) target = $region37
    $region36: #{tpu_custom_call.1} parent=1 // pred_region
      %81 = dma.done [#allocation9], 16
    $region37: #{tpu_custom_call.1} parent=1 // pred_fallthru
      _
    // Predicated region
    $region38: #{tpu_custom_call.1} parent=1 // pred_check
      _
    $region39: #{tpu_custom_call.1} parent=1 // pred_check_branch
      %83 = sbr.rel (0) target = $region41
    $region40: #{tpu_custom_call.1} parent=1 // pred_region
      %84 = dma.done [#allocation12], 16
    $region41: #{tpu_custom_call.1} parent=1 // pred_fallthru
      _
    %85 = sfence
    %vm86 = vcmask 1043456
    %vm87 = vcmask 162820
    %vm88 = vmor %vm87, %vm86
    %89 = vst.msk [vmem:[#allocation2] sm:$0xff] %vm88, 0.0
    %90 = vst.msk [vmem:[#allocation2 + $0x8] sm:$0xff] %vm88, 0.0
    %v91 = vld [vmem:[#allocation3] sm:$0xf]
    %v92 = vld [vmem:[#allocation3 + $0x4] sm:$0xf]
    %vm93 = vcmask 125952
    %94 = vst.msk [vmem:[#allocation2 + $0x4] sm:$0xf] %vm93, %v91
    %95 = vst.msk [vmem:[#allocation2 + $0xc] sm:$0xf] %vm93, %v92
    %v96 = vld [vmem:[#allocation2] sm:$0x11]
    %v97 = vld [vmem:[#allocation2 + $0x8] sm:$0x11]
    %s98 = sld [smem:[#allocation7]]
    %v99 = vstv %s98
    %v100 = vmul.f32 %v99, %v96
    %v101 = vmul.f32 %v99, %v97
    %v102 = vadd.f32 %v100, 0.0
    %v103 = vadd.f32 %v101, 0.0
    %s104 = sld [smem:[#allocation7 + $0x24]]
    %v105 = vstv %s104
    %v106 = vmul.f32 %v105, %v96
    %v107 = vmul.f32 %v105, %v97
    %v108 = vadd.f32 %v106, 0.0
    %v109 = vadd.f32 %v107, 0.0
    %s110 = sld [smem:[#allocation7 + $0x48]]
    %v111 = vstv %s110
    %v112 = vmul.f32 %v111, %v96
    %v113 = vmul.f32 %v111, %v97
    %v114 = vadd.f32 %v112, 0.0
    %v115 = vadd.f32 %v113, 0.0
    %s116 = sld [smem:[#allocation7 + $0x6c]]
    %v117 = vstv %s116
    %v118 = vmul.f32 %v117, %v96
    %v119 = vmul.f32 %v117, %v97
    %v120 = vadd.f32 %v118, 0.0
    %v121 = vadd.f32 %v119, 0.0
    %s122 = sld [smem:[#allocation7 + $0x1]]
    %v123 = vstv %s122
    %v124 = vmul.f32 %v123, %v96
    %v125 = vmul.f32 %v123, %v97
    %128 = vrot.lane.b32.xlu0 %v124, 127
    %v129 = vpop.permute.xlu0 %128
    %130 = vrot.lane.b32.xlu0 %v125, 127
    %v131 = vpop.permute.xlu0 %130
    %v132 = vrot.slane %v129, 4
    %v133 = vrot.slane %v131, 4
    %vm134 = vcmask 1039360
    %v135 = vsel %vm134, %v129, %v132
    %v136 = vsel %vm134, %v131, %v133
    %v139 = vadd.f32 %v102, %v135
    %v140 = vadd.f32 %v103, %v136
    %s141 = sld [smem:[#allocation7 + $0x25]]
    %v142 = vstv %s141
    %v143 = vmul.f32 %v142, %v96
    %v144 = vmul.f32 %v142, %v97
    %147 = vrot.lane.b32.xlu0 %v143, 127
    %v148 = vpop.permute.xlu0 %147
    %149 = vrot.lane.b32.xlu0 %v144, 127
    %v150 = vpop.permute.xlu0 %149
    %v151 = vrot.slane %v148, 4
    %v152 = vrot.slane %v150, 4
    %v153 = vsel %vm134, %v148, %v151
    %v154 = vsel %vm134, %v150, %v152
    %v157 = vadd.f32 %v108, %v153
    %v158 = vadd.f32 %v109, %v154
    %s159 = sld [smem:[#allocation7 + $0x49]]
    %v160 = vstv %s159
    %v161 = vmul.f32 %v160, %v96
    %v162 = vmul.f32 %v160, %v97
    %165 = vrot.lane.b32.xlu0 %v161, 127
    %v166 = vpop.permute.xlu0 %165
    %167 = vrot.lane.b32.xlu0 %v162, 127
    %v168 = vpop.permute.xlu0 %167
    %v169 = vrot.slane %v166, 4
    %v170 = vrot.slane %v168, 4
    %v171 = vsel %vm134, %v166, %v169
    %v172 = vsel %vm134, %v168, %v170
    %v175 = vadd.f32 %v114, %v171
    %v176 = vadd.f32 %v115, %v172
    %s177 = sld [smem:[#allocation7 + $0x6d]]
    %v178 = vstv %s177
    %v179 = vmul.f32 %v178, %v96
    %v180 = vmul.f32 %v178, %v97
    %183 = vrot.lane.b32.xlu0 %v179, 127
    %v184 = vpop.permute.xlu0 %183
    %185 = vrot.lane.b32.xlu0 %v180, 127
    %v186 = vpop.permute.xlu0 %185
    %v187 = vrot.slane %v184, 4
    %v188 = vrot.slane %v186, 4
    %v189 = vsel %vm134, %v184, %v187
    %v190 = vsel %vm134, %v186, %v188
    %v193 = vadd.f32 %v120, %v189
    %v194 = vadd.f32 %v121, %v190
    %s195 = sld [smem:[#allocation7 + $0x2]]
    %v196 = vstv %s195
    %v197 = vmul.f32 %v196, %v96
    %v198 = vmul.f32 %v196, %v97
    %201 = vrot.lane.b32.xlu0 %v197, 126
    %v202 = vpop.permute.xlu0 %201
    %203 = vrot.lane.b32.xlu0 %v198, 126
    %v204 = vpop.permute.xlu0 %203
    %v205 = vrot.slane %v202, 4
    %v206 = vrot.slane %v204, 4
    %vm207 = vcmask 1031168
    %v208 = vsel %vm207, %v202, %v205
    %v209 = vsel %vm207, %v204, %v206
    %v212 = vadd.f32 %v139, %v208
    %v213 = vadd.f32 %v140, %v209
    %s214 = sld [smem:[#allocation7 + $0x26]]
    %v215 = vstv %s214
    %v216 = vmul.f32 %v215, %v96
    %v217 = vmul.f32 %v215, %v97
    %220 = vrot.lane.b32.xlu0 %v216, 126
    %v221 = vpop.permute.xlu0 %220
    %222 = vrot.lane.b32.xlu0 %v217, 126
    %v223 = vpop.permute.xlu0 %222
    %v224 = vrot.slane %v221, 4
    %v225 = vrot.slane %v223, 4
    %v226 = vsel %vm207, %v221, %v224
    %v227 = vsel %vm207, %v223, %v225
    %v230 = vadd.f32 %v157, %v226
    %v231 = vadd.f32 %v158, %v227
    %s232 = sld [smem:[#allocation7 + $0x4a]]
    %v233 = vstv %s232
    %v234 = vmul.f32 %v233, %v96
    %v235 = vmul.f32 %v233, %v97
    %238 = vrot.lane.b32.xlu0 %v234, 126
    %v239 = vpop.permute.xlu0 %238
    %240 = vrot.lane.b32.xlu0 %v235, 126
    %v241 = vpop.permute.xlu0 %240
    %v242 = vrot.slane %v239, 4
    %v243 = vrot.slane %v241, 4
    %v244 = vsel %vm207, %v239, %v242
    %v245 = vsel %vm207, %v241, %v243
    %v248 = vadd.f32 %v175, %v244
    %v249 = vadd.f32 %v176, %v245
    %s250 = sld [smem:[#allocation7 + $0x6e]]
    %v251 = vstv %s250
    %v252 = vmul.f32 %v251, %v96
    %v253 = vmul.f32 %v251, %v97
    %256 = vrot.lane.b32.xlu0 %v252, 126
    %v257 = vpop.permute.xlu0 %256
    %258 = vrot.lane.b32.xlu0 %v253, 126
    %v259 = vpop.permute.xlu0 %258
    %v260 = vrot.slane %v257, 4
    %v261 = vrot.slane %v259, 4
    %v262 = vsel %vm207, %v257, %v260
    %v263 = vsel %vm207, %v259, %v261
    %v266 = vadd.f32 %v193, %v262
    %v267 = vadd.f32 %v194, %v263
    %s268 = sld [smem:[#allocation7 + $0x3]]
    %v269 = vstv %s268
    %v270 = vmul.f32 %v269, %v96
    %v271 = vmul.f32 %v269, %v97
    %274 = vrot.lane.b32.xlu0 %v270, 125
    %v275 = vpop.permute.xlu0 %274
    %276 = vrot.lane.b32.xlu0 %v271, 125
    %v277 = vpop.permute.xlu0 %276
    %v278 = vrot.slane %v275, 4
    %v279 = vrot.slane %v277, 4
    %vm280 = vcmask 1022976
    %v281 = vsel %vm280, %v275, %v278
    %v282 = vsel %vm280, %v277, %v279
    %v285 = vadd.f32 %v212, %v281
    %v286 = vadd.f32 %v213, %v282
    %s287 = sld [smem:[#allocation7 + $0x27]]
    %v288 = vstv %s287
    %v289 = vmul.f32 %v288, %v96
    %v290 = vmul.f32 %v288, %v97
    %293 = vrot.lane.b32.xlu0 %v289, 125
    %v294 = vpop.permute.xlu0 %293
    %295 = vrot.lane.b32.xlu0 %v290, 125
    %v296 = vpop.permute.xlu0 %295
    %v297 = vrot.slane %v294, 4
    %v298 = vrot.slane %v296, 4
    %v299 = vsel %vm280, %v294, %v297
    %v300 = vsel %vm280, %v296, %v298
    %v303 = vadd.f32 %v230, %v299
    %v304 = vadd.f32 %v231, %v300
    %s305 = sld [smem:[#allocation7 + $0x4b]]
    %v306 = vstv %s305
    %v307 = vmul.f32 %v306, %v96
    %v308 = vmul.f32 %v306, %v97
    %311 = vrot.lane.b32.xlu0 %v307, 125
    %v312 = vpop.permute.xlu0 %311
    %313 = vrot.lane.b32.xlu0 %v308, 125
    %v314 = vpop.permute.xlu0 %313
    %v315 = vrot.slane %v312, 4
    %v316 = vrot.slane %v314, 4
    %v317 = vsel %vm280, %v312, %v315
    %v318 = vsel %vm280, %v314, %v316
    %v321 = vadd.f32 %v248, %v317
    %v322 = vadd.f32 %v249, %v318
    %s323 = sld [smem:[#allocation7 + $0x6f]]
    %v324 = vstv %s323
    %v325 = vmul.f32 %v324, %v96
    %v326 = vmul.f32 %v324, %v97
    %329 = vrot.lane.b32.xlu0 %v325, 125
    %v330 = vpop.permute.xlu0 %329
    %331 = vrot.lane.b32.xlu0 %v326, 125
    %v332 = vpop.permute.xlu0 %331
    %v333 = vrot.slane %v330, 4
    %v334 = vrot.slane %v332, 4
    %v335 = vsel %vm280, %v330, %v333
    %v336 = vsel %vm280, %v332, %v334
    %v339 = vadd.f32 %v266, %v335
    %v340 = vadd.f32 %v267, %v336
    %v341 = vld [vmem:[#allocation2 + $0x4] sm:$0x1]
    %v342 = vld [vmem:[#allocation2 + $0xc] sm:$0x1]
    %s343 = sld [smem:[#allocation7 + $0x4]]
    %v344 = vstv %s343
    %v345 = vmul.f32 %v344, %v341
    %v346 = vmul.f32 %v344, %v342
    %349 = vrot.lane.b32.xlu0 %v345, 124
    %v350 = vpop.permute.xlu0 %349
    %351 = vrot.lane.b32.xlu0 %v346, 124
    %v352 = vpop.permute.xlu0 %351
    %v353 = vrot.slane %v350, 4
    %v354 = vrot.slane %v352, 4
    %vm355 = vcmask 1014784
    %v356 = vsel %vm355, %v353, %v350
    %v357 = vsel %vm355, %v354, %v352
    %v360 = vadd.f32 %v285, %v356
    %v361 = vadd.f32 %v286, %v357
    %s362 = sld [smem:[#allocation7 + $0x28]]
    %v363 = vstv %s362
    %v364 = vmul.f32 %v363, %v341
    %v365 = vmul.f32 %v363, %v342
    %368 = vrot.lane.b32.xlu0 %v364, 124
    %v369 = vpop.permute.xlu0 %368
    %370 = vrot.lane.b32.xlu0 %v365, 124
    %v371 = vpop.permute.xlu0 %370
    %v372 = vrot.slane %v369, 4
    %v373 = vrot.slane %v371, 4
    %v374 = vsel %vm355, %v372, %v369
    %v375 = vsel %vm355, %v373, %v371
    %v378 = vadd.f32 %v303, %v374
    %v379 = vadd.f32 %v304, %v375
    %s380 = sld [smem:[#allocation7 + $0x4c]]
    %v381 = vstv %s380
    %v382 = vmul.f32 %v381, %v341
    %v383 = vmul.f32 %v381, %v342
    %386 = vrot.lane.b32.xlu0 %v382, 124
    %v387 = vpop.permute.xlu0 %386
    %388 = vrot.lane.b32.xlu0 %v383, 124
    %v389 = vpop.permute.xlu0 %388
    %v390 = vrot.slane %v387, 4
    %v391 = vrot.slane %v389, 4
    %v392 = vsel %vm355, %v390, %v387
    %v393 = vsel %vm355, %v391, %v389
    %v396 = vadd.f32 %v321, %v392
    %v397 = vadd.f32 %v322, %v393
    %s398 = sld [smem:[#allocation7 + $0x70]]
    %v399 = vstv %s398
    %v400 = vmul.f32 %v399, %v341
    %v401 = vmul.f32 %v399, %v342
    %404 = vrot.lane.b32.xlu0 %v400, 124
    %v405 = vpop.permute.xlu0 %404
    %406 = vrot.lane.b32.xlu0 %v401, 124
    %v407 = vpop.permute.xlu0 %406
    %v408 = vrot.slane %v405, 4
    %v409 = vrot.slane %v407, 4
    %v410 = vsel %vm355, %v408, %v405
    %v411 = vsel %vm355, %v409, %v407
    %v414 = vadd.f32 %v339, %v410
    %v415 = vadd.f32 %v340, %v411
    %s416 = sld [smem:[#allocation7 + $0x5]]
    %v417 = vstv %s416
    %v418 = vmul.f32 %v417, %v341
    %v419 = vmul.f32 %v417, %v342
    %422 = vrot.lane.b32.xlu0 %v418, 123
    %v423 = vpop.permute.xlu0 %422
    %424 = vrot.lane.b32.xlu0 %v419, 123
    %v425 = vpop.permute.xlu0 %424
    %v426 = vrot.slane %v423, 4
    %v427 = vrot.slane %v425, 4
    %vm428 = vcmask 1006592
    %v429 = vsel %vm428, %v426, %v423
    %v430 = vsel %vm428, %v427, %v425
    %v433 = vadd.f32 %v360, %v429
    %v434 = vadd.f32 %v361, %v430
    %s435 = sld [smem:[#allocation7 + $0x29]]
    %v436 = vstv %s435
    %v437 = vmul.f32 %v436, %v341
    %v438 = vmul.f32 %v436, %v342
    %441 = vrot.lane.b32.xlu0 %v437, 123
    %v442 = vpop.permute.xlu0 %441
    %443 = vrot.lane.b32.xlu0 %v438, 123
    %v444 = vpop.permute.xlu0 %443
    %v445 = vrot.slane %v442, 4
    %v446 = vrot.slane %v444, 4
    %v447 = vsel %vm428, %v445, %v442
    %v448 = vsel %vm428, %v446, %v444
    %v451 = vadd.f32 %v378, %v447
    %v452 = vadd.f32 %v379, %v448
    %s453 = sld [smem:[#allocation7 + $0x4d]]
    %v454 = vstv %s453
    %v455 = vmul.f32 %v454, %v341
    %v456 = vmul.f32 %v454, %v342
    %459 = vrot.lane.b32.xlu0 %v455, 123
    %v460 = vpop.permute.xlu0 %459
    %461 = vrot.lane.b32.xlu0 %v456, 123
    %v462 = vpop.permute.xlu0 %461
    %v463 = vrot.slane %v460, 4
    %v464 = vrot.slane %v462, 4
    %v465 = vsel %vm428, %v463, %v460
    %v466 = vsel %vm428, %v464, %v462
    %v469 = vadd.f32 %v396, %v465
    %v470 = vadd.f32 %v397, %v466
    %s471 = sld [smem:[#allocation7 + $0x71]]
    %v472 = vstv %s471
    %v473 = vmul.f32 %v472, %v341
    %v474 = vmul.f32 %v472, %v342
    %477 = vrot.lane.b32.xlu0 %v473, 123
    %v478 = vpop.permute.xlu0 %477
    %479 = vrot.lane.b32.xlu0 %v474, 123
    %v480 = vpop.permute.xlu0 %479
    %v481 = vrot.slane %v478, 4
    %v482 = vrot.slane %v480, 4
    %v483 = vsel %vm428, %v481, %v478
    %v484 = vsel %vm428, %v482, %v480
    %v487 = vadd.f32 %v414, %v483
    %v488 = vadd.f32 %v415, %v484
    %s489 = sld [smem:[#allocation7 + $0x6]]
    %v490 = vstv %s489
    %v491 = vmul.f32 %v490, %v341
    %v492 = vmul.f32 %v490, %v342
    %495 = vrot.lane.b32.xlu0 %v491, 122
    %v496 = vpop.permute.xlu0 %495
    %497 = vrot.lane.b32.xlu0 %v492, 122
    %v498 = vpop.permute.xlu0 %497
    %v499 = vrot.slane %v496, 4
    %v500 = vrot.slane %v498, 4
    %vm501 = vcmask 998400
    %v502 = vsel %vm501, %v499, %v496
    %v503 = vsel %vm501, %v500, %v498
    %v506 = vadd.f32 %v433, %v502
    %v507 = vadd.f32 %v434, %v503
    %s508 = sld [smem:[#allocation7 + $0x2a]]
    %v509 = vstv %s508
    %v510 = vmul.f32 %v509, %v341
    %v511 = vmul.f32 %v509, %v342
    %514 = vrot.lane.b32.xlu0 %v510, 122
    %v515 = vpop.permute.xlu0 %514
    %516 = vrot.lane.b32.xlu0 %v511, 122
    %v517 = vpop.permute.xlu0 %516
    %v518 = vrot.slane %v515, 4
    %v519 = vrot.slane %v517, 4
    %v520 = vsel %vm501, %v518, %v515
    %v521 = vsel %vm501, %v519, %v517
    %v524 = vadd.f32 %v451, %v520
    %v525 = vadd.f32 %v452, %v521
    %s526 = sld [smem:[#allocation7 + $0x4e]]
    %v527 = vstv %s526
    %v528 = vmul.f32 %v527, %v341
    %v529 = vmul.f32 %v527, %v342
    %532 = vrot.lane.b32.xlu0 %v528, 122
    %v533 = vpop.permute.xlu0 %532
    %534 = vrot.lane.b32.xlu0 %v529, 122
    %v535 = vpop.permute.xlu0 %534
    %v536 = vrot.slane %v533, 4
    %v537 = vrot.slane %v535, 4
    %v538 = vsel %vm501, %v536, %v533
    %v539 = vsel %vm501, %v537, %v535
    %v542 = vadd.f32 %v469, %v538
    %v543 = vadd.f32 %v470, %v539
    %s544 = sld [smem:[#allocation7 + $0x72]]
    %v545 = vstv %s544
    %v546 = vmul.f32 %v545, %v341
    %v547 = vmul.f32 %v545, %v342
    %550 = vrot.lane.b32.xlu0 %v546, 122
    %v551 = vpop.permute.xlu0 %550
    %552 = vrot.lane.b32.xlu0 %v547, 122
    %v553 = vpop.permute.xlu0 %552
    %v554 = vrot.slane %v551, 4
    %v555 = vrot.slane %v553, 4
    %v556 = vsel %vm501, %v554, %v551
    %v557 = vsel %vm501, %v555, %v553
    %v560 = vadd.f32 %v487, %v556
    %v561 = vadd.f32 %v488, %v557
    %s562 = sld [smem:[#allocation7 + $0x7]]
    %v563 = vstv %s562
    %v564 = vmul.f32 %v563, %v341
    %v565 = vmul.f32 %v563, %v342
    %568 = vrot.lane.b32.xlu0 %v564, 121
    %v569 = vpop.permute.xlu0 %568
    %570 = vrot.lane.b32.xlu0 %v565, 121
    %v571 = vpop.permute.xlu0 %570
    %v572 = vrot.slane %v569, 4
    %v573 = vrot.slane %v571, 4
    %vm574 = vcmask 990208
    %v575 = vsel %vm574, %v572, %v569
    %v576 = vsel %vm574, %v573, %v571
    %v579 = vadd.f32 %v506, %v575
    %v580 = vadd.f32 %v507, %v576
    %s581 = sld [smem:[#allocation7 + $0x2b]]
    %v582 = vstv %s581
    %v583 = vmul.f32 %v582, %v341
    %v584 = vmul.f32 %v582, %v342
    %587 = vrot.lane.b32.xlu0 %v583, 121
    %v588 = vpop.permute.xlu0 %587
    %589 = vrot.lane.b32.xlu0 %v584, 121
    %v590 = vpop.permute.xlu0 %589
    %v591 = vrot.slane %v588, 4
    %v592 = vrot.slane %v590, 4
    %v593 = vsel %vm574, %v591, %v588
    %v594 = vsel %vm574, %v592, %v590
    %v597 = vadd.f32 %v524, %v593
    %v598 = vadd.f32 %v525, %v594
    %s599 = sld [smem:[#allocation7 + $0x4f]]
    %v600 = vstv %s599
    %v601 = vmul.f32 %v600, %v341
    %v602 = vmul.f32 %v600, %v342
    %605 = vrot.lane.b32.xlu0 %v601, 121
    %v606 = vpop.permute.xlu0 %605
    %607 = vrot.lane.b32.xlu0 %v602, 121
    %v608 = vpop.permute.xlu0 %607
    %v609 = vrot.slane %v606, 4
    %v610 = vrot.slane %v608, 4
    %v611 = vsel %vm574, %v609, %v606
    %v612 = vsel %vm574, %v610, %v608
    %v615 = vadd.f32 %v542, %v611
    %v616 = vadd.f32 %v543, %v612
    %s617 = sld [smem:[#allocation7 + $0x73]]
    %v618 = vstv %s617
    %v619 = vmul.f32 %v618, %v341
    %v620 = vmul.f32 %v618, %v342
    %623 = vrot.lane.b32.xlu0 %v619, 121
    %v624 = vpop.permute.xlu0 %623
    %625 = vrot.lane.b32.xlu0 %v620, 121
    %v626 = vpop.permute.xlu0 %625
    %v627 = vrot.slane %v624, 4
    %v628 = vrot.slane %v626, 4
    %v629 = vsel %vm574, %v627, %v624
    %v630 = vsel %vm574, %v628, %v626
    %v633 = vadd.f32 %v560, %v629
    %v634 = vadd.f32 %v561, %v630
    %s635 = sld [smem:[#allocation7 + $0x8]]
    %v636 = vstv %s635
    %v637 = vmul.f32 %v636, %v341
    %v638 = vmul.f32 %v636, %v342
    %641 = vrot.lane.b32.xlu0 %v637, 120
    %v642 = vpop.permute.xlu0 %641
    %643 = vrot.lane.b32.xlu0 %v638, 120
    %v644 = vpop.permute.xlu0 %643
    %v645 = vrot.slane %v642, 4
    %v646 = vrot.slane %v644, 4
    %vm647 = vcmask 982016
    %v648 = vsel %vm647, %v645, %v642
    %v649 = vsel %vm647, %v646, %v644
    %v652 = vadd.f32 %v579, %v648
    %v653 = vadd.f32 %v580, %v649
    %s654 = sld [smem:[#allocation7 + $0x2c]]
    %v655 = vstv %s654
    %v656 = vmul.f32 %v655, %v341
    %v657 = vmul.f32 %v655, %v342
    %660 = vrot.lane.b32.xlu0 %v656, 120
    %v661 = vpop.permute.xlu0 %660
    %662 = vrot.lane.b32.xlu0 %v657, 120
    %v663 = vpop.permute.xlu0 %662
    %v664 = vrot.slane %v661, 4
    %v665 = vrot.slane %v663, 4
    %v666 = vsel %vm647, %v664, %v661
    %v667 = vsel %vm647, %v665, %v663
    %v670 = vadd.f32 %v597, %v666
    %v671 = vadd.f32 %v598, %v667
    %s672 = sld [smem:[#allocation7 + $0x50]]
    %v673 = vstv %s672
    %v674 = vmul.f32 %v673, %v341
    %v675 = vmul.f32 %v673, %v342
    %678 = vrot.lane.b32.xlu0 %v674, 120
    %v679 = vpop.permute.xlu0 %678
    %680 = vrot.lane.b32.xlu0 %v675, 120
    %v681 = vpop.permute.xlu0 %680
    %v682 = vrot.slane %v679, 4
    %v683 = vrot.slane %v681, 4
    %v684 = vsel %vm647, %v682, %v679
    %v685 = vsel %vm647, %v683, %v681
    %v688 = vadd.f32 %v615, %v684
    %v689 = vadd.f32 %v616, %v685
    %s690 = sld [smem:[#allocation7 + $0x74]]
    %v691 = vstv %s690
    %v692 = vmul.f32 %v691, %v341
    %v693 = vmul.f32 %v691, %v342
    %696 = vrot.lane.b32.xlu0 %v692, 120
    %v697 = vpop.permute.xlu0 %696
    %698 = vrot.lane.b32.xlu0 %v693, 120
    %v699 = vpop.permute.xlu0 %698
    %v700 = vrot.slane %v697, 4
    %v701 = vrot.slane %v699, 4
    %v702 = vsel %vm647, %v700, %v697
    %v703 = vsel %vm647, %v701, %v699
    %v706 = vadd.f32 %v633, %v702
    %v707 = vadd.f32 %v634, %v703
    %v708 = vld [vmem:[#allocation2 + $0x1] sm:$0x11]
    %v709 = vld [vmem:[#allocation2 + $0x9] sm:$0x11]
    %s710 = sld [smem:[#allocation7 + $0x9]]
    %v711 = vstv %s710
    %v712 = vmul.f32 %v711, %v708
    %v713 = vmul.f32 %v711, %v709
    %v714 = vadd.f32 %v652, %v712
    %v715 = vadd.f32 %v653, %v713
    %s716 = sld [smem:[#allocation7 + $0x2d]]
    %v717 = vstv %s716
    %v718 = vmul.f32 %v717, %v708
    %v719 = vmul.f32 %v717, %v709
    %v720 = vadd.f32 %v670, %v718
    %v721 = vadd.f32 %v671, %v719
    %s722 = sld [smem:[#allocation7 + $0x51]]
    %v723 = vstv %s722
    %v724 = vmul.f32 %v723, %v708
    %v725 = vmul.f32 %v723, %v709
    %v726 = vadd.f32 %v688, %v724
    %v727 = vadd.f32 %v689, %v725
    %s728 = sld [smem:[#allocation7 + $0x75]]
    %v729 = vstv %s728
    %v730 = vmul.f32 %v729, %v708
    %v731 = vmul.f32 %v729, %v709
    %v732 = vadd.f32 %v706, %v730
    %v733 = vadd.f32 %v707, %v731
    %s734 = sld [smem:[#allocation7 + $0xa]]
    %v735 = vstv %s734
    %v736 = vmul.f32 %v735, %v708
    %v737 = vmul.f32 %v735, %v709
    %740 = vrot.lane.b32.xlu0 %v736, 127
    %v741 = vpop.permute.xlu0 %740
    %742 = vrot.lane.b32.xlu0 %v737, 127
    %v743 = vpop.permute.xlu0 %742
    %v744 = vrot.slane %v741, 4
    %v745 = vrot.slane %v743, 4
    %v746 = vsel %vm134, %v741, %v744
    %v747 = vsel %vm134, %v743, %v745
    %v750 = vadd.f32 %v714, %v746
    %v751 = vadd.f32 %v715, %v747
    %s752 = sld [smem:[#allocation7 + $0x2e]]
    %v753 = vstv %s752
    %v754 = vmul.f32 %v753, %v708
    %v755 = vmul.f32 %v753, %v709
    %758 = vrot.lane.b32.xlu0 %v754, 127
    %v759 = vpop.permute.xlu0 %758
    %760 = vrot.lane.b32.xlu0 %v755, 127
    %v761 = vpop.permute.xlu0 %760
    %v762 = vrot.slane %v759, 4
    %v763 = vrot.slane %v761, 4
    %v764 = vsel %vm134, %v759, %v762
    %v765 = vsel %vm134, %v761, %v763
    %v768 = vadd.f32 %v720, %v764
    %v769 = vadd.f32 %v721, %v765
    %s770 = sld [smem:[#allocation7 + $0x52]]
    %v771 = vstv %s770
    %v772 = vmul.f32 %v771, %v708
    %v773 = vmul.f32 %v771, %v709
    %776 = vrot.lane.b32.xlu0 %v772, 127
    %v777 = vpop.permute.xlu0 %776
    %778 = vrot.lane.b32.xlu0 %v773, 127
    %v779 = vpop.permute.xlu0 %778
    %v780 = vrot.slane %v777, 4
    %v781 = vrot.slane %v779, 4
    %v782 = vsel %vm134, %v777, %v780
    %v783 = vsel %vm134, %v779, %v781
    %v786 = vadd.f32 %v726, %v782
    %v787 = vadd.f32 %v727, %v783
    %s788 = sld [smem:[#allocation7 + $0x76]]
    %v789 = vstv %s788
    %v790 = vmul.f32 %v789, %v708
    %v791 = vmul.f32 %v789, %v709
    %794 = vrot.lane.b32.xlu0 %v790, 127
    %v795 = vpop.permute.xlu0 %794
    %796 = vrot.lane.b32.xlu0 %v791, 127
    %v797 = vpop.permute.xlu0 %796
    %v798 = vrot.slane %v795, 4
    %v799 = vrot.slane %v797, 4
    %v800 = vsel %vm134, %v795, %v798
    %v801 = vsel %vm134, %v797, %v799
    %v804 = vadd.f32 %v732, %v800
    %v805 = vadd.f32 %v733, %v801
    %s806 = sld [smem:[#allocation7 + $0xb]]
    %v807 = vstv %s806
    %v808 = vmul.f32 %v807, %v708
    %v809 = vmul.f32 %v807, %v709
    %812 = vrot.lane.b32.xlu0 %v808, 126
    %v813 = vpop.permute.xlu0 %812
    %814 = vrot.lane.b32.xlu0 %v809, 126
    %v815 = vpop.permute.xlu0 %814
    %v816 = vrot.slane %v813, 4
    %v817 = vrot.slane %v815, 4
    %v818 = vsel %vm207, %v813, %v816
    %v819 = vsel %vm207, %v815, %v817
    %v822 = vadd.f32 %v750, %v818
    %v823 = vadd.f32 %v751, %v819
    %s824 = sld [smem:[#allocation7 + $0x2f]]
    %v825 = vstv %s824
    %v826 = vmul.f32 %v825, %v708
    %v827 = vmul.f32 %v825, %v709
    %830 = vrot.lane.b32.xlu0 %v826, 126
    %v831 = vpop.permute.xlu0 %830
    %832 = vrot.lane.b32.xlu0 %v827, 126
    %v833 = vpop.permute.xlu0 %832
    %v834 = vrot.slane %v831, 4
    %v835 = vrot.slane %v833, 4
    %v836 = vsel %vm207, %v831, %v834
    %v837 = vsel %vm207, %v833, %v835
    %v840 = vadd.f32 %v768, %v836
    %v841 = vadd.f32 %v769, %v837
    %s842 = sld [smem:[#allocation7 + $0x53]]
    %v843 = vstv %s842
    %v844 = vmul.f32 %v843, %v708
    %v845 = vmul.f32 %v843, %v709
    %848 = vrot.lane.b32.xlu0 %v844, 126
    %v849 = vpop.permute.xlu0 %848
    %850 = vrot.lane.b32.xlu0 %v845, 126
    %v851 = vpop.permute.xlu0 %850
    %v852 = vrot.slane %v849, 4
    %v853 = vrot.slane %v851, 4
    %v854 = vsel %vm207, %v849, %v852
    %v855 = vsel %vm207, %v851, %v853
    %v858 = vadd.f32 %v786, %v854
    %v859 = vadd.f32 %v787, %v855
    %s860 = sld [smem:[#allocation7 + $0x77]]
    %v861 = vstv %s860
    %v862 = vmul.f32 %v861, %v708
    %v863 = vmul.f32 %v861, %v709
    %866 = vrot.lane.b32.xlu0 %v862, 126
    %v867 = vpop.permute.xlu0 %866
    %868 = vrot.lane.b32.xlu0 %v863, 126
    %v869 = vpop.permute.xlu0 %868
    %v870 = vrot.slane %v867, 4
    %v871 = vrot.slane %v869, 4
    %v872 = vsel %vm207, %v867, %v870
    %v873 = vsel %vm207, %v869, %v871
    %v876 = vadd.f32 %v804, %v872
    %v877 = vadd.f32 %v805, %v873
    %s878 = sld [smem:[#allocation7 + $0xc]]
    %v879 = vstv %s878
    %v880 = vmul.f32 %v879, %v708
    %v881 = vmul.f32 %v879, %v709
    %884 = vrot.lane.b32.xlu0 %v880, 125
    %v885 = vpop.permute.xlu0 %884
    %886 = vrot.lane.b32.xlu0 %v881, 125
    %v887 = vpop.permute.xlu0 %886
    %v888 = vrot.slane %v885, 4
    %v889 = vrot.slane %v887, 4
    %v890 = vsel %vm280, %v885, %v888
    %v891 = vsel %vm280, %v887, %v889
    %v894 = vadd.f32 %v822, %v890
    %v895 = vadd.f32 %v823, %v891
    %s896 = sld [smem:[#allocation7 + $0x30]]
    %v897 = vstv %s896
    %v898 = vmul.f32 %v897, %v708
    %v899 = vmul.f32 %v897, %v709
    %902 = vrot.lane.b32.xlu0 %v898, 125
    %v903 = vpop.permute.xlu0 %902
    %904 = vrot.lane.b32.xlu0 %v899, 125
    %v905 = vpop.permute.xlu0 %904
    %v906 = vrot.slane %v903, 4
    %v907 = vrot.slane %v905, 4
    %v908 = vsel %vm280, %v903, %v906
    %v909 = vsel %vm280, %v905, %v907
    %v912 = vadd.f32 %v840, %v908
    %v913 = vadd.f32 %v841, %v909
    %s914 = sld [smem:[#allocation7 + $0x54]]
    %v915 = vstv %s914
    %v916 = vmul.f32 %v915, %v708
    %v917 = vmul.f32 %v915, %v709
    %920 = vrot.lane.b32.xlu0 %v916, 125
    %v921 = vpop.permute.xlu0 %920
    %922 = vrot.lane.b32.xlu0 %v917, 125
    %v923 = vpop.permute.xlu0 %922
    %v924 = vrot.slane %v921, 4
    %v925 = vrot.slane %v923, 4
    %v926 = vsel %vm280, %v921, %v924
    %v927 = vsel %vm280, %v923, %v925
    %v930 = vadd.f32 %v858, %v926
    %v931 = vadd.f32 %v859, %v927
    %s932 = sld [smem:[#allocation7 + $0x78]]
    %v933 = vstv %s932
    %v934 = vmul.f32 %v933, %v708
    %v935 = vmul.f32 %v933, %v709
    %938 = vrot.lane.b32.xlu0 %v934, 125
    %v939 = vpop.permute.xlu0 %938
    %940 = vrot.lane.b32.xlu0 %v935, 125
    %v941 = vpop.permute.xlu0 %940
    %v942 = vrot.slane %v939, 4
    %v943 = vrot.slane %v941, 4
    %v944 = vsel %vm280, %v939, %v942
    %v945 = vsel %vm280, %v941, %v943
    %v948 = vadd.f32 %v876, %v944
    %v949 = vadd.f32 %v877, %v945
    %v950 = vld [vmem:[#allocation2 + $0x5] sm:$0x1]
    %v951 = vld [vmem:[#allocation2 + $0xd] sm:$0x1]
    %s952 = sld [smem:[#allocation7 + $0xd]]
    %v953 = vstv %s952
    %v954 = vmul.f32 %v953, %v950
    %v955 = vmul.f32 %v953, %v951
    %958 = vrot.lane.b32.xlu0 %v954, 124
    %v959 = vpop.permute.xlu0 %958
    %960 = vrot.lane.b32.xlu0 %v955, 124
    %v961 = vpop.permute.xlu0 %960
    %v962 = vrot.slane %v959, 4
    %v963 = vrot.slane %v961, 4
    %v964 = vsel %vm355, %v962, %v959
    %v965 = vsel %vm355, %v963, %v961
    %v968 = vadd.f32 %v894, %v964
    %v969 = vadd.f32 %v895, %v965
    %s970 = sld [smem:[#allocation7 + $0x31]]
    %v971 = vstv %s970
    %v972 = vmul.f32 %v971, %v950
    %v973 = vmul.f32 %v971, %v951
    %976 = vrot.lane.b32.xlu0 %v972, 124
    %v977 = vpop.permute.xlu0 %976
    %978 = vrot.lane.b32.xlu0 %v973, 124
    %v979 = vpop.permute.xlu0 %978
    %v980 = vrot.slane %v977, 4
    %v981 = vrot.slane %v979, 4
    %v982 = vsel %vm355, %v980, %v977
    %v983 = vsel %vm355, %v981, %v979
    %v986 = vadd.f32 %v912, %v982
    %v987 = vadd.f32 %v913, %v983
    %s988 = sld [smem:[#allocation7 + $0x55]]
    %v989 = vstv %s988
    %v990 = vmul.f32 %v989, %v950
    %v991 = vmul.f32 %v989, %v951
    %994 = vrot.lane.b32.xlu0 %v990, 124
    %v995 = vpop.permute.xlu0 %994
    %996 = vrot.lane.b32.xlu0 %v991, 124
    %v997 = vpop.permute.xlu0 %996
    %v998 = vrot.slane %v995, 4
    %v999 = vrot.slane %v997, 4
    %v1000 = vsel %vm355, %v998, %v995
    %v1001 = vsel %vm355, %v999, %v997
    %v1004 = vadd.f32 %v930, %v1000
    %v1005 = vadd.f32 %v931, %v1001
    %s1006 = sld [smem:[#allocation7 + $0x79]]
    %v1007 = vstv %s1006
    %v1008 = vmul.f32 %v1007, %v950
    %v1009 = vmul.f32 %v1007, %v951
    %1012 = vrot.lane.b32.xlu0 %v1008, 124
    %v1013 = vpop.permute.xlu0 %1012
    %1014 = vrot.lane.b32.xlu0 %v1009, 124
    %v1015 = vpop.permute.xlu0 %1014
    %v1016 = vrot.slane %v1013, 4
    %v1017 = vrot.slane %v1015, 4
    %v1018 = vsel %vm355, %v1016, %v1013
    %v1019 = vsel %vm355, %v1017, %v1015
    %v1022 = vadd.f32 %v948, %v1018
    %v1023 = vadd.f32 %v949, %v1019
    %s1024 = sld [smem:[#allocation7 + $0xe]]
    %v1025 = vstv %s1024
    %v1026 = vmul.f32 %v1025, %v950
    %v1027 = vmul.f32 %v1025, %v951
    %1030 = vrot.lane.b32.xlu0 %v1026, 123
    %v1031 = vpop.permute.xlu0 %1030
    %1032 = vrot.lane.b32.xlu0 %v1027, 123
    %v1033 = vpop.permute.xlu0 %1032
    %v1034 = vrot.slane %v1031, 4
    %v1035 = vrot.slane %v1033, 4
    %v1036 = vsel %vm428, %v1034, %v1031
    %v1037 = vsel %vm428, %v1035, %v1033
    %v1040 = vadd.f32 %v968, %v1036
    %v1041 = vadd.f32 %v969, %v1037
    %s1042 = sld [smem:[#allocation7 + $0x32]]
    %v1043 = vstv %s1042
    %v1044 = vmul.f32 %v1043, %v950
    %v1045 = vmul.f32 %v1043, %v951
    %1048 = vrot.lane.b32.xlu0 %v1044, 123
    %v1049 = vpop.permute.xlu0 %1048
    %1050 = vrot.lane.b32.xlu0 %v1045, 123
    %v1051 = vpop.permute.xlu0 %1050
    %v1052 = vrot.slane %v1049, 4
    %v1053 = vrot.slane %v1051, 4
    %v1054 = vsel %vm428, %v1052, %v1049
    %v1055 = vsel %vm428, %v1053, %v1051
    %v1058 = vadd.f32 %v986, %v1054
    %v1059 = vadd.f32 %v987, %v1055
    %s1060 = sld [smem:[#allocation7 + $0x56]]
    %v1061 = vstv %s1060
    %v1062 = vmul.f32 %v1061, %v950
    %v1063 = vmul.f32 %v1061, %v951
    %1066 = vrot.lane.b32.xlu0 %v1062, 123
    %v1067 = vpop.permute.xlu0 %1066
    %1068 = vrot.lane.b32.xlu0 %v1063, 123
    %v1069 = vpop.permute.xlu0 %1068
    %v1070 = vrot.slane %v1067, 4
    %v1071 = vrot.slane %v1069, 4
    %v1072 = vsel %vm428, %v1070, %v1067
    %v1073 = vsel %vm428, %v1071, %v1069
    %v1076 = vadd.f32 %v1004, %v1072
    %v1077 = vadd.f32 %v1005, %v1073
    %s1078 = sld [smem:[#allocation7 + $0x7a]]
    %v1079 = vstv %s1078
    %v1080 = vmul.f32 %v1079, %v950
    %v1081 = vmul.f32 %v1079, %v951
    %1084 = vrot.lane.b32.xlu0 %v1080, 123
    %v1085 = vpop.permute.xlu0 %1084
    %1086 = vrot.lane.b32.xlu0 %v1081, 123
    %v1087 = vpop.permute.xlu0 %1086
    %v1088 = vrot.slane %v1085, 4
    %v1089 = vrot.slane %v1087, 4
    %v1090 = vsel %vm428, %v1088, %v1085
    %v1091 = vsel %vm428, %v1089, %v1087
    %v1094 = vadd.f32 %v1022, %v1090
    %v1095 = vadd.f32 %v1023, %v1091
    %s1096 = sld [smem:[#allocation7 + $0xf]]
    %v1097 = vstv %s1096
    %v1098 = vmul.f32 %v1097, %v950
    %v1099 = vmul.f32 %v1097, %v951
    %1102 = vrot.lane.b32.xlu0 %v1098, 122
    %v1103 = vpop.permute.xlu0 %1102
    %1104 = vrot.lane.b32.xlu0 %v1099, 122
    %v1105 = vpop.permute.xlu0 %1104
    %v1106 = vrot.slane %v1103, 4
    %v1107 = vrot.slane %v1105, 4
    %v1108 = vsel %vm501, %v1106, %v1103
    %v1109 = vsel %vm501, %v1107, %v1105
    %v1112 = vadd.f32 %v1040, %v1108
    %v1113 = vadd.f32 %v1041, %v1109
    %s1114 = sld [smem:[#allocation7 + $0x33]]
    %v1115 = vstv %s1114
    %v1116 = vmul.f32 %v1115, %v950
    %v1117 = vmul.f32 %v1115, %v951
    %1120 = vrot.lane.b32.xlu0 %v1116, 122
    %v1121 = vpop.permute.xlu0 %1120
    %1122 = vrot.lane.b32.xlu0 %v1117, 122
    %v1123 = vpop.permute.xlu0 %1122
    %v1124 = vrot.slane %v1121, 4
    %v1125 = vrot.slane %v1123, 4
    %v1126 = vsel %vm501, %v1124, %v1121
    %v1127 = vsel %vm501, %v1125, %v1123
    %v1130 = vadd.f32 %v1058, %v1126
    %v1131 = vadd.f32 %v1059, %v1127
    %s1132 = sld [smem:[#allocation7 + $0x57]]
    %v1133 = vstv %s1132
    %v1134 = vmul.f32 %v1133, %v950
    %v1135 = vmul.f32 %v1133, %v951
    %1138 = vrot.lane.b32.xlu0 %v1134, 122
    %v1139 = vpop.permute.xlu0 %1138
    %1140 = vrot.lane.b32.xlu0 %v1135, 122
    %v1141 = vpop.permute.xlu0 %1140
    %v1142 = vrot.slane %v1139, 4
    %v1143 = vrot.slane %v1141, 4
    %v1144 = vsel %vm501, %v1142, %v1139
    %v1145 = vsel %vm501, %v1143, %v1141
    %v1148 = vadd.f32 %v1076, %v1144
    %v1149 = vadd.f32 %v1077, %v1145
    %s1150 = sld [smem:[#allocation7 + $0x7b]]
    %v1151 = vstv %s1150
    %v1152 = vmul.f32 %v1151, %v950
    %v1153 = vmul.f32 %v1151, %v951
    %1156 = vrot.lane.b32.xlu0 %v1152, 122
    %v1157 = vpop.permute.xlu0 %1156
    %1158 = vrot.lane.b32.xlu0 %v1153, 122
    %v1159 = vpop.permute.xlu0 %1158
    %v1160 = vrot.slane %v1157, 4
    %v1161 = vrot.slane %v1159, 4
    %v1162 = vsel %vm501, %v1160, %v1157
    %v1163 = vsel %vm501, %v1161, %v1159
    %v1166 = vadd.f32 %v1094, %v1162
    %v1167 = vadd.f32 %v1095, %v1163
    %s1168 = sld [smem:[#allocation7 + $0x10]]
    %v1169 = vstv %s1168
    %v1170 = vmul.f32 %v1169, %v950
    %v1171 = vmul.f32 %v1169, %v951
    %1174 = vrot.lane.b32.xlu0 %v1170, 121
    %v1175 = vpop.permute.xlu0 %1174
    %1176 = vrot.lane.b32.xlu0 %v1171, 121
    %v1177 = vpop.permute.xlu0 %1176
    %v1178 = vrot.slane %v1175, 4
    %v1179 = vrot.slane %v1177, 4
    %v1180 = vsel %vm574, %v1178, %v1175
    %v1181 = vsel %vm574, %v1179, %v1177
    %v1184 = vadd.f32 %v1112, %v1180
    %v1185 = vadd.f32 %v1113, %v1181
    %s1186 = sld [smem:[#allocation7 + $0x34]]
    %v1187 = vstv %s1186
    %v1188 = vmul.f32 %v1187, %v950
    %v1189 = vmul.f32 %v1187, %v951
    %1192 = vrot.lane.b32.xlu0 %v1188, 121
    %v1193 = vpop.permute.xlu0 %1192
    %1194 = vrot.lane.b32.xlu0 %v1189, 121
    %v1195 = vpop.permute.xlu0 %1194
    %v1196 = vrot.slane %v1193, 4
    %v1197 = vrot.slane %v1195, 4
    %v1198 = vsel %vm574, %v1196, %v1193
    %v1199 = vsel %vm574, %v1197, %v1195
    %v1202 = vadd.f32 %v1130, %v1198
    %v1203 = vadd.f32 %v1131, %v1199
    %s1204 = sld [smem:[#allocation7 + $0x58]]
    %v1205 = vstv %s1204
    %v1206 = vmul.f32 %v1205, %v950
    %v1207 = vmul.f32 %v1205, %v951
    %1210 = vrot.lane.b32.xlu0 %v1206, 121
    %v1211 = vpop.permute.xlu0 %1210
    %1212 = vrot.lane.b32.xlu0 %v1207, 121
    %v1213 = vpop.permute.xlu0 %1212
    %v1214 = vrot.slane %v1211, 4
    %v1215 = vrot.slane %v1213, 4
    %v1216 = vsel %vm574, %v1214, %v1211
    %v1217 = vsel %vm574, %v1215, %v1213
    %v1220 = vadd.f32 %v1148, %v1216
    %v1221 = vadd.f32 %v1149, %v1217
    %s1222 = sld [smem:[#allocation7 + $0x7c]]
    %v1223 = vstv %s1222
    %v1224 = vmul.f32 %v1223, %v950
    %v1225 = vmul.f32 %v1223, %v951
    %1228 = vrot.lane.b32.xlu0 %v1224, 121
    %v1229 = vpop.permute.xlu0 %1228
    %1230 = vrot.lane.b32.xlu0 %v1225, 121
    %v1231 = vpop.permute.xlu0 %1230
    %v1232 = vrot.slane %v1229, 4
    %v1233 = vrot.slane %v1231, 4
    %v1234 = vsel %vm574, %v1232, %v1229
    %v1235 = vsel %vm574, %v1233, %v1231
    %v1238 = vadd.f32 %v1166, %v1234
    %v1239 = vadd.f32 %v1167, %v1235
    %s1240 = sld [smem:[#allocation7 + $0x11]]
    %v1241 = vstv %s1240
    %v1242 = vmul.f32 %v1241, %v950
    %v1243 = vmul.f32 %v1241, %v951
    %1246 = vrot.lane.b32.xlu0 %v1242, 120
    %v1247 = vpop.permute.xlu0 %1246
    %1248 = vrot.lane.b32.xlu0 %v1243, 120
    %v1249 = vpop.permute.xlu0 %1248
    %v1250 = vrot.slane %v1247, 4
    %v1251 = vrot.slane %v1249, 4
    %v1252 = vsel %vm647, %v1250, %v1247
    %v1253 = vsel %vm647, %v1251, %v1249
    %v1256 = vadd.f32 %v1184, %v1252
    %v1257 = vadd.f32 %v1185, %v1253
    %s1258 = sld [smem:[#allocation7 + $0x35]]
    %v1259 = vstv %s1258
    %v1260 = vmul.f32 %v1259, %v950
    %v1261 = vmul.f32 %v1259, %v951
    %1264 = vrot.lane.b32.xlu0 %v1260, 120
    %v1265 = vpop.permute.xlu0 %1264
    %1266 = vrot.lane.b32.xlu0 %v1261, 120
    %v1267 = vpop.permute.xlu0 %1266
    %v1268 = vrot.slane %v1265, 4
    %v1269 = vrot.slane %v1267, 4
    %v1270 = vsel %vm647, %v1268, %v1265
    %v1271 = vsel %vm647, %v1269, %v1267
    %v1274 = vadd.f32 %v1202, %v1270
    %v1275 = vadd.f32 %v1203, %v1271
    %s1276 = sld [smem:[#allocation7 + $0x59]]
    %v1277 = vstv %s1276
    %v1278 = vmul.f32 %v1277, %v950
    %v1279 = vmul.f32 %v1277, %v951
    %1282 = vrot.lane.b32.xlu0 %v1278, 120
    %v1283 = vpop.permute.xlu0 %1282
    %1284 = vrot.lane.b32.xlu0 %v1279, 120
    %v1285 = vpop.permute.xlu0 %1284
    %v1286 = vrot.slane %v1283, 4
    %v1287 = vrot.slane %v1285, 4
    %v1288 = vsel %vm647, %v1286, %v1283
    %v1289 = vsel %vm647, %v1287, %v1285
    %v1292 = vadd.f32 %v1220, %v1288
    %v1293 = vadd.f32 %v1221, %v1289
    %s1294 = sld [smem:[#allocation7 + $0x7d]]
    %v1295 = vstv %s1294
    %v1296 = vmul.f32 %v1295, %v950
    %v1297 = vmul.f32 %v1295, %v951
    %1300 = vrot.lane.b32.xlu0 %v1296, 120
    %v1301 = vpop.permute.xlu0 %1300
    %1302 = vrot.lane.b32.xlu0 %v1297, 120
    %v1303 = vpop.permute.xlu0 %1302
    %v1304 = vrot.slane %v1301, 4
    %v1305 = vrot.slane %v1303, 4
    %v1306 = vsel %vm647, %v1304, %v1301
    %v1307 = vsel %vm647, %v1305, %v1303
    %v1310 = vadd.f32 %v1238, %v1306
    %v1311 = vadd.f32 %v1239, %v1307
    %v1312 = vld [vmem:[#allocation2 + $0x2] sm:$0x11]
    %v1313 = vld [vmem:[#allocation2 + $0xa] sm:$0x11]
    %s1314 = sld [smem:[#allocation7 + $0x12]]
    %v1315 = vstv %s1314
    %v1316 = vmul.f32 %v1315, %v1312
    %v1317 = vmul.f32 %v1315, %v1313
    %v1318 = vadd.f32 %v1256, %v1316
    %v1319 = vadd.f32 %v1257, %v1317
    %s1320 = sld [smem:[#allocation7 + $0x36]]
    %v1321 = vstv %s1320
    %v1322 = vmul.f32 %v1321, %v1312
    %v1323 = vmul.f32 %v1321, %v1313
    %v1324 = vadd.f32 %v1274, %v1322
    %v1325 = vadd.f32 %v1275, %v1323
    %s1326 = sld [smem:[#allocation7 + $0x5a]]
    %v1327 = vstv %s1326
    %v1328 = vmul.f32 %v1327, %v1312
    %v1329 = vmul.f32 %v1327, %v1313
    %v1330 = vadd.f32 %v1292, %v1328
    %v1331 = vadd.f32 %v1293, %v1329
    %s1332 = sld [smem:[#allocation7 + $0x7e]]
    %v1333 = vstv %s1332
    %v1334 = vmul.f32 %v1333, %v1312
    %v1335 = vmul.f32 %v1333, %v1313
    %v1336 = vadd.f32 %v1310, %v1334
    %v1337 = vadd.f32 %v1311, %v1335
    %s1338 = sld [smem:[#allocation7 + $0x13]]
    %v1339 = vstv %s1338
    %v1340 = vmul.f32 %v1339, %v1312
    %v1341 = vmul.f32 %v1339, %v1313
    %1344 = vrot.lane.b32.xlu0 %v1340, 127
    %v1345 = vpop.permute.xlu0 %1344
    %1346 = vrot.lane.b32.xlu0 %v1341, 127
    %v1347 = vpop.permute.xlu0 %1346
    %v1348 = vrot.slane %v1345, 4
    %v1349 = vrot.slane %v1347, 4
    %v1350 = vsel %vm134, %v1345, %v1348
    %v1351 = vsel %vm134, %v1347, %v1349
    %v1354 = vadd.f32 %v1318, %v1350
    %v1355 = vadd.f32 %v1319, %v1351
    %s1356 = sld [smem:[#allocation7 + $0x37]]
    %v1357 = vstv %s1356
    %v1358 = vmul.f32 %v1357, %v1312
    %v1359 = vmul.f32 %v1357, %v1313
    %1362 = vrot.lane.b32.xlu0 %v1358, 127
    %v1363 = vpop.permute.xlu0 %1362
    %1364 = vrot.lane.b32.xlu0 %v1359, 127
    %v1365 = vpop.permute.xlu0 %1364
    %v1366 = vrot.slane %v1363, 4
    %v1367 = vrot.slane %v1365, 4
    %v1368 = vsel %vm134, %v1363, %v1366
    %v1369 = vsel %vm134, %v1365, %v1367
    %v1372 = vadd.f32 %v1324, %v1368
    %v1373 = vadd.f32 %v1325, %v1369
    %s1374 = sld [smem:[#allocation7 + $0x5b]]
    %v1375 = vstv %s1374
    %v1376 = vmul.f32 %v1375, %v1312
    %v1377 = vmul.f32 %v1375, %v1313
    %1380 = vrot.lane.b32.xlu0 %v1376, 127
    %v1381 = vpop.permute.xlu0 %1380
    %1382 = vrot.lane.b32.xlu0 %v1377, 127
    %v1383 = vpop.permute.xlu0 %1382
    %v1384 = vrot.slane %v1381, 4
    %v1385 = vrot.slane %v1383, 4
    %v1386 = vsel %vm134, %v1381, %v1384
    %v1387 = vsel %vm134, %v1383, %v1385
    %v1390 = vadd.f32 %v1330, %v1386
    %v1391 = vadd.f32 %v1331, %v1387
    %s1392 = sld [smem:[#allocation7 + $0x7f]]
    %v1393 = vstv %s1392
    %v1394 = vmul.f32 %v1393, %v1312
    %v1395 = vmul.f32 %v1393, %v1313
    %1398 = vrot.lane.b32.xlu0 %v1394, 127
    %v1399 = vpop.permute.xlu0 %1398
    %1400 = vrot.lane.b32.xlu0 %v1395, 127
    %v1401 = vpop.permute.xlu0 %1400
    %v1402 = vrot.slane %v1399, 4
    %v1403 = vrot.slane %v1401, 4
    %v1404 = vsel %vm134, %v1399, %v1402
    %v1405 = vsel %vm134, %v1401, %v1403
    %v1408 = vadd.f32 %v1336, %v1404
    %v1409 = vadd.f32 %v1337, %v1405
    %s1410 = sld [smem:[#allocation7 + $0x14]]
    %v1411 = vstv %s1410
    %v1412 = vmul.f32 %v1411, %v1312
    %v1413 = vmul.f32 %v1411, %v1313
    %1416 = vrot.lane.b32.xlu0 %v1412, 126
    %v1417 = vpop.permute.xlu0 %1416
    %1418 = vrot.lane.b32.xlu0 %v1413, 126
    %v1419 = vpop.permute.xlu0 %1418
    %v1420 = vrot.slane %v1417, 4
    %v1421 = vrot.slane %v1419, 4
    %v1422 = vsel %vm207, %v1417, %v1420
    %v1423 = vsel %vm207, %v1419, %v1421
    %v1426 = vadd.f32 %v1354, %v1422
    %v1427 = vadd.f32 %v1355, %v1423
    %s1428 = sld [smem:[#allocation7 + $0x38]]
    %v1429 = vstv %s1428
    %v1430 = vmul.f32 %v1429, %v1312
    %v1431 = vmul.f32 %v1429, %v1313
    %1434 = vrot.lane.b32.xlu0 %v1430, 126
    %v1435 = vpop.permute.xlu0 %1434
    %1436 = vrot.lane.b32.xlu0 %v1431, 126
    %v1437 = vpop.permute.xlu0 %1436
    %v1438 = vrot.slane %v1435, 4
    %v1439 = vrot.slane %v1437, 4
    %v1440 = vsel %vm207, %v1435, %v1438
    %v1441 = vsel %vm207, %v1437, %v1439
    %v1444 = vadd.f32 %v1372, %v1440
    %v1445 = vadd.f32 %v1373, %v1441
    %s1446 = sld [smem:[#allocation7 + $0x5c]]
    %v1447 = vstv %s1446
    %v1448 = vmul.f32 %v1447, %v1312
    %v1449 = vmul.f32 %v1447, %v1313
    %1452 = vrot.lane.b32.xlu0 %v1448, 126
    %v1453 = vpop.permute.xlu0 %1452
    %1454 = vrot.lane.b32.xlu0 %v1449, 126
    %v1455 = vpop.permute.xlu0 %1454
    %v1456 = vrot.slane %v1453, 4
    %v1457 = vrot.slane %v1455, 4
    %v1458 = vsel %vm207, %v1453, %v1456
    %v1459 = vsel %vm207, %v1455, %v1457
    %v1462 = vadd.f32 %v1390, %v1458
    %v1463 = vadd.f32 %v1391, %v1459
    %s1464 = sld [smem:[#allocation7 + $0x80]]
    %v1465 = vstv %s1464
    %v1466 = vmul.f32 %v1465, %v1312
    %v1467 = vmul.f32 %v1465, %v1313
    %1470 = vrot.lane.b32.xlu0 %v1466, 126
    %v1471 = vpop.permute.xlu0 %1470
    %1472 = vrot.lane.b32.xlu0 %v1467, 126
    %v1473 = vpop.permute.xlu0 %1472
    %v1474 = vrot.slane %v1471, 4
    %v1475 = vrot.slane %v1473, 4
    %v1476 = vsel %vm207, %v1471, %v1474
    %v1477 = vsel %vm207, %v1473, %v1475
    %v1480 = vadd.f32 %v1408, %v1476
    %v1481 = vadd.f32 %v1409, %v1477
    %s1482 = sld [smem:[#allocation7 + $0x15]]
    %v1483 = vstv %s1482
    %v1484 = vmul.f32 %v1483, %v1312
    %v1485 = vmul.f32 %v1483, %v1313
    %1488 = vrot.lane.b32.xlu0 %v1484, 125
    %v1489 = vpop.permute.xlu0 %1488
    %1490 = vrot.lane.b32.xlu0 %v1485, 125
    %v1491 = vpop.permute.xlu0 %1490
    %v1492 = vrot.slane %v1489, 4
    %v1493 = vrot.slane %v1491, 4
    %v1494 = vsel %vm280, %v1489, %v1492
    %v1495 = vsel %vm280, %v1491, %v1493
    %v1498 = vadd.f32 %v1426, %v1494
    %v1499 = vadd.f32 %v1427, %v1495
    %s1500 = sld [smem:[#allocation7 + $0x39]]
    %v1501 = vstv %s1500
    %v1502 = vmul.f32 %v1501, %v1312
    %v1503 = vmul.f32 %v1501, %v1313
    %1506 = vrot.lane.b32.xlu0 %v1502, 125
    %v1507 = vpop.permute.xlu0 %1506
    %1508 = vrot.lane.b32.xlu0 %v1503, 125
    %v1509 = vpop.permute.xlu0 %1508
    %v1510 = vrot.slane %v1507, 4
    %v1511 = vrot.slane %v1509, 4
    %v1512 = vsel %vm280, %v1507, %v1510
    %v1513 = vsel %vm280, %v1509, %v1511
    %v1516 = vadd.f32 %v1444, %v1512
    %v1517 = vadd.f32 %v1445, %v1513
    %s1518 = sld [smem:[#allocation7 + $0x5d]]
    %v1519 = vstv %s1518
    %v1520 = vmul.f32 %v1519, %v1312
    %v1521 = vmul.f32 %v1519, %v1313
    %1524 = vrot.lane.b32.xlu0 %v1520, 125
    %v1525 = vpop.permute.xlu0 %1524
    %1526 = vrot.lane.b32.xlu0 %v1521, 125
    %v1527 = vpop.permute.xlu0 %1526
    %v1528 = vrot.slane %v1525, 4
    %v1529 = vrot.slane %v1527, 4
    %v1530 = vsel %vm280, %v1525, %v1528
    %v1531 = vsel %vm280, %v1527, %v1529
    %v1534 = vadd.f32 %v1462, %v1530
    %v1535 = vadd.f32 %v1463, %v1531
    %s1536 = sld [smem:[#allocation7 + $0x81]]
    %v1537 = vstv %s1536
    %v1538 = vmul.f32 %v1537, %v1312
    %v1539 = vmul.f32 %v1537, %v1313
    %1542 = vrot.lane.b32.xlu0 %v1538, 125
    %v1543 = vpop.permute.xlu0 %1542
    %1544 = vrot.lane.b32.xlu0 %v1539, 125
    %v1545 = vpop.permute.xlu0 %1544
    %v1546 = vrot.slane %v1543, 4
    %v1547 = vrot.slane %v1545, 4
    %v1548 = vsel %vm280, %v1543, %v1546
    %v1549 = vsel %vm280, %v1545, %v1547
    %v1552 = vadd.f32 %v1480, %v1548
    %v1553 = vadd.f32 %v1481, %v1549
    %v1554 = vld [vmem:[#allocation2 + $0x6] sm:$0x1]
    %v1555 = vld [vmem:[#allocation2 + $0xe] sm:$0x1]
    %s1556 = sld [smem:[#allocation7 + $0x16]]
    %v1557 = vstv %s1556
    %v1558 = vmul.f32 %v1557, %v1554
    %v1559 = vmul.f32 %v1557, %v1555
    %1562 = vrot.lane.b32.xlu0 %v1558, 124
    %v1563 = vpop.permute.xlu0 %1562
    %1564 = vrot.lane.b32.xlu0 %v1559, 124
    %v1565 = vpop.permute.xlu0 %1564
    %v1566 = vrot.slane %v1563, 4
    %v1567 = vrot.slane %v1565, 4
    %v1568 = vsel %vm355, %v1566, %v1563
    %v1569 = vsel %vm355, %v1567, %v1565
    %v1572 = vadd.f32 %v1498, %v1568
    %v1573 = vadd.f32 %v1499, %v1569
    %s1574 = sld [smem:[#allocation7 + $0x3a]]
    %v1575 = vstv %s1574
    %v1576 = vmul.f32 %v1575, %v1554
    %v1577 = vmul.f32 %v1575, %v1555
    %1580 = vrot.lane.b32.xlu0 %v1576, 124
    %v1581 = vpop.permute.xlu0 %1580
    %1582 = vrot.lane.b32.xlu0 %v1577, 124
    %v1583 = vpop.permute.xlu0 %1582
    %v1584 = vrot.slane %v1581, 4
    %v1585 = vrot.slane %v1583, 4
    %v1586 = vsel %vm355, %v1584, %v1581
    %v1587 = vsel %vm355, %v1585, %v1583
    %v1590 = vadd.f32 %v1516, %v1586
    %v1591 = vadd.f32 %v1517, %v1587
    %s1592 = sld [smem:[#allocation7 + $0x5e]]
    %v1593 = vstv %s1592
    %v1594 = vmul.f32 %v1593, %v1554
    %v1595 = vmul.f32 %v1593, %v1555
    %1598 = vrot.lane.b32.xlu0 %v1594, 124
    %v1599 = vpop.permute.xlu0 %1598
    %1600 = vrot.lane.b32.xlu0 %v1595, 124
    %v1601 = vpop.permute.xlu0 %1600
    %v1602 = vrot.slane %v1599, 4
    %v1603 = vrot.slane %v1601, 4
    %v1604 = vsel %vm355, %v1602, %v1599
    %v1605 = vsel %vm355, %v1603, %v1601
    %v1608 = vadd.f32 %v1534, %v1604
    %v1609 = vadd.f32 %v1535, %v1605
    %s1610 = sld [smem:[#allocation7 + $0x82]]
    %v1611 = vstv %s1610
    %v1612 = vmul.f32 %v1611, %v1554
    %v1613 = vmul.f32 %v1611, %v1555
    %1616 = vrot.lane.b32.xlu0 %v1612, 124
    %v1617 = vpop.permute.xlu0 %1616
    %1618 = vrot.lane.b32.xlu0 %v1613, 124
    %v1619 = vpop.permute.xlu0 %1618
    %v1620 = vrot.slane %v1617, 4
    %v1621 = vrot.slane %v1619, 4
    %v1622 = vsel %vm355, %v1620, %v1617
    %v1623 = vsel %vm355, %v1621, %v1619
    %v1626 = vadd.f32 %v1552, %v1622
    %v1627 = vadd.f32 %v1553, %v1623
    %s1628 = sld [smem:[#allocation7 + $0x17]]
    %v1629 = vstv %s1628
    %v1630 = vmul.f32 %v1629, %v1554
    %v1631 = vmul.f32 %v1629, %v1555
    %1634 = vrot.lane.b32.xlu0 %v1630, 123
    %v1635 = vpop.permute.xlu0 %1634
    %1636 = vrot.lane.b32.xlu0 %v1631, 123
    %v1637 = vpop.permute.xlu0 %1636
    %v1638 = vrot.slane %v1635, 4
    %v1639 = vrot.slane %v1637, 4
    %v1640 = vsel %vm428, %v1638, %v1635
    %v1641 = vsel %vm428, %v1639, %v1637
    %v1644 = vadd.f32 %v1572, %v1640
    %v1645 = vadd.f32 %v1573, %v1641
    %s1646 = sld [smem:[#allocation7 + $0x3b]]
    %v1647 = vstv %s1646
    %v1648 = vmul.f32 %v1647, %v1554
    %v1649 = vmul.f32 %v1647, %v1555
    %1652 = vrot.lane.b32.xlu0 %v1648, 123
    %v1653 = vpop.permute.xlu0 %1652
    %1654 = vrot.lane.b32.xlu0 %v1649, 123
    %v1655 = vpop.permute.xlu0 %1654
    %v1656 = vrot.slane %v1653, 4
    %v1657 = vrot.slane %v1655, 4
    %v1658 = vsel %vm428, %v1656, %v1653
    %v1659 = vsel %vm428, %v1657, %v1655
    %v1662 = vadd.f32 %v1590, %v1658
    %v1663 = vadd.f32 %v1591, %v1659
    %s1664 = sld [smem:[#allocation7 + $0x5f]]
    %v1665 = vstv %s1664
    %v1666 = vmul.f32 %v1665, %v1554
    %v1667 = vmul.f32 %v1665, %v1555
    %1670 = vrot.lane.b32.xlu0 %v1666, 123
    %v1671 = vpop.permute.xlu0 %1670
    %1672 = vrot.lane.b32.xlu0 %v1667, 123
    %v1673 = vpop.permute.xlu0 %1672
    %v1674 = vrot.slane %v1671, 4
    %v1675 = vrot.slane %v1673, 4
    %v1676 = vsel %vm428, %v1674, %v1671
    %v1677 = vsel %vm428, %v1675, %v1673
    %v1680 = vadd.f32 %v1608, %v1676
    %v1681 = vadd.f32 %v1609, %v1677
    %s1682 = sld [smem:[#allocation7 + $0x83]]
    %v1683 = vstv %s1682
    %v1684 = vmul.f32 %v1683, %v1554
    %v1685 = vmul.f32 %v1683, %v1555
    %1688 = vrot.lane.b32.xlu0 %v1684, 123
    %v1689 = vpop.permute.xlu0 %1688
    %1690 = vrot.lane.b32.xlu0 %v1685, 123
    %v1691 = vpop.permute.xlu0 %1690
    %v1692 = vrot.slane %v1689, 4
    %v1693 = vrot.slane %v1691, 4
    %v1694 = vsel %vm428, %v1692, %v1689
    %v1695 = vsel %vm428, %v1693, %v1691
    %v1698 = vadd.f32 %v1626, %v1694
    %v1699 = vadd.f32 %v1627, %v1695
    %s1700 = sld [smem:[#allocation7 + $0x18]]
    %v1701 = vstv %s1700
    %v1702 = vmul.f32 %v1701, %v1554
    %v1703 = vmul.f32 %v1701, %v1555
    %1706 = vrot.lane.b32.xlu0 %v1702, 122
    %v1707 = vpop.permute.xlu0 %1706
    %1708 = vrot.lane.b32.xlu0 %v1703, 122
    %v1709 = vpop.permute.xlu0 %1708
    %v1710 = vrot.slane %v1707, 4
    %v1711 = vrot.slane %v1709, 4
    %v1712 = vsel %vm501, %v1710, %v1707
    %v1713 = vsel %vm501, %v1711, %v1709
    %v1716 = vadd.f32 %v1644, %v1712
    %v1717 = vadd.f32 %v1645, %v1713
    %s1718 = sld [smem:[#allocation7 + $0x3c]]
    %v1719 = vstv %s1718
    %v1720 = vmul.f32 %v1719, %v1554
    %v1721 = vmul.f32 %v1719, %v1555
    %1724 = vrot.lane.b32.xlu0 %v1720, 122
    %v1725 = vpop.permute.xlu0 %1724
    %1726 = vrot.lane.b32.xlu0 %v1721, 122
    %v1727 = vpop.permute.xlu0 %1726
    %v1728 = vrot.slane %v1725, 4
    %v1729 = vrot.slane %v1727, 4
    %v1730 = vsel %vm501, %v1728, %v1725
    %v1731 = vsel %vm501, %v1729, %v1727
    %v1734 = vadd.f32 %v1662, %v1730
    %v1735 = vadd.f32 %v1663, %v1731
    %s1736 = sld [smem:[#allocation7 + $0x60]]
    %v1737 = vstv %s1736
    %v1738 = vmul.f32 %v1737, %v1554
    %v1739 = vmul.f32 %v1737, %v1555
    %1742 = vrot.lane.b32.xlu0 %v1738, 122
    %v1743 = vpop.permute.xlu0 %1742
    %1744 = vrot.lane.b32.xlu0 %v1739, 122
    %v1745 = vpop.permute.xlu0 %1744
    %v1746 = vrot.slane %v1743, 4
    %v1747 = vrot.slane %v1745, 4
    %v1748 = vsel %vm501, %v1746, %v1743
    %v1749 = vsel %vm501, %v1747, %v1745
    %v1752 = vadd.f32 %v1680, %v1748
    %v1753 = vadd.f32 %v1681, %v1749
    %s1754 = sld [smem:[#allocation7 + $0x84]]
    %v1755 = vstv %s1754
    %v1756 = vmul.f32 %v1755, %v1554
    %v1757 = vmul.f32 %v1755, %v1555
    %1760 = vrot.lane.b32.xlu0 %v1756, 122
    %v1761 = vpop.permute.xlu0 %1760
    %1762 = vrot.lane.b32.xlu0 %v1757, 122
    %v1763 = vpop.permute.xlu0 %1762
    %v1764 = vrot.slane %v1761, 4
    %v1765 = vrot.slane %v1763, 4
    %v1766 = vsel %vm501, %v1764, %v1761
    %v1767 = vsel %vm501, %v1765, %v1763
    %v1770 = vadd.f32 %v1698, %v1766
    %v1771 = vadd.f32 %v1699, %v1767
    %s1772 = sld [smem:[#allocation7 + $0x19]]
    %v1773 = vstv %s1772
    %v1774 = vmul.f32 %v1773, %v1554
    %v1775 = vmul.f32 %v1773, %v1555
    %1778 = vrot.lane.b32.xlu0 %v1774, 121
    %v1779 = vpop.permute.xlu0 %1778
    %1780 = vrot.lane.b32.xlu0 %v1775, 121
    %v1781 = vpop.permute.xlu0 %1780
    %v1782 = vrot.slane %v1779, 4
    %v1783 = vrot.slane %v1781, 4
    %v1784 = vsel %vm574, %v1782, %v1779
    %v1785 = vsel %vm574, %v1783, %v1781
    %v1788 = vadd.f32 %v1716, %v1784
    %v1789 = vadd.f32 %v1717, %v1785
    %s1790 = sld [smem:[#allocation7 + $0x3d]]
    %v1791 = vstv %s1790
    %v1792 = vmul.f32 %v1791, %v1554
    %v1793 = vmul.f32 %v1791, %v1555
    %1796 = vrot.lane.b32.xlu0 %v1792, 121
    %v1797 = vpop.permute.xlu0 %1796
    %1798 = vrot.lane.b32.xlu0 %v1793, 121
    %v1799 = vpop.permute.xlu0 %1798
    %v1800 = vrot.slane %v1797, 4
    %v1801 = vrot.slane %v1799, 4
    %v1802 = vsel %vm574, %v1800, %v1797
    %v1803 = vsel %vm574, %v1801, %v1799
    %v1806 = vadd.f32 %v1734, %v1802
    %v1807 = vadd.f32 %v1735, %v1803
    %s1808 = sld [smem:[#allocation7 + $0x61]]
    %v1809 = vstv %s1808
    %v1810 = vmul.f32 %v1809, %v1554
    %v1811 = vmul.f32 %v1809, %v1555
    %1814 = vrot.lane.b32.xlu0 %v1810, 121
    %v1815 = vpop.permute.xlu0 %1814
    %1816 = vrot.lane.b32.xlu0 %v1811, 121
    %v1817 = vpop.permute.xlu0 %1816
    %v1818 = vrot.slane %v1815, 4
    %v1819 = vrot.slane %v1817, 4
    %v1820 = vsel %vm574, %v1818, %v1815
    %v1821 = vsel %vm574, %v1819, %v1817
    %v1824 = vadd.f32 %v1752, %v1820
    %v1825 = vadd.f32 %v1753, %v1821
    %s1826 = sld [smem:[#allocation7 + $0x85]]
    %v1827 = vstv %s1826
    %v1828 = vmul.f32 %v1827, %v1554
    %v1829 = vmul.f32 %v1827, %v1555
    %1832 = vrot.lane.b32.xlu0 %v1828, 121
    %v1833 = vpop.permute.xlu0 %1832
    %1834 = vrot.lane.b32.xlu0 %v1829, 121
    %v1835 = vpop.permute.xlu0 %1834
    %v1836 = vrot.slane %v1833, 4
    %v1837 = vrot.slane %v1835, 4
    %v1838 = vsel %vm574, %v1836, %v1833
    %v1839 = vsel %vm574, %v1837, %v1835
    %v1842 = vadd.f32 %v1770, %v1838
    %v1843 = vadd.f32 %v1771, %v1839
    %s1844 = sld [smem:[#allocation7 + $0x1a]]
    %v1845 = vstv %s1844
    %v1846 = vmul.f32 %v1845, %v1554
    %v1847 = vmul.f32 %v1845, %v1555
    %1850 = vrot.lane.b32.xlu0 %v1846, 120
    %v1851 = vpop.permute.xlu0 %1850
    %1852 = vrot.lane.b32.xlu0 %v1847, 120
    %v1853 = vpop.permute.xlu0 %1852
    %v1854 = vrot.slane %v1851, 4
    %v1855 = vrot.slane %v1853, 4
    %v1856 = vsel %vm647, %v1854, %v1851
    %v1857 = vsel %vm647, %v1855, %v1853
    %v1860 = vadd.f32 %v1788, %v1856
    %v1861 = vadd.f32 %v1789, %v1857
    %s1862 = sld [smem:[#allocation7 + $0x3e]]
    %v1863 = vstv %s1862
    %v1864 = vmul.f32 %v1863, %v1554
    %v1865 = vmul.f32 %v1863, %v1555
    %1868 = vrot.lane.b32.xlu0 %v1864, 120
    %v1869 = vpop.permute.xlu0 %1868
    %1870 = vrot.lane.b32.xlu0 %v1865, 120
    %v1871 = vpop.permute.xlu0 %1870
    %v1872 = vrot.slane %v1869, 4
    %v1873 = vrot.slane %v1871, 4
    %v1874 = vsel %vm647, %v1872, %v1869
    %v1875 = vsel %vm647, %v1873, %v1871
    %v1878 = vadd.f32 %v1806, %v1874
    %v1879 = vadd.f32 %v1807, %v1875
    %s1880 = sld [smem:[#allocation7 + $0x62]]
    %v1881 = vstv %s1880
    %v1882 = vmul.f32 %v1881, %v1554
    %v1883 = vmul.f32 %v1881, %v1555
    %1886 = vrot.lane.b32.xlu0 %v1882, 120
    %v1887 = vpop.permute.xlu0 %1886
    %1888 = vrot.lane.b32.xlu0 %v1883, 120
    %v1889 = vpop.permute.xlu0 %1888
    %v1890 = vrot.slane %v1887, 4
    %v1891 = vrot.slane %v1889, 4
    %v1892 = vsel %vm647, %v1890, %v1887
    %v1893 = vsel %vm647, %v1891, %v1889
    %v1896 = vadd.f32 %v1824, %v1892
    %v1897 = vadd.f32 %v1825, %v1893
    %s1898 = sld [smem:[#allocation7 + $0x86]]
    %v1899 = vstv %s1898
    %v1900 = vmul.f32 %v1899, %v1554
    %v1901 = vmul.f32 %v1899, %v1555
    %1904 = vrot.lane.b32.xlu0 %v1900, 120
    %v1905 = vpop.permute.xlu0 %1904
    %1906 = vrot.lane.b32.xlu0 %v1901, 120
    %v1907 = vpop.permute.xlu0 %1906
    %v1908 = vrot.slane %v1905, 4
    %v1909 = vrot.slane %v1907, 4
    %v1910 = vsel %vm647, %v1908, %v1905
    %v1911 = vsel %vm647, %v1909, %v1907
    %v1914 = vadd.f32 %v1842, %v1910
    %v1915 = vadd.f32 %v1843, %v1911
    %v1916 = vld [vmem:[#allocation2 + $0x3] sm:$0x11]
    %v1917 = vld [vmem:[#allocation2 + $0xb] sm:$0x11]
    %s1918 = sld [smem:[#allocation7 + $0x1b]]
    %v1919 = vstv %s1918
    %v1920 = vmul.f32 %v1919, %v1916
    %v1921 = vmul.f32 %v1919, %v1917
    %v1922 = vadd.f32 %v1860, %v1920
    %v1923 = vadd.f32 %v1861, %v1921
    %s1924 = sld [smem:[#allocation7 + $0x3f]]
    %v1925 = vstv %s1924
    %v1926 = vmul.f32 %v1925, %v1916
    %v1927 = vmul.f32 %v1925, %v1917
    %v1928 = vadd.f32 %v1878, %v1926
    %v1929 = vadd.f32 %v1879, %v1927
    %s1930 = sld [smem:[#allocation7 + $0x63]]
    %v1931 = vstv %s1930
    %v1932 = vmul.f32 %v1931, %v1916
    %v1933 = vmul.f32 %v1931, %v1917
    %v1934 = vadd.f32 %v1896, %v1932
    %v1935 = vadd.f32 %v1897, %v1933
    %s1936 = sld [smem:[#allocation7 + $0x87]]
    %v1937 = vstv %s1936
    %v1938 = vmul.f32 %v1937, %v1916
    %v1939 = vmul.f32 %v1937, %v1917
    %v1940 = vadd.f32 %v1914, %v1938
    %v1941 = vadd.f32 %v1915, %v1939
    %s1942 = sld [smem:[#allocation7 + $0x1c]]
    %v1943 = vstv %s1942
    %v1944 = vmul.f32 %v1943, %v1916
    %v1945 = vmul.f32 %v1943, %v1917
    %1948 = vrot.lane.b32.xlu0 %v1944, 127
    %v1949 = vpop.permute.xlu0 %1948
    %1950 = vrot.lane.b32.xlu0 %v1945, 127
    %v1951 = vpop.permute.xlu0 %1950
    %v1952 = vrot.slane %v1949, 4
    %v1953 = vrot.slane %v1951, 4
    %v1954 = vsel %vm134, %v1949, %v1952
    %v1955 = vsel %vm134, %v1951, %v1953
    %v1958 = vadd.f32 %v1922, %v1954
    %v1959 = vadd.f32 %v1923, %v1955
    %s1960 = sld [smem:[#allocation7 + $0x40]]
    %v1961 = vstv %s1960
    %v1962 = vmul.f32 %v1961, %v1916
    %v1963 = vmul.f32 %v1961, %v1917
    %1966 = vrot.lane.b32.xlu0 %v1962, 127
    %v1967 = vpop.permute.xlu0 %1966
    %1968 = vrot.lane.b32.xlu0 %v1963, 127
    %v1969 = vpop.permute.xlu0 %1968
    %v1970 = vrot.slane %v1967, 4
    %v1971 = vrot.slane %v1969, 4
    %v1972 = vsel %vm134, %v1967, %v1970
    %v1973 = vsel %vm134, %v1969, %v1971
    %v1976 = vadd.f32 %v1928, %v1972
    %v1977 = vadd.f32 %v1929, %v1973
    %s1978 = sld [smem:[#allocation7 + $0x64]]
    %v1979 = vstv %s1978
    %v1980 = vmul.f32 %v1979, %v1916
    %v1981 = vmul.f32 %v1979, %v1917
    %1984 = vrot.lane.b32.xlu0 %v1980, 127
    %v1985 = vpop.permute.xlu0 %1984
    %1986 = vrot.lane.b32.xlu0 %v1981, 127
    %v1987 = vpop.permute.xlu0 %1986
    %v1988 = vrot.slane %v1985, 4
    %v1989 = vrot.slane %v1987, 4
    %v1990 = vsel %vm134, %v1985, %v1988
    %v1991 = vsel %vm134, %v1987, %v1989
    %v1994 = vadd.f32 %v1934, %v1990
    %v1995 = vadd.f32 %v1935, %v1991
    %s1996 = sld [smem:[#allocation7 + $0x88]]
    %v1997 = vstv %s1996
    %v1998 = vmul.f32 %v1997, %v1916
    %v1999 = vmul.f32 %v1997, %v1917
    %2002 = vrot.lane.b32.xlu0 %v1998, 127
    %v2003 = vpop.permute.xlu0 %2002
    %2004 = vrot.lane.b32.xlu0 %v1999, 127
    %v2005 = vpop.permute.xlu0 %2004
    %v2006 = vrot.slane %v2003, 4
    %v2007 = vrot.slane %v2005, 4
    %v2008 = vsel %vm134, %v2003, %v2006
    %v2009 = vsel %vm134, %v2005, %v2007
    %v2012 = vadd.f32 %v1940, %v2008
    %v2013 = vadd.f32 %v1941, %v2009
    %s2014 = sld [smem:[#allocation7 + $0x1d]]
    %v2015 = vstv %s2014
    %v2016 = vmul.f32 %v2015, %v1916
    %v2017 = vmul.f32 %v2015, %v1917
    %2020 = vrot.lane.b32.xlu0 %v2016, 126
    %v2021 = vpop.permute.xlu0 %2020
    %2022 = vrot.lane.b32.xlu0 %v2017, 126
    %v2023 = vpop.permute.xlu0 %2022
    %v2024 = vrot.slane %v2021, 4
    %v2025 = vrot.slane %v2023, 4
    %v2026 = vsel %vm207, %v2021, %v2024
    %v2027 = vsel %vm207, %v2023, %v2025
    %v2030 = vadd.f32 %v1958, %v2026
    %v2031 = vadd.f32 %v1959, %v2027
    %s2032 = sld [smem:[#allocation7 + $0x41]]
    %v2033 = vstv %s2032
    %v2034 = vmul.f32 %v2033, %v1916
    %v2035 = vmul.f32 %v2033, %v1917
    %2038 = vrot.lane.b32.xlu0 %v2034, 126
    %v2039 = vpop.permute.xlu0 %2038
    %2040 = vrot.lane.b32.xlu0 %v2035, 126
    %v2041 = vpop.permute.xlu0 %2040
    %v2042 = vrot.slane %v2039, 4
    %v2043 = vrot.slane %v2041, 4
    %v2044 = vsel %vm207, %v2039, %v2042
    %v2045 = vsel %vm207, %v2041, %v2043
    %v2048 = vadd.f32 %v1976, %v2044
    %v2049 = vadd.f32 %v1977, %v2045
    %s2050 = sld [smem:[#allocation7 + $0x65]]
    %v2051 = vstv %s2050
    %v2052 = vmul.f32 %v2051, %v1916
    %v2053 = vmul.f32 %v2051, %v1917
    %2056 = vrot.lane.b32.xlu0 %v2052, 126
    %v2057 = vpop.permute.xlu0 %2056
    %2058 = vrot.lane.b32.xlu0 %v2053, 126
    %v2059 = vpop.permute.xlu0 %2058
    %v2060 = vrot.slane %v2057, 4
    %v2061 = vrot.slane %v2059, 4
    %v2062 = vsel %vm207, %v2057, %v2060
    %v2063 = vsel %vm207, %v2059, %v2061
    %v2066 = vadd.f32 %v1994, %v2062
    %v2067 = vadd.f32 %v1995, %v2063
    %s2068 = sld [smem:[#allocation7 + $0x89]]
    %v2069 = vstv %s2068
    %v2070 = vmul.f32 %v2069, %v1916
    %v2071 = vmul.f32 %v2069, %v1917
    %2074 = vrot.lane.b32.xlu0 %v2070, 126
    %v2075 = vpop.permute.xlu0 %2074
    %2076 = vrot.lane.b32.xlu0 %v2071, 126
    %v2077 = vpop.permute.xlu0 %2076
    %v2078 = vrot.slane %v2075, 4
    %v2079 = vrot.slane %v2077, 4
    %v2080 = vsel %vm207, %v2075, %v2078
    %v2081 = vsel %vm207, %v2077, %v2079
    %v2084 = vadd.f32 %v2012, %v2080
    %v2085 = vadd.f32 %v2013, %v2081
    %s2086 = sld [smem:[#allocation7 + $0x1e]]
    %v2087 = vstv %s2086
    %v2088 = vmul.f32 %v2087, %v1916
    %v2089 = vmul.f32 %v2087, %v1917
    %2092 = vrot.lane.b32.xlu0 %v2088, 125
    %v2093 = vpop.permute.xlu0 %2092
    %2094 = vrot.lane.b32.xlu0 %v2089, 125
    %v2095 = vpop.permute.xlu0 %2094
    %v2096 = vrot.slane %v2093, 4
    %v2097 = vrot.slane %v2095, 4
    %v2098 = vsel %vm280, %v2093, %v2096
    %v2099 = vsel %vm280, %v2095, %v2097
    %v2102 = vadd.f32 %v2030, %v2098
    %v2103 = vadd.f32 %v2031, %v2099
    %s2104 = sld [smem:[#allocation7 + $0x42]]
    %v2105 = vstv %s2104
    %v2106 = vmul.f32 %v2105, %v1916
    %v2107 = vmul.f32 %v2105, %v1917
    %2110 = vrot.lane.b32.xlu0 %v2106, 125
    %v2111 = vpop.permute.xlu0 %2110
    %2112 = vrot.lane.b32.xlu0 %v2107, 125
    %v2113 = vpop.permute.xlu0 %2112
    %v2114 = vrot.slane %v2111, 4
    %v2115 = vrot.slane %v2113, 4
    %v2116 = vsel %vm280, %v2111, %v2114
    %v2117 = vsel %vm280, %v2113, %v2115
    %v2120 = vadd.f32 %v2048, %v2116
    %v2121 = vadd.f32 %v2049, %v2117
    %s2122 = sld [smem:[#allocation7 + $0x66]]
    %v2123 = vstv %s2122
    %v2124 = vmul.f32 %v2123, %v1916
    %v2125 = vmul.f32 %v2123, %v1917
    %2128 = vrot.lane.b32.xlu0 %v2124, 125
    %v2129 = vpop.permute.xlu0 %2128
    %2130 = vrot.lane.b32.xlu0 %v2125, 125
    %v2131 = vpop.permute.xlu0 %2130
    %v2132 = vrot.slane %v2129, 4
    %v2133 = vrot.slane %v2131, 4
    %v2134 = vsel %vm280, %v2129, %v2132
    %v2135 = vsel %vm280, %v2131, %v2133
    %v2138 = vadd.f32 %v2066, %v2134
    %v2139 = vadd.f32 %v2067, %v2135
    %s2140 = sld [smem:[#allocation7 + $0x8a]]
    %v2141 = vstv %s2140
    %v2142 = vmul.f32 %v2141, %v1916
    %v2143 = vmul.f32 %v2141, %v1917
    %2146 = vrot.lane.b32.xlu0 %v2142, 125
    %v2147 = vpop.permute.xlu0 %2146
    %2148 = vrot.lane.b32.xlu0 %v2143, 125
    %v2149 = vpop.permute.xlu0 %2148
    %v2150 = vrot.slane %v2147, 4
    %v2151 = vrot.slane %v2149, 4
    %v2152 = vsel %vm280, %v2147, %v2150
    %v2153 = vsel %vm280, %v2149, %v2151
    %v2156 = vadd.f32 %v2084, %v2152
    %v2157 = vadd.f32 %v2085, %v2153
    %v2158 = vld [vmem:[#allocation2 + $0x7] sm:$0x1]
    %v2159 = vld [vmem:[#allocation2 + $0xf] sm:$0x1]
    %s2160 = sld [smem:[#allocation7 + $0x1f]]
    %v2161 = vstv %s2160
    %v2162 = vmul.f32 %v2161, %v2158
    %v2163 = vmul.f32 %v2161, %v2159
    %2166 = vrot.lane.b32.xlu0 %v2162, 124
    %v2167 = vpop.permute.xlu0 %2166
    %2168 = vrot.lane.b32.xlu0 %v2163, 124
    %v2169 = vpop.permute.xlu0 %2168
    %v2170 = vrot.slane %v2167, 4
    %v2171 = vrot.slane %v2169, 4
    %v2172 = vsel %vm355, %v2170, %v2167
    %v2173 = vsel %vm355, %v2171, %v2169
    %v2176 = vadd.f32 %v2102, %v2172
    %v2177 = vadd.f32 %v2103, %v2173
    %s2178 = sld [smem:[#allocation7 + $0x43]]
    %v2179 = vstv %s2178
    %v2180 = vmul.f32 %v2179, %v2158
    %v2181 = vmul.f32 %v2179, %v2159
    %2184 = vrot.lane.b32.xlu0 %v2180, 124
    %v2185 = vpop.permute.xlu0 %2184
    %2186 = vrot.lane.b32.xlu0 %v2181, 124
    %v2187 = vpop.permute.xlu0 %2186
    %v2188 = vrot.slane %v2185, 4
    %v2189 = vrot.slane %v2187, 4
    %v2190 = vsel %vm355, %v2188, %v2185
    %v2191 = vsel %vm355, %v2189, %v2187
    %v2194 = vadd.f32 %v2120, %v2190
    %v2195 = vadd.f32 %v2121, %v2191
    %s2196 = sld [smem:[#allocation7 + $0x67]]
    %v2197 = vstv %s2196
    %v2198 = vmul.f32 %v2197, %v2158
    %v2199 = vmul.f32 %v2197, %v2159
    %2202 = vrot.lane.b32.xlu0 %v2198, 124
    %v2203 = vpop.permute.xlu0 %2202
    %2204 = vrot.lane.b32.xlu0 %v2199, 124
    %v2205 = vpop.permute.xlu0 %2204
    %v2206 = vrot.slane %v2203, 4
    %v2207 = vrot.slane %v2205, 4
    %v2208 = vsel %vm355, %v2206, %v2203
    %v2209 = vsel %vm355, %v2207, %v2205
    %v2212 = vadd.f32 %v2138, %v2208
    %v2213 = vadd.f32 %v2139, %v2209
    %s2214 = sld [smem:[#allocation7 + $0x8b]]
    %v2215 = vstv %s2214
    %v2216 = vmul.f32 %v2215, %v2158
    %v2217 = vmul.f32 %v2215, %v2159
    %2220 = vrot.lane.b32.xlu0 %v2216, 124
    %v2221 = vpop.permute.xlu0 %2220
    %2222 = vrot.lane.b32.xlu0 %v2217, 124
    %v2223 = vpop.permute.xlu0 %2222
    %v2224 = vrot.slane %v2221, 4
    %v2225 = vrot.slane %v2223, 4
    %v2226 = vsel %vm355, %v2224, %v2221
    %v2227 = vsel %vm355, %v2225, %v2223
    %v2230 = vadd.f32 %v2156, %v2226
    %v2231 = vadd.f32 %v2157, %v2227
    %s2232 = sld [smem:[#allocation7 + $0x20]]
    %v2233 = vstv %s2232
    %v2234 = vmul.f32 %v2233, %v2158
    %v2235 = vmul.f32 %v2233, %v2159
    %2238 = vrot.lane.b32.xlu0 %v2234, 123
    %v2239 = vpop.permute.xlu0 %2238
    %2240 = vrot.lane.b32.xlu0 %v2235, 123
    %v2241 = vpop.permute.xlu0 %2240
    %v2242 = vrot.slane %v2239, 4
    %v2243 = vrot.slane %v2241, 4
    %v2244 = vsel %vm428, %v2242, %v2239
    %v2245 = vsel %vm428, %v2243, %v2241
    %v2248 = vadd.f32 %v2176, %v2244
    %v2249 = vadd.f32 %v2177, %v2245
    %s2250 = sld [smem:[#allocation7 + $0x44]]
    %v2251 = vstv %s2250
    %v2252 = vmul.f32 %v2251, %v2158
    %v2253 = vmul.f32 %v2251, %v2159
    %2256 = vrot.lane.b32.xlu0 %v2252, 123
    %v2257 = vpop.permute.xlu0 %2256
    %2258 = vrot.lane.b32.xlu0 %v2253, 123
    %v2259 = vpop.permute.xlu0 %2258
    %v2260 = vrot.slane %v2257, 4
    %v2261 = vrot.slane %v2259, 4
    %v2262 = vsel %vm428, %v2260, %v2257
    %v2263 = vsel %vm428, %v2261, %v2259
    %v2266 = vadd.f32 %v2194, %v2262
    %v2267 = vadd.f32 %v2195, %v2263
    %s2268 = sld [smem:[#allocation7 + $0x68]]
    %v2269 = vstv %s2268
    %v2270 = vmul.f32 %v2269, %v2158
    %v2271 = vmul.f32 %v2269, %v2159
    %2274 = vrot.lane.b32.xlu0 %v2270, 123
    %v2275 = vpop.permute.xlu0 %2274
    %2276 = vrot.lane.b32.xlu0 %v2271, 123
    %v2277 = vpop.permute.xlu0 %2276
    %v2278 = vrot.slane %v2275, 4
    %v2279 = vrot.slane %v2277, 4
    %v2280 = vsel %vm428, %v2278, %v2275
    %v2281 = vsel %vm428, %v2279, %v2277
    %v2284 = vadd.f32 %v2212, %v2280
    %v2285 = vadd.f32 %v2213, %v2281
    %s2286 = sld [smem:[#allocation7 + $0x8c]]
    %v2287 = vstv %s2286
    %v2288 = vmul.f32 %v2287, %v2158
    %v2289 = vmul.f32 %v2287, %v2159
    %2292 = vrot.lane.b32.xlu0 %v2288, 123
    %v2293 = vpop.permute.xlu0 %2292
    %2294 = vrot.lane.b32.xlu0 %v2289, 123
    %v2295 = vpop.permute.xlu0 %2294
    %v2296 = vrot.slane %v2293, 4
    %v2297 = vrot.slane %v2295, 4
    %v2298 = vsel %vm428, %v2296, %v2293
    %v2299 = vsel %vm428, %v2297, %v2295
    %v2302 = vadd.f32 %v2230, %v2298
    %v2303 = vadd.f32 %v2231, %v2299
    %s2304 = sld [smem:[#allocation7 + $0x21]]
    %v2305 = vstv %s2304
    %v2306 = vmul.f32 %v2305, %v2158
    %v2307 = vmul.f32 %v2305, %v2159
    %2310 = vrot.lane.b32.xlu0 %v2306, 122
    %v2311 = vpop.permute.xlu0 %2310
    %2312 = vrot.lane.b32.xlu0 %v2307, 122
    %v2313 = vpop.permute.xlu0 %2312
    %v2314 = vrot.slane %v2311, 4
    %v2315 = vrot.slane %v2313, 4
    %v2316 = vsel %vm501, %v2314, %v2311
    %v2317 = vsel %vm501, %v2315, %v2313
    %v2320 = vadd.f32 %v2248, %v2316
    %v2321 = vadd.f32 %v2249, %v2317
    %s2322 = sld [smem:[#allocation7 + $0x45]]
    %v2323 = vstv %s2322
    %v2324 = vmul.f32 %v2323, %v2158
    %v2325 = vmul.f32 %v2323, %v2159
    %2328 = vrot.lane.b32.xlu0 %v2324, 122
    %v2329 = vpop.permute.xlu0 %2328
    %2330 = vrot.lane.b32.xlu0 %v2325, 122
    %v2331 = vpop.permute.xlu0 %2330
    %v2332 = vrot.slane %v2329, 4
    %v2333 = vrot.slane %v2331, 4
    %v2334 = vsel %vm501, %v2332, %v2329
    %v2335 = vsel %vm501, %v2333, %v2331
    %v2338 = vadd.f32 %v2266, %v2334
    %v2339 = vadd.f32 %v2267, %v2335
    %s2340 = sld [smem:[#allocation7 + $0x69]]
    %v2341 = vstv %s2340
    %v2342 = vmul.f32 %v2341, %v2158
    %v2343 = vmul.f32 %v2341, %v2159
    %2346 = vrot.lane.b32.xlu0 %v2342, 122
    %v2347 = vpop.permute.xlu0 %2346
    %2348 = vrot.lane.b32.xlu0 %v2343, 122
    %v2349 = vpop.permute.xlu0 %2348
    %v2350 = vrot.slane %v2347, 4
    %v2351 = vrot.slane %v2349, 4
    %v2352 = vsel %vm501, %v2350, %v2347
    %v2353 = vsel %vm501, %v2351, %v2349
    %v2356 = vadd.f32 %v2284, %v2352
    %v2357 = vadd.f32 %v2285, %v2353
    %s2358 = sld [smem:[#allocation7 + $0x8d]]
    %v2359 = vstv %s2358
    %v2360 = vmul.f32 %v2359, %v2158
    %v2361 = vmul.f32 %v2359, %v2159
    %2364 = vrot.lane.b32.xlu0 %v2360, 122
    %v2365 = vpop.permute.xlu0 %2364
    %2366 = vrot.lane.b32.xlu0 %v2361, 122
    %v2367 = vpop.permute.xlu0 %2366
    %v2368 = vrot.slane %v2365, 4
    %v2369 = vrot.slane %v2367, 4
    %v2370 = vsel %vm501, %v2368, %v2365
    %v2371 = vsel %vm501, %v2369, %v2367
    %v2374 = vadd.f32 %v2302, %v2370
    %v2375 = vadd.f32 %v2303, %v2371
    %s2376 = sld [smem:[#allocation7 + $0x22]]
    %v2377 = vstv %s2376
    %v2378 = vmul.f32 %v2377, %v2158
    %v2379 = vmul.f32 %v2377, %v2159
    %2382 = vrot.lane.b32.xlu0 %v2378, 121
    %v2383 = vpop.permute.xlu0 %2382
    %2384 = vrot.lane.b32.xlu0 %v2379, 121
    %v2385 = vpop.permute.xlu0 %2384
    %v2386 = vrot.slane %v2383, 4
    %v2387 = vrot.slane %v2385, 4
    %v2388 = vsel %vm574, %v2386, %v2383
    %v2389 = vsel %vm574, %v2387, %v2385
    %v2392 = vadd.f32 %v2320, %v2388
    %v2393 = vadd.f32 %v2321, %v2389
    %s2394 = sld [smem:[#allocation7 + $0x46]]
    %v2395 = vstv %s2394
    %v2396 = vmul.f32 %v2395, %v2158
    %v2397 = vmul.f32 %v2395, %v2159
    %2400 = vrot.lane.b32.xlu0 %v2396, 121
    %v2401 = vpop.permute.xlu0 %2400
    %2402 = vrot.lane.b32.xlu0 %v2397, 121
    %v2403 = vpop.permute.xlu0 %2402
    %v2404 = vrot.slane %v2401, 4
    %v2405 = vrot.slane %v2403, 4
    %v2406 = vsel %vm574, %v2404, %v2401
    %v2407 = vsel %vm574, %v2405, %v2403
    %v2410 = vadd.f32 %v2338, %v2406
    %v2411 = vadd.f32 %v2339, %v2407
    %s2412 = sld [smem:[#allocation7 + $0x6a]]
    %v2413 = vstv %s2412
    %v2414 = vmul.f32 %v2413, %v2158
    %v2415 = vmul.f32 %v2413, %v2159
    %2418 = vrot.lane.b32.xlu0 %v2414, 121
    %v2419 = vpop.permute.xlu0 %2418
    %2420 = vrot.lane.b32.xlu0 %v2415, 121
    %v2421 = vpop.permute.xlu0 %2420
    %v2422 = vrot.slane %v2419, 4
    %v2423 = vrot.slane %v2421, 4
    %v2424 = vsel %vm574, %v2422, %v2419
    %v2425 = vsel %vm574, %v2423, %v2421
    %v2428 = vadd.f32 %v2356, %v2424
    %v2429 = vadd.f32 %v2357, %v2425
    %s2430 = sld [smem:[#allocation7 + $0x8e]]
    %v2431 = vstv %s2430
    %v2432 = vmul.f32 %v2431, %v2158
    %v2433 = vmul.f32 %v2431, %v2159
    %2436 = vrot.lane.b32.xlu0 %v2432, 121
    %v2437 = vpop.permute.xlu0 %2436
    %2438 = vrot.lane.b32.xlu0 %v2433, 121
    %v2439 = vpop.permute.xlu0 %2438
    %v2440 = vrot.slane %v2437, 4
    %v2441 = vrot.slane %v2439, 4
    %v2442 = vsel %vm574, %v2440, %v2437
    %v2443 = vsel %vm574, %v2441, %v2439
    %v2446 = vadd.f32 %v2374, %v2442
    %v2447 = vadd.f32 %v2375, %v2443
    %s2448 = sld [smem:[#allocation7 + $0x23]]
    %v2449 = vstv %s2448
    %v2450 = vmul.f32 %v2449, %v2158
    %v2451 = vmul.f32 %v2449, %v2159
    %2454 = vrot.lane.b32.xlu0 %v2450, 120
    %v2455 = vpop.permute.xlu0 %2454
    %2456 = vrot.lane.b32.xlu0 %v2451, 120
    %v2457 = vpop.permute.xlu0 %2456
    %v2458 = vrot.slane %v2455, 4
    %v2459 = vrot.slane %v2457, 4
    %v2460 = vsel %vm647, %v2458, %v2455
    %v2461 = vsel %vm647, %v2459, %v2457
    %v2464 = vadd.f32 %v2392, %v2460
    %v2465 = vadd.f32 %v2393, %v2461
    %s2466 = sld [smem:[#allocation7 + $0x47]]
    %v2467 = vstv %s2466
    %v2468 = vmul.f32 %v2467, %v2158
    %v2469 = vmul.f32 %v2467, %v2159
    %2472 = vrot.lane.b32.xlu0 %v2468, 120
    %v2473 = vpop.permute.xlu0 %2472
    %2474 = vrot.lane.b32.xlu0 %v2469, 120
    %v2475 = vpop.permute.xlu0 %2474
    %v2476 = vrot.slane %v2473, 4
    %v2477 = vrot.slane %v2475, 4
    %v2478 = vsel %vm647, %v2476, %v2473
    %v2479 = vsel %vm647, %v2477, %v2475
    %v2482 = vadd.f32 %v2410, %v2478
    %v2483 = vadd.f32 %v2411, %v2479
    %s2484 = sld [smem:[#allocation7 + $0x6b]]
    %v2485 = vstv %s2484
    %v2486 = vmul.f32 %v2485, %v2158
    %v2487 = vmul.f32 %v2485, %v2159
    %2490 = vrot.lane.b32.xlu0 %v2486, 120
    %v2491 = vpop.permute.xlu0 %2490
    %2492 = vrot.lane.b32.xlu0 %v2487, 120
    %v2493 = vpop.permute.xlu0 %2492
    %v2494 = vrot.slane %v2491, 4
    %v2495 = vrot.slane %v2493, 4
    %v2496 = vsel %vm647, %v2494, %v2491
    %v2497 = vsel %vm647, %v2495, %v2493
    %v2500 = vadd.f32 %v2428, %v2496
    %v2501 = vadd.f32 %v2429, %v2497
    %s2502 = sld [smem:[#allocation7 + $0x8f]]
    %v2503 = vstv %s2502
    %v2504 = vmul.f32 %v2503, %v2158
    %v2505 = vmul.f32 %v2503, %v2159
    %2508 = vrot.lane.b32.xlu0 %v2504, 120
    %v2509 = vpop.permute.xlu0 %2508
    %2510 = vrot.lane.b32.xlu0 %v2505, 120
    %v2511 = vpop.permute.xlu0 %2510
    %v2512 = vrot.slane %v2509, 4
    %v2513 = vrot.slane %v2511, 4
    %v2514 = vsel %vm647, %v2512, %v2509
    %v2515 = vsel %vm647, %v2513, %v2511
    %v2518 = vadd.f32 %v2446, %v2514
    %v2519 = vadd.f32 %v2447, %v2515
    %v2520 = vlaneseq
    %v2521 = vshrl.u32 %v2520, 7
    %v2522 = vadd.s32 %v2521, 8
    %v2523 = vlaneseq
    %v2524 = vand.u32 %v2523, 127
    %v2525 = vmul.u32 %v2524, 2
    %vm2526 = vcmp.eq.s32.totalorder %v2521, %v2525
    %vm2527 = vcmp.eq.s32.totalorder %v2522, %v2525
    %v2528 = vsel %vm2526, 1.0, 0.0
    %v2529 = vsel %vm2527, 1.0, 0.0
    %v2530 = vadd.s32 %v2525, 1
    %vm2531 = vcmp.eq.s32.totalorder %v2521, %v2530
    %vm2532 = vcmp.eq.s32.totalorder %v2522, %v2530
    %v2533 = vsel %vm2531, 1.0, 0.0
    %v2534 = vsel %vm2532, 1.0, 0.0
    %s2535 = sld [smem:[#allocation8]]
    %v2536 = vstv %s2535
    %v2537 = vadd.f32 %v2464, %v2536
    %v2538 = vadd.f32 %v2465, %v2536
    %vm2539 = vcmp.gt.f32.partialorder %v2537, 0.0
    %vm2540 = vcmp.gt.f32.partialorder %v2538, 0.0
    %v2541 = vmin.f32 %v2537, 0.0
    %v2542 = vmin.f32 %v2538, 0.0
    %v2543 = vmul.f32 %v2541, 1.442695
    %v2544 = vpow.pop %v2543
    %v2545 = vmul.f32 %v2542, 1.442695
    %v2546 = vpow.pop %v2545
    %v2547 = vsub.f32 %v2544, 1.0
    %v2548 = vsub.f32 %v2546, 1.0
    %v2549 = vsel %vm2539, %v2537, %v2547
    %v2550 = vsel %vm2540, %v2538, %v2548
    %v2553 = vlaneseq
    %v2554 = vshrl.u32 %v2553, 7
    %v2555 = vsub.s32 0, %v2554
    %v2556 = vrot.slane %v2549, %v2555
    %v2557 = vlaneseq
    %v2558 = vshrl.u32 %v2557, 7
    %v2559 = vsub.s32 4, %v2558
    %v2560 = vrot.slane %v2549, %v2559
    %v2561 = vlaneseq
    %v2562 = vshrl.u32 %v2561, 7
    %v2563 = vsub.s32 0, %v2562
    %v2564 = vrot.slane %v2550, %v2563
    %v2565 = vlaneseq
    %v2566 = vshrl.u32 %v2565, 7
    %v2567 = vsub.s32 4, %v2566
    %v2568 = vrot.slane %v2550, %v2567
    %vm2569 = vcmask 1041409
    %v2570 = vsel %vm2569, %v2564, %v2556
    %v2571 = vsel %vm2569, %v2568, %v2560
    %2572 = vrot.lane.b32.xlu0 %v2570, 4
    %v2573 = vpop.permute.xlu0 %2572
    %2574 = vrot.lane.b32.xlu0 %v2571, 4
    %v2575 = vpop.permute.xlu0 %2574
    %vm2576 = vcmask 31744
    %v2577 = vsel %vm2576, %v2573, %v2575
    %vm2579 = vcmask 123904
    %v2580 = vsel %vm2579, %v2577, 0.0
    %2581 = vadd.xlane.f32.xlu0 %v2580
    %v2582 = vpop.xlane.xlu0 %2581
    %v2583 = vrot.slane %v2582, 4
    %v2584 = vadd.f32 %v2582, %v2583
    %v2585 = vrot.slane %v2584, 2
    %v2586 = vadd.f32 %v2584, %v2585
    %v2587 = vrot.slane %v2586, 1
    %v2588 = vadd.f32 %v2586, %v2587
    %s2589 = vtos %v2588
    %s2590 = smul.f32 %s2589, 0.03125
    %v2591 = vstv %s2590
    %v2592 = vsub.f32 %v2549, %v2591
    %v2593 = vsub.f32 %v2550, %v2591
    %v2594 = vmul.f32 %v2592, %v2592
    %v2595 = vmul.f32 %v2593, %v2593
    %v2598 = vlaneseq
    %v2599 = vshrl.u32 %v2598, 7
    %v2600 = vsub.s32 0, %v2599
    %v2601 = vrot.slane %v2594, %v2600
    %v2602 = vlaneseq
    %v2603 = vshrl.u32 %v2602, 7
    %v2604 = vsub.s32 4, %v2603
    %v2605 = vrot.slane %v2594, %v2604
    %v2606 = vlaneseq
    %v2607 = vshrl.u32 %v2606, 7
    %v2608 = vsub.s32 0, %v2607
    %v2609 = vrot.slane %v2595, %v2608
    %v2610 = vlaneseq
    %v2611 = vshrl.u32 %v2610, 7
    %v2612 = vsub.s32 4, %v2611
    %v2613 = vrot.slane %v2595, %v2612
    %v2614 = vsel %vm2569, %v2609, %v2601
    %v2615 = vsel %vm2569, %v2613, %v2605
    %2616 = vrot.lane.b32.xlu0 %v2614, 4
    %v2617 = vpop.permute.xlu0 %2616
    %2618 = vrot.lane.b32.xlu0 %v2615, 4
    %v2619 = vpop.permute.xlu0 %2618
    %v2620 = vsel %vm2576, %v2617, %v2619
    %v2622 = vsel %vm2579, %v2620, 0.0
    %2623 = vadd.xlane.f32.xlu0 %v2622
    %v2624 = vpop.xlane.xlu0 %2623
    %v2625 = vrot.slane %v2624, 4
    %v2626 = vadd.f32 %v2624, %v2625
    %v2627 = vrot.slane %v2626, 2
    %v2628 = vadd.f32 %v2626, %v2627
    %v2629 = vrot.slane %v2628, 1
    %v2630 = vadd.f32 %v2628, %v2629
    %s2631 = vtos %v2630
    %s2632 = smul.f32 %s2631, 0.03125
    %s2633 = sld [smem:[#allocation10]]
    %s2634 = sadd.f32 %s2632, 1e-05
    %v2635 = vstv %s2634
    %v2636 = vrsqrt.pop %v2635
    %s2637 = vtos %v2636
    %s2638 = smul.f32 %s2633, %s2637
    %v2639 = vstv %s2638
    %v2640 = vmul.f32 %v2592, %v2639
    %v2641 = vmul.f32 %v2593, %v2639
    %s2642 = sld [smem:[#allocation11]]
    %v2643 = vstv %s2642
    %v2644 = vadd.f32 %v2640, %v2643
    %v2645 = vadd.f32 %v2641, %v2643
    %v2648 = vlaneseq
    %v2649 = vshrl.u32 %v2648, 7
    %v2650 = vsub.s32 0, %v2649
    %v2651 = vrot.slane %v2644, %v2650
    %v2652 = vlaneseq
    %v2653 = vshrl.u32 %v2652, 7
    %v2654 = vsub.s32 4, %v2653
    %v2655 = vrot.slane %v2644, %v2654
    %v2656 = vlaneseq
    %v2657 = vshrl.u32 %v2656, 7
    %v2658 = vsub.s32 0, %v2657
    %v2659 = vrot.slane %v2645, %v2658
    %v2660 = vlaneseq
    %v2661 = vshrl.u32 %v2660, 7
    %v2662 = vsub.s32 4, %v2661
    %v2663 = vrot.slane %v2645, %v2662
    %2664 = vrot.lane.b32.xlu0 %v2651, 4
    %v2665 = vpop.permute.xlu0 %2664
    %2666 = vrot.lane.b32.xlu0 %v2655, 4
    %v2667 = vpop.permute.xlu0 %2666
    %2668 = vrot.lane.b32.xlu0 %v2659, 4
    %v2669 = vpop.permute.xlu0 %2668
    %2670 = vrot.lane.b32.xlu0 %v2663, 4
    %v2671 = vpop.permute.xlu0 %2670
    %v2672 = vsel %vm2576, %v2665, %v2667
    %v2673 = vsel %vm2576, %v2669, %v2671
    %vm2676 = vcmask 122880
    %2677 = vst.msk [vmem:[#allocation14] sm:$0x1] %vm2676, %v2672
    %2678 = vst.msk [vmem:[#allocation14 + $0x4] sm:$0x1] %vm2676, %v2673
    %v2679 = vsel %vm2569, %v2659, %v2651
    %v2680 = vsel %vm2569, %v2663, %v2655
    %2681 = vrot.lane.b32.xlu0 %v2679, 4
    %v2682 = vpop.permute.xlu0 %2681
    %2683 = vrot.lane.b32.xlu0 %v2680, 4
    %v2684 = vpop.permute.xlu0 %2683
    %v2685 = vsel %vm2576, %v2682, %v2684
    %vm2686 = vcmask 130048
    %v2687 = vsel %vm2686, %v2685, 0
    %2689 = vmatprep.subr.mxu0 0.0
    %2690 = vmatpush1.msra.mxu0 %v2528
    %2691 = vmatprep.subr.mxu0 0.0
    %2692 = vmatpush1.msra.mxu0 %v2529
    %2693 = vmatprep.subr.mxu0 0.0
    %2694 = vmatpush1.msra.mxu0 0.0
    %2695 = vmatprep.subr.mxu0 0.0
    %2696 = vmatpush1.msra.mxu0 0.0
    %2697 = vmatprep.subr.mxu0 0.0
    %2698 = vmatpush1.msra.mxu0 0.0
    %2699 = vmatprep.subr.mxu0 0.0
    %2700 = vmatpush1.msra.mxu0 0.0
    %2701 = vmatprep.subr.mxu0 0.0
    %2702 = vmatpush1.msra.mxu0 0.0
    %2703 = vmatprep.subr.mxu0 0.0
    %2704 = vmatpush1.msra.mxu0 0.0
    %2705 = vmatprep.subr.mxu0 0.0
    %2706 = vmatpush1.msra.mxu0 0.0
    %2707 = vmatprep.subr.mxu0 0.0
    %2708 = vmatpush1.msra.mxu0 0.0
    %2709 = vmatprep.subr.mxu0 0.0
    %2710 = vmatpush1.msra.mxu0 0.0
    %2711 = vmatprep.subr.mxu0 0.0
    %2712 = vmatpush1.msra.mxu0 0.0
    %2713 = vmatprep.subr.mxu0 0.0
    %2714 = vmatpush1.msra.mxu0 0.0
    %2715 = vmatprep.subr.mxu0 0.0
    %2716 = vmatpush1.msra.mxu0 0.0
    %2717 = vmatprep.subr.mxu0 0.0
    %2718 = vmatpush1.msra.mxu0 0.0
    %2719 = vmatprep.subr.mxu0 0.0
    %2720 = vmatpush1.msra.mxu0 0.0
    %2721 = vmatprep.subr.mxu0 0.0
    %2722 = vmatpush1.msra.mxu0 0.0
    %2723 = vmatprep.subr.mxu0 0.0
    %2724 = vmatpush1.msra.mxu0 0.0
    %2725 = vmatprep.subr.mxu0 0.0
    %2726 = vmatpush1.msra.mxu0 0.0
    %2727 = vmatprep.subr.mxu0 0.0
    %2728 = vmatpush1.msra.mxu0 0.0
    %2729 = vmatprep.subr.mxu0 0.0
    %2730 = vmatpush1.msra.mxu0 0.0
    %2731 = vmatprep.subr.mxu0 0.0
    %2732 = vmatpush1.msra.mxu0 0.0
    %2733 = vmatprep.subr.mxu0 0.0
    %2734 = vmatpush1.msra.mxu0 0.0
    %2735 = vmatprep.subr.mxu0 0.0
    %2736 = vmatpush1.msra.mxu0 0.0
    %2737 = vmatprep.subr.mxu0 0.0
    %2738 = vmatpush1.msra.mxu0 0.0
    %2739 = vmatprep.subr.mxu0 0.0
    %2740 = vmatpush1.msra.mxu0 0.0
    %2741 = vmatprep.subr.mxu0 0.0
    %2742 = vmatpush1.msra.mxu0 0.0
    %2743 = vmatprep.subr.mxu0 0.0
    %2744 = vmatpush1.msra.mxu0 0.0
    %2745 = vmatprep.subr.mxu0 0.0
    %2746 = vmatpush1.msra.mxu0 0.0
    %2747 = vmatprep.subr.mxu0 0.0
    %2748 = vmatpush1.msra.mxu0 0.0
    %2749 = vmatprep.subr.mxu0 0.0
    %2750 = vmatpush1.msra.mxu0 0.0
    %2751 = vmatprep.subr.mxu0 0.0
    %2752 = vmatpush1.msra.mxu0 0.0
    %2753 = vmatprep.mubr.f32.mxu0 0.0
    %v2754 = vand.u32 %v2687, 4294901760
    %v2755 = vsub.f32 %v2687, %v2754
    %v2756 = vand.u32 %v2755, 4294901760
    %v2757 = vsub.f32 %v2755, %v2756
    %v2758 = vand.u32 %v2757, 4294901760
    %2759 = vmatmul.mubr.f32.gmra.mrb[0].mxu0 %v2758
    %v2760 = vpop.f32.mrb[0].mxu0
    %v2761 = vadd.f32 0.0, %v2760
    %v2762 = vpop.f32.mrb[0].mxu0
    %2763 = vdwg.mxu0
    %2764 = vmatprep.subr.mxu0 0.0
    %v2765 = vsub.f32 %v2528, %v2528
    %v2766 = vand.u32 %v2765, 4294901760
    %v2767 = vsub.f32 %v2765, %v2766
    %v2768 = vand.u32 %v2767, 4294901760
    %2769 = vmatpush1.msra.mxu0 %v2768
    %2770 = vmatprep.subr.mxu0 0.0
    %v2771 = vsub.f32 %v2529, %v2529
    %v2772 = vand.u32 %v2771, 4294901760
    %v2773 = vsub.f32 %v2771, %v2772
    %v2774 = vand.u32 %v2773, 4294901760
    %2775 = vmatpush1.msra.mxu0 %v2774
    %2776 = vmatprep.subr.mxu0 0.0
    %2777 = vmatpush1.msra.mxu0 0.0
    %2778 = vmatprep.subr.mxu0 0.0
    %2779 = vmatpush1.msra.mxu0 0.0
    %2780 = vmatprep.subr.mxu0 0.0
    %2781 = vmatpush1.msra.mxu0 0.0
    %2782 = vmatprep.subr.mxu0 0.0
    %2783 = vmatpush1.msra.mxu0 0.0
    %2784 = vmatprep.subr.mxu0 0.0
    %2785 = vmatpush1.msra.mxu0 0.0
    %2786 = vmatprep.subr.mxu0 0.0
    %2787 = vmatpush1.msra.mxu0 0.0
    %2788 = vmatprep.subr.mxu0 0.0
    %2789 = vmatpush1.msra.mxu0 0.0
    %2790 = vmatprep.subr.mxu0 0.0
    %2791 = vmatpush1.msra.mxu0 0.0
    %2792 = vmatprep.subr.mxu0 0.0
    %2793 = vmatpush1.msra.mxu0 0.0
    %2794 = vmatprep.subr.mxu0 0.0
    %2795 = vmatpush1.msra.mxu0 0.0
    %2796 = vmatprep.subr.mxu0 0.0
    %2797 = vmatpush1.msra.mxu0 0.0
    %2798 = vmatprep.subr.mxu0 0.0
    %2799 = vmatpush1.msra.mxu0 0.0
    %2800 = vmatprep.subr.mxu0 0.0
    %2801 = vmatpush1.msra.mxu0 0.0
    %2802 = vmatprep.subr.mxu0 0.0
    %2803 = vmatpush1.msra.mxu0 0.0
    %2804 = vmatprep.subr.mxu0 0.0
    %2805 = vmatpush1.msra.mxu0 0.0
    %2806 = vmatprep.subr.mxu0 0.0
    %2807 = vmatpush1.msra.mxu0 0.0
    %2808 = vmatprep.subr.mxu0 0.0
    %2809 = vmatpush1.msra.mxu0 0.0
    %2810 = vmatprep.subr.mxu0 0.0
    %2811 = vmatpush1.msra.mxu0 0.0
    %2812 = vmatprep.subr.mxu0 0.0
    %2813 = vmatpush1.msra.mxu0 0.0
    %2814 = vmatprep.subr.mxu0 0.0
    %2815 = vmatpush1.msra.mxu0 0.0
    %2816 = vmatprep.subr.mxu0 0.0
    %2817 = vmatpush1.msra.mxu0 0.0
    %2818 = vmatprep.subr.mxu0 0.0
    %2819 = vmatpush1.msra.mxu0 0.0
    %2820 = vmatprep.subr.mxu0 0.0
    %2821 = vmatpush1.msra.mxu0 0.0
    %2822 = vmatprep.subr.mxu0 0.0
    %2823 = vmatpush1.msra.mxu0 0.0
    %2824 = vmatprep.subr.mxu0 0.0
    %2825 = vmatpush1.msra.mxu0 0.0
    %2826 = vmatprep.subr.mxu0 0.0
    %2827 = vmatpush1.msra.mxu0 0.0
    %2828 = vmatprep.subr.mxu0 0.0
    %2829 = vmatpush1.msra.mxu0 0.0
    %2830 = vmatprep.subr.mxu0 0.0
    %2831 = vmatpush1.msra.mxu0 0.0
    %2832 = vmatprep.subr.mxu0 0.0
    %2833 = vmatpush1.msra.mxu0 0.0
    %2834 = vmatprep.subr.mxu0 0.0
    %2835 = vmatpush1.msra.mxu0 0.0
    %2836 = vmatprep.mubr.f32.mxu0 0.0
    %v2837 = vand.u32 %v2687, 4294901760
    %2838 = vmatmul.mubr.f32.gmra.mrb[0].mxu0 %v2837
    %v2839 = vpop.f32.mrb[0].mxu0
    %v2840 = vadd.f32 %v2761, %v2839
    %v2841 = vpop.f32.mrb[0].mxu0
    %2842 = vdwg.mxu0
    %2843 = vmatprep.subr.mxu0 0.0
    %v2844 = vsub.f32 %v2528, %v2528
    %2845 = vmatpush1.msra.mxu0 %v2844
    %2846 = vmatprep.subr.mxu0 0.0
    %v2847 = vsub.f32 %v2529, %v2529
    %2848 = vmatpush1.msra.mxu0 %v2847
    %2849 = vmatprep.subr.mxu0 0.0
    %2850 = vmatpush1.msra.mxu0 0.0
    %2851 = vmatprep.subr.mxu0 0.0
    %2852 = vmatpush1.msra.mxu0 0.0
    %2853 = vmatprep.subr.mxu0 0.0
    %2854 = vmatpush1.msra.mxu0 0.0
    %2855 = vmatprep.subr.mxu0 0.0
    %2856 = vmatpush1.msra.mxu0 0.0
    %2857 = vmatprep.subr.mxu0 0.0
    %2858 = vmatpush1.msra.mxu0 0.0
    %2859 = vmatprep.subr.mxu0 0.0
    %2860 = vmatpush1.msra.mxu0 0.0
    %2861 = vmatprep.subr.mxu0 0.0
    %2862 = vmatpush1.msra.mxu0 0.0
    %2863 = vmatprep.subr.mxu0 0.0
    %2864 = vmatpush1.msra.mxu0 0.0
    %2865 = vmatprep.subr.mxu0 0.0
    %2866 = vmatpush1.msra.mxu0 0.0
    %2867 = vmatprep.subr.mxu0 0.0
    %2868 = vmatpush1.msra.mxu0 0.0
    %2869 = vmatprep.subr.mxu0 0.0
    %2870 = vmatpush1.msra.mxu0 0.0
    %2871 = vmatprep.subr.mxu0 0.0
    %2872 = vmatpush1.msra.mxu0 0.0
    %2873 = vmatprep.subr.mxu0 0.0
    %2874 = vmatpush1.msra.mxu0 0.0
    %2875 = vmatprep.subr.mxu0 0.0
    %2876 = vmatpush1.msra.mxu0 0.0
    %2877 = vmatprep.subr.mxu0 0.0
    %2878 = vmatpush1.msra.mxu0 0.0
    %2879 = vmatprep.subr.mxu0 0.0
    %2880 = vmatpush1.msra.mxu0 0.0
    %2881 = vmatprep.subr.mxu0 0.0
    %2882 = vmatpush1.msra.mxu0 0.0
    %2883 = vmatprep.subr.mxu0 0.0
    %2884 = vmatpush1.msra.mxu0 0.0
    %2885 = vmatprep.subr.mxu0 0.0
    %2886 = vmatpush1.msra.mxu0 0.0
    %2887 = vmatprep.subr.mxu0 0.0
    %2888 = vmatpush1.msra.mxu0 0.0
    %2889 = vmatprep.subr.mxu0 0.0
    %2890 = vmatpush1.msra.mxu0 0.0
    %2891 = vmatprep.subr.mxu0 0.0
    %2892 = vmatpush1.msra.mxu0 0.0
    %2893 = vmatprep.subr.mxu0 0.0
    %2894 = vmatpush1.msra.mxu0 0.0
    %2895 = vmatprep.subr.mxu0 0.0
    %2896 = vmatpush1.msra.mxu0 0.0
    %2897 = vmatprep.subr.mxu0 0.0
    %2898 = vmatpush1.msra.mxu0 0.0
    %2899 = vmatprep.subr.mxu0 0.0
    %2900 = vmatpush1.msra.mxu0 0.0
    %2901 = vmatprep.subr.mxu0 0.0
    %2902 = vmatpush1.msra.mxu0 0.0
    %2903 = vmatprep.subr.mxu0 0.0
    %2904 = vmatpush1.msra.mxu0 0.0
    %2905 = vmatprep.subr.mxu0 0.0
    %2906 = vmatpush1.msra.mxu0 0.0
    %2907 = vmatprep.subr.mxu0 0.0
    %2908 = vmatpush1.msra.mxu0 0.0
    %2909 = vmatprep.mubr.f32.mxu0 0.0
    %v2910 = vand.u32 %v2687, 4294901760
    %v2911 = vsub.f32 %v2687, %v2910
    %2912 = vmatmul.mubr.f32.gmra.mrb[0].mxu0 %v2911
    %v2913 = vpop.f32.mrb[0].mxu0
    %v2914 = vadd.f32 %v2840, %v2913
    %v2915 = vpop.f32.mrb[0].mxu0
    %2916 = vdwg.mxu0
    %2917 = vmatprep.subr.mxu0 0.0
    %2918 = vmatpush1.msra.mxu0 %v2528
    %2919 = vmatprep.subr.mxu0 0.0
    %2920 = vmatpush1.msra.mxu0 %v2529
    %2921 = vmatprep.subr.mxu0 0.0
    %2922 = vmatpush1.msra.mxu0 0.0
    %2923 = vmatprep.subr.mxu0 0.0
    %2924 = vmatpush1.msra.mxu0 0.0
    %2925 = vmatprep.subr.mxu0 0.0
    %2926 = vmatpush1.msra.mxu0 0.0
    %2927 = vmatprep.subr.mxu0 0.0
    %2928 = vmatpush1.msra.mxu0 0.0
    %2929 = vmatprep.subr.mxu0 0.0
    %2930 = vmatpush1.msra.mxu0 0.0
    %2931 = vmatprep.subr.mxu0 0.0
    %2932 = vmatpush1.msra.mxu0 0.0
    %2933 = vmatprep.subr.mxu0 0.0
    %2934 = vmatpush1.msra.mxu0 0.0
    %2935 = vmatprep.subr.mxu0 0.0
    %2936 = vmatpush1.msra.mxu0 0.0
    %2937 = vmatprep.subr.mxu0 0.0
    %2938 = vmatpush1.msra.mxu0 0.0
    %2939 = vmatprep.subr.mxu0 0.0
    %2940 = vmatpush1.msra.mxu0 0.0
    %2941 = vmatprep.subr.mxu0 0.0
    %2942 = vmatpush1.msra.mxu0 0.0
    %2943 = vmatprep.subr.mxu0 0.0
    %2944 = vmatpush1.msra.mxu0 0.0
    %2945 = vmatprep.subr.mxu0 0.0
    %2946 = vmatpush1.msra.mxu0 0.0
    %2947 = vmatprep.subr.mxu0 0.0
    %2948 = vmatpush1.msra.mxu0 0.0
    %2949 = vmatprep.subr.mxu0 0.0
    %2950 = vmatpush1.msra.mxu0 0.0
    %2951 = vmatprep.subr.mxu0 0.0
    %2952 = vmatpush1.msra.mxu0 0.0
    %2953 = vmatprep.subr.mxu0 0.0
    %2954 = vmatpush1.msra.mxu0 0.0
    %2955 = vmatprep.subr.mxu0 0.0
    %2956 = vmatpush1.msra.mxu0 0.0
    %2957 = vmatprep.subr.mxu0 0.0
    %2958 = vmatpush1.msra.mxu0 0.0
    %2959 = vmatprep.subr.mxu0 0.0
    %2960 = vmatpush1.msra.mxu0 0.0
    %2961 = vmatprep.subr.mxu0 0.0
    %2962 = vmatpush1.msra.mxu0 0.0
    %2963 = vmatprep.subr.mxu0 0.0
    %2964 = vmatpush1.msra.mxu0 0.0
    %2965 = vmatprep.subr.mxu0 0.0
    %2966 = vmatpush1.msra.mxu0 0.0
    %2967 = vmatprep.subr.mxu0 0.0
    %2968 = vmatpush1.msra.mxu0 0.0
    %2969 = vmatprep.subr.mxu0 0.0
    %2970 = vmatpush1.msra.mxu0 0.0
    %2971 = vmatprep.subr.mxu0 0.0
    %2972 = vmatpush1.msra.mxu0 0.0
    %2973 = vmatprep.subr.mxu0 0.0
    %2974 = vmatpush1.msra.mxu0 0.0
    %2975 = vmatprep.subr.mxu0 0.0
    %2976 = vmatpush1.msra.mxu0 0.0
    %2977 = vmatprep.subr.mxu0 0.0
    %2978 = vmatpush1.msra.mxu0 0.0
    %2979 = vmatprep.subr.mxu0 0.0
    %2980 = vmatpush1.msra.mxu0 0.0
    %2981 = vmatprep.mubr.f32.mxu0 0.0
    %v2982 = vand.u32 %v2687, 4294901760
    %v2983 = vsub.f32 %v2687, %v2982
    %v2984 = vand.u32 %v2983, 4294901760
    %2985 = vmatmul.mubr.f32.gmra.mrb[0].mxu0 %v2984
    %v2986 = vpop.f32.mrb[0].mxu0
    %v2987 = vadd.f32 %v2914, %v2986
    %v2988 = vpop.f32.mrb[0].mxu0
    %2989 = vdwg.mxu0
    %2990 = vmatprep.subr.mxu0 0.0
    %v2991 = vsub.f32 %v2528, %v2528
    %v2992 = vand.u32 %v2991, 4294901760
    %2993 = vmatpush1.msra.mxu0 %v2992
    %2994 = vmatprep.subr.mxu0 0.0
    %v2995 = vsub.f32 %v2529, %v2529
    %v2996 = vand.u32 %v2995, 4294901760
    %2997 = vmatpush1.msra.mxu0 %v2996
    %2998 = vmatprep.subr.mxu0 0.0
    %2999 = vmatpush1.msra.mxu0 0.0
    %3000 = vmatprep.subr.mxu0 0.0
    %3001 = vmatpush1.msra.mxu0 0.0
    %3002 = vmatprep.subr.mxu0 0.0
    %3003 = vmatpush1.msra.mxu0 0.0
    %3004 = vmatprep.subr.mxu0 0.0
    %3005 = vmatpush1.msra.mxu0 0.0
    %3006 = vmatprep.subr.mxu0 0.0
    %3007 = vmatpush1.msra.mxu0 0.0
    %3008 = vmatprep.subr.mxu0 0.0
    %3009 = vmatpush1.msra.mxu0 0.0
    %3010 = vmatprep.subr.mxu0 0.0
    %3011 = vmatpush1.msra.mxu0 0.0
    %3012 = vmatprep.subr.mxu0 0.0
    %3013 = vmatpush1.msra.mxu0 0.0
    %3014 = vmatprep.subr.mxu0 0.0
    %3015 = vmatpush1.msra.mxu0 0.0
    %3016 = vmatprep.subr.mxu0 0.0
    %3017 = vmatpush1.msra.mxu0 0.0
    %3018 = vmatprep.subr.mxu0 0.0
    %3019 = vmatpush1.msra.mxu0 0.0
    %3020 = vmatprep.subr.mxu0 0.0
    %3021 = vmatpush1.msra.mxu0 0.0
    %3022 = vmatprep.subr.mxu0 0.0
    %3023 = vmatpush1.msra.mxu0 0.0
    %3024 = vmatprep.subr.mxu0 0.0
    %3025 = vmatpush1.msra.mxu0 0.0
    %3026 = vmatprep.subr.mxu0 0.0
    %3027 = vmatpush1.msra.mxu0 0.0
    %3028 = vmatprep.subr.mxu0 0.0
    %3029 = vmatpush1.msra.mxu0 0.0
    %3030 = vmatprep.subr.mxu0 0.0
    %3031 = vmatpush1.msra.mxu0 0.0
    %3032 = vmatprep.subr.mxu0 0.0
    %3033 = vmatpush1.msra.mxu0 0.0
    %3034 = vmatprep.subr.mxu0 0.0
    %3035 = vmatpush1.msra.mxu0 0.0
    %3036 = vmatprep.subr.mxu0 0.0
    %3037 = vmatpush1.msra.mxu0 0.0
    %3038 = vmatprep.subr.mxu0 0.0
    %3039 = vmatpush1.msra.mxu0 0.0
    %3040 = vmatprep.subr.mxu0 0.0
    %3041 = vmatpush1.msra.mxu0 0.0
    %3042 = vmatprep.subr.mxu0 0.0
    %3043 = vmatpush1.msra.mxu0 0.0
    %3044 = vmatprep.subr.mxu0 0.0
    %3045 = vmatpush1.msra.mxu0 0.0
    %3046 = vmatprep.subr.mxu0 0.0
    %3047 = vmatpush1.msra.mxu0 0.0
    %3048 = vmatprep.subr.mxu0 0.0
    %3049 = vmatpush1.msra.mxu0 0.0
    %3050 = vmatprep.subr.mxu0 0.0
    %3051 = vmatpush1.msra.mxu0 0.0
    %3052 = vmatprep.subr.mxu0 0.0
    %3053 = vmatpush1.msra.mxu0 0.0
    %3054 = vmatprep.subr.mxu0 0.0
    %3055 = vmatpush1.msra.mxu0 0.0
    %3056 = vmatprep.subr.mxu0 0.0
    %3057 = vmatpush1.msra.mxu0 0.0
    %3058 = vmatprep.mubr.f32.mxu0 0.0
    %v3059 = vand.u32 %v2687, 4294901760
    %3060 = vmatmul.mubr.f32.gmra.mrb[0].mxu0 %v3059
    %v3061 = vpop.f32.mrb[0].mxu0
    %v3062 = vadd.f32 %v2987, %v3061
    %v3063 = vpop.f32.mrb[0].mxu0
    %3064 = vdwg.mxu0
    %3065 = vmatprep.subr.mxu0 0.0
    %3066 = vmatpush1.msra.mxu0 %v2528
    %3067 = vmatprep.subr.mxu0 0.0
    %3068 = vmatpush1.msra.mxu0 %v2529
    %3069 = vmatprep.subr.mxu0 0.0
    %3070 = vmatpush1.msra.mxu0 0.0
    %3071 = vmatprep.subr.mxu0 0.0
    %3072 = vmatpush1.msra.mxu0 0.0
    %3073 = vmatprep.subr.mxu0 0.0
    %3074 = vmatpush1.msra.mxu0 0.0
    %3075 = vmatprep.subr.mxu0 0.0
    %3076 = vmatpush1.msra.mxu0 0.0
    %3077 = vmatprep.subr.mxu0 0.0
    %3078 = vmatpush1.msra.mxu0 0.0
    %3079 = vmatprep.subr.mxu0 0.0
    %3080 = vmatpush1.msra.mxu0 0.0
    %3081 = vmatprep.subr.mxu0 0.0
    %3082 = vmatpush1.msra.mxu0 0.0
    %3083 = vmatprep.subr.mxu0 0.0
    %3084 = vmatpush1.msra.mxu0 0.0
    %3085 = vmatprep.subr.mxu0 0.0
    %3086 = vmatpush1.msra.mxu0 0.0
    %3087 = vmatprep.subr.mxu0 0.0
    %3088 = vmatpush1.msra.mxu0 0.0
    %3089 = vmatprep.subr.mxu0 0.0
    %3090 = vmatpush1.msra.mxu0 0.0
    %3091 = vmatprep.subr.mxu0 0.0
    %3092 = vmatpush1.msra.mxu0 0.0
    %3093 = vmatprep.subr.mxu0 0.0
    %3094 = vmatpush1.msra.mxu0 0.0
    %3095 = vmatprep.subr.mxu0 0.0
    %3096 = vmatpush1.msra.mxu0 0.0
    %3097 = vmatprep.subr.mxu0 0.0
    %3098 = vmatpush1.msra.mxu0 0.0
    %3099 = vmatprep.subr.mxu0 0.0
    %3100 = vmatpush1.msra.mxu0 0.0
    %3101 = vmatprep.subr.mxu0 0.0
    %3102 = vmatpush1.msra.mxu0 0.0
    %3103 = vmatprep.subr.mxu0 0.0
    %3104 = vmatpush1.msra.mxu0 0.0
    %3105 = vmatprep.subr.mxu0 0.0
    %3106 = vmatpush1.msra.mxu0 0.0
    %3107 = vmatprep.subr.mxu0 0.0
    %3108 = vmatpush1.msra.mxu0 0.0
    %3109 = vmatprep.subr.mxu0 0.0
    %3110 = vmatpush1.msra.mxu0 0.0
    %3111 = vmatprep.subr.mxu0 0.0
    %3112 = vmatpush1.msra.mxu0 0.0
    %3113 = vmatprep.subr.mxu0 0.0
    %3114 = vmatpush1.msra.mxu0 0.0
    %3115 = vmatprep.subr.mxu0 0.0
    %3116 = vmatpush1.msra.mxu0 0.0
    %3117 = vmatprep.subr.mxu0 0.0
    %3118 = vmatpush1.msra.mxu0 0.0
    %3119 = vmatprep.subr.mxu0 0.0
    %3120 = vmatpush1.msra.mxu0 0.0
    %3121 = vmatprep.subr.mxu0 0.0
    %3122 = vmatpush1.msra.mxu0 0.0
    %3123 = vmatprep.subr.mxu0 0.0
    %3124 = vmatpush1.msra.mxu0 0.0
    %3125 = vmatprep.subr.mxu0 0.0
    %3126 = vmatpush1.msra.mxu0 0.0
    %3127 = vmatprep.subr.mxu0 0.0
    %3128 = vmatpush1.msra.mxu0 0.0
    %3129 = vmatprep.mubr.f32.mxu0 0.0
    %v3130 = vand.u32 %v2687, 4294901760
    %3131 = vmatmul.mubr.f32.gmra.mrb[0].mxu0 %v3130
    %v3132 = vpop.f32.mrb[0].mxu0
    %v3133 = vadd.f32 %v3062, %v3132
    %v3134 = vpop.f32.mrb[0].mxu0
    %3135 = vdwg.mxu0
    %3136 = vmatprep.subr.mxu0 0.0
    %3137 = vmatpush1.msra.mxu0 %v2533
    %3138 = vmatprep.subr.mxu0 0.0
    %3139 = vmatpush1.msra.mxu0 %v2534
    %3140 = vmatprep.subr.mxu0 0.0
    %3141 = vmatpush1.msra.mxu0 0.0
    %3142 = vmatprep.subr.mxu0 0.0
    %3143 = vmatpush1.msra.mxu0 0.0
    %3144 = vmatprep.subr.mxu0 0.0
    %3145 = vmatpush1.msra.mxu0 0.0
    %3146 = vmatprep.subr.mxu0 0.0
    %3147 = vmatpush1.msra.mxu0 0.0
    %3148 = vmatprep.subr.mxu0 0.0
    %3149 = vmatpush1.msra.mxu0 0.0
    %3150 = vmatprep.subr.mxu0 0.0
    %3151 = vmatpush1.msra.mxu0 0.0
    %3152 = vmatprep.subr.mxu0 0.0
    %3153 = vmatpush1.msra.mxu0 0.0
    %3154 = vmatprep.subr.mxu0 0.0
    %3155 = vmatpush1.msra.mxu0 0.0
    %3156 = vmatprep.subr.mxu0 0.0
    %3157 = vmatpush1.msra.mxu0 0.0
    %3158 = vmatprep.subr.mxu0 0.0
    %3159 = vmatpush1.msra.mxu0 0.0
    %3160 = vmatprep.subr.mxu0 0.0
    %3161 = vmatpush1.msra.mxu0 0.0
    %3162 = vmatprep.subr.mxu0 0.0
    %3163 = vmatpush1.msra.mxu0 0.0
    %3164 = vmatprep.subr.mxu0 0.0
    %3165 = vmatpush1.msra.mxu0 0.0
    %3166 = vmatprep.subr.mxu0 0.0
    %3167 = vmatpush1.msra.mxu0 0.0
    %3168 = vmatprep.subr.mxu0 0.0
    %3169 = vmatpush1.msra.mxu0 0.0
    %3170 = vmatprep.subr.mxu0 0.0
    %3171 = vmatpush1.msra.mxu0 0.0
    %3172 = vmatprep.subr.mxu0 0.0
    %3173 = vmatpush1.msra.mxu0 0.0
    %3174 = vmatprep.subr.mxu0 0.0
    %3175 = vmatpush1.msra.mxu0 0.0
    %3176 = vmatprep.subr.mxu0 0.0
    %3177 = vmatpush1.msra.mxu0 0.0
    %3178 = vmatprep.subr.mxu0 0.0
    %3179 = vmatpush1.msra.mxu0 0.0
    %3180 = vmatprep.subr.mxu0 0.0
    %3181 = vmatpush1.msra.mxu0 0.0
    %3182 = vmatprep.subr.mxu0 0.0
    %3183 = vmatpush1.msra.mxu0 0.0
    %3184 = vmatprep.subr.mxu0 0.0
    %3185 = vmatpush1.msra.mxu0 0.0
    %3186 = vmatprep.subr.mxu0 0.0
    %3187 = vmatpush1.msra.mxu0 0.0
    %3188 = vmatprep.subr.mxu0 0.0
    %3189 = vmatpush1.msra.mxu0 0.0
    %3190 = vmatprep.subr.mxu0 0.0
    %3191 = vmatpush1.msra.mxu0 0.0
    %3192 = vmatprep.subr.mxu0 0.0
    %3193 = vmatpush1.msra.mxu0 0.0
    %3194 = vmatprep.subr.mxu0 0.0
    %3195 = vmatpush1.msra.mxu0 0.0
    %3196 = vmatprep.subr.mxu0 0.0
    %3197 = vmatpush1.msra.mxu0 0.0
    %3198 = vmatprep.subr.mxu0 0.0
    %3199 = vmatpush1.msra.mxu0 0.0
    %3200 = vmatprep.mubr.f32.mxu0 0.0
    %v3201 = vand.u32 %v2687, 4294901760
    %v3202 = vsub.f32 %v2687, %v3201
    %v3203 = vand.u32 %v3202, 4294901760
    %v3204 = vsub.f32 %v3202, %v3203
    %v3205 = vand.u32 %v3204, 4294901760
    %3206 = vmatmul.mubr.f32.gmra.mrb[0].mxu0 %v3205
    %v3207 = vpop.f32.mrb[0].mxu0
    %v3208 = vadd.f32 0.0, %v3207
    %v3209 = vpop.f32.mrb[0].mxu0
    %3210 = vdwg.mxu0
    %3211 = vmatprep.subr.mxu0 0.0
    %v3212 = vsub.f32 %v2533, %v2533
    %v3213 = vand.u32 %v3212, 4294901760
    %v3214 = vsub.f32 %v3212, %v3213
    %v3215 = vand.u32 %v3214, 4294901760
    %3216 = vmatpush1.msra.mxu0 %v3215
    %3217 = vmatprep.subr.mxu0 0.0
    %v3218 = vsub.f32 %v2534, %v2534
    %v3219 = vand.u32 %v3218, 4294901760
    %v3220 = vsub.f32 %v3218, %v3219
    %v3221 = vand.u32 %v3220, 4294901760
    %3222 = vmatpush1.msra.mxu0 %v3221
    %3223 = vmatprep.subr.mxu0 0.0
    %3224 = vmatpush1.msra.mxu0 0.0
    %3225 = vmatprep.subr.mxu0 0.0
    %3226 = vmatpush1.msra.mxu0 0.0
    %3227 = vmatprep.subr.mxu0 0.0
    %3228 = vmatpush1.msra.mxu0 0.0
    %3229 = vmatprep.subr.mxu0 0.0
    %3230 = vmatpush1.msra.mxu0 0.0
    %3231 = vmatprep.subr.mxu0 0.0
    %3232 = vmatpush1.msra.mxu0 0.0
    %3233 = vmatprep.subr.mxu0 0.0
    %3234 = vmatpush1.msra.mxu0 0.0
    %3235 = vmatprep.subr.mxu0 0.0
    %3236 = vmatpush1.msra.mxu0 0.0
    %3237 = vmatprep.subr.mxu0 0.0
    %3238 = vmatpush1.msra.mxu0 0.0
    %3239 = vmatprep.subr.mxu0 0.0
    %3240 = vmatpush1.msra.mxu0 0.0
    %3241 = vmatprep.subr.mxu0 0.0
    %3242 = vmatpush1.msra.mxu0 0.0
    %3243 = vmatprep.subr.mxu0 0.0
    %3244 = vmatpush1.msra.mxu0 0.0
    %3245 = vmatprep.subr.mxu0 0.0
    %3246 = vmatpush1.msra.mxu0 0.0
    %3247 = vmatprep.subr.mxu0 0.0
    %3248 = vmatpush1.msra.mxu0 0.0
    %3249 = vmatprep.subr.mxu0 0.0
    %3250 = vmatpush1.msra.mxu0 0.0
    %3251 = vmatprep.subr.mxu0 0.0
    %3252 = vmatpush1.msra.mxu0 0.0
    %3253 = vmatprep.subr.mxu0 0.0
    %3254 = vmatpush1.msra.mxu0 0.0
    %3255 = vmatprep.subr.mxu0 0.0
    %3256 = vmatpush1.msra.mxu0 0.0
    %3257 = vmatprep.subr.mxu0 0.0
    %3258 = vmatpush1.msra.mxu0 0.0
    %3259 = vmatprep.subr.mxu0 0.0
    %3260 = vmatpush1.msra.mxu0 0.0
    %3261 = vmatprep.subr.mxu0 0.0
    %3262 = vmatpush1.msra.mxu0 0.0
    %3263 = vmatprep.subr.mxu0 0.0
    %3264 = vmatpush1.msra.mxu0 0.0
    %3265 = vmatprep.subr.mxu0 0.0
    %3266 = vmatpush1.msra.mxu0 0.0
    %3267 = vmatprep.subr.mxu0 0.0
    %3268 = vmatpush1.msra.mxu0 0.0
    %3269 = vmatprep.subr.mxu0 0.0
    %3270 = vmatpush1.msra.mxu0 0.0
    %3271 = vmatprep.subr.mxu0 0.0
    %3272 = vmatpush1.msra.mxu0 0.0
    %3273 = vmatprep.subr.mxu0 0.0
    %3274 = vmatpush1.msra.mxu0 0.0
    %3275 = vmatprep.subr.mxu0 0.0
    %3276 = vmatpush1.msra.mxu0 0.0
    %3277 = vmatprep.subr.mxu0 0.0
    %3278 = vmatpush1.msra.mxu0 0.0
    %3279 = vmatprep.subr.mxu0 0.0
    %3280 = vmatpush1.msra.mxu0 0.0
    %3281 = vmatprep.subr.mxu0 0.0
    %3282 = vmatpush1.msra.mxu0 0.0
    %3283 = vmatprep.mubr.f32.mxu0 0.0
    %v3284 = vand.u32 %v2687, 4294901760
    %3285 = vmatmul.mubr.f32.gmra.mrb[0].mxu0 %v3284
    %v3286 = vpop.f32.mrb[0].mxu0
    %v3287 = vadd.f32 %v3208, %v3286
    %v3288 = vpop.f32.mrb[0].mxu0
    %3289 = vdwg.mxu0
    %3290 = vmatprep.subr.mxu0 0.0
    %v3291 = vsub.f32 %v2533, %v2533
    %3292 = vmatpush1.msra.mxu0 %v3291
    %3293 = vmatprep.subr.mxu0 0.0
    %v3294 = vsub.f32 %v2534, %v2534
    %3295 = vmatpush1.msra.mxu0 %v3294
    %3296 = vmatprep.subr.mxu0 0.0
    %3297 = vmatpush1.msra.mxu0 0.0
    %3298 = vmatprep.subr.mxu0 0.0
    %3299 = vmatpush1.msra.mxu0 0.0
    %3300 = vmatprep.subr.mxu0 0.0
    %3301 = vmatpush1.msra.mxu0 0.0
    %3302 = vmatprep.subr.mxu0 0.0
    %3303 = vmatpush1.msra.mxu0 0.0
    %3304 = vmatprep.subr.mxu0 0.0
    %3305 = vmatpush1.msra.mxu0 0.0
    %3306 = vmatprep.subr.mxu0 0.0
    %3307 = vmatpush1.msra.mxu0 0.0
    %3308 = vmatprep.subr.mxu0 0.0
    %3309 = vmatpush1.msra.mxu0 0.0
    %3310 = vmatprep.subr.mxu0 0.0
    %3311 = vmatpush1.msra.mxu0 0.0
    %3312 = vmatprep.subr.mxu0 0.0
    %3313 = vmatpush1.msra.mxu0 0.0
    %3314 = vmatprep.subr.mxu0 0.0
    %3315 = vmatpush1.msra.mxu0 0.0
    %3316 = vmatprep.subr.mxu0 0.0
    %3317 = vmatpush1.msra.mxu0 0.0
    %3318 = vmatprep.subr.mxu0 0.0
    %3319 = vmatpush1.msra.mxu0 0.0
    %3320 = vmatprep.subr.mxu0 0.0
    %3321 = vmatpush1.msra.mxu0 0.0
    %3322 = vmatprep.subr.mxu0 0.0
    %3323 = vmatpush1.msra.mxu0 0.0
    %3324 = vmatprep.subr.mxu0 0.0
    %3325 = vmatpush1.msra.mxu0 0.0
    %3326 = vmatprep.subr.mxu0 0.0
    %3327 = vmatpush1.msra.mxu0 0.0
    %3328 = vmatprep.subr.mxu0 0.0
    %3329 = vmatpush1.msra.mxu0 0.0
    %3330 = vmatprep.subr.mxu0 0.0
    %3331 = vmatpush1.msra.mxu0 0.0
    %3332 = vmatprep.subr.mxu0 0.0
    %3333 = vmatpush1.msra.mxu0 0.0
    %3334 = vmatprep.subr.mxu0 0.0
    %3335 = vmatpush1.msra.mxu0 0.0
    %3336 = vmatprep.subr.mxu0 0.0
    %3337 = vmatpush1.msra.mxu0 0.0
    %3338 = vmatprep.subr.mxu0 0.0
    %3339 = vmatpush1.msra.mxu0 0.0
    %3340 = vmatprep.subr.mxu0 0.0
    %3341 = vmatpush1.msra.mxu0 0.0
    %3342 = vmatprep.subr.mxu0 0.0
    %3343 = vmatpush1.msra.mxu0 0.0
    %3344 = vmatprep.subr.mxu0 0.0
    %3345 = vmatpush1.msra.mxu0 0.0
    %3346 = vmatprep.subr.mxu0 0.0
    %3347 = vmatpush1.msra.mxu0 0.0
    %3348 = vmatprep.subr.mxu0 0.0
    %3349 = vmatpush1.msra.mxu0 0.0
    %3350 = vmatprep.subr.mxu0 0.0
    %3351 = vmatpush1.msra.mxu0 0.0
    %3352 = vmatprep.subr.mxu0 0.0
    %3353 = vmatpush1.msra.mxu0 0.0
    %3354 = vmatprep.subr.mxu0 0.0
    %3355 = vmatpush1.msra.mxu0 0.0
    %3356 = vmatprep.mubr.f32.mxu0 0.0
    %v3357 = vand.u32 %v2687, 4294901760
    %v3358 = vsub.f32 %v2687, %v3357
    %3359 = vmatmul.mubr.f32.gmra.mrb[0].mxu0 %v3358
    %v3360 = vpop.f32.mrb[0].mxu0
    %v3361 = vadd.f32 %v3287, %v3360
    %v3362 = vpop.f32.mrb[0].mxu0
    %3363 = vdwg.mxu0
    %3364 = vmatprep.subr.mxu0 0.0
    %3365 = vmatpush1.msra.mxu0 %v2533
    %3366 = vmatprep.subr.mxu0 0.0
    %3367 = vmatpush1.msra.mxu0 %v2534
    %3368 = vmatprep.subr.mxu0 0.0
    %3369 = vmatpush1.msra.mxu0 0.0
    %3370 = vmatprep.subr.mxu0 0.0
    %3371 = vmatpush1.msra.mxu0 0.0
    %3372 = vmatprep.subr.mxu0 0.0
    %3373 = vmatpush1.msra.mxu0 0.0
    %3374 = vmatprep.subr.mxu0 0.0
    %3375 = vmatpush1.msra.mxu0 0.0
    %3376 = vmatprep.subr.mxu0 0.0
    %3377 = vmatpush1.msra.mxu0 0.0
    %3378 = vmatprep.subr.mxu0 0.0
    %3379 = vmatpush1.msra.mxu0 0.0
    %3380 = vmatprep.subr.mxu0 0.0
    %3381 = vmatpush1.msra.mxu0 0.0
    %3382 = vmatprep.subr.mxu0 0.0
    %3383 = vmatpush1.msra.mxu0 0.0
    %3384 = vmatprep.subr.mxu0 0.0
    %3385 = vmatpush1.msra.mxu0 0.0
    %3386 = vmatprep.subr.mxu0 0.0
    %3387 = vmatpush1.msra.mxu0 0.0
    %3388 = vmatprep.subr.mxu0 0.0
    %3389 = vmatpush1.msra.mxu0 0.0
    %3390 = vmatprep.subr.mxu0 0.0
    %3391 = vmatpush1.msra.mxu0 0.0
    %3392 = vmatprep.subr.mxu0 0.0
    %3393 = vmatpush1.msra.mxu0 0.0
    %3394 = vmatprep.subr.mxu0 0.0
    %3395 = vmatpush1.msra.mxu0 0.0
    %3396 = vmatprep.subr.mxu0 0.0
    %3397 = vmatpush1.msra.mxu0 0.0
    %3398 = vmatprep.subr.mxu0 0.0
    %3399 = vmatpush1.msra.mxu0 0.0
    %3400 = vmatprep.subr.mxu0 0.0
    %3401 = vmatpush1.msra.mxu0 0.0
    %3402 = vmatprep.subr.mxu0 0.0
    %3403 = vmatpush1.msra.mxu0 0.0
    %3404 = vmatprep.subr.mxu0 0.0
    %3405 = vmatpush1.msra.mxu0 0.0
    %3406 = vmatprep.subr.mxu0 0.0
    %3407 = vmatpush1.msra.mxu0 0.0
    %3408 = vmatprep.subr.mxu0 0.0
    %3409 = vmatpush1.msra.mxu0 0.0
    %3410 = vmatprep.subr.mxu0 0.0
    %3411 = vmatpush1.msra.mxu0 0.0
    %3412 = vmatprep.subr.mxu0 0.0
    %3413 = vmatpush1.msra.mxu0 0.0
    %3414 = vmatprep.subr.mxu0 0.0
    %3415 = vmatpush1.msra.mxu0 0.0
    %3416 = vmatprep.subr.mxu0 0.0
    %3417 = vmatpush1.msra.mxu0 0.0
    %3418 = vmatprep.subr.mxu0 0.0
    %3419 = vmatpush1.msra.mxu0 0.0
    %3420 = vmatprep.subr.mxu0 0.0
    %3421 = vmatpush1.msra.mxu0 0.0
    %3422 = vmatprep.subr.mxu0 0.0
    %3423 = vmatpush1.msra.mxu0 0.0
    %3424 = vmatprep.subr.mxu0 0.0
    %3425 = vmatpush1.msra.mxu0 0.0
    %3426 = vmatprep.subr.mxu0 0.0
    %3427 = vmatpush1.msra.mxu0 0.0
    %3428 = vmatprep.mubr.f32.mxu0 0.0
    %v3429 = vand.u32 %v2687, 4294901760
    %v3430 = vsub.f32 %v2687, %v3429
    %v3431 = vand.u32 %v3430, 4294901760
    %3432 = vmatmul.mubr.f32.gmra.mrb[0].mxu0 %v3431
    %v3433 = vpop.f32.mrb[0].mxu0
    %v3434 = vadd.f32 %v3361, %v3433
    %v3435 = vpop.f32.mrb[0].mxu0
    %3436 = vdwg.mxu0
    %3437 = vmatprep.subr.mxu0 0.0
    %v3438 = vsub.f32 %v2533, %v2533
    %v3439 = vand.u32 %v3438, 4294901760
    %3440 = vmatpush1.msra.mxu0 %v3439
    %3441 = vmatprep.subr.mxu0 0.0
    %v3442 = vsub.f32 %v2534, %v2534
    %v3443 = vand.u32 %v3442, 4294901760
    %3444 = vmatpush1.msra.mxu0 %v3443
    %3445 = vmatprep.subr.mxu0 0.0
    %3446 = vmatpush1.msra.mxu0 0.0
    %3447 = vmatprep.subr.mxu0 0.0
    %3448 = vmatpush1.msra.mxu0 0.0
    %3449 = vmatprep.subr.mxu0 0.0
    %3450 = vmatpush1.msra.mxu0 0.0
    %3451 = vmatprep.subr.mxu0 0.0
    %3452 = vmatpush1.msra.mxu0 0.0
    %3453 = vmatprep.subr.mxu0 0.0
    %3454 = vmatpush1.msra.mxu0 0.0
    %3455 = vmatprep.subr.mxu0 0.0
    %3456 = vmatpush1.msra.mxu0 0.0
    %3457 = vmatprep.subr.mxu0 0.0
    %3458 = vmatpush1.msra.mxu0 0.0
    %3459 = vmatprep.subr.mxu0 0.0
    %3460 = vmatpush1.msra.mxu0 0.0
    %3461 = vmatprep.subr.mxu0 0.0
    %3462 = vmatpush1.msra.mxu0 0.0
    %3463 = vmatprep.subr.mxu0 0.0
    %3464 = vmatpush1.msra.mxu0 0.0
    %3465 = vmatprep.subr.mxu0 0.0
    %3466 = vmatpush1.msra.mxu0 0.0
    %3467 = vmatprep.subr.mxu0 0.0
    %3468 = vmatpush1.msra.mxu0 0.0
    %3469 = vmatprep.subr.mxu0 0.0
    %3470 = vmatpush1.msra.mxu0 0.0
    %3471 = vmatprep.subr.mxu0 0.0
    %3472 = vmatpush1.msra.mxu0 0.0
    %3473 = vmatprep.subr.mxu0 0.0
    %3474 = vmatpush1.msra.mxu0 0.0
    %3475 = vmatprep.subr.mxu0 0.0
    %3476 = vmatpush1.msra.mxu0 0.0
    %3477 = vmatprep.subr.mxu0 0.0
    %3478 = vmatpush1.msra.mxu0 0.0
    %3479 = vmatprep.subr.mxu0 0.0
    %3480 = vmatpush1.msra.mxu0 0.0
    %3481 = vmatprep.subr.mxu0 0.0
    %3482 = vmatpush1.msra.mxu0 0.0
    %3483 = vmatprep.subr.mxu0 0.0
    %3484 = vmatpush1.msra.mxu0 0.0
    %3485 = vmatprep.subr.mxu0 0.0
    %3486 = vmatpush1.msra.mxu0 0.0
    %3487 = vmatprep.subr.mxu0 0.0
    %3488 = vmatpush1.msra.mxu0 0.0
    %3489 = vmatprep.subr.mxu0 0.0
    %3490 = vmatpush1.msra.mxu0 0.0
    %3491 = vmatprep.subr.mxu0 0.0
    %3492 = vmatpush1.msra.mxu0 0.0
    %3493 = vmatprep.subr.mxu0 0.0
    %3494 = vmatpush1.msra.mxu0 0.0
    %3495 = vmatprep.subr.mxu0 0.0
    %3496 = vmatpush1.msra.mxu0 0.0
    %3497 = vmatprep.subr.mxu0 0.0
    %3498 = vmatpush1.msra.mxu0 0.0
    %3499 = vmatprep.subr.mxu0 0.0
    %3500 = vmatpush1.msra.mxu0 0.0
    %3501 = vmatprep.subr.mxu0 0.0
    %3502 = vmatpush1.msra.mxu0 0.0
    %3503 = vmatprep.subr.mxu0 0.0
    %3504 = vmatpush1.msra.mxu0 0.0
    %3505 = vmatprep.mubr.f32.mxu0 0.0
    %v3506 = vand.u32 %v2687, 4294901760
    %3507 = vmatmul.mubr.f32.gmra.mrb[0].mxu0 %v3506
    %v3508 = vpop.f32.mrb[0].mxu0
    %v3509 = vadd.f32 %v3434, %v3508
    %v3510 = vpop.f32.mrb[0].mxu0
    %3511 = vdwg.mxu0
    %3512 = vmatprep.subr.mxu0 0.0
    %3513 = vmatpush1.msra.mxu0 %v2533
    %3514 = vmatprep.subr.mxu0 0.0
    %3515 = vmatpush1.msra.mxu0 %v2534
    %3516 = vmatprep.subr.mxu0 0.0
    %3517 = vmatpush1.msra.mxu0 0.0
    %3518 = vmatprep.subr.mxu0 0.0
    %3519 = vmatpush1.msra.mxu0 0.0
    %3520 = vmatprep.subr.mxu0 0.0
    %3521 = vmatpush1.msra.mxu0 0.0
    %3522 = vmatprep.subr.mxu0 0.0
    %3523 = vmatpush1.msra.mxu0 0.0
    %3524 = vmatprep.subr.mxu0 0.0
    %3525 = vmatpush1.msra.mxu0 0.0
    %3526 = vmatprep.subr.mxu0 0.0
    %3527 = vmatpush1.msra.mxu0 0.0
    %3528 = vmatprep.subr.mxu0 0.0
    %3529 = vmatpush1.msra.mxu0 0.0
    %3530 = vmatprep.subr.mxu0 0.0
    %3531 = vmatpush1.msra.mxu0 0.0
    %3532 = vmatprep.subr.mxu0 0.0
    %3533 = vmatpush1.msra.mxu0 0.0
    %3534 = vmatprep.subr.mxu0 0.0
    %3535 = vmatpush1.msra.mxu0 0.0
    %3536 = vmatprep.subr.mxu0 0.0
    %3537 = vmatpush1.msra.mxu0 0.0
    %3538 = vmatprep.subr.mxu0 0.0
    %3539 = vmatpush1.msra.mxu0 0.0
    %3540 = vmatprep.subr.mxu0 0.0
    %3541 = vmatpush1.msra.mxu0 0.0
    %3542 = vmatprep.subr.mxu0 0.0
    %3543 = vmatpush1.msra.mxu0 0.0
    %3544 = vmatprep.subr.mxu0 0.0
    %3545 = vmatpush1.msra.mxu0 0.0
    %3546 = vmatprep.subr.mxu0 0.0
    %3547 = vmatpush1.msra.mxu0 0.0
    %3548 = vmatprep.subr.mxu0 0.0
    %3549 = vmatpush1.msra.mxu0 0.0
    %3550 = vmatprep.subr.mxu0 0.0
    %3551 = vmatpush1.msra.mxu0 0.0
    %3552 = vmatprep.subr.mxu0 0.0
    %3553 = vmatpush1.msra.mxu0 0.0
    %3554 = vmatprep.subr.mxu0 0.0
    %3555 = vmatpush1.msra.mxu0 0.0
    %3556 = vmatprep.subr.mxu0 0.0
    %3557 = vmatpush1.msra.mxu0 0.0
    %3558 = vmatprep.subr.mxu0 0.0
    %3559 = vmatpush1.msra.mxu0 0.0
    %3560 = vmatprep.subr.mxu0 0.0
    %3561 = vmatpush1.msra.mxu0 0.0
    %3562 = vmatprep.subr.mxu0 0.0
    %3563 = vmatpush1.msra.mxu0 0.0
    %3564 = vmatprep.subr.mxu0 0.0
    %3565 = vmatpush1.msra.mxu0 0.0
    %3566 = vmatprep.subr.mxu0 0.0
    %3567 = vmatpush1.msra.mxu0 0.0
    %3568 = vmatprep.subr.mxu0 0.0
    %3569 = vmatpush1.msra.mxu0 0.0
    %3570 = vmatprep.subr.mxu0 0.0
    %3571 = vmatpush1.msra.mxu0 0.0
    %3572 = vmatprep.subr.mxu0 0.0
    %3573 = vmatpush1.msra.mxu0 0.0
    %3574 = vmatprep.subr.mxu0 0.0
    %3575 = vmatpush1.msra.mxu0 0.0
    %3576 = vmatprep.mubr.f32.mxu0 0.0
    %v3577 = vand.u32 %v2687, 4294901760
    %3578 = vmatmul.mubr.f32.gmra.mrb[0].mxu0 %v3577
    %v3579 = vpop.f32.mrb[0].mxu0
    %v3580 = vadd.f32 %v3509, %v3579
    %v3581 = vpop.f32.mrb[0].mxu0
    %3582 = vdwg.mxu0
    %v3583 = vmax.f32 %v3133, %v3580
    %v3586 = vunpack.c.l.s4 1966171168
    %v3587 = vunpack.c.0.s8 %v3586
    %v3588 = vlaneseq
    %v3589 = vshrl.u32 %v3588, 7
    %v3590 = vsub.s32 %v3587, %v3589
    %v3591 = vrot.slane %v3583, %v3590
    %v3592 = vcombine.high %v3591, %v3591
    %v3594 = vunpack.c.l.s4 1966171168
    %v3595 = vunpack.c.0.s8 %v3594
    %v3596 = vlaneseq
    %v3597 = vshrl.u32 %v3596, 7
    %v3598 = vsub.s32 %v3595, %v3597
    %v3599 = vrot.slane %v3591, %v3598
    %v3601 = vunpack.c.l.s4 1966171168
    %v3602 = vunpack.c.0.s8 %v3601
    %v3603 = vlaneseq
    %v3604 = vshrl.u32 %v3603, 7
    %v3605 = vsub.s32 %v3602, %v3604
    %v3606 = vrot.slane %v3592, %v3605
    %vm3609 = vcmask 57344
    %3610 = vst.msk [vmem:[#allocation13] sm:$0x1] %vm3609, %v3599
    %3611 = vst.msk [vmem:[#allocation13 + $0x4] sm:$0x1] %vm3609, %v3606
    %s3612 = sld [smem:[#allocation8 + $0x1]]
    %v3613 = vstv %s3612
    %v3614 = vadd.f32 %v2482, %v3613
    %v3615 = vadd.f32 %v2483, %v3613
    %vm3616 = vcmp.gt.f32.partialorder %v3614, 0.0
    %vm3617 = vcmp.gt.f32.partialorder %v3615, 0.0
    %v3618 = vmin.f32 %v3614, 0.0
    %v3619 = vmin.f32 %v3615, 0.0
    %v3620 = vmul.f32 %v3618, 1.442695
    %v3621 = vpow.pop %v3620
    %v3622 = vmul.f32 %v3619, 1.442695
    %v3623 = vpow.pop %v3622
    %v3624 = vsub.f32 %v3621, 1.0
    %v3625 = vsub.f32 %v3623, 1.0
    %v3626 = vsel %vm3616, %v3614, %v3624
    %v3627 = vsel %vm3617, %v3615, %v3625
    %v3630 = vlaneseq
    %v3631 = vshrl.u32 %v3630, 7
    %v3632 = vsub.s32 0, %v3631
    %v3633 = vrot.slane %v3626, %v3632
    %v3634 = vlaneseq
    %v3635 = vshrl.u32 %v3634, 7
    %v3636 = vsub.s32 4, %v3635
    %v3637 = vrot.slane %v3626, %v3636
    %v3638 = vlaneseq
    %v3639 = vshrl.u32 %v3638, 7
    %v3640 = vsub.s32 0, %v3639
    %v3641 = vrot.slane %v3627, %v3640
    %v3642 = vlaneseq
    %v3643 = vshrl.u32 %v3642, 7
    %v3644 = vsub.s32 4, %v3643
    %v3645 = vrot.slane %v3627, %v3644
    %v3646 = vsel %vm2569, %v3641, %v3633
    %v3647 = vsel %vm2569, %v3645, %v3637
    %3648 = vrot.lane.b32.xlu0 %v3646, 4
    %v3649 = vpop.permute.xlu0 %3648
    %3650 = vrot.lane.b32.xlu0 %v3647, 4
    %v3651 = vpop.permute.xlu0 %3650
    %v3652 = vsel %vm2576, %v3649, %v3651
    %v3654 = vsel %vm2579, %v3652, 0.0
    %3655 = vadd.xlane.f32.xlu0 %v3654
    %v3656 = vpop.xlane.xlu0 %3655
    %v3657 = vrot.slane %v3656, 4
    %v3658 = vadd.f32 %v3656, %v3657
    %v3659 = vrot.slane %v3658, 2
    %v3660 = vadd.f32 %v3658, %v3659
    %v3661 = vrot.slane %v3660, 1
    %v3662 = vadd.f32 %v3660, %v3661
    %s3663 = vtos %v3662
    %s3664 = smul.f32 %s3663, 0.03125
    %v3665 = vstv %s3664
    %v3666 = vsub.f32 %v3626, %v3665
    %v3667 = vsub.f32 %v3627, %v3665
    %v3668 = vmul.f32 %v3666, %v3666
    %v3669 = vmul.f32 %v3667, %v3667
    %v3672 = vlaneseq
    %v3673 = vshrl.u32 %v3672, 7
    %v3674 = vsub.s32 0, %v3673
    %v3675 = vrot.slane %v3668, %v3674
    %v3676 = vlaneseq
    %v3677 = vshrl.u32 %v3676, 7
    %v3678 = vsub.s32 4, %v3677
    %v3679 = vrot.slane %v3668, %v3678
    %v3680 = vlaneseq
    %v3681 = vshrl.u32 %v3680, 7
    %v3682 = vsub.s32 0, %v3681
    %v3683 = vrot.slane %v3669, %v3682
    %v3684 = vlaneseq
    %v3685 = vshrl.u32 %v3684, 7
    %v3686 = vsub.s32 4, %v3685
    %v3687 = vrot.slane %v3669, %v3686
    %v3688 = vsel %vm2569, %v3683, %v3675
    %v3689 = vsel %vm2569, %v3687, %v3679
    %3690 = vrot.lane.b32.xlu0 %v3688, 4
    %v3691 = vpop.permute.xlu0 %3690
    %3692 = vrot.lane.b32.xlu0 %v3689, 4
    %v3693 = vpop.permute.xlu0 %3692
    %v3694 = vsel %vm2576, %v3691, %v3693
    %v3696 = vsel %vm2579, %v3694, 0.0
    %3697 = vadd.xlane.f32.xlu0 %v3696
    %v3698 = vpop.xlane.xlu0 %3697
    %v3699 = vrot.slane %v3698, 4
    %v3700 = vadd.f32 %v3698, %v3699
    %v3701 = vrot.slane %v3700, 2
    %v3702 = vadd.f32 %v3700, %v3701
    %v3703 = vrot.slane %v3702, 1
    %v3704 = vadd.f32 %v3702, %v3703
    %s3705 = vtos %v3704
    %s3706 = smul.f32 %s3705, 0.03125
    %s3707 = sld [smem:[#allocation10 + $0x1]]
    %s3708 = sadd.f32 %s3706, 1e-05
    %v3709 = vstv %s3708
    %v3710 = vrsqrt.pop %v3709
    %s3711 = vtos %v3710
    %s3712 = smul.f32 %s3707, %s3711
    %v3713 = vstv %s3712
    %v3714 = vmul.f32 %v3666, %v3713
    %v3715 = vmul.f32 %v3667, %v3713
    %s3716 = sld [smem:[#allocation11 + $0x1]]
    %v3717 = vstv %s3716
    %v3718 = vadd.f32 %v3714, %v3717
    %v3719 = vadd.f32 %v3715, %v3717
    %v3722 = vlaneseq
    %v3723 = vshrl.u32 %v3722, 7
    %v3724 = vsub.s32 0, %v3723
    %v3725 = vrot.slane %v3718, %v3724
    %v3726 = vlaneseq
    %v3727 = vshrl.u32 %v3726, 7
    %v3728 = vsub.s32 4, %v3727
    %v3729 = vrot.slane %v3718, %v3728
    %v3730 = vlaneseq
    %v3731 = vshrl.u32 %v3730, 7
    %v3732 = vsub.s32 0, %v3731
    %v3733 = vrot.slane %v3719, %v3732
    %v3734 = vlaneseq
    %v3735 = vshrl.u32 %v3734, 7
    %v3736 = vsub.s32 4, %v3735
    %v3737 = vrot.slane %v3719, %v3736
    %3738 = vrot.lane.b32.xlu0 %v3725, 4
    %v3739 = vpop.permute.xlu0 %3738
    %3740 = vrot.lane.b32.xlu0 %v3729, 4
    %v3741 = vpop.permute.xlu0 %3740
    %3742 = vrot.lane.b32.xlu0 %v3733, 4
    %v3743 = vpop.permute.xlu0 %3742
    %3744 = vrot.lane.b32.xlu0 %v3737, 4
    %v3745 = vpop.permute.xlu0 %3744
    %v3746 = vsel %vm2576, %v3739, %v3741
    %v3747 = vsel %vm2576, %v3743, %v3745
    %3750 = vst.msk [vmem:[#allocation14 + $0x1] sm:$0x1] %vm2676, %v3746
    %3751 = vst.msk [vmem:[#allocation14 + $0x5] sm:$0x1] %vm2676, %v3747
    %v3752 = vsel %vm2569, %v3733, %v3725
    %v3753 = vsel %vm2569, %v3737, %v3729
    %3754 = vrot.lane.b32.xlu0 %v3752, 4
    %v3755 = vpop.permute.xlu0 %3754
    %3756 = vrot.lane.b32.xlu0 %v3753, 4
    %v3757 = vpop.permute.xlu0 %3756
    %v3758 = vsel %vm2576, %v3755, %v3757
    %v3759 = vsel %vm2686, %v3758, 0
    %3761 = vmatprep.subr.mxu0 0.0
    %3762 = vmatpush1.msra.mxu0 %v2528
    %3763 = vmatprep.subr.mxu0 0.0
    %3764 = vmatpush1.msra.mxu0 %v2529
    %3765 = vmatprep.subr.mxu0 0.0
    %3766 = vmatpush1.msra.mxu0 0.0
    %3767 = vmatprep.subr.mxu0 0.0
    %3768 = vmatpush1.msra.mxu0 0.0
    %3769 = vmatprep.subr.mxu0 0.0
    %3770 = vmatpush1.msra.mxu0 0.0
    %3771 = vmatprep.subr.mxu0 0.0
    %3772 = vmatpush1.msra.mxu0 0.0
    %3773 = vmatprep.subr.mxu0 0.0
    %3774 = vmatpush1.msra.mxu0 0.0
    %3775 = vmatprep.subr.mxu0 0.0
    %3776 = vmatpush1.msra.mxu0 0.0
    %3777 = vmatprep.subr.mxu0 0.0
    %3778 = vmatpush1.msra.mxu0 0.0
    %3779 = vmatprep.subr.mxu0 0.0
    %3780 = vmatpush1.msra.mxu0 0.0
    %3781 = vmatprep.subr.mxu0 0.0
    %3782 = vmatpush1.msra.mxu0 0.0
    %3783 = vmatprep.subr.mxu0 0.0
    %3784 = vmatpush1.msra.mxu0 0.0
    %3785 = vmatprep.subr.mxu0 0.0
    %3786 = vmatpush1.msra.mxu0 0.0
    %3787 = vmatprep.subr.mxu0 0.0
    %3788 = vmatpush1.msra.mxu0 0.0
    %3789 = vmatprep.subr.mxu0 0.0
    %3790 = vmatpush1.msra.mxu0 0.0
    %3791 = vmatprep.subr.mxu0 0.0
    %3792 = vmatpush1.msra.mxu0 0.0
    %3793 = vmatprep.subr.mxu0 0.0
    %3794 = vmatpush1.msra.mxu0 0.0
    %3795 = vmatprep.subr.mxu0 0.0
    %3796 = vmatpush1.msra.mxu0 0.0
    %3797 = vmatprep.subr.mxu0 0.0
    %3798 = vmatpush1.msra.mxu0 0.0
    %3799 = vmatprep.subr.mxu0 0.0
    %3800 = vmatpush1.msra.mxu0 0.0
    %3801 = vmatprep.subr.mxu0 0.0
    %3802 = vmatpush1.msra.mxu0 0.0
    %3803 = vmatprep.subr.mxu0 0.0
    %3804 = vmatpush1.msra.mxu0 0.0
    %3805 = vmatprep.subr.mxu0 0.0
    %3806 = vmatpush1.msra.mxu0 0.0
    %3807 = vmatprep.subr.mxu0 0.0
    %3808 = vmatpush1.msra.mxu0 0.0
    %3809 = vmatprep.subr.mxu0 0.0
    %3810 = vmatpush1.msra.mxu0 0.0
    %3811 = vmatprep.subr.mxu0 0.0
    %3812 = vmatpush1.msra.mxu0 0.0
    %3813 = vmatprep.subr.mxu0 0.0
    %3814 = vmatpush1.msra.mxu0 0.0
    %3815 = vmatprep.subr.mxu0 0.0
    %3816 = vmatpush1.msra.mxu0 0.0
    %3817 = vmatprep.subr.mxu0 0.0
    %3818 = vmatpush1.msra.mxu0 0.0
    %3819 = vmatprep.subr.mxu0 0.0
    %3820 = vmatpush1.msra.mxu0 0.0
    %3821 = vmatprep.subr.mxu0 0.0
    %3822 = vmatpush1.msra.mxu0 0.0
    %3823 = vmatprep.subr.mxu0 0.0
    %3824 = vmatpush1.msra.mxu0 0.0
    %3825 = vmatprep.mubr.f32.mxu0 0.0
    %v3826 = vand.u32 %v3759, 4294901760
    %v3827 = vsub.f32 %v3759, %v3826
    %v3828 = vand.u32 %v3827, 4294901760
    %v3829 = vsub.f32 %v3827, %v3828
    %v3830 = vand.u32 %v3829, 4294901760
    %3831 = vmatmul.mubr.f32.gmra.mrb[0].mxu0 %v3830
    %v3832 = vpop.f32.mrb[0].mxu0
    %v3833 = vadd.f32 0.0, %v3832
    %v3834 = vpop.f32.mrb[0].mxu0
    %3835 = vdwg.mxu0
    %3836 = vmatprep.subr.mxu0 0.0
    %v3837 = vsub.f32 %v2528, %v2528
    %v3838 = vand.u32 %v3837, 4294901760
    %v3839 = vsub.f32 %v3837, %v3838
    %v3840 = vand.u32 %v3839, 4294901760
    %3841 = vmatpush1.msra.mxu0 %v3840
    %3842 = vmatprep.subr.mxu0 0.0
    %v3843 = vsub.f32 %v2529, %v2529
    %v3844 = vand.u32 %v3843, 4294901760
    %v3845 = vsub.f32 %v3843, %v3844
    %v3846 = vand.u32 %v3845, 4294901760
    %3847 = vmatpush1.msra.mxu0 %v3846
    %3848 = vmatprep.subr.mxu0 0.0
    %3849 = vmatpush1.msra.mxu0 0.0
    %3850 = vmatprep.subr.mxu0 0.0
    %3851 = vmatpush1.msra.mxu0 0.0
    %3852 = vmatprep.subr.mxu0 0.0
    %3853 = vmatpush1.msra.mxu0 0.0
    %3854 = vmatprep.subr.mxu0 0.0
    %3855 = vmatpush1.msra.mxu0 0.0
    %3856 = vmatprep.subr.mxu0 0.0
    %3857 = vmatpush1.msra.mxu0 0.0
    %3858 = vmatprep.subr.mxu0 0.0
    %3859 = vmatpush1.msra.mxu0 0.0
    %3860 = vmatprep.subr.mxu0 0.0
    %3861 = vmatpush1.msra.mxu0 0.0
    %3862 = vmatprep.subr.mxu0 0.0
    %3863 = vmatpush1.msra.mxu0 0.0
    %3864 = vmatprep.subr.mxu0 0.0
    %3865 = vmatpush1.msra.mxu0 0.0
    %3866 = vmatprep.subr.mxu0 0.0
    %3867 = vmatpush1.msra.mxu0 0.0
    %3868 = vmatprep.subr.mxu0 0.0
    %3869 = vmatpush1.msra.mxu0 0.0
    %3870 = vmatprep.subr.mxu0 0.0
    %3871 = vmatpush1.msra.mxu0 0.0
    %3872 = vmatprep.subr.mxu0 0.0
    %3873 = vmatpush1.msra.mxu0 0.0
    %3874 = vmatprep.subr.mxu0 0.0
    %3875 = vmatpush1.msra.mxu0 0.0
    %3876 = vmatprep.subr.mxu0 0.0
    %3877 = vmatpush1.msra.mxu0 0.0
    %3878 = vmatprep.subr.mxu0 0.0
    %3879 = vmatpush1.msra.mxu0 0.0
    %3880 = vmatprep.subr.mxu0 0.0
    %3881 = vmatpush1.msra.mxu0 0.0
    %3882 = vmatprep.subr.mxu0 0.0
    %3883 = vmatpush1.msra.mxu0 0.0
    %3884 = vmatprep.subr.mxu0 0.0
    %3885 = vmatpush1.msra.mxu0 0.0
    %3886 = vmatprep.subr.mxu0 0.0
    %3887 = vmatpush1.msra.mxu0 0.0
    %3888 = vmatprep.subr.mxu0 0.0
    %3889 = vmatpush1.msra.mxu0 0.0
    %3890 = vmatprep.subr.mxu0 0.0
    %3891 = vmatpush1.msra.mxu0 0.0
    %3892 = vmatprep.subr.mxu0 0.0
    %3893 = vmatpush1.msra.mxu0 0.0
    %3894 = vmatprep.subr.mxu0 0.0
    %3895 = vmatpush1.msra.mxu0 0.0
    %3896 = vmatprep.subr.mxu0 0.0
    %3897 = vmatpush1.msra.mxu0 0.0
    %3898 = vmatprep.subr.mxu0 0.0
    %3899 = vmatpush1.msra.mxu0 0.0
    %3900 = vmatprep.subr.mxu0 0.0
    %3901 = vmatpush1.msra.mxu0 0.0
    %3902 = vmatprep.subr.mxu0 0.0
    %3903 = vmatpush1.msra.mxu0 0.0
    %3904 = vmatprep.subr.mxu0 0.0
    %3905 = vmatpush1.msra.mxu0 0.0
    %3906 = vmatprep.subr.mxu0 0.0
    %3907 = vmatpush1.msra.mxu0 0.0
    %3908 = vmatprep.mubr.f32.mxu0 0.0
    %v3909 = vand.u32 %v3759, 4294901760
    %3910 = vmatmul.mubr.f32.gmra.mrb[0].mxu0 %v3909
    %v3911 = vpop.f32.mrb[0].mxu0
    %v3912 = vadd.f32 %v3833, %v3911
    %v3913 = vpop.f32.mrb[0].mxu0
    %3914 = vdwg.mxu0
    %3915 = vmatprep.subr.mxu0 0.0
    %v3916 = vsub.f32 %v2528, %v2528
    %3917 = vmatpush1.msra.mxu0 %v3916
    %3918 = vmatprep.subr.mxu0 0.0
    %v3919 = vsub.f32 %v2529, %v2529
    %3920 = vmatpush1.msra.mxu0 %v3919
    %3921 = vmatprep.subr.mxu0 0.0
    %3922 = vmatpush1.msra.mxu0 0.0
    %3923 = vmatprep.subr.mxu0 0.0
    %3924 = vmatpush1.msra.mxu0 0.0
    %3925 = vmatprep.subr.mxu0 0.0
    %3926 = vmatpush1.msra.mxu0 0.0
    %3927 = vmatprep.subr.mxu0 0.0
    %3928 = vmatpush1.msra.mxu0 0.0
    %3929 = vmatprep.subr.mxu0 0.0
    %3930 = vmatpush1.msra.mxu0 0.0
    %3931 = vmatprep.subr.mxu0 0.0
    %3932 = vmatpush1.msra.mxu0 0.0
    %3933 = vmatprep.subr.mxu0 0.0
    %3934 = vmatpush1.msra.mxu0 0.0
    %3935 = vmatprep.subr.mxu0 0.0
    %3936 = vmatpush1.msra.mxu0 0.0
    %3937 = vmatprep.subr.mxu0 0.0
    %3938 = vmatpush1.msra.mxu0 0.0
    %3939 = vmatprep.subr.mxu0 0.0
    %3940 = vmatpush1.msra.mxu0 0.0
    %3941 = vmatprep.subr.mxu0 0.0
    %3942 = vmatpush1.msra.mxu0 0.0
    %3943 = vmatprep.subr.mxu0 0.0
    %3944 = vmatpush1.msra.mxu0 0.0
    %3945 = vmatprep.subr.mxu0 0.0
    %3946 = vmatpush1.msra.mxu0 0.0
    %3947 = vmatprep.subr.mxu0 0.0
    %3948 = vmatpush1.msra.mxu0 0.0
    %3949 = vmatprep.subr.mxu0 0.0
    %3950 = vmatpush1.msra.mxu0 0.0
    %3951 = vmatprep.subr.mxu0 0.0
    %3952 = vmatpush1.msra.mxu0 0.0
    %3953 = vmatprep.subr.mxu0 0.0
    %3954 = vmatpush1.msra.mxu0 0.0
    %3955 = vmatprep.subr.mxu0 0.0
    %3956 = vmatpush1.msra.mxu0 0.0
    %3957 = vmatprep.subr.mxu0 0.0
    %3958 = vmatpush1.msra.mxu0 0.0
    %3959 = vmatprep.subr.mxu0 0.0
    %3960 = vmatpush1.msra.mxu0 0.0
    %3961 = vmatprep.subr.mxu0 0.0
    %3962 = vmatpush1.msra.mxu0 0.0
    %3963 = vmatprep.subr.mxu0 0.0
    %3964 = vmatpush1.msra.mxu0 0.0
    %3965 = vmatprep.subr.mxu0 0.0
    %3966 = vmatpush1.msra.mxu0 0.0
    %3967 = vmatprep.subr.mxu0 0.0
    %3968 = vmatpush1.msra.mxu0 0.0
    %3969 = vmatprep.subr.mxu0 0.0
    %3970 = vmatpush1.msra.mxu0 0.0
    %3971 = vmatprep.subr.mxu0 0.0
    %3972 = vmatpush1.msra.mxu0 0.0
    %3973 = vmatprep.subr.mxu0 0.0
    %3974 = vmatpush1.msra.mxu0 0.0
    %3975 = vmatprep.subr.mxu0 0.0
    %3976 = vmatpush1.msra.mxu0 0.0
    %3977 = vmatprep.subr.mxu0 0.0
    %3978 = vmatpush1.msra.mxu0 0.0
    %3979 = vmatprep.subr.mxu0 0.0
    %3980 = vmatpush1.msra.mxu0 0.0
    %3981 = vmatprep.mubr.f32.mxu0 0.0
    %v3982 = vand.u32 %v3759, 4294901760
    %v3983 = vsub.f32 %v3759, %v3982
    %3984 = vmatmul.mubr.f32.gmra.mrb[0].mxu0 %v3983
    %v3985 = vpop.f32.mrb[0].mxu0
    %v3986 = vadd.f32 %v3912, %v3985
    %v3987 = vpop.f32.mrb[0].mxu0
    %3988 = vdwg.mxu0
    %3989 = vmatprep.subr.mxu0 0.0
    %3990 = vmatpush1.msra.mxu0 %v2528
    %3991 = vmatprep.subr.mxu0 0.0
    %3992 = vmatpush1.msra.mxu0 %v2529
    %3993 = vmatprep.subr.mxu0 0.0
    %3994 = vmatpush1.msra.mxu0 0.0
    %3995 = vmatprep.subr.mxu0 0.0
    %3996 = vmatpush1.msra.mxu0 0.0
    %3997 = vmatprep.subr.mxu0 0.0
    %3998 = vmatpush1.msra.mxu0 0.0
    %3999 = vmatprep.subr.mxu0 0.0
    %4000 = vmatpush1.msra.mxu0 0.0
    %4001 = vmatprep.subr.mxu0 0.0
    %4002 = vmatpush1.msra.mxu0 0.0
    %4003 = vmatprep.subr.mxu0 0.0
    %4004 = vmatpush1.msra.mxu0 0.0
    %4005 = vmatprep.subr.mxu0 0.0
    %4006 = vmatpush1.msra.mxu0 0.0
    %4007 = vmatprep.subr.mxu0 0.0
    %4008 = vmatpush1.msra.mxu0 0.0
    %4009 = vmatprep.subr.mxu0 0.0
    %4010 = vmatpush1.msra.mxu0 0.0
    %4011 = vmatprep.subr.mxu0 0.0
    %4012 = vmatpush1.msra.mxu0 0.0
    %4013 = vmatprep.subr.mxu0 0.0
    %4014 = vmatpush1.msra.mxu0 0.0
    %4015 = vmatprep.subr.mxu0 0.0
    %4016 = vmatpush1.msra.mxu0 0.0
    %4017 = vmatprep.subr.mxu0 0.0
    %4018 = vmatpush1.msra.mxu0 0.0
    %4019 = vmatprep.subr.mxu0 0.0
    %4020 = vmatpush1.msra.mxu0 0.0
    %4021 = vmatprep.subr.mxu0 0.0
    %4022 = vmatpush1.msra.mxu0 0.0
    %4023 = vmatprep.subr.mxu0 0.0
    %4024 = vmatpush1.msra.mxu0 0.0
    %4025 = vmatprep.subr.mxu0 0.0
    %4026 = vmatpush1.msra.mxu0 0.0
    %4027 = vmatprep.subr.mxu0 0.0
    %4028 = vmatpush1.msra.mxu0 0.0
    %4029 = vmatprep.subr.mxu0 0.0
    %4030 = vmatpush1.msra.mxu0 0.0
    %4031 = vmatprep.subr.mxu0 0.0
    %4032 = vmatpush1.msra.mxu0 0.0
    %4033 = vmatprep.subr.mxu0 0.0
    %4034 = vmatpush1.msra.mxu0 0.0
    %4035 = vmatprep.subr.mxu0 0.0
    %4036 = vmatpush1.msra.mxu0 0.0
    %4037 = vmatprep.subr.mxu0 0.0
    %4038 = vmatpush1.msra.mxu0 0.0
    %4039 = vmatprep.subr.mxu0 0.0
    %4040 = vmatpush1.msra.mxu0 0.0
    %4041 = vmatprep.subr.mxu0 0.0
    %4042 = vmatpush1.msra.mxu0 0.0
    %4043 = vmatprep.subr.mxu0 0.0
    %4044 = vmatpush1.msra.mxu0 0.0
    %4045 = vmatprep.subr.mxu0 0.0
    %4046 = vmatpush1.msra.mxu0 0.0
    %4047 = vmatprep.subr.mxu0 0.0
    %4048 = vmatpush1.msra.mxu0 0.0
    %4049 = vmatprep.subr.mxu0 0.0
    %4050 = vmatpush1.msra.mxu0 0.0
    %4051 = vmatprep.subr.mxu0 0.0
    %4052 = vmatpush1.msra.mxu0 0.0
    %4053 = vmatprep.mubr.f32.mxu0 0.0
    %v4054 = vand.u32 %v3759, 4294901760
    %v4055 = vsub.f32 %v3759, %v4054
    %v4056 = vand.u32 %v4055, 4294901760
    %4057 = vmatmul.mubr.f32.gmra.mrb[0].mxu0 %v4056
    %v4058 = vpop.f32.mrb[0].mxu0
    %v4059 = vadd.f32 %v3986, %v4058
    %v4060 = vpop.f32.mrb[0].mxu0
    %4061 = vdwg.mxu0
    %4062 = vmatprep.subr.mxu0 0.0
    %v4063 = vsub.f32 %v2528, %v2528
    %v4064 = vand.u32 %v4063, 4294901760
    %4065 = vmatpush1.msra.mxu0 %v4064
    %4066 = vmatprep.subr.mxu0 0.0
    %v4067 = vsub.f32 %v2529, %v2529
    %v4068 = vand.u32 %v4067, 4294901760
    %4069 = vmatpush1.msra.mxu0 %v4068
    %4070 = vmatprep.subr.mxu0 0.0
    %4071 = vmatpush1.msra.mxu0 0.0
    %4072 = vmatprep.subr.mxu0 0.0
    %4073 = vmatpush1.msra.mxu0 0.0
    %4074 = vmatprep.subr.mxu0 0.0
    %4075 = vmatpush1.msra.mxu0 0.0
    %4076 = vmatprep.subr.mxu0 0.0
    %4077 = vmatpush1.msra.mxu0 0.0
    %4078 = vmatprep.subr.mxu0 0.0
    %4079 = vmatpush1.msra.mxu0 0.0
    %4080 = vmatprep.subr.mxu0 0.0
    %4081 = vmatpush1.msra.mxu0 0.0
    %4082 = vmatprep.subr.mxu0 0.0
    %4083 = vmatpush1.msra.mxu0 0.0
    %4084 = vmatprep.subr.mxu0 0.0
    %4085 = vmatpush1.msra.mxu0 0.0
    %4086 = vmatprep.subr.mxu0 0.0
    %4087 = vmatpush1.msra.mxu0 0.0
    %4088 = vmatprep.subr.mxu0 0.0
    %4089 = vmatpush1.msra.mxu0 0.0
    %4090 = vmatprep.subr.mxu0 0.0
    %4091 = vmatpush1.msra.mxu0 0.0
    %4092 = vmatprep.subr.mxu0 0.0
    %4093 = vmatpush1.msra.mxu0 0.0
    %4094 = vmatprep.subr.mxu0 0.0
    %4095 = vmatpush1.msra.mxu0 0.0
    %4096 = vmatprep.subr.mxu0 0.0
    %4097 = vmatpush1.msra.mxu0 0.0
    %4098 = vmatprep.subr.mxu0 0.0
    %4099 = vmatpush1.msra.mxu0 0.0
    %4100 = vmatprep.subr.mxu0 0.0
    %4101 = vmatpush1.msra.mxu0 0.0
    %4102 = vmatprep.subr.mxu0 0.0
    %4103 = vmatpush1.msra.mxu0 0.0
    %4104 = vmatprep.subr.mxu0 0.0
    %4105 = vmatpush1.msra.mxu0 0.0
    %4106 = vmatprep.subr.mxu0 0.0
    %4107 = vmatpush1.msra.mxu0 0.0
    %4108 = vmatprep.subr.mxu0 0.0
    %4109 = vmatpush1.msra.mxu0 0.0
    %4110 = vmatprep.subr.mxu0 0.0
    %4111 = vmatpush1.msra.mxu0 0.0
    %4112 = vmatprep.subr.mxu0 0.0
    %4113 = vmatpush1.msra.mxu0 0.0
    %4114 = vmatprep.subr.mxu0 0.0
    %4115 = vmatpush1.msra.mxu0 0.0
    %4116 = vmatprep.subr.mxu0 0.0
    %4117 = vmatpush1.msra.mxu0 0.0
    %4118 = vmatprep.subr.mxu0 0.0
    %4119 = vmatpush1.msra.mxu0 0.0
    %4120 = vmatprep.subr.mxu0 0.0
    %4121 = vmatpush1.msra.mxu0 0.0
    %4122 = vmatprep.subr.mxu0 0.0
    %4123 = vmatpush1.msra.mxu0 0.0
    %4124 = vmatprep.subr.mxu0 0.0
    %4125 = vmatpush1.msra.mxu0 0.0
    %4126 = vmatprep.subr.mxu0 0.0
    %4127 = vmatpush1.msra.mxu0 0.0
    %4128 = vmatprep.subr.mxu0 0.0
    %4129 = vmatpush1.msra.mxu0 0.0
    %4130 = vmatprep.mubr.f32.mxu0 0.0
    %v4131 = vand.u32 %v3759, 4294901760
    %4132 = vmatmul.mubr.f32.gmra.mrb[0].mxu0 %v4131
    %v4133 = vpop.f32.mrb[0].mxu0
    %v4134 = vadd.f32 %v4059, %v4133
    %v4135 = vpop.f32.mrb[0].mxu0
    %4136 = vdwg.mxu0
    %4137 = vmatprep.subr.mxu0 0.0
    %4138 = vmatpush1.msra.mxu0 %v2528
    %4139 = vmatprep.subr.mxu0 0.0
    %4140 = vmatpush1.msra.mxu0 %v2529
    %4141 = vmatprep.subr.mxu0 0.0
    %4142 = vmatpush1.msra.mxu0 0.0
    %4143 = vmatprep.subr.mxu0 0.0
    %4144 = vmatpush1.msra.mxu0 0.0
    %4145 = vmatprep.subr.mxu0 0.0
    %4146 = vmatpush1.msra.mxu0 0.0
    %4147 = vmatprep.subr.mxu0 0.0
    %4148 = vmatpush1.msra.mxu0 0.0
    %4149 = vmatprep.subr.mxu0 0.0
    %4150 = vmatpush1.msra.mxu0 0.0
    %4151 = vmatprep.subr.mxu0 0.0
    %4152 = vmatpush1.msra.mxu0 0.0
    %4153 = vmatprep.subr.mxu0 0.0
    %4154 = vmatpush1.msra.mxu0 0.0
    %4155 = vmatprep.subr.mxu0 0.0
    %4156 = vmatpush1.msra.mxu0 0.0
    %4157 = vmatprep.subr.mxu0 0.0
    %4158 = vmatpush1.msra.mxu0 0.0
    %4159 = vmatprep.subr.mxu0 0.0
    %4160 = vmatpush1.msra.mxu0 0.0
    %4161 = vmatprep.subr.mxu0 0.0
    %4162 = vmatpush1.msra.mxu0 0.0
    %4163 = vmatprep.subr.mxu0 0.0
    %4164 = vmatpush1.msra.mxu0 0.0
    %4165 = vmatprep.subr.mxu0 0.0
    %4166 = vmatpush1.msra.mxu0 0.0
    %4167 = vmatprep.subr.mxu0 0.0
    %4168 = vmatpush1.msra.mxu0 0.0
    %4169 = vmatprep.subr.mxu0 0.0
    %4170 = vmatpush1.msra.mxu0 0.0
    %4171 = vmatprep.subr.mxu0 0.0
    %4172 = vmatpush1.msra.mxu0 0.0
    %4173 = vmatprep.subr.mxu0 0.0
    %4174 = vmatpush1.msra.mxu0 0.0
    %4175 = vmatprep.subr.mxu0 0.0
    %4176 = vmatpush1.msra.mxu0 0.0
    %4177 = vmatprep.subr.mxu0 0.0
    %4178 = vmatpush1.msra.mxu0 0.0
    %4179 = vmatprep.subr.mxu0 0.0
    %4180 = vmatpush1.msra.mxu0 0.0
    %4181 = vmatprep.subr.mxu0 0.0
    %4182 = vmatpush1.msra.mxu0 0.0
    %4183 = vmatprep.subr.mxu0 0.0
    %4184 = vmatpush1.msra.mxu0 0.0
    %4185 = vmatprep.subr.mxu0 0.0
    %4186 = vmatpush1.msra.mxu0 0.0
    %4187 = vmatprep.subr.mxu0 0.0
    %4188 = vmatpush1.msra.mxu0 0.0
    %4189 = vmatprep.subr.mxu0 0.0
    %4190 = vmatpush1.msra.mxu0 0.0
    %4191 = vmatprep.subr.mxu0 0.0
    %4192 = vmatpush1.msra.mxu0 0.0
    %4193 = vmatprep.subr.mxu0 0.0
    %4194 = vmatpush1.msra.mxu0 0.0
    %4195 = vmatprep.subr.mxu0 0.0
    %4196 = vmatpush1.msra.mxu0 0.0
    %4197 = vmatprep.subr.mxu0 0.0
    %4198 = vmatpush1.msra.mxu0 0.0
    %4199 = vmatprep.subr.mxu0 0.0
    %4200 = vmatpush1.msra.mxu0 0.0
    %4201 = vmatprep.mubr.f32.mxu0 0.0
    %v4202 = vand.u32 %v3759, 4294901760
    %4203 = vmatmul.mubr.f32.gmra.mrb[0].mxu0 %v4202
    %v4204 = vpop.f32.mrb[0].mxu0
    %v4205 = vadd.f32 %v4134, %v4204
    %v4206 = vpop.f32.mrb[0].mxu0
    %4207 = vdwg.mxu0
    %4208 = vmatprep.subr.mxu0 0.0
    %4209 = vmatpush1.msra.mxu0 %v2533
    %4210 = vmatprep.subr.mxu0 0.0
    %4211 = vmatpush1.msra.mxu0 %v2534
    %4212 = vmatprep.subr.mxu0 0.0
    %4213 = vmatpush1.msra.mxu0 0.0
    %4214 = vmatprep.subr.mxu0 0.0
    %4215 = vmatpush1.msra.mxu0 0.0
    %4216 = vmatprep.subr.mxu0 0.0
    %4217 = vmatpush1.msra.mxu0 0.0
    %4218 = vmatprep.subr.mxu0 0.0
    %4219 = vmatpush1.msra.mxu0 0.0
    %4220 = vmatprep.subr.mxu0 0.0
    %4221 = vmatpush1.msra.mxu0 0.0
    %4222 = vmatprep.subr.mxu0 0.0
    %4223 = vmatpush1.msra.mxu0 0.0
    %4224 = vmatprep.subr.mxu0 0.0
    %4225 = vmatpush1.msra.mxu0 0.0
    %4226 = vmatprep.subr.mxu0 0.0
    %4227 = vmatpush1.msra.mxu0 0.0
    %4228 = vmatprep.subr.mxu0 0.0
    %4229 = vmatpush1.msra.mxu0 0.0
    %4230 = vmatprep.subr.mxu0 0.0
    %4231 = vmatpush1.msra.mxu0 0.0
    %4232 = vmatprep.subr.mxu0 0.0
    %4233 = vmatpush1.msra.mxu0 0.0
    %4234 = vmatprep.subr.mxu0 0.0
    %4235 = vmatpush1.msra.mxu0 0.0
    %4236 = vmatprep.subr.mxu0 0.0
    %4237 = vmatpush1.msra.mxu0 0.0
    %4238 = vmatprep.subr.mxu0 0.0
    %4239 = vmatpush1.msra.mxu0 0.0
    %4240 = vmatprep.subr.mxu0 0.0
    %4241 = vmatpush1.msra.mxu0 0.0
    %4242 = vmatprep.subr.mxu0 0.0
    %4243 = vmatpush1.msra.mxu0 0.0
    %4244 = vmatprep.subr.mxu0 0.0
    %4245 = vmatpush1.msra.mxu0 0.0
    %4246 = vmatprep.subr.mxu0 0.0
    %4247 = vmatpush1.msra.mxu0 0.0
    %4248 = vmatprep.subr.mxu0 0.0
    %4249 = vmatpush1.msra.mxu0 0.0
    %4250 = vmatprep.subr.mxu0 0.0
    %4251 = vmatpush1.msra.mxu0 0.0
    %4252 = vmatprep.subr.mxu0 0.0
    %4253 = vmatpush1.msra.mxu0 0.0
    %4254 = vmatprep.subr.mxu0 0.0
    %4255 = vmatpush1.msra.mxu0 0.0
    %4256 = vmatprep.subr.mxu0 0.0
    %4257 = vmatpush1.msra.mxu0 0.0
    %4258 = vmatprep.subr.mxu0 0.0
    %4259 = vmatpush1.msra.mxu0 0.0
    %4260 = vmatprep.subr.mxu0 0.0
    %4261 = vmatpush1.msra.mxu0 0.0
    %4262 = vmatprep.subr.mxu0 0.0
    %4263 = vmatpush1.msra.mxu0 0.0
    %4264 = vmatprep.subr.mxu0 0.0
    %4265 = vmatpush1.msra.mxu0 0.0
    %4266 = vmatprep.subr.mxu0 0.0
    %4267 = vmatpush1.msra.mxu0 0.0
    %4268 = vmatprep.subr.mxu0 0.0
    %4269 = vmatpush1.msra.mxu0 0.0
    %4270 = vmatprep.subr.mxu0 0.0
    %4271 = vmatpush1.msra.mxu0 0.0
    %4272 = vmatprep.mubr.f32.mxu0 0.0
    %v4273 = vand.u32 %v3759, 4294901760
    %v4274 = vsub.f32 %v3759, %v4273
    %v4275 = vand.u32 %v4274, 4294901760
    %v4276 = vsub.f32 %v4274, %v4275
    %v4277 = vand.u32 %v4276, 4294901760
    %4278 = vmatmul.mubr.f32.gmra.mrb[0].mxu0 %v4277
    %v4279 = vpop.f32.mrb[0].mxu0
    %v4280 = vadd.f32 0.0, %v4279
    %v4281 = vpop.f32.mrb[0].mxu0
    %4282 = vdwg.mxu0
    %4283 = vmatprep.subr.mxu0 0.0
    %v4284 = vsub.f32 %v2533, %v2533
    %v4285 = vand.u32 %v4284, 4294901760
    %v4286 = vsub.f32 %v4284, %v4285
    %v4287 = vand.u32 %v4286, 4294901760
    %4288 = vmatpush1.msra.mxu0 %v4287
    %4289 = vmatprep.subr.mxu0 0.0
    %v4290 = vsub.f32 %v2534, %v2534
    %v4291 = vand.u32 %v4290, 4294901760
    %v4292 = vsub.f32 %v4290, %v4291
    %v4293 = vand.u32 %v4292, 4294901760
    %4294 = vmatpush1.msra.mxu0 %v4293
    %4295 = vmatprep.subr.mxu0 0.0
    %4296 = vmatpush1.msra.mxu0 0.0
    %4297 = vmatprep.subr.mxu0 0.0
    %4298 = vmatpush1.msra.mxu0 0.0
    %4299 = vmatprep.subr.mxu0 0.0
    %4300 = vmatpush1.msra.mxu0 0.0
    %4301 = vmatprep.subr.mxu0 0.0
    %4302 = vmatpush1.msra.mxu0 0.0
    %4303 = vmatprep.subr.mxu0 0.0
    %4304 = vmatpush1.msra.mxu0 0.0
    %4305 = vmatprep.subr.mxu0 0.0
    %4306 = vmatpush1.msra.mxu0 0.0
    %4307 = vmatprep.subr.mxu0 0.0
    %4308 = vmatpush1.msra.mxu0 0.0
    %4309 = vmatprep.subr.mxu0 0.0
    %4310 = vmatpush1.msra.mxu0 0.0
    %4311 = vmatprep.subr.mxu0 0.0
    %4312 = vmatpush1.msra.mxu0 0.0
    %4313 = vmatprep.subr.mxu0 0.0
    %4314 = vmatpush1.msra.mxu0 0.0
    %4315 = vmatprep.subr.mxu0 0.0
    %4316 = vmatpush1.msra.mxu0 0.0
    %4317 = vmatprep.subr.mxu0 0.0
    %4318 = vmatpush1.msra.mxu0 0.0
    %4319 = vmatprep.subr.mxu0 0.0
    %4320 = vmatpush1.msra.mxu0 0.0
    %4321 = vmatprep.subr.mxu0 0.0
    %4322 = vmatpush1.msra.mxu0 0.0
    %4323 = vmatprep.subr.mxu0 0.0
    %4324 = vmatpush1.msra.mxu0 0.0
    %4325 = vmatprep.subr.mxu0 0.0
    %4326 = vmatpush1.msra.mxu0 0.0
    %4327 = vmatprep.subr.mxu0 0.0
    %4328 = vmatpush1.msra.mxu0 0.0
    %4329 = vmatprep.subr.mxu0 0.0
    %4330 = vmatpush1.msra.mxu0 0.0
    %4331 = vmatprep.subr.mxu0 0.0
    %4332 = vmatpush1.msra.mxu0 0.0
    %4333 = vmatprep.subr.mxu0 0.0
    %4334 = vmatpush1.msra.mxu0 0.0
    %4335 = vmatprep.subr.mxu0 0.0
    %4336 = vmatpush1.msra.mxu0 0.0
    %4337 = vmatprep.subr.mxu0 0.0
    %4338 = vmatpush1.msra.mxu0 0.0
    %4339 = vmatprep.subr.mxu0 0.0
    %4340 = vmatpush1.msra.mxu0 0.0
    %4341 = vmatprep.subr.mxu0 0.0
    %4342 = vmatpush1.msra.mxu0 0.0
    %4343 = vmatprep.subr.mxu0 0.0
    %4344 = vmatpush1.msra.mxu0 0.0
    %4345 = vmatprep.subr.mxu0 0.0
    %4346 = vmatpush1.msra.mxu0 0.0
    %4347 = vmatprep.subr.mxu0 0.0
    %4348 = vmatpush1.msra.mxu0 0.0
    %4349 = vmatprep.subr.mxu0 0.0
    %4350 = vmatpush1.msra.mxu0 0.0
    %4351 = vmatprep.subr.mxu0 0.0
    %4352 = vmatpush1.msra.mxu0 0.0
    %4353 = vmatprep.subr.mxu0 0.0
    %4354 = vmatpush1.msra.mxu0 0.0
    %4355 = vmatprep.mubr.f32.mxu0 0.0
    %v4356 = vand.u32 %v3759, 4294901760
    %4357 = vmatmul.mubr.f32.gmra.mrb[0].mxu0 %v4356
    %v4358 = vpop.f32.mrb[0].mxu0
    %v4359 = vadd.f32 %v4280, %v4358
    %v4360 = vpop.f32.mrb[0].mxu0
    %4361 = vdwg.mxu0
    %4362 = vmatprep.subr.mxu0 0.0
    %v4363 = vsub.f32 %v2533, %v2533
    %4364 = vmatpush1.msra.mxu0 %v4363
    %4365 = vmatprep.subr.mxu0 0.0
    %v4366 = vsub.f32 %v2534, %v2534
    %4367 = vmatpush1.msra.mxu0 %v4366
    %4368 = vmatprep.subr.mxu0 0.0
    %4369 = vmatpush1.msra.mxu0 0.0
    %4370 = vmatprep.subr.mxu0 0.0
    %4371 = vmatpush1.msra.mxu0 0.0
    %4372 = vmatprep.subr.mxu0 0.0
    %4373 = vmatpush1.msra.mxu0 0.0
    %4374 = vmatprep.subr.mxu0 0.0
    %4375 = vmatpush1.msra.mxu0 0.0
    %4376 = vmatprep.subr.mxu0 0.0
    %4377 = vmatpush1.msra.mxu0 0.0
    %4378 = vmatprep.subr.mxu0 0.0
    %4379 = vmatpush1.msra.mxu0 0.0
    %4380 = vmatprep.subr.mxu0 0.0
    %4381 = vmatpush1.msra.mxu0 0.0
    %4382 = vmatprep.subr.mxu0 0.0
    %4383 = vmatpush1.msra.mxu0 0.0
    %4384 = vmatprep.subr.mxu0 0.0
    %4385 = vmatpush1.msra.mxu0 0.0
    %4386 = vmatprep.subr.mxu0 0.0
    %4387 = vmatpush1.msra.mxu0 0.0
    %4388 = vmatprep.subr.mxu0 0.0
    %4389 = vmatpush1.msra.mxu0 0.0
    %4390 = vmatprep.subr.mxu0 0.0
    %4391 = vmatpush1.msra.mxu0 0.0
    %4392 = vmatprep.subr.mxu0 0.0
    %4393 = vmatpush1.msra.mxu0 0.0
    %4394 = vmatprep.subr.mxu0 0.0
    %4395 = vmatpush1.msra.mxu0 0.0
    %4396 = vmatprep.subr.mxu0 0.0
    %4397 = vmatpush1.msra.mxu0 0.0
    %4398 = vmatprep.subr.mxu0 0.0
    %4399 = vmatpush1.msra.mxu0 0.0
    %4400 = vmatprep.subr.mxu0 0.0
    %4401 = vmatpush1.msra.mxu0 0.0
    %4402 = vmatprep.subr.mxu0 0.0
    %4403 = vmatpush1.msra.mxu0 0.0
    %4404 = vmatprep.subr.mxu0 0.0
    %4405 = vmatpush1.msra.mxu0 0.0
    %4406 = vmatprep.subr.mxu0 0.0
    %4407 = vmatpush1.msra.mxu0 0.0
    %4408 = vmatprep.subr.mxu0 0.0
    %4409 = vmatpush1.msra.mxu0 0.0
    %4410 = vmatprep.subr.mxu0 0.0
    %4411 = vmatpush1.msra.mxu0 0.0
    %4412 = vmatprep.subr.mxu0 0.0
    %4413 = vmatpush1.msra.mxu0 0.0
    %4414 = vmatprep.subr.mxu0 0.0
    %4415 = vmatpush1.msra.mxu0 0.0
    %4416 = vmatprep.subr.mxu0 0.0
    %4417 = vmatpush1.msra.mxu0 0.0
    %4418 = vmatprep.subr.mxu0 0.0
    %4419 = vmatpush1.msra.mxu0 0.0
    %4420 = vmatprep.subr.mxu0 0.0
    %4421 = vmatpush1.msra.mxu0 0.0
    %4422 = vmatprep.subr.mxu0 0.0
    %4423 = vmatpush1.msra.mxu0 0.0
    %4424 = vmatprep.subr.mxu0 0.0
    %4425 = vmatpush1.msra.mxu0 0.0
    %4426 = vmatprep.subr.mxu0 0.0
    %4427 = vmatpush1.msra.mxu0 0.0
    %4428 = vmatprep.mubr.f32.mxu0 0.0
    %v4429 = vand.u32 %v3759, 4294901760
    %v4430 = vsub.f32 %v3759, %v4429
    %4431 = vmatmul.mubr.f32.gmra.mrb[0].mxu0 %v4430
    %v4432 = vpop.f32.mrb[0].mxu0
    %v4433 = vadd.f32 %v4359, %v4432
    %v4434 = vpop.f32.mrb[0].mxu0
    %4435 = vdwg.mxu0
    %4436 = vmatprep.subr.mxu0 0.0
    %4437 = vmatpush1.msra.mxu0 %v2533
    %4438 = vmatprep.subr.mxu0 0.0
    %4439 = vmatpush1.msra.mxu0 %v2534
    %4440 = vmatprep.subr.mxu0 0.0
    %4441 = vmatpush1.msra.mxu0 0.0
    %4442 = vmatprep.subr.mxu0 0.0
    %4443 = vmatpush1.msra.mxu0 0.0
    %4444 = vmatprep.subr.mxu0 0.0
    %4445 = vmatpush1.msra.mxu0 0.0
    %4446 = vmatprep.subr.mxu0 0.0
    %4447 = vmatpush1.msra.mxu0 0.0
    %4448 = vmatprep.subr.mxu0 0.0
    %4449 = vmatpush1.msra.mxu0 0.0
    %4450 = vmatprep.subr.mxu0 0.0
    %4451 = vmatpush1.msra.mxu0 0.0
    %4452 = vmatprep.subr.mxu0 0.0
    %4453 = vmatpush1.msra.mxu0 0.0
    %4454 = vmatprep.subr.mxu0 0.0
    %4455 = vmatpush1.msra.mxu0 0.0
    %4456 = vmatprep.subr.mxu0 0.0
    %4457 = vmatpush1.msra.mxu0 0.0
    %4458 = vmatprep.subr.mxu0 0.0
    %4459 = vmatpush1.msra.mxu0 0.0
    %4460 = vmatprep.subr.mxu0 0.0
    %4461 = vmatpush1.msra.mxu0 0.0
    %4462 = vmatprep.subr.mxu0 0.0
    %4463 = vmatpush1.msra.mxu0 0.0
    %4464 = vmatprep.subr.mxu0 0.0
    %4465 = vmatpush1.msra.mxu0 0.0
    %4466 = vmatprep.subr.mxu0 0.0
    %4467 = vmatpush1.msra.mxu0 0.0
    %4468 = vmatprep.subr.mxu0 0.0
    %4469 = vmatpush1.msra.mxu0 0.0
    %4470 = vmatprep.subr.mxu0 0.0
    %4471 = vmatpush1.msra.mxu0 0.0
    %4472 = vmatprep.subr.mxu0 0.0
    %4473 = vmatpush1.msra.mxu0 0.0
    %4474 = vmatprep.subr.mxu0 0.0
    %4475 = vmatpush1.msra.mxu0 0.0
    %4476 = vmatprep.subr.mxu0 0.0
    %4477 = vmatpush1.msra.mxu0 0.0
    %4478 = vmatprep.subr.mxu0 0.0
    %4479 = vmatpush1.msra.mxu0 0.0
    %4480 = vmatprep.subr.mxu0 0.0
    %4481 = vmatpush1.msra.mxu0 0.0
    %4482 = vmatprep.subr.mxu0 0.0
    %4483 = vmatpush1.msra.mxu0 0.0
    %4484 = vmatprep.subr.mxu0 0.0
    %4485 = vmatpush1.msra.mxu0 0.0
    %4486 = vmatprep.subr.mxu0 0.0
    %4487 = vmatpush1.msra.mxu0 0.0
    %4488 = vmatprep.subr.mxu0 0.0
    %4489 = vmatpush1.msra.mxu0 0.0
    %4490 = vmatprep.subr.mxu0 0.0
    %4491 = vmatpush1.msra.mxu0 0.0
    %4492 = vmatprep.subr.mxu0 0.0
    %4493 = vmatpush1.msra.mxu0 0.0
    %4494 = vmatprep.subr.mxu0 0.0
    %4495 = vmatpush1.msra.mxu0 0.0
    %4496 = vmatprep.subr.mxu0 0.0
    %4497 = vmatpush1.msra.mxu0 0.0
    %4498 = vmatprep.subr.mxu0 0.0
    %4499 = vmatpush1.msra.mxu0 0.0
    %4500 = vmatprep.mubr.f32.mxu0 0.0
    %v4501 = vand.u32 %v3759, 4294901760
    %v4502 = vsub.f32 %v3759, %v4501
    %v4503 = vand.u32 %v4502, 4294901760
    %4504 = vmatmul.mubr.f32.gmra.mrb[0].mxu0 %v4503
    %v4505 = vpop.f32.mrb[0].mxu0
    %v4506 = vadd.f32 %v4433, %v4505
    %v4507 = vpop.f32.mrb[0].mxu0
    %4508 = vdwg.mxu0
    %4509 = vmatprep.subr.mxu0 0.0
    %v4510 = vsub.f32 %v2533, %v2533
    %v4511 = vand.u32 %v4510, 4294901760
    %4512 = vmatpush1.msra.mxu0 %v4511
    %4513 = vmatprep.subr.mxu0 0.0
    %v4514 = vsub.f32 %v2534, %v2534
    %v4515 = vand.u32 %v4514, 4294901760
    %4516 = vmatpush1.msra.mxu0 %v4515
    %4517 = vmatprep.subr.mxu0 0.0
    %4518 = vmatpush1.msra.mxu0 0.0
    %4519 = vmatprep.subr.mxu0 0.0
    %4520 = vmatpush1.msra.mxu0 0.0
    %4521 = vmatprep.subr.mxu0 0.0
    %4522 = vmatpush1.msra.mxu0 0.0
    %4523 = vmatprep.subr.mxu0 0.0
    %4524 = vmatpush1.msra.mxu0 0.0
    %4525 = vmatprep.subr.mxu0 0.0
    %4526 = vmatpush1.msra.mxu0 0.0
    %4527 = vmatprep.subr.mxu0 0.0
    %4528 = vmatpush1.msra.mxu0 0.0
    %4529 = vmatprep.subr.mxu0 0.0
    %4530 = vmatpush1.msra.mxu0 0.0
    %4531 = vmatprep.subr.mxu0 0.0
    %4532 = vmatpush1.msra.mxu0 0.0
    %4533 = vmatprep.subr.mxu0 0.0
    %4534 = vmatpush1.msra.mxu0 0.0
    %4535 = vmatprep.subr.mxu0 0.0
    %4536 = vmatpush1.msra.mxu0 0.0
    %4537 = vmatprep.subr.mxu0 0.0
    %4538 = vmatpush1.msra.mxu0 0.0
    %4539 = vmatprep.subr.mxu0 0.0
    %4540 = vmatpush1.msra.mxu0 0.0
    %4541 = vmatprep.subr.mxu0 0.0
    %4542 = vmatpush1.msra.mxu0 0.0
    %4543 = vmatprep.subr.mxu0 0.0
    %4544 = vmatpush1.msra.mxu0 0.0
    %4545 = vmatprep.subr.mxu0 0.0
    %4546 = vmatpush1.msra.mxu0 0.0
    %4547 = vmatprep.subr.mxu0 0.0
    %4548 = vmatpush1.msra.mxu0 0.0
    %4549 = vmatprep.subr.mxu0 0.0
    %4550 = vmatpush1.msra.mxu0 0.0
    %4551 = vmatprep.subr.mxu0 0.0
    %4552 = vmatpush1.msra.mxu0 0.0
    %4553 = vmatprep.subr.mxu0 0.0
    %4554 = vmatpush1.msra.mxu0 0.0
    %4555 = vmatprep.subr.mxu0 0.0
    %4556 = vmatpush1.msra.mxu0 0.0
    %4557 = vmatprep.subr.mxu0 0.0
    %4558 = vmatpush1.msra.mxu0 0.0
    %4559 = vmatprep.subr.mxu0 0.0
    %4560 = vmatpush1.msra.mxu0 0.0
    %4561 = vmatprep.subr.mxu0 0.0
    %4562 = vmatpush1.msra.mxu0 0.0
    %4563 = vmatprep.subr.mxu0 0.0
    %4564 = vmatpush1.msra.mxu0 0.0
    %4565 = vmatprep.subr.mxu0 0.0
    %4566 = vmatpush1.msra.mxu0 0.0
    %4567 = vmatprep.subr.mxu0 0.0
    %4568 = vmatpush1.msra.mxu0 0.0
    %4569 = vmatprep.subr.mxu0 0.0
    %4570 = vmatpush1.msra.mxu0 0.0
    %4571 = vmatprep.subr.mxu0 0.0
    %4572 = vmatpush1.msra.mxu0 0.0
    %4573 = vmatprep.subr.mxu0 0.0
    %4574 = vmatpush1.msra.mxu0 0.0
    %4575 = vmatprep.subr.mxu0 0.0
    %4576 = vmatpush1.msra.mxu0 0.0
    %4577 = vmatprep.mubr.f32.mxu0 0.0
    %v4578 = vand.u32 %v3759, 4294901760
    %4579 = vmatmul.mubr.f32.gmra.mrb[0].mxu0 %v4578
    %v4580 = vpop.f32.mrb[0].mxu0
    %v4581 = vadd.f32 %v4506, %v4580
    %v4582 = vpop.f32.mrb[0].mxu0
    %4583 = vdwg.mxu0
    %4584 = vmatprep.subr.mxu0 0.0
    %4585 = vmatpush1.msra.mxu0 %v2533
    %4586 = vmatprep.subr.mxu0 0.0
    %4587 = vmatpush1.msra.mxu0 %v2534
    %4588 = vmatprep.subr.mxu0 0.0
    %4589 = vmatpush1.msra.mxu0 0.0
    %4590 = vmatprep.subr.mxu0 0.0
    %4591 = vmatpush1.msra.mxu0 0.0
    %4592 = vmatprep.subr.mxu0 0.0
    %4593 = vmatpush1.msra.mxu0 0.0
    %4594 = vmatprep.subr.mxu0 0.0
    %4595 = vmatpush1.msra.mxu0 0.0
    %4596 = vmatprep.subr.mxu0 0.0
    %4597 = vmatpush1.msra.mxu0 0.0
    %4598 = vmatprep.subr.mxu0 0.0
    %4599 = vmatpush1.msra.mxu0 0.0
    %4600 = vmatprep.subr.mxu0 0.0
    %4601 = vmatpush1.msra.mxu0 0.0
    %4602 = vmatprep.subr.mxu0 0.0
    %4603 = vmatpush1.msra.mxu0 0.0
    %4604 = vmatprep.subr.mxu0 0.0
    %4605 = vmatpush1.msra.mxu0 0.0
    %4606 = vmatprep.subr.mxu0 0.0
    %4607 = vmatpush1.msra.mxu0 0.0
    %4608 = vmatprep.subr.mxu0 0.0
    %4609 = vmatpush1.msra.mxu0 0.0
    %4610 = vmatprep.subr.mxu0 0.0
    %4611 = vmatpush1.msra.mxu0 0.0
    %4612 = vmatprep.subr.mxu0 0.0
    %4613 = vmatpush1.msra.mxu0 0.0
    %4614 = vmatprep.subr.mxu0 0.0
    %4615 = vmatpush1.msra.mxu0 0.0
    %4616 = vmatprep.subr.mxu0 0.0
    %4617 = vmatpush1.msra.mxu0 0.0
    %4618 = vmatprep.subr.mxu0 0.0
    %4619 = vmatpush1.msra.mxu0 0.0
    %4620 = vmatprep.subr.mxu0 0.0
    %4621 = vmatpush1.msra.mxu0 0.0
    %4622 = vmatprep.subr.mxu0 0.0
    %4623 = vmatpush1.msra.mxu0 0.0
    %4624 = vmatprep.subr.mxu0 0.0
    %4625 = vmatpush1.msra.mxu0 0.0
    %4626 = vmatprep.subr.mxu0 0.0
    %4627 = vmatpush1.msra.mxu0 0.0
    %4628 = vmatprep.subr.mxu0 0.0
    %4629 = vmatpush1.msra.mxu0 0.0
    %4630 = vmatprep.subr.mxu0 0.0
    %4631 = vmatpush1.msra.mxu0 0.0
    %4632 = vmatprep.subr.mxu0 0.0
    %4633 = vmatpush1.msra.mxu0 0.0
    %4634 = vmatprep.subr.mxu0 0.0
    %4635 = vmatpush1.msra.mxu0 0.0
    %4636 = vmatprep.subr.mxu0 0.0
    %4637 = vmatpush1.msra.mxu0 0.0
    %4638 = vmatprep.subr.mxu0 0.0
    %4639 = vmatpush1.msra.mxu0 0.0
    %4640 = vmatprep.subr.mxu0 0.0
    %4641 = vmatpush1.msra.mxu0 0.0
    %4642 = vmatprep.subr.mxu0 0.0
    %4643 = vmatpush1.msra.mxu0 0.0
    %4644 = vmatprep.subr.mxu0 0.0
    %4645 = vmatpush1.msra.mxu0 0.0
    %4646 = vmatprep.subr.mxu0 0.0
    %4647 = vmatpush1.msra.mxu0 0.0
    %4648 = vmatprep.mubr.f32.mxu0 0.0
    %v4649 = vand.u32 %v3759, 4294901760
    %4650 = vmatmul.mubr.f32.gmra.mrb[0].mxu0 %v4649
    %v4651 = vpop.f32.mrb[0].mxu0
    %v4652 = vadd.f32 %v4581, %v4651
    %v4653 = vpop.f32.mrb[0].mxu0
    %4654 = vdwg.mxu0
    %v4655 = vmax.f32 %v4205, %v4652
    %v4658 = vunpack.c.l.s4 1966171168
    %v4659 = vunpack.c.0.s8 %v4658
    %v4660 = vlaneseq
    %v4661 = vshrl.u32 %v4660, 7
    %v4662 = vsub.s32 %v4659, %v4661
    %v4663 = vrot.slane %v4655, %v4662
    %v4664 = vcombine.high %v4663, %v4663
    %v4666 = vunpack.c.l.s4 1966171168
    %v4667 = vunpack.c.0.s8 %v4666
    %v4668 = vlaneseq
    %v4669 = vshrl.u32 %v4668, 7
    %v4670 = vsub.s32 %v4667, %v4669
    %v4671 = vrot.slane %v4663, %v4670
    %v4673 = vunpack.c.l.s4 1966171168
    %v4674 = vunpack.c.0.s8 %v4673
    %v4675 = vlaneseq
    %v4676 = vshrl.u32 %v4675, 7
    %v4677 = vsub.s32 %v4674, %v4676
    %v4678 = vrot.slane %v4664, %v4677
    %4681 = vst.msk [vmem:[#allocation13 + $0x1] sm:$0x1] %vm3609, %v4671
    %4682 = vst.msk [vmem:[#allocation13 + $0x5] sm:$0x1] %vm3609, %v4678
    %s4683 = sld [smem:[#allocation8 + $0x2]]
    %v4684 = vstv %s4683
    %v4685 = vadd.f32 %v2500, %v4684
    %v4686 = vadd.f32 %v2501, %v4684
    %vm4687 = vcmp.gt.f32.partialorder %v4685, 0.0
    %vm4688 = vcmp.gt.f32.partialorder %v4686, 0.0
    %v4689 = vmin.f32 %v4685, 0.0
    %v4690 = vmin.f32 %v4686, 0.0
    %v4691 = vmul.f32 %v4689, 1.442695
    %v4692 = vpow.pop %v4691
    %v4693 = vmul.f32 %v4690, 1.442695
    %v4694 = vpow.pop %v4693
    %v4695 = vsub.f32 %v4692, 1.0
    %v4696 = vsub.f32 %v4694, 1.0
    %v4697 = vsel %vm4687, %v4685, %v4695
    %v4698 = vsel %vm4688, %v4686, %v4696
    %v4701 = vlaneseq
    %v4702 = vshrl.u32 %v4701, 7
    %v4703 = vsub.s32 0, %v4702
    %v4704 = vrot.slane %v4697, %v4703
    %v4705 = vlaneseq
    %v4706 = vshrl.u32 %v4705, 7
    %v4707 = vsub.s32 4, %v4706
    %v4708 = vrot.slane %v4697, %v4707
    %v4709 = vlaneseq
    %v4710 = vshrl.u32 %v4709, 7
    %v4711 = vsub.s32 0, %v4710
    %v4712 = vrot.slane %v4698, %v4711
    %v4713 = vlaneseq
    %v4714 = vshrl.u32 %v4713, 7
    %v4715 = vsub.s32 4, %v4714
    %v4716 = vrot.slane %v4698, %v4715
    %v4717 = vsel %vm2569, %v4712, %v4704
    %v4718 = vsel %vm2569, %v4716, %v4708
    %4719 = vrot.lane.b32.xlu0 %v4717, 4
    %v4720 = vpop.permute.xlu0 %4719
    %4721 = vrot.lane.b32.xlu0 %v4718, 4
    %v4722 = vpop.permute.xlu0 %4721
    %v4723 = vsel %vm2576, %v4720, %v4722
    %v4725 = vsel %vm2579, %v4723, 0.0
    %4726 = vadd.xlane.f32.xlu0 %v4725
    %v4727 = vpop.xlane.xlu0 %4726
    %v4728 = vrot.slane %v4727, 4
    %v4729 = vadd.f32 %v4727, %v4728
    %v4730 = vrot.slane %v4729, 2
    %v4731 = vadd.f32 %v4729, %v4730
    %v4732 = vrot.slane %v4731, 1
    %v4733 = vadd.f32 %v4731, %v4732
    %s4734 = vtos %v4733
    %s4735 = smul.f32 %s4734, 0.03125
    %v4736 = vstv %s4735
    %v4737 = vsub.f32 %v4697, %v4736
    %v4738 = vsub.f32 %v4698, %v4736
    %v4739 = vmul.f32 %v4737, %v4737
    %v4740 = vmul.f32 %v4738, %v4738
    %v4743 = vlaneseq
    %v4744 = vshrl.u32 %v4743, 7
    %v4745 = vsub.s32 0, %v4744
    %v4746 = vrot.slane %v4739, %v4745
    %v4747 = vlaneseq
    %v4748 = vshrl.u32 %v4747, 7
    %v4749 = vsub.s32 4, %v4748
    %v4750 = vrot.slane %v4739, %v4749
    %v4751 = vlaneseq
    %v4752 = vshrl.u32 %v4751, 7
    %v4753 = vsub.s32 0, %v4752
    %v4754 = vrot.slane %v4740, %v4753
    %v4755 = vlaneseq
    %v4756 = vshrl.u32 %v4755, 7
    %v4757 = vsub.s32 4, %v4756
    %v4758 = vrot.slane %v4740, %v4757
    %v4759 = vsel %vm2569, %v4754, %v4746
    %v4760 = vsel %vm2569, %v4758, %v4750
    %4761 = vrot.lane.b32.xlu0 %v4759, 4
    %v4762 = vpop.permute.xlu0 %4761
    %4763 = vrot.lane.b32.xlu0 %v4760, 4
    %v4764 = vpop.permute.xlu0 %4763
    %v4765 = vsel %vm2576, %v4762, %v4764
    %v4767 = vsel %vm2579, %v4765, 0.0
    %4768 = vadd.xlane.f32.xlu0 %v4767
    %v4769 = vpop.xlane.xlu0 %4768
    %v4770 = vrot.slane %v4769, 4
    %v4771 = vadd.f32 %v4769, %v4770
    %v4772 = vrot.slane %v4771, 2
    %v4773 = vadd.f32 %v4771, %v4772
    %v4774 = vrot.slane %v4773, 1
    %v4775 = vadd.f32 %v4773, %v4774
    %s4776 = vtos %v4775
    %s4777 = smul.f32 %s4776, 0.03125
    %s4778 = sld [smem:[#allocation10 + $0x2]]
    %s4779 = sadd.f32 %s4777, 1e-05
    %v4780 = vstv %s4779
    %v4781 = vrsqrt.pop %v4780
    %s4782 = vtos %v4781
    %s4783 = smul.f32 %s4778, %s4782
    %v4784 = vstv %s4783
    %v4785 = vmul.f32 %v4737, %v4784
    %v4786 = vmul.f32 %v4738, %v4784
    %s4787 = sld [smem:[#allocation11 + $0x2]]
    %v4788 = vstv %s4787
    %v4789 = vadd.f32 %v4785, %v4788
    %v4790 = vadd.f32 %v4786, %v4788
    %v4793 = vlaneseq
    %v4794 = vshrl.u32 %v4793, 7
    %v4795 = vsub.s32 0, %v4794
    %v4796 = vrot.slane %v4789, %v4795
    %v4797 = vlaneseq
    %v4798 = vshrl.u32 %v4797, 7
    %v4799 = vsub.s32 4, %v4798
    %v4800 = vrot.slane %v4789, %v4799
    %v4801 = vlaneseq
    %v4802 = vshrl.u32 %v4801, 7
    %v4803 = vsub.s32 0, %v4802
    %v4804 = vrot.slane %v4790, %v4803
    %v4805 = vlaneseq
    %v4806 = vshrl.u32 %v4805, 7
    %v4807 = vsub.s32 4, %v4806
    %v4808 = vrot.slane %v4790, %v4807
    %4809 = vrot.lane.b32.xlu0 %v4796, 4
    %v4810 = vpop.permute.xlu0 %4809
    %4811 = vrot.lane.b32.xlu0 %v4800, 4
    %v4812 = vpop.permute.xlu0 %4811
    %4813 = vrot.lane.b32.xlu0 %v4804, 4
    %v4814 = vpop.permute.xlu0 %4813
    %4815 = vrot.lane.b32.xlu0 %v4808, 4
    %v4816 = vpop.permute.xlu0 %4815
    %v4817 = vsel %vm2576, %v4810, %v4812
    %v4818 = vsel %vm2576, %v4814, %v4816
    %4821 = vst.msk [vmem:[#allocation14 + $0x2] sm:$0x1] %vm2676, %v4817
    %4822 = vst.msk [vmem:[#allocation14 + $0x6] sm:$0x1] %vm2676, %v4818
    %v4823 = vsel %vm2569, %v4804, %v4796
    %v4824 = vsel %vm2569, %v4808, %v4800
    %4825 = vrot.lane.b32.xlu0 %v4823, 4
    %v4826 = vpop.permute.xlu0 %4825
    %4827 = vrot.lane.b32.xlu0 %v4824, 4
    %v4828 = vpop.permute.xlu0 %4827
    %v4829 = vsel %vm2576, %v4826, %v4828
    %v4830 = vsel %vm2686, %v4829, 0
    %4832 = vmatprep.subr.mxu0 0.0
    %4833 = vmatpush1.msra.mxu0 %v2528
    %4834 = vmatprep.subr.mxu0 0.0
    %4835 = vmatpush1.msra.mxu0 %v2529
    %4836 = vmatprep.subr.mxu0 0.0
    %4837 = vmatpush1.msra.mxu0 0.0
    %4838 = vmatprep.subr.mxu0 0.0
    %4839 = vmatpush1.msra.mxu0 0.0
    %4840 = vmatprep.subr.mxu0 0.0
    %4841 = vmatpush1.msra.mxu0 0.0
    %4842 = vmatprep.subr.mxu0 0.0
    %4843 = vmatpush1.msra.mxu0 0.0
    %4844 = vmatprep.subr.mxu0 0.0
    %4845 = vmatpush1.msra.mxu0 0.0
    %4846 = vmatprep.subr.mxu0 0.0
    %4847 = vmatpush1.msra.mxu0 0.0
    %4848 = vmatprep.subr.mxu0 0.0
    %4849 = vmatpush1.msra.mxu0 0.0
    %4850 = vmatprep.subr.mxu0 0.0
    %4851 = vmatpush1.msra.mxu0 0.0
    %4852 = vmatprep.subr.mxu0 0.0
    %4853 = vmatpush1.msra.mxu0 0.0
    %4854 = vmatprep.subr.mxu0 0.0
    %4855 = vmatpush1.msra.mxu0 0.0
    %4856 = vmatprep.subr.mxu0 0.0
    %4857 = vmatpush1.msra.mxu0 0.0
    %4858 = vmatprep.subr.mxu0 0.0
    %4859 = vmatpush1.msra.mxu0 0.0
    %4860 = vmatprep.subr.mxu0 0.0
    %4861 = vmatpush1.msra.mxu0 0.0
    %4862 = vmatprep.subr.mxu0 0.0
    %4863 = vmatpush1.msra.mxu0 0.0
    %4864 = vmatprep.subr.mxu0 0.0
    %4865 = vmatpush1.msra.mxu0 0.0
    %4866 = vmatprep.subr.mxu0 0.0
    %4867 = vmatpush1.msra.mxu0 0.0
    %4868 = vmatprep.subr.mxu0 0.0
    %4869 = vmatpush1.msra.mxu0 0.0
    %4870 = vmatprep.subr.mxu0 0.0
    %4871 = vmatpush1.msra.mxu0 0.0
    %4872 = vmatprep.subr.mxu0 0.0
    %4873 = vmatpush1.msra.mxu0 0.0
    %4874 = vmatprep.subr.mxu0 0.0
    %4875 = vmatpush1.msra.mxu0 0.0
    %4876 = vmatprep.subr.mxu0 0.0
    %4877 = vmatpush1.msra.mxu0 0.0
    %4878 = vmatprep.subr.mxu0 0.0
    %4879 = vmatpush1.msra.mxu0 0.0
    %4880 = vmatprep.subr.mxu0 0.0
    %4881 = vmatpush1.msra.mxu0 0.0
    %4882 = vmatprep.subr.mxu0 0.0
    %4883 = vmatpush1.msra.mxu0 0.0
    %4884 = vmatprep.subr.mxu0 0.0
    %4885 = vmatpush1.msra.mxu0 0.0
    %4886 = vmatprep.subr.mxu0 0.0
    %4887 = vmatpush1.msra.mxu0 0.0
    %4888 = vmatprep.subr.mxu0 0.0
    %4889 = vmatpush1.msra.mxu0 0.0
    %4890 = vmatprep.subr.mxu0 0.0
    %4891 = vmatpush1.msra.mxu0 0.0
    %4892 = vmatprep.subr.mxu0 0.0
    %4893 = vmatpush1.msra.mxu0 0.0
    %4894 = vmatprep.subr.mxu0 0.0
    %4895 = vmatpush1.msra.mxu0 0.0
    %4896 = vmatprep.mubr.f32.mxu0 0.0
    %v4897 = vand.u32 %v4830, 4294901760
    %v4898 = vsub.f32 %v4830, %v4897
    %v4899 = vand.u32 %v4898, 4294901760
    %v4900 = vsub.f32 %v4898, %v4899
    %v4901 = vand.u32 %v4900, 4294901760
    %4902 = vmatmul.mubr.f32.gmra.mrb[0].mxu0 %v4901
    %v4903 = vpop.f32.mrb[0].mxu0
    %v4904 = vadd.f32 0.0, %v4903
    %v4905 = vpop.f32.mrb[0].mxu0
    %4906 = vdwg.mxu0
    %4907 = vmatprep.subr.mxu0 0.0
    %v4908 = vsub.f32 %v2528, %v2528
    %v4909 = vand.u32 %v4908, 4294901760
    %v4910 = vsub.f32 %v4908, %v4909
    %v4911 = vand.u32 %v4910, 4294901760
    %4912 = vmatpush1.msra.mxu0 %v4911
    %4913 = vmatprep.subr.mxu0 0.0
    %v4914 = vsub.f32 %v2529, %v2529
    %v4915 = vand.u32 %v4914, 4294901760
    %v4916 = vsub.f32 %v4914, %v4915
    %v4917 = vand.u32 %v4916, 4294901760
    %4918 = vmatpush1.msra.mxu0 %v4917
    %4919 = vmatprep.subr.mxu0 0.0
    %4920 = vmatpush1.msra.mxu0 0.0
    %4921 = vmatprep.subr.mxu0 0.0
    %4922 = vmatpush1.msra.mxu0 0.0
    %4923 = vmatprep.subr.mxu0 0.0
    %4924 = vmatpush1.msra.mxu0 0.0
    %4925 = vmatprep.subr.mxu0 0.0
    %4926 = vmatpush1.msra.mxu0 0.0
    %4927 = vmatprep.subr.mxu0 0.0
    %4928 = vmatpush1.msra.mxu0 0.0
    %4929 = vmatprep.subr.mxu0 0.0
    %4930 = vmatpush1.msra.mxu0 0.0
    %4931 = vmatprep.subr.mxu0 0.0
    %4932 = vmatpush1.msra.mxu0 0.0
    %4933 = vmatprep.subr.mxu0 0.0
    %4934 = vmatpush1.msra.mxu0 0.0
    %4935 = vmatprep.subr.mxu0 0.0
    %4936 = vmatpush1.msra.mxu0 0.0
    %4937 = vmatprep.subr.mxu0 0.0
    %4938 = vmatpush1.msra.mxu0 0.0
    %4939 = vmatprep.subr.mxu0 0.0
    %4940 = vmatpush1.msra.mxu0 0.0
    %4941 = vmatprep.subr.mxu0 0.0
    %4942 = vmatpush1.msra.mxu0 0.0
    %4943 = vmatprep.subr.mxu0 0.0
    %4944 = vmatpush1.msra.mxu0 0.0
    %4945 = vmatprep.subr.mxu0 0.0
    %4946 = vmatpush1.msra.mxu0 0.0
    %4947 = vmatprep.subr.mxu0 0.0
    %4948 = vmatpush1.msra.mxu0 0.0
    %4949 = vmatprep.subr.mxu0 0.0
    %4950 = vmatpush1.msra.mxu0 0.0
    %4951 = vmatprep.subr.mxu0 0.0
    %4952 = vmatpush1.msra.mxu0 0.0
    %4953 = vmatprep.subr.mxu0 0.0
    %4954 = vmatpush1.msra.mxu0 0.0
    %4955 = vmatprep.subr.mxu0 0.0
    %4956 = vmatpush1.msra.mxu0 0.0
    %4957 = vmatprep.subr.mxu0 0.0
    %4958 = vmatpush1.msra.mxu0 0.0
    %4959 = vmatprep.subr.mxu0 0.0
    %4960 = vmatpush1.msra.mxu0 0.0
    %4961 = vmatprep.subr.mxu0 0.0
    %4962 = vmatpush1.msra.mxu0 0.0
    %4963 = vmatprep.subr.mxu0 0.0
    %4964 = vmatpush1.msra.mxu0 0.0
    %4965 = vmatprep.subr.mxu0 0.0
    %4966 = vmatpush1.msra.mxu0 0.0
    %4967 = vmatprep.subr.mxu0 0.0
    %4968 = vmatpush1.msra.mxu0 0.0
    %4969 = vmatprep.subr.mxu0 0.0
    %4970 = vmatpush1.msra.mxu0 0.0
    %4971 = vmatprep.subr.mxu0 0.0
    %4972 = vmatpush1.msra.mxu0 0.0
    %4973 = vmatprep.subr.mxu0 0.0
    %4974 = vmatpush1.msra.mxu0 0.0
    %4975 = vmatprep.subr.mxu0 0.0
    %4976 = vmatpush1.msra.mxu0 0.0
    %4977 = vmatprep.subr.mxu0 0.0
    %4978 = vmatpush1.msra.mxu0 0.0
    %4979 = vmatprep.mubr.f32.mxu0 0.0
    %v4980 = vand.u32 %v4830, 4294901760
    %4981 = vmatmul.mubr.f32.gmra.mrb[0].mxu0 %v4980
    %v4982 = vpop.f32.mrb[0].mxu0
    %v4983 = vadd.f32 %v4904, %v4982
    %v4984 = vpop.f32.mrb[0].mxu0
    %4985 = vdwg.mxu0
    %4986 = vmatprep.subr.mxu0 0.0
    %v4987 = vsub.f32 %v2528, %v2528
    %4988 = vmatpush1.msra.mxu0 %v4987
    %4989 = vmatprep.subr.mxu0 0.0
    %v4990 = vsub.f32 %v2529, %v2529
    %4991 = vmatpush1.msra.mxu0 %v4990
    %4992 = vmatprep.subr.mxu0 0.0
    %4993 = vmatpush1.msra.mxu0 0.0
    %4994 = vmatprep.subr.mxu0 0.0
    %4995 = vmatpush1.msra.mxu0 0.0
    %4996 = vmatprep.subr.mxu0 0.0
    %4997 = vmatpush1.msra.mxu0 0.0
    %4998 = vmatprep.subr.mxu0 0.0
    %4999 = vmatpush1.msra.mxu0 0.0
    %5000 = vmatprep.subr.mxu0 0.0
    %5001 = vmatpush1.msra.mxu0 0.0
    %5002 = vmatprep.subr.mxu0 0.0
    %5003 = vmatpush1.msra.mxu0 0.0
    %5004 = vmatprep.subr.mxu0 0.0
    %5005 = vmatpush1.msra.mxu0 0.0
    %5006 = vmatprep.subr.mxu0 0.0
    %5007 = vmatpush1.msra.mxu0 0.0
    %5008 = vmatprep.subr.mxu0 0.0
    %5009 = vmatpush1.msra.mxu0 0.0
    %5010 = vmatprep.subr.mxu0 0.0
    %5011 = vmatpush1.msra.mxu0 0.0
    %5012 = vmatprep.subr.mxu0 0.0
    %5013 = vmatpush1.msra.mxu0 0.0
    %5014 = vmatprep.subr.mxu0 0.0
    %5015 = vmatpush1.msra.mxu0 0.0
    %5016 = vmatprep.subr.mxu0 0.0
    %5017 = vmatpush1.msra.mxu0 0.0
    %5018 = vmatprep.subr.mxu0 0.0
    %5019 = vmatpush1.msra.mxu0 0.0
    %5020 = vmatprep.subr.mxu0 0.0
    %5021 = vmatpush1.msra.mxu0 0.0
    %5022 = vmatprep.subr.mxu0 0.0
    %5023 = vmatpush1.msra.mxu0 0.0
    %5024 = vmatprep.subr.mxu0 0.0
    %5025 = vmatpush1.msra.mxu0 0.0
    %5026 = vmatprep.subr.mxu0 0.0
    %5027 = vmatpush1.msra.mxu0 0.0
    %5028 = vmatprep.subr.mxu0 0.0
    %5029 = vmatpush1.msra.mxu0 0.0
    %5030 = vmatprep.subr.mxu0 0.0
    %5031 = vmatpush1.msra.mxu0 0.0
    %5032 = vmatprep.subr.mxu0 0.0
    %5033 = vmatpush1.msra.mxu0 0.0
    %5034 = vmatprep.subr.mxu0 0.0
    %5035 = vmatpush1.msra.mxu0 0.0
    %5036 = vmatprep.subr.mxu0 0.0
    %5037 = vmatpush1.msra.mxu0 0.0
    %5038 = vmatprep.subr.mxu0 0.0
    %5039 = vmatpush1.msra.mxu0 0.0
    %5040 = vmatprep.subr.mxu0 0.0
    %5041 = vmatpush1.msra.mxu0 0.0
    %5042 = vmatprep.subr.mxu0 0.0
    %5043 = vmatpush1.msra.mxu0 0.0
    %5044 = vmatprep.subr.mxu0 0.0
    %5045 = vmatpush1.msra.mxu0 0.0
    %5046 = vmatprep.subr.mxu0 0.0
    %5047 = vmatpush1.msra.mxu0 0.0
    %5048 = vmatprep.subr.mxu0 0.0
    %5049 = vmatpush1.msra.mxu0 0.0
    %5050 = vmatprep.subr.mxu0 0.0
    %5051 = vmatpush1.msra.mxu0 0.0
    %5052 = vmatprep.mubr.f32.mxu0 0.0
    %v5053 = vand.u32 %v4830, 4294901760
    %v5054 = vsub.f32 %v4830, %v5053
    %5055 = vmatmul.mubr.f32.gmra.mrb[0].mxu0 %v5054
    %v5056 = vpop.f32.mrb[0].mxu0
    %v5057 = vadd.f32 %v4983, %v5056
    %v5058 = vpop.f32.mrb[0].mxu0
    %5059 = vdwg.mxu0
    %5060 = vmatprep.subr.mxu0 0.0
    %5061 = vmatpush1.msra.mxu0 %v2528
    %5062 = vmatprep.subr.mxu0 0.0
    %5063 = vmatpush1.msra.mxu0 %v2529
    %5064 = vmatprep.subr.mxu0 0.0
    %5065 = vmatpush1.msra.mxu0 0.0
    %5066 = vmatprep.subr.mxu0 0.0
    %5067 = vmatpush1.msra.mxu0 0.0
    %5068 = vmatprep.subr.mxu0 0.0
    %5069 = vmatpush1.msra.mxu0 0.0
    %5070 = vmatprep.subr.mxu0 0.0
    %5071 = vmatpush1.msra.mxu0 0.0
    %5072 = vmatprep.subr.mxu0 0.0
    %5073 = vmatpush1.msra.mxu0 0.0
    %5074 = vmatprep.subr.mxu0 0.0
    %5075 = vmatpush1.msra.mxu0 0.0
    %5076 = vmatprep.subr.mxu0 0.0
    %5077 = vmatpush1.msra.mxu0 0.0
    %5078 = vmatprep.subr.mxu0 0.0
    %5079 = vmatpush1.msra.mxu0 0.0
    %5080 = vmatprep.subr.mxu0 0.0
    %5081 = vmatpush1.msra.mxu0 0.0
    %5082 = vmatprep.subr.mxu0 0.0
    %5083 = vmatpush1.msra.mxu0 0.0
    %5084 = vmatprep.subr.mxu0 0.0
    %5085 = vmatpush1.msra.mxu0 0.0
    %5086 = vmatprep.subr.mxu0 0.0
    %5087 = vmatpush1.msra.mxu0 0.0
    %5088 = vmatprep.subr.mxu0 0.0
    %5089 = vmatpush1.msra.mxu0 0.0
    %5090 = vmatprep.subr.mxu0 0.0
    %5091 = vmatpush1.msra.mxu0 0.0
    %5092 = vmatprep.subr.mxu0 0.0
    %5093 = vmatpush1.msra.mxu0 0.0
    %5094 = vmatprep.subr.mxu0 0.0
    %5095 = vmatpush1.msra.mxu0 0.0
    %5096 = vmatprep.subr.mxu0 0.0
    %5097 = vmatpush1.msra.mxu0 0.0
    %5098 = vmatprep.subr.mxu0 0.0
    %5099 = vmatpush1.msra.mxu0 0.0
    %5100 = vmatprep.subr.mxu0 0.0
    %5101 = vmatpush1.msra.mxu0 0.0
    %5102 = vmatprep.subr.mxu0 0.0
    %5103 = vmatpush1.msra.mxu0 0.0
    %5104 = vmatprep.subr.mxu0 0.0
    %5105 = vmatpush1.msra.mxu0 0.0
    %5106 = vmatprep.subr.mxu0 0.0
    %5107 = vmatpush1.msra.mxu0 0.0
    %5108 = vmatprep.subr.mxu0 0.0
    %5109 = vmatpush1.msra.mxu0 0.0
    %5110 = vmatprep.subr.mxu0 0.0
    %5111 = vmatpush1.msra.mxu0 0.0
    %5112 = vmatprep.subr.mxu0 0.0
    %5113 = vmatpush1.msra.mxu0 0.0
    %5114 = vmatprep.subr.mxu0 0.0
    %5115 = vmatpush1.msra.mxu0 0.0
    %5116 = vmatprep.subr.mxu0 0.0
    %5117 = vmatpush1.msra.mxu0 0.0
    %5118 = vmatprep.subr.mxu0 0.0
    %5119 = vmatpush1.msra.mxu0 0.0
    %5120 = vmatprep.subr.mxu0 0.0
    %5121 = vmatpush1.msra.mxu0 0.0
    %5122 = vmatprep.subr.mxu0 0.0
    %5123 = vmatpush1.msra.mxu0 0.0
    %5124 = vmatprep.mubr.f32.mxu0 0.0
    %v5125 = vand.u32 %v4830, 4294901760
    %v5126 = vsub.f32 %v4830, %v5125
    %v5127 = vand.u32 %v5126, 4294901760
    %5128 = vmatmul.mubr.f32.gmra.mrb[0].mxu0 %v5127
    %v5129 = vpop.f32.mrb[0].mxu0
    %v5130 = vadd.f32 %v5057, %v5129
    %v5131 = vpop.f32.mrb[0].mxu0
    %5132 = vdwg.mxu0
    %5133 = vmatprep.subr.mxu0 0.0
    %v5134 = vsub.f32 %v2528, %v2528
    %v5135 = vand.u32 %v5134, 4294901760
    %5136 = vmatpush1.msra.mxu0 %v5135
    %5137 = vmatprep.subr.mxu0 0.0
    %v5138 = vsub.f32 %v2529, %v2529
    %v5139 = vand.u32 %v5138, 4294901760
    %5140 = vmatpush1.msra.mxu0 %v5139
    %5141 = vmatprep.subr.mxu0 0.0
    %5142 = vmatpush1.msra.mxu0 0.0
    %5143 = vmatprep.subr.mxu0 0.0
    %5144 = vmatpush1.msra.mxu0 0.0
    %5145 = vmatprep.subr.mxu0 0.0
    %5146 = vmatpush1.msra.mxu0 0.0
    %5147 = vmatprep.subr.mxu0 0.0
    %5148 = vmatpush1.msra.mxu0 0.0
    %5149 = vmatprep.subr.mxu0 0.0
    %5150 = vmatpush1.msra.mxu0 0.0
    %5151 = vmatprep.subr.mxu0 0.0
    %5152 = vmatpush1.msra.mxu0 0.0
    %5153 = vmatprep.subr.mxu0 0.0
    %5154 = vmatpush1.msra.mxu0 0.0
    %5155 = vmatprep.subr.mxu0 0.0
    %5156 = vmatpush1.msra.mxu0 0.0
    %5157 = vmatprep.subr.mxu0 0.0
    %5158 = vmatpush1.msra.mxu0 0.0
    %5159 = vmatprep.subr.mxu0 0.0
    %5160 = vmatpush1.msra.mxu0 0.0
    %5161 = vmatprep.subr.mxu0 0.0
    %5162 = vmatpush1.msra.mxu0 0.0
    %5163 = vmatprep.subr.mxu0 0.0
    %5164 = vmatpush1.msra.mxu0 0.0
    %5165 = vmatprep.subr.mxu0 0.0
    %5166 = vmatpush1.msra.mxu0 0.0
    %5167 = vmatprep.subr.mxu0 0.0
    %5168 = vmatpush1.msra.mxu0 0.0
    %5169 = vmatprep.subr.mxu0 0.0
    %5170 = vmatpush1.msra.mxu0 0.0
    %5171 = vmatprep.subr.mxu0 0.0
    %5172 = vmatpush1.msra.mxu0 0.0
    %5173 = vmatprep.subr.mxu0 0.0
    %5174 = vmatpush1.msra.mxu0 0.0
    %5175 = vmatprep.subr.mxu0 0.0
    %5176 = vmatpush1.msra.mxu0 0.0
    %5177 = vmatprep.subr.mxu0 0.0
    %5178 = vmatpush1.msra.mxu0 0.0
    %5179 = vmatprep.subr.mxu0 0.0
    %5180 = vmatpush1.msra.mxu0 0.0
    %5181 = vmatprep.subr.mxu0 0.0
    %5182 = vmatpush1.msra.mxu0 0.0
    %5183 = vmatprep.subr.mxu0 0.0
    %5184 = vmatpush1.msra.mxu0 0.0
    %5185 = vmatprep.subr.mxu0 0.0
    %5186 = vmatpush1.msra.mxu0 0.0
    %5187 = vmatprep.subr.mxu0 0.0
    %5188 = vmatpush1.msra.mxu0 0.0
    %5189 = vmatprep.subr.mxu0 0.0
    %5190 = vmatpush1.msra.mxu0 0.0
    %5191 = vmatprep.subr.mxu0 0.0
    %5192 = vmatpush1.msra.mxu0 0.0
    %5193 = vmatprep.subr.mxu0 0.0
    %5194 = vmatpush1.msra.mxu0 0.0
    %5195 = vmatprep.subr.mxu0 0.0
    %5196 = vmatpush1.msra.mxu0 0.0
    %5197 = vmatprep.subr.mxu0 0.0
    %5198 = vmatpush1.msra.mxu0 0.0
    %5199 = vmatprep.subr.mxu0 0.0
    %5200 = vmatpush1.msra.mxu0 0.0
    %5201 = vmatprep.mubr.f32.mxu0 0.0
    %v5202 = vand.u32 %v4830, 4294901760
    %5203 = vmatmul.mubr.f32.gmra.mrb[0].mxu0 %v5202
    %v5204 = vpop.f32.mrb[0].mxu0
    %v5205 = vadd.f32 %v5130, %v5204
    %v5206 = vpop.f32.mrb[0].mxu0
    %5207 = vdwg.mxu0
    %5208 = vmatprep.subr.mxu0 0.0
    %5209 = vmatpush1.msra.mxu0 %v2528
    %5210 = vmatprep.subr.mxu0 0.0
    %5211 = vmatpush1.msra.mxu0 %v2529
    %5212 = vmatprep.subr.mxu0 0.0
    %5213 = vmatpush1.msra.mxu0 0.0
    %5214 = vmatprep.subr.mxu0 0.0
    %5215 = vmatpush1.msra.mxu0 0.0
    %5216 = vmatprep.subr.mxu0 0.0
    %5217 = vmatpush1.msra.mxu0 0.0
    %5218 = vmatprep.subr.mxu0 0.0
    %5219 = vmatpush1.msra.mxu0 0.0
    %5220 = vmatprep.subr.mxu0 0.0
    %5221 = vmatpush1.msra.mxu0 0.0
    %5222 = vmatprep.subr.mxu0 0.0
    %5223 = vmatpush1.msra.mxu0 0.0
    %5224 = vmatprep.subr.mxu0 0.0
    %5225 = vmatpush1.msra.mxu0 0.0
    %5226 = vmatprep.subr.mxu0 0.0
    %5227 = vmatpush1.msra.mxu0 0.0
    %5228 = vmatprep.subr.mxu0 0.0
    %5229 = vmatpush1.msra.mxu0 0.0
    %5230 = vmatprep.subr.mxu0 0.0
    %5231 = vmatpush1.msra.mxu0 0.0
    %5232 = vmatprep.subr.mxu0 0.0
    %5233 = vmatpush1.msra.mxu0 0.0
    %5234 = vmatprep.subr.mxu0 0.0
    %5235 = vmatpush1.msra.mxu0 0.0
    %5236 = vmatprep.subr.mxu0 0.0
    %5237 = vmatpush1.msra.mxu0 0.0
    %5238 = vmatprep.subr.mxu0 0.0
    %5239 = vmatpush1.msra.mxu0 0.0
    %5240 = vmatprep.subr.mxu0 0.0
    %5241 = vmatpush1.msra.mxu0 0.0
    %5242 = vmatprep.subr.mxu0 0.0
    %5243 = vmatpush1.msra.mxu0 0.0
    %5244 = vmatprep.subr.mxu0 0.0
    %5245 = vmatpush1.msra.mxu0 0.0
    %5246 = vmatprep.subr.mxu0 0.0
    %5247 = vmatpush1.msra.mxu0 0.0
    %5248 = vmatprep.subr.mxu0 0.0
    %5249 = vmatpush1.msra.mxu0 0.0
    %5250 = vmatprep.subr.mxu0 0.0
    %5251 = vmatpush1.msra.mxu0 0.0
    %5252 = vmatprep.subr.mxu0 0.0
    %5253 = vmatpush1.msra.mxu0 0.0
    %5254 = vmatprep.subr.mxu0 0.0
    %5255 = vmatpush1.msra.mxu0 0.0
    %5256 = vmatprep.subr.mxu0 0.0
    %5257 = vmatpush1.msra.mxu0 0.0
    %5258 = vmatprep.subr.mxu0 0.0
    %5259 = vmatpush1.msra.mxu0 0.0
    %5260 = vmatprep.subr.mxu0 0.0
    %5261 = vmatpush1.msra.mxu0 0.0
    %5262 = vmatprep.subr.mxu0 0.0
    %5263 = vmatpush1.msra.mxu0 0.0
    %5264 = vmatprep.subr.mxu0 0.0
    %5265 = vmatpush1.msra.mxu0 0.0
    %5266 = vmatprep.subr.mxu0 0.0
    %5267 = vmatpush1.msra.mxu0 0.0
    %5268 = vmatprep.subr.mxu0 0.0
    %5269 = vmatpush1.msra.mxu0 0.0
    %5270 = vmatprep.subr.mxu0 0.0
    %5271 = vmatpush1.msra.mxu0 0.0
    %5272 = vmatprep.mubr.f32.mxu0 0.0
    %v5273 = vand.u32 %v4830, 4294901760
    %5274 = vmatmul.mubr.f32.gmra.mrb[0].mxu0 %v5273
    %v5275 = vpop.f32.mrb[0].mxu0
    %v5276 = vadd.f32 %v5205, %v5275
    %v5277 = vpop.f32.mrb[0].mxu0
    %5278 = vdwg.mxu0
    %5279 = vmatprep.subr.mxu0 0.0
    %5280 = vmatpush1.msra.mxu0 %v2533
    %5281 = vmatprep.subr.mxu0 0.0
    %5282 = vmatpush1.msra.mxu0 %v2534
    %5283 = vmatprep.subr.mxu0 0.0
    %5284 = vmatpush1.msra.mxu0 0.0
    %5285 = vmatprep.subr.mxu0 0.0
    %5286 = vmatpush1.msra.mxu0 0.0
    %5287 = vmatprep.subr.mxu0 0.0
    %5288 = vmatpush1.msra.mxu0 0.0
    %5289 = vmatprep.subr.mxu0 0.0
    %5290 = vmatpush1.msra.mxu0 0.0
    %5291 = vmatprep.subr.mxu0 0.0
    %5292 = vmatpush1.msra.mxu0 0.0
    %5293 = vmatprep.subr.mxu0 0.0
    %5294 = vmatpush1.msra.mxu0 0.0
    %5295 = vmatprep.subr.mxu0 0.0
    %5296 = vmatpush1.msra.mxu0 0.0
    %5297 = vmatprep.subr.mxu0 0.0
    %5298 = vmatpush1.msra.mxu0 0.0
    %5299 = vmatprep.subr.mxu0 0.0
    %5300 = vmatpush1.msra.mxu0 0.0
    %5301 = vmatprep.subr.mxu0 0.0
    %5302 = vmatpush1.msra.mxu0 0.0
    %5303 = vmatprep.subr.mxu0 0.0
    %5304 = vmatpush1.msra.mxu0 0.0
    %5305 = vmatprep.subr.mxu0 0.0
    %5306 = vmatpush1.msra.mxu0 0.0
    %5307 = vmatprep.subr.mxu0 0.0
    %5308 = vmatpush1.msra.mxu0 0.0
    %5309 = vmatprep.subr.mxu0 0.0
    %5310 = vmatpush1.msra.mxu0 0.0
    %5311 = vmatprep.subr.mxu0 0.0
    %5312 = vmatpush1.msra.mxu0 0.0
    %5313 = vmatprep.subr.mxu0 0.0
    %5314 = vmatpush1.msra.mxu0 0.0
    %5315 = vmatprep.subr.mxu0 0.0
    %5316 = vmatpush1.msra.mxu0 0.0
    %5317 = vmatprep.subr.mxu0 0.0
    %5318 = vmatpush1.msra.mxu0 0.0
    %5319 = vmatprep.subr.mxu0 0.0
    %5320 = vmatpush1.msra.mxu0 0.0
    %5321 = vmatprep.subr.mxu0 0.0
    %5322 = vmatpush1.msra.mxu0 0.0
    %5323 = vmatprep.subr.mxu0 0.0
    %5324 = vmatpush1.msra.mxu0 0.0
    %5325 = vmatprep.subr.mxu0 0.0
    %5326 = vmatpush1.msra.mxu0 0.0
    %5327 = vmatprep.subr.mxu0 0.0
    %5328 = vmatpush1.msra.mxu0 0.0
    %5329 = vmatprep.subr.mxu0 0.0
    %5330 = vmatpush1.msra.mxu0 0.0
    %5331 = vmatprep.subr.mxu0 0.0
    %5332 = vmatpush1.msra.mxu0 0.0
    %5333 = vmatprep.subr.mxu0 0.0
    %5334 = vmatpush1.msra.mxu0 0.0
    %5335 = vmatprep.subr.mxu0 0.0
    %5336 = vmatpush1.msra.mxu0 0.0
    %5337 = vmatprep.subr.mxu0 0.0
    %5338 = vmatpush1.msra.mxu0 0.0
    %5339 = vmatprep.subr.mxu0 0.0
    %5340 = vmatpush1.msra.mxu0 0.0
    %5341 = vmatprep.subr.mxu0 0.0
    %5342 = vmatpush1.msra.mxu0 0.0
    %5343 = vmatprep.mubr.f32.mxu0 0.0
    %v5344 = vand.u32 %v4830, 4294901760
    %v5345 = vsub.f32 %v4830, %v5344
    %v5346 = vand.u32 %v5345, 4294901760
    %v5347 = vsub.f32 %v5345, %v5346
    %v5348 = vand.u32 %v5347, 4294901760
    %5349 = vmatmul.mubr.f32.gmra.mrb[0].mxu0 %v5348
    %v5350 = vpop.f32.mrb[0].mxu0
    %v5351 = vadd.f32 0.0, %v5350
    %v5352 = vpop.f32.mrb[0].mxu0
    %5353 = vdwg.mxu0
    %5354 = vmatprep.subr.mxu0 0.0
    %v5355 = vsub.f32 %v2533, %v2533
    %v5356 = vand.u32 %v5355, 4294901760
    %v5357 = vsub.f32 %v5355, %v5356
    %v5358 = vand.u32 %v5357, 4294901760
    %5359 = vmatpush1.msra.mxu0 %v5358
    %5360 = vmatprep.subr.mxu0 0.0
    %v5361 = vsub.f32 %v2534, %v2534
    %v5362 = vand.u32 %v5361, 4294901760
    %v5363 = vsub.f32 %v5361, %v5362
    %v5364 = vand.u32 %v5363, 4294901760
    %5365 = vmatpush1.msra.mxu0 %v5364
    %5366 = vmatprep.subr.mxu0 0.0
    %5367 = vmatpush1.msra.mxu0 0.0
    %5368 = vmatprep.subr.mxu0 0.0
    %5369 = vmatpush1.msra.mxu0 0.0
    %5370 = vmatprep.subr.mxu0 0.0
    %5371 = vmatpush1.msra.mxu0 0.0
    %5372 = vmatprep.subr.mxu0 0.0
    %5373 = vmatpush1.msra.mxu0 0.0
    %5374 = vmatprep.subr.mxu0 0.0
    %5375 = vmatpush1.msra.mxu0 0.0
    %5376 = vmatprep.subr.mxu0 0.0
    %5377 = vmatpush1.msra.mxu0 0.0
    %5378 = vmatprep.subr.mxu0 0.0
    %5379 = vmatpush1.msra.mxu0 0.0
    %5380 = vmatprep.subr.mxu0 0.0
    %5381 = vmatpush1.msra.mxu0 0.0
    %5382 = vmatprep.subr.mxu0 0.0
    %5383 = vmatpush1.msra.mxu0 0.0
    %5384 = vmatprep.subr.mxu0 0.0
    %5385 = vmatpush1.msra.mxu0 0.0
    %5386 = vmatprep.subr.mxu0 0.0
    %5387 = vmatpush1.msra.mxu0 0.0
    %5388 = vmatprep.subr.mxu0 0.0
    %5389 = vmatpush1.msra.mxu0 0.0
    %5390 = vmatprep.subr.mxu0 0.0
    %5391 = vmatpush1.msra.mxu0 0.0
    %5392 = vmatprep.subr.mxu0 0.0
    %5393 = vmatpush1.msra.mxu0 0.0
    %5394 = vmatprep.subr.mxu0 0.0
    %5395 = vmatpush1.msra.mxu0 0.0
    %5396 = vmatprep.subr.mxu0 0.0
    %5397 = vmatpush1.msra.mxu0 0.0
    %5398 = vmatprep.subr.mxu0 0.0
    %5399 = vmatpush1.msra.mxu0 0.0
    %5400 = vmatprep.subr.mxu0 0.0
    %5401 = vmatpush1.msra.mxu0 0.0
    %5402 = vmatprep.subr.mxu0 0.0
    %5403 = vmatpush1.msra.mxu0 0.0
    %5404 = vmatprep.subr.mxu0 0.0
    %5405 = vmatpush1.msra.mxu0 0.0
    %5406 = vmatprep.subr.mxu0 0.0
    %5407 = vmatpush1.msra.mxu0 0.0
    %5408 = vmatprep.subr.mxu0 0.0
    %5409 = vmatpush1.msra.mxu0 0.0
    %5410 = vmatprep.subr.mxu0 0.0
    %5411 = vmatpush1.msra.mxu0 0.0
    %5412 = vmatprep.subr.mxu0 0.0
    %5413 = vmatpush1.msra.mxu0 0.0
    %5414 = vmatprep.subr.mxu0 0.0
    %5415 = vmatpush1.msra.mxu0 0.0
    %5416 = vmatprep.subr.mxu0 0.0
    %5417 = vmatpush1.msra.mxu0 0.0
    %5418 = vmatprep.subr.mxu0 0.0
    %5419 = vmatpush1.msra.mxu0 0.0
    %5420 = vmatprep.subr.mxu0 0.0
    %5421 = vmatpush1.msra.mxu0 0.0
    %5422 = vmatprep.subr.mxu0 0.0
    %5423 = vmatpush1.msra.mxu0 0.0
    %5424 = vmatprep.subr.mxu0 0.0
    %5425 = vmatpush1.msra.mxu0 0.0
    %5426 = vmatprep.mubr.f32.mxu0 0.0
    %v5427 = vand.u32 %v4830, 4294901760
    %5428 = vmatmul.mubr.f32.gmra.mrb[0].mxu0 %v5427
    %v5429 = vpop.f32.mrb[0].mxu0
    %v5430 = vadd.f32 %v5351, %v5429
    %v5431 = vpop.f32.mrb[0].mxu0
    %5432 = vdwg.mxu0
    %5433 = vmatprep.subr.mxu0 0.0
    %v5434 = vsub.f32 %v2533, %v2533
    %5435 = vmatpush1.msra.mxu0 %v5434
    %5436 = vmatprep.subr.mxu0 0.0
    %v5437 = vsub.f32 %v2534, %v2534
    %5438 = vmatpush1.msra.mxu0 %v5437
    %5439 = vmatprep.subr.mxu0 0.0
    %5440 = vmatpush1.msra.mxu0 0.0
    %5441 = vmatprep.subr.mxu0 0.0
    %5442 = vmatpush1.msra.mxu0 0.0
    %5443 = vmatprep.subr.mxu0 0.0
    %5444 = vmatpush1.msra.mxu0 0.0
    %5445 = vmatprep.subr.mxu0 0.0
    %5446 = vmatpush1.msra.mxu0 0.0
    %5447 = vmatprep.subr.mxu0 0.0
    %5448 = vmatpush1.msra.mxu0 0.0
    %5449 = vmatprep.subr.mxu0 0.0
    %5450 = vmatpush1.msra.mxu0 0.0
    %5451 = vmatprep.subr.mxu0 0.0
    %5452 = vmatpush1.msra.mxu0 0.0
    %5453 = vmatprep.subr.mxu0 0.0
    %5454 = vmatpush1.msra.mxu0 0.0
    %5455 = vmatprep.subr.mxu0 0.0
    %5456 = vmatpush1.msra.mxu0 0.0
    %5457 = vmatprep.subr.mxu0 0.0
    %5458 = vmatpush1.msra.mxu0 0.0
    %5459 = vmatprep.subr.mxu0 0.0
    %5460 = vmatpush1.msra.mxu0 0.0
    %5461 = vmatprep.subr.mxu0 0.0
    %5462 = vmatpush1.msra.mxu0 0.0
    %5463 = vmatprep.subr.mxu0 0.0
    %5464 = vmatpush1.msra.mxu0 0.0
    %5465 = vmatprep.subr.mxu0 0.0
    %5466 = vmatpush1.msra.mxu0 0.0
    %5467 = vmatprep.subr.mxu0 0.0
    %5468 = vmatpush1.msra.mxu0 0.0
    %5469 = vmatprep.subr.mxu0 0.0
    %5470 = vmatpush1.msra.mxu0 0.0
    %5471 = vmatprep.subr.mxu0 0.0
    %5472 = vmatpush1.msra.mxu0 0.0
    %5473 = vmatprep.subr.mxu0 0.0
    %5474 = vmatpush1.msra.mxu0 0.0
    %5475 = vmatprep.subr.mxu0 0.0
    %5476 = vmatpush1.msra.mxu0 0.0
    %5477 = vmatprep.subr.mxu0 0.0
    %5478 = vmatpush1.msra.mxu0 0.0
    %5479 = vmatprep.subr.mxu0 0.0
    %5480 = vmatpush1.msra.mxu0 0.0
    %5481 = vmatprep.subr.mxu0 0.0
    %5482 = vmatpush1.msra.mxu0 0.0
    %5483 = vmatprep.subr.mxu0 0.0
    %5484 = vmatpush1.msra.mxu0 0.0
    %5485 = vmatprep.subr.mxu0 0.0
    %5486 = vmatpush1.msra.mxu0 0.0
    %5487 = vmatprep.subr.mxu0 0.0
    %5488 = vmatpush1.msra.mxu0 0.0
    %5489 = vmatprep.subr.mxu0 0.0
    %5490 = vmatpush1.msra.mxu0 0.0
    %5491 = vmatprep.subr.mxu0 0.0
    %5492 = vmatpush1.msra.mxu0 0.0
    %5493 = vmatprep.subr.mxu0 0.0
    %5494 = vmatpush1.msra.mxu0 0.0
    %5495 = vmatprep.subr.mxu0 0.0
    %5496 = vmatpush1.msra.mxu0 0.0
    %5497 = vmatprep.subr.mxu0 0.0
    %5498 = vmatpush1.msra.mxu0 0.0
    %5499 = vmatprep.mubr.f32.mxu0 0.0
    %v5500 = vand.u32 %v4830, 4294901760
    %v5501 = vsub.f32 %v4830, %v5500
    %5502 = vmatmul.mubr.f32.gmra.mrb[0].mxu0 %v5501
    %v5503 = vpop.f32.mrb[0].mxu0
    %v5504 = vadd.f32 %v5430, %v5503
    %v5505 = vpop.f32.mrb[0].mxu0
    %5506 = vdwg.mxu0
    %5507 = vmatprep.subr.mxu0 0.0
    %5508 = vmatpush1.msra.mxu0 %v2533
    %5509 = vmatprep.subr.mxu0 0.0
    %5510 = vmatpush1.msra.mxu0 %v2534
    %5511 = vmatprep.subr.mxu0 0.0
    %5512 = vmatpush1.msra.mxu0 0.0
    %5513 = vmatprep.subr.mxu0 0.0
    %5514 = vmatpush1.msra.mxu0 0.0
    %5515 = vmatprep.subr.mxu0 0.0
    %5516 = vmatpush1.msra.mxu0 0.0
    %5517 = vmatprep.subr.mxu0 0.0
    %5518 = vmatpush1.msra.mxu0 0.0
    %5519 = vmatprep.subr.mxu0 0.0
    %5520 = vmatpush1.msra.mxu0 0.0
    %5521 = vmatprep.subr.mxu0 0.0
    %5522 = vmatpush1.msra.mxu0 0.0
    %5523 = vmatprep.subr.mxu0 0.0
    %5524 = vmatpush1.msra.mxu0 0.0
    %5525 = vmatprep.subr.mxu0 0.0
    %5526 = vmatpush1.msra.mxu0 0.0
    %5527 = vmatprep.subr.mxu0 0.0
    %5528 = vmatpush1.msra.mxu0 0.0
    %5529 = vmatprep.subr.mxu0 0.0
    %5530 = vmatpush1.msra.mxu0 0.0
    %5531 = vmatprep.subr.mxu0 0.0
    %5532 = vmatpush1.msra.mxu0 0.0
    %5533 = vmatprep.subr.mxu0 0.0
    %5534 = vmatpush1.msra.mxu0 0.0
    %5535 = vmatprep.subr.mxu0 0.0
    %5536 = vmatpush1.msra.mxu0 0.0
    %5537 = vmatprep.subr.mxu0 0.0
    %5538 = vmatpush1.msra.mxu0 0.0
    %5539 = vmatprep.subr.mxu0 0.0
    %5540 = vmatpush1.msra.mxu0 0.0
    %5541 = vmatprep.subr.mxu0 0.0
    %5542 = vmatpush1.msra.mxu0 0.0
    %5543 = vmatprep.subr.mxu0 0.0
    %5544 = vmatpush1.msra.mxu0 0.0
    %5545 = vmatprep.subr.mxu0 0.0
    %5546 = vmatpush1.msra.mxu0 0.0
    %5547 = vmatprep.subr.mxu0 0.0
    %5548 = vmatpush1.msra.mxu0 0.0
    %5549 = vmatprep.subr.mxu0 0.0
    %5550 = vmatpush1.msra.mxu0 0.0
    %5551 = vmatprep.subr.mxu0 0.0
    %5552 = vmatpush1.msra.mxu0 0.0
    %5553 = vmatprep.subr.mxu0 0.0
    %5554 = vmatpush1.msra.mxu0 0.0
    %5555 = vmatprep.subr.mxu0 0.0
    %5556 = vmatpush1.msra.mxu0 0.0
    %5557 = vmatprep.subr.mxu0 0.0
    %5558 = vmatpush1.msra.mxu0 0.0
    %5559 = vmatprep.subr.mxu0 0.0
    %5560 = vmatpush1.msra.mxu0 0.0
    %5561 = vmatprep.subr.mxu0 0.0
    %5562 = vmatpush1.msra.mxu0 0.0
    %5563 = vmatprep.subr.mxu0 0.0
    %5564 = vmatpush1.msra.mxu0 0.0
    %5565 = vmatprep.subr.mxu0 0.0
    %5566 = vmatpush1.msra.mxu0 0.0
    %5567 = vmatprep.subr.mxu0 0.0
    %5568 = vmatpush1.msra.mxu0 0.0
    %5569 = vmatprep.subr.mxu0 0.0
    %5570 = vmatpush1.msra.mxu0 0.0
    %5571 = vmatprep.mubr.f32.mxu0 0.0
    %v5572 = vand.u32 %v4830, 4294901760
    %v5573 = vsub.f32 %v4830, %v5572
    %v5574 = vand.u32 %v5573, 4294901760
    %5575 = vmatmul.mubr.f32.gmra.mrb[0].mxu0 %v5574
    %v5576 = vpop.f32.mrb[0].mxu0
    %v5577 = vadd.f32 %v5504, %v5576
    %v5578 = vpop.f32.mrb[0].mxu0
    %5579 = vdwg.mxu0
    %5580 = vmatprep.subr.mxu0 0.0
    %v5581 = vsub.f32 %v2533, %v2533
    %v5582 = vand.u32 %v5581, 4294901760
    %5583 = vmatpush1.msra.mxu0 %v5582
    %5584 = vmatprep.subr.mxu0 0.0
    %v5585 = vsub.f32 %v2534, %v2534
    %v5586 = vand.u32 %v5585, 4294901760
    %5587 = vmatpush1.msra.mxu0 %v5586
    %5588 = vmatprep.subr.mxu0 0.0
    %5589 = vmatpush1.msra.mxu0 0.0
    %5590 = vmatprep.subr.mxu0 0.0
    %5591 = vmatpush1.msra.mxu0 0.0
    %5592 = vmatprep.subr.mxu0 0.0
    %5593 = vmatpush1.msra.mxu0 0.0
    %5594 = vmatprep.subr.mxu0 0.0
    %5595 = vmatpush1.msra.mxu0 0.0
    %5596 = vmatprep.subr.mxu0 0.0
    %5597 = vmatpush1.msra.mxu0 0.0
    %5598 = vmatprep.subr.mxu0 0.0
    %5599 = vmatpush1.msra.mxu0 0.0
    %5600 = vmatprep.subr.mxu0 0.0
    %5601 = vmatpush1.msra.mxu0 0.0
    %5602 = vmatprep.subr.mxu0 0.0
    %5603 = vmatpush1.msra.mxu0 0.0
    %5604 = vmatprep.subr.mxu0 0.0
    %5605 = vmatpush1.msra.mxu0 0.0
    %5606 = vmatprep.subr.mxu0 0.0
    %5607 = vmatpush1.msra.mxu0 0.0
    %5608 = vmatprep.subr.mxu0 0.0
    %5609 = vmatpush1.msra.mxu0 0.0
    %5610 = vmatprep.subr.mxu0 0.0
    %5611 = vmatpush1.msra.mxu0 0.0
    %5612 = vmatprep.subr.mxu0 0.0
    %5613 = vmatpush1.msra.mxu0 0.0
    %5614 = vmatprep.subr.mxu0 0.0
    %5615 = vmatpush1.msra.mxu0 0.0
    %5616 = vmatprep.subr.mxu0 0.0
    %5617 = vmatpush1.msra.mxu0 0.0
    %5618 = vmatprep.subr.mxu0 0.0
    %5619 = vmatpush1.msra.mxu0 0.0
    %5620 = vmatprep.subr.mxu0 0.0
    %5621 = vmatpush1.msra.mxu0 0.0
    %5622 = vmatprep.subr.mxu0 0.0
    %5623 = vmatpush1.msra.mxu0 0.0
    %5624 = vmatprep.subr.mxu0 0.0
    %5625 = vmatpush1.msra.mxu0 0.0
    %5626 = vmatprep.subr.mxu0 0.0
    %5627 = vmatpush1.msra.mxu0 0.0
    %5628 = vmatprep.subr.mxu0 0.0
    %5629 = vmatpush1.msra.mxu0 0.0
    %5630 = vmatprep.subr.mxu0 0.0
    %5631 = vmatpush1.msra.mxu0 0.0
    %5632 = vmatprep.subr.mxu0 0.0
    %5633 = vmatpush1.msra.mxu0 0.0
    %5634 = vmatprep.subr.mxu0 0.0
    %5635 = vmatpush1.msra.mxu0 0.0
    %5636 = vmatprep.subr.mxu0 0.0
    %5637 = vmatpush1.msra.mxu0 0.0
    %5638 = vmatprep.subr.mxu0 0.0
    %5639 = vmatpush1.msra.mxu0 0.0
    %5640 = vmatprep.subr.mxu0 0.0
    %5641 = vmatpush1.msra.mxu0 0.0
    %5642 = vmatprep.subr.mxu0 0.0
    %5643 = vmatpush1.msra.mxu0 0.0
    %5644 = vmatprep.subr.mxu0 0.0
    %5645 = vmatpush1.msra.mxu0 0.0
    %5646 = vmatprep.subr.mxu0 0.0
    %5647 = vmatpush1.msra.mxu0 0.0
    %5648 = vmatprep.mubr.f32.mxu0 0.0
    %v5649 = vand.u32 %v4830, 4294901760
    %5650 = vmatmul.mubr.f32.gmra.mrb[0].mxu0 %v5649
    %v5651 = vpop.f32.mrb[0].mxu0
    %v5652 = vadd.f32 %v5577, %v5651
    %v5653 = vpop.f32.mrb[0].mxu0
    %5654 = vdwg.mxu0
    %5655 = vmatprep.subr.mxu0 0.0
    %5656 = vmatpush1.msra.mxu0 %v2533
    %5657 = vmatprep.subr.mxu0 0.0
    %5658 = vmatpush1.msra.mxu0 %v2534
    %5659 = vmatprep.subr.mxu0 0.0
    %5660 = vmatpush1.msra.mxu0 0.0
    %5661 = vmatprep.subr.mxu0 0.0
    %5662 = vmatpush1.msra.mxu0 0.0
    %5663 = vmatprep.subr.mxu0 0.0
    %5664 = vmatpush1.msra.mxu0 0.0
    %5665 = vmatprep.subr.mxu0 0.0
    %5666 = vmatpush1.msra.mxu0 0.0
    %5667 = vmatprep.subr.mxu0 0.0
    %5668 = vmatpush1.msra.mxu0 0.0
    %5669 = vmatprep.subr.mxu0 0.0
    %5670 = vmatpush1.msra.mxu0 0.0
    %5671 = vmatprep.subr.mxu0 0.0
    %5672 = vmatpush1.msra.mxu0 0.0
    %5673 = vmatprep.subr.mxu0 0.0
    %5674 = vmatpush1.msra.mxu0 0.0
    %5675 = vmatprep.subr.mxu0 0.0
    %5676 = vmatpush1.msra.mxu0 0.0
    %5677 = vmatprep.subr.mxu0 0.0
    %5678 = vmatpush1.msra.mxu0 0.0
    %5679 = vmatprep.subr.mxu0 0.0
    %5680 = vmatpush1.msra.mxu0 0.0
    %5681 = vmatprep.subr.mxu0 0.0
    %5682 = vmatpush1.msra.mxu0 0.0
    %5683 = vmatprep.subr.mxu0 0.0
    %5684 = vmatpush1.msra.mxu0 0.0
    %5685 = vmatprep.subr.mxu0 0.0
    %5686 = vmatpush1.msra.mxu0 0.0
    %5687 = vmatprep.subr.mxu0 0.0
    %5688 = vmatpush1.msra.mxu0 0.0
    %5689 = vmatprep.subr.mxu0 0.0
    %5690 = vmatpush1.msra.mxu0 0.0
    %5691 = vmatprep.subr.mxu0 0.0
    %5692 = vmatpush1.msra.mxu0 0.0
    %5693 = vmatprep.subr.mxu0 0.0
    %5694 = vmatpush1.msra.mxu0 0.0
    %5695 = vmatprep.subr.mxu0 0.0
    %5696 = vmatpush1.msra.mxu0 0.0
    %5697 = vmatprep.subr.mxu0 0.0
    %5698 = vmatpush1.msra.mxu0 0.0
    %5699 = vmatprep.subr.mxu0 0.0
    %5700 = vmatpush1.msra.mxu0 0.0
    %5701 = vmatprep.subr.mxu0 0.0
    %5702 = vmatpush1.msra.mxu0 0.0
    %5703 = vmatprep.subr.mxu0 0.0
    %5704 = vmatpush1.msra.mxu0 0.0
    %5705 = vmatprep.subr.mxu0 0.0
    %5706 = vmatpush1.msra.mxu0 0.0
    %5707 = vmatprep.subr.mxu0 0.0
    %5708 = vmatpush1.msra.mxu0 0.0
    %5709 = vmatprep.subr.mxu0 0.0
    %5710 = vmatpush1.msra.mxu0 0.0
    %5711 = vmatprep.subr.mxu0 0.0
    %5712 = vmatpush1.msra.mxu0 0.0
    %5713 = vmatprep.subr.mxu0 0.0
    %5714 = vmatpush1.msra.mxu0 0.0
    %5715 = vmatprep.subr.mxu0 0.0
    %5716 = vmatpush1.msra.mxu0 0.0
    %5717 = vmatprep.subr.mxu0 0.0
    %5718 = vmatpush1.msra.mxu0 0.0
    %5719 = vmatprep.mubr.f32.mxu0 0.0
    %v5720 = vand.u32 %v4830, 4294901760
    %5721 = vmatmul.mubr.f32.gmra.mrb[0].mxu0 %v5720
    %v5722 = vpop.f32.mrb[0].mxu0
    %v5723 = vadd.f32 %v5652, %v5722
    %v5724 = vpop.f32.mrb[0].mxu0
    %5725 = vdwg.mxu0
    %v5726 = vmax.f32 %v5276, %v5723
    %v5729 = vunpack.c.l.s4 1966171168
    %v5730 = vunpack.c.0.s8 %v5729
    %v5731 = vlaneseq
    %v5732 = vshrl.u32 %v5731, 7
    %v5733 = vsub.s32 %v5730, %v5732
    %v5734 = vrot.slane %v5726, %v5733
    %v5735 = vcombine.high %v5734, %v5734
    %v5737 = vunpack.c.l.s4 1966171168
    %v5738 = vunpack.c.0.s8 %v5737
    %v5739 = vlaneseq
    %v5740 = vshrl.u32 %v5739, 7
    %v5741 = vsub.s32 %v5738, %v5740
    %v5742 = vrot.slane %v5734, %v5741
    %v5744 = vunpack.c.l.s4 1966171168
    %v5745 = vunpack.c.0.s8 %v5744
    %v5746 = vlaneseq
    %v5747 = vshrl.u32 %v5746, 7
    %v5748 = vsub.s32 %v5745, %v5747
    %v5749 = vrot.slane %v5735, %v5748
    %5752 = vst.msk [vmem:[#allocation13 + $0x2] sm:$0x1] %vm3609, %v5742
    %5753 = vst.msk [vmem:[#allocation13 + $0x6] sm:$0x1] %vm3609, %v5749
    %s5754 = sld [smem:[#allocation8 + $0x3]]
    %v5755 = vstv %s5754
    %v5756 = vadd.f32 %v2518, %v5755
    %v5757 = vadd.f32 %v2519, %v5755
    %vm5758 = vcmp.gt.f32.partialorder %v5756, 0.0
    %vm5759 = vcmp.gt.f32.partialorder %v5757, 0.0
    %v5760 = vmin.f32 %v5756, 0.0
    %v5761 = vmin.f32 %v5757, 0.0
    %v5762 = vmul.f32 %v5760, 1.442695
    %v5763 = vpow.pop %v5762
    %v5764 = vmul.f32 %v5761, 1.442695
    %v5765 = vpow.pop %v5764
    %v5766 = vsub.f32 %v5763, 1.0
    %v5767 = vsub.f32 %v5765, 1.0
    %v5768 = vsel %vm5758, %v5756, %v5766
    %v5769 = vsel %vm5759, %v5757, %v5767
    %v5772 = vlaneseq
    %v5773 = vshrl.u32 %v5772, 7
    %v5774 = vsub.s32 0, %v5773
    %v5775 = vrot.slane %v5768, %v5774
    %v5776 = vlaneseq
    %v5777 = vshrl.u32 %v5776, 7
    %v5778 = vsub.s32 4, %v5777
    %v5779 = vrot.slane %v5768, %v5778
    %v5780 = vlaneseq
    %v5781 = vshrl.u32 %v5780, 7
    %v5782 = vsub.s32 0, %v5781
    %v5783 = vrot.slane %v5769, %v5782
    %v5784 = vlaneseq
    %v5785 = vshrl.u32 %v5784, 7
    %v5786 = vsub.s32 4, %v5785
    %v5787 = vrot.slane %v5769, %v5786
    %v5788 = vsel %vm2569, %v5783, %v5775
    %v5789 = vsel %vm2569, %v5787, %v5779
    %5790 = vrot.lane.b32.xlu0 %v5788, 4
    %v5791 = vpop.permute.xlu0 %5790
    %5792 = vrot.lane.b32.xlu0 %v5789, 4
    %v5793 = vpop.permute.xlu0 %5792
    %v5794 = vsel %vm2576, %v5791, %v5793
    %v5796 = vsel %vm2579, %v5794, 0.0
    %5797 = vadd.xlane.f32.xlu0 %v5796
    %v5798 = vpop.xlane.xlu0 %5797
    %v5799 = vrot.slane %v5798, 4
    %v5800 = vadd.f32 %v5798, %v5799
    %v5801 = vrot.slane %v5800, 2
    %v5802 = vadd.f32 %v5800, %v5801
    %v5803 = vrot.slane %v5802, 1
    %v5804 = vadd.f32 %v5802, %v5803
    %s5805 = vtos %v5804
    %s5806 = smul.f32 %s5805, 0.03125
    %v5807 = vstv %s5806
    %v5808 = vsub.f32 %v5768, %v5807
    %v5809 = vsub.f32 %v5769, %v5807
    %v5810 = vmul.f32 %v5808, %v5808
    %v5811 = vmul.f32 %v5809, %v5809
    %v5814 = vlaneseq
    %v5815 = vshrl.u32 %v5814, 7
    %v5816 = vsub.s32 0, %v5815
    %v5817 = vrot.slane %v5810, %v5816
    %v5818 = vlaneseq
    %v5819 = vshrl.u32 %v5818, 7
    %v5820 = vsub.s32 4, %v5819
    %v5821 = vrot.slane %v5810, %v5820
    %v5822 = vlaneseq
    %v5823 = vshrl.u32 %v5822, 7
    %v5824 = vsub.s32 0, %v5823
    %v5825 = vrot.slane %v5811, %v5824
    %v5826 = vlaneseq
    %v5827 = vshrl.u32 %v5826, 7
    %v5828 = vsub.s32 4, %v5827
    %v5829 = vrot.slane %v5811, %v5828
    %v5830 = vsel %vm2569, %v5825, %v5817
    %v5831 = vsel %vm2569, %v5829, %v5821
    %5832 = vrot.lane.b32.xlu0 %v5830, 4
    %v5833 = vpop.permute.xlu0 %5832
    %5834 = vrot.lane.b32.xlu0 %v5831, 4
    %v5835 = vpop.permute.xlu0 %5834
    %v5836 = vsel %vm2576, %v5833, %v5835
    %v5838 = vsel %vm2579, %v5836, 0.0
    %5839 = vadd.xlane.f32.xlu0 %v5838
    %v5840 = vpop.xlane.xlu0 %5839
    %v5841 = vrot.slane %v5840, 4
    %v5842 = vadd.f32 %v5840, %v5841
    %v5843 = vrot.slane %v5842, 2
    %v5844 = vadd.f32 %v5842, %v5843
    %v5845 = vrot.slane %v5844, 1
    %v5846 = vadd.f32 %v5844, %v5845
    %s5847 = vtos %v5846
    %s5848 = smul.f32 %s5847, 0.03125
    %s5849 = sld [smem:[#allocation10 + $0x3]]
    %s5850 = sadd.f32 %s5848, 1e-05
    %v5851 = vstv %s5850
    %v5852 = vrsqrt.pop %v5851
    %s5853 = vtos %v5852
    %s5854 = smul.f32 %s5849, %s5853
    %v5855 = vstv %s5854
    %v5856 = vmul.f32 %v5808, %v5855
    %v5857 = vmul.f32 %v5809, %v5855
    %s5858 = sld [smem:[#allocation11 + $0x3]]
    %v5859 = vstv %s5858
    %v5860 = vadd.f32 %v5856, %v5859
    %v5861 = vadd.f32 %v5857, %v5859
    %v5864 = vlaneseq
    %v5865 = vshrl.u32 %v5864, 7
    %v5866 = vsub.s32 0, %v5865
    %v5867 = vrot.slane %v5860, %v5866
    %v5868 = vlaneseq
    %v5869 = vshrl.u32 %v5868, 7
    %v5870 = vsub.s32 4, %v5869
    %v5871 = vrot.slane %v5860, %v5870
    %v5872 = vlaneseq
    %v5873 = vshrl.u32 %v5872, 7
    %v5874 = vsub.s32 0, %v5873
    %v5875 = vrot.slane %v5861, %v5874
    %v5876 = vlaneseq
    %v5877 = vshrl.u32 %v5876, 7
    %v5878 = vsub.s32 4, %v5877
    %v5879 = vrot.slane %v5861, %v5878
    %5880 = vrot.lane.b32.xlu0 %v5867, 4
    %v5881 = vpop.permute.xlu0 %5880
    %5882 = vrot.lane.b32.xlu0 %v5871, 4
    %v5883 = vpop.permute.xlu0 %5882
    %5884 = vrot.lane.b32.xlu0 %v5875, 4
    %v5885 = vpop.permute.xlu0 %5884
    %5886 = vrot.lane.b32.xlu0 %v5879, 4
    %v5887 = vpop.permute.xlu0 %5886
    %v5888 = vsel %vm2576, %v5881, %v5883
    %v5889 = vsel %vm2576, %v5885, %v5887
    %5892 = vst.msk [vmem:[#allocation14 + $0x3] sm:$0x1] %vm2676, %v5888
    %5893 = vst.msk [vmem:[#allocation14 + $0x7] sm:$0x1] %vm2676, %v5889
    %v5894 = vsel %vm2569, %v5875, %v5867
    %v5895 = vsel %vm2569, %v5879, %v5871
    %5896 = vrot.lane.b32.xlu0 %v5894, 4
    %v5897 = vpop.permute.xlu0 %5896
    %5898 = vrot.lane.b32.xlu0 %v5895, 4
    %v5899 = vpop.permute.xlu0 %5898
    %v5900 = vsel %vm2576, %v5897, %v5899
    %v5901 = vsel %vm2686, %v5900, 0
    %5903 = vmatprep.subr.mxu0 0.0
    %5904 = vmatpush1.msra.mxu0 %v2528
    %5905 = vmatprep.subr.mxu0 0.0
    %5906 = vmatpush1.msra.mxu0 %v2529
    %5907 = vmatprep.subr.mxu0 0.0
    %5908 = vmatpush1.msra.mxu0 0.0
    %5909 = vmatprep.subr.mxu0 0.0
    %5910 = vmatpush1.msra.mxu0 0.0
    %5911 = vmatprep.subr.mxu0 0.0
    %5912 = vmatpush1.msra.mxu0 0.0
    %5913 = vmatprep.subr.mxu0 0.0
    %5914 = vmatpush1.msra.mxu0 0.0
    %5915 = vmatprep.subr.mxu0 0.0
    %5916 = vmatpush1.msra.mxu0 0.0
    %5917 = vmatprep.subr.mxu0 0.0
    %5918 = vmatpush1.msra.mxu0 0.0
    %5919 = vmatprep.subr.mxu0 0.0
    %5920 = vmatpush1.msra.mxu0 0.0
    %5921 = vmatprep.subr.mxu0 0.0
    %5922 = vmatpush1.msra.mxu0 0.0
    %5923 = vmatprep.subr.mxu0 0.0
    %5924 = vmatpush1.msra.mxu0 0.0
    %5925 = vmatprep.subr.mxu0 0.0
    %5926 = vmatpush1.msra.mxu0 0.0
    %5927 = vmatprep.subr.mxu0 0.0
    %5928 = vmatpush1.msra.mxu0 0.0
    %5929 = vmatprep.subr.mxu0 0.0
    %5930 = vmatpush1.msra.mxu0 0.0
    %5931 = vmatprep.subr.mxu0 0.0
    %5932 = vmatpush1.msra.mxu0 0.0
    %5933 = vmatprep.subr.mxu0 0.0
    %5934 = vmatpush1.msra.mxu0 0.0
    %5935 = vmatprep.subr.mxu0 0.0
    %5936 = vmatpush1.msra.mxu0 0.0
    %5937 = vmatprep.subr.mxu0 0.0
    %5938 = vmatpush1.msra.mxu0 0.0
    %5939 = vmatprep.subr.mxu0 0.0
    %5940 = vmatpush1.msra.mxu0 0.0
    %5941 = vmatprep.subr.mxu0 0.0
    %5942 = vmatpush1.msra.mxu0 0.0
    %5943 = vmatprep.subr.mxu0 0.0
    %5944 = vmatpush1.msra.mxu0 0.0
    %5945 = vmatprep.subr.mxu0 0.0
    %5946 = vmatpush1.msra.mxu0 0.0
    %5947 = vmatprep.subr.mxu0 0.0
    %5948 = vmatpush1.msra.mxu0 0.0
    %5949 = vmatprep.subr.mxu0 0.0
    %5950 = vmatpush1.msra.mxu0 0.0
    %5951 = vmatprep.subr.mxu0 0.0
    %5952 = vmatpush1.msra.mxu0 0.0
    %5953 = vmatprep.subr.mxu0 0.0
    %5954 = vmatpush1.msra.mxu0 0.0
    %5955 = vmatprep.subr.mxu0 0.0
    %5956 = vmatpush1.msra.mxu0 0.0
    %5957 = vmatprep.subr.mxu0 0.0
    %5958 = vmatpush1.msra.mxu0 0.0
    %5959 = vmatprep.subr.mxu0 0.0
    %5960 = vmatpush1.msra.mxu0 0.0
    %5961 = vmatprep.subr.mxu0 0.0
    %5962 = vmatpush1.msra.mxu0 0.0
    %5963 = vmatprep.subr.mxu0 0.0
    %5964 = vmatpush1.msra.mxu0 0.0
    %5965 = vmatprep.subr.mxu0 0.0
    %5966 = vmatpush1.msra.mxu0 0.0
    %5967 = vmatprep.mubr.f32.mxu0 0.0
    %v5968 = vand.u32 %v5901, 4294901760
    %v5969 = vsub.f32 %v5901, %v5968
    %v5970 = vand.u32 %v5969, 4294901760
    %v5971 = vsub.f32 %v5969, %v5970
    %v5972 = vand.u32 %v5971, 4294901760
    %5973 = vmatmul.mubr.f32.gmra.mrb[0].mxu0 %v5972
    %v5974 = vpop.f32.mrb[0].mxu0
    %v5975 = vadd.f32 0.0, %v5974
    %v5976 = vpop.f32.mrb[0].mxu0
    %5977 = vdwg.mxu0
    %5978 = vmatprep.subr.mxu0 0.0
    %v5979 = vsub.f32 %v2528, %v2528
    %v5980 = vand.u32 %v5979, 4294901760
    %v5981 = vsub.f32 %v5979, %v5980
    %v5982 = vand.u32 %v5981, 4294901760
    %5983 = vmatpush1.msra.mxu0 %v5982
    %5984 = vmatprep.subr.mxu0 0.0
    %v5985 = vsub.f32 %v2529, %v2529
    %v5986 = vand.u32 %v5985, 4294901760
    %v5987 = vsub.f32 %v5985, %v5986
    %v5988 = vand.u32 %v5987, 4294901760
    %5989 = vmatpush1.msra.mxu0 %v5988
    %5990 = vmatprep.subr.mxu0 0.0
    %5991 = vmatpush1.msra.mxu0 0.0
    %5992 = vmatprep.subr.mxu0 0.0
    %5993 = vmatpush1.msra.mxu0 0.0
    %5994 = vmatprep.subr.mxu0 0.0
    %5995 = vmatpush1.msra.mxu0 0.0
    %5996 = vmatprep.subr.mxu0 0.0
    %5997 = vmatpush1.msra.mxu0 0.0
    %5998 = vmatprep.subr.mxu0 0.0
    %5999 = vmatpush1.msra.mxu0 0.0
    %6000 = vmatprep.subr.mxu0 0.0
    %6001 = vmatpush1.msra.mxu0 0.0
    %6002 = vmatprep.subr.mxu0 0.0
    %6003 = vmatpush1.msra.mxu0 0.0
    %6004 = vmatprep.subr.mxu0 0.0
    %6005 = vmatpush1.msra.mxu0 0.0
    %6006 = vmatprep.subr.mxu0 0.0
    %6007 = vmatpush1.msra.mxu0 0.0
    %6008 = vmatprep.subr.mxu0 0.0
    %6009 = vmatpush1.msra.mxu0 0.0
    %6010 = vmatprep.subr.mxu0 0.0
    %6011 = vmatpush1.msra.mxu0 0.0
    %6012 = vmatprep.subr.mxu0 0.0
    %6013 = vmatpush1.msra.mxu0 0.0
    %6014 = vmatprep.subr.mxu0 0.0
    %6015 = vmatpush1.msra.mxu0 0.0
    %6016 = vmatprep.subr.mxu0 0.0
    %6017 = vmatpush1.msra.mxu0 0.0
    %6018 = vmatprep.subr.mxu0 0.0
    %6019 = vmatpush1.msra.mxu0 0.0
    %6020 = vmatprep.subr.mxu0 0.0
    %6021 = vmatpush1.msra.mxu0 0.0
    %6022 = vmatprep.subr.mxu0 0.0
    %6023 = vmatpush1.msra.mxu0 0.0
    %6024 = vmatprep.subr.mxu0 0.0
    %6025 = vmatpush1.msra.mxu0 0.0
    %6026 = vmatprep.subr.mxu0 0.0
    %6027 = vmatpush1.msra.mxu0 0.0
    %6028 = vmatprep.subr.mxu0 0.0
    %6029 = vmatpush1.msra.mxu0 0.0
    %6030 = vmatprep.subr.mxu0 0.0
    %6031 = vmatpush1.msra.mxu0 0.0
    %6032 = vmatprep.subr.mxu0 0.0
    %6033 = vmatpush1.msra.mxu0 0.0
    %6034 = vmatprep.subr.mxu0 0.0
    %6035 = vmatpush1.msra.mxu0 0.0
    %6036 = vmatprep.subr.mxu0 0.0
    %6037 = vmatpush1.msra.mxu0 0.0
    %6038 = vmatprep.subr.mxu0 0.0
    %6039 = vmatpush1.msra.mxu0 0.0
    %6040 = vmatprep.subr.mxu0 0.0
    %6041 = vmatpush1.msra.mxu0 0.0
    %6042 = vmatprep.subr.mxu0 0.0
    %6043 = vmatpush1.msra.mxu0 0.0
    %6044 = vmatprep.subr.mxu0 0.0
    %6045 = vmatpush1.msra.mxu0 0.0
    %6046 = vmatprep.subr.mxu0 0.0
    %6047 = vmatpush1.msra.mxu0 0.0
    %6048 = vmatprep.subr.mxu0 0.0
    %6049 = vmatpush1.msra.mxu0 0.0
    %6050 = vmatprep.mubr.f32.mxu0 0.0
    %v6051 = vand.u32 %v5901, 4294901760
    %6052 = vmatmul.mubr.f32.gmra.mrb[0].mxu0 %v6051
    %v6053 = vpop.f32.mrb[0].mxu0
    %v6054 = vadd.f32 %v5975, %v6053
    %v6055 = vpop.f32.mrb[0].mxu0
    %6056 = vdwg.mxu0
    %6057 = vmatprep.subr.mxu0 0.0
    %v6058 = vsub.f32 %v2528, %v2528
    %6059 = vmatpush1.msra.mxu0 %v6058
    %6060 = vmatprep.subr.mxu0 0.0
    %v6061 = vsub.f32 %v2529, %v2529
    %6062 = vmatpush1.msra.mxu0 %v6061
    %6063 = vmatprep.subr.mxu0 0.0
    %6064 = vmatpush1.msra.mxu0 0.0
    %6065 = vmatprep.subr.mxu0 0.0
    %6066 = vmatpush1.msra.mxu0 0.0
    %6067 = vmatprep.subr.mxu0 0.0
    %6068 = vmatpush1.msra.mxu0 0.0
    %6069 = vmatprep.subr.mxu0 0.0
    %6070 = vmatpush1.msra.mxu0 0.0
    %6071 = vmatprep.subr.mxu0 0.0
    %6072 = vmatpush1.msra.mxu0 0.0
    %6073 = vmatprep.subr.mxu0 0.0
    %6074 = vmatpush1.msra.mxu0 0.0
    %6075 = vmatprep.subr.mxu0 0.0
    %6076 = vmatpush1.msra.mxu0 0.0
    %6077 = vmatprep.subr.mxu0 0.0
    %6078 = vmatpush1.msra.mxu0 0.0
    %6079 = vmatprep.subr.mxu0 0.0
    %6080 = vmatpush1.msra.mxu0 0.0
    %6081 = vmatprep.subr.mxu0 0.0
    %6082 = vmatpush1.msra.mxu0 0.0
    %6083 = vmatprep.subr.mxu0 0.0
    %6084 = vmatpush1.msra.mxu0 0.0
    %6085 = vmatprep.subr.mxu0 0.0
    %6086 = vmatpush1.msra.mxu0 0.0
    %6087 = vmatprep.subr.mxu0 0.0
    %6088 = vmatpush1.msra.mxu0 0.0
    %6089 = vmatprep.subr.mxu0 0.0
    %6090 = vmatpush1.msra.mxu0 0.0
    %6091 = vmatprep.subr.mxu0 0.0
    %6092 = vmatpush1.msra.mxu0 0.0
    %6093 = vmatprep.subr.mxu0 0.0
    %6094 = vmatpush1.msra.mxu0 0.0
    %6095 = vmatprep.subr.mxu0 0.0
    %6096 = vmatpush1.msra.mxu0 0.0
    %6097 = vmatprep.subr.mxu0 0.0
    %6098 = vmatpush1.msra.mxu0 0.0
    %6099 = vmatprep.subr.mxu0 0.0
    %6100 = vmatpush1.msra.mxu0 0.0
    %6101 = vmatprep.subr.mxu0 0.0
    %6102 = vmatpush1.msra.mxu0 0.0
    %6103 = vmatprep.subr.mxu0 0.0
    %6104 = vmatpush1.msra.mxu0 0.0
    %6105 = vmatprep.subr.mxu0 0.0
    %6106 = vmatpush1.msra.mxu0 0.0
    %6107 = vmatprep.subr.mxu0 0.0
    %6108 = vmatpush1.msra.mxu0 0.0
    %6109 = vmatprep.subr.mxu0 0.0
    %6110 = vmatpush1.msra.mxu0 0.0
    %6111 = vmatprep.subr.mxu0 0.0
    %6112 = vmatpush1.msra.mxu0 0.0
    %6113 = vmatprep.subr.mxu0 0.0
    %6114 = vmatpush1.msra.mxu0 0.0
    %6115 = vmatprep.subr.mxu0 0.0
    %6116 = vmatpush1.msra.mxu0 0.0
    %6117 = vmatprep.subr.mxu0 0.0
    %6118 = vmatpush1.msra.mxu0 0.0
    %6119 = vmatprep.subr.mxu0 0.0
    %6120 = vmatpush1.msra.mxu0 0.0
    %6121 = vmatprep.subr.mxu0 0.0
    %6122 = vmatpush1.msra.mxu0 0.0
    %6123 = vmatprep.mubr.f32.mxu0 0.0
    %v6124 = vand.u32 %v5901, 4294901760
    %v6125 = vsub.f32 %v5901, %v6124
    %6126 = vmatmul.mubr.f32.gmra.mrb[0].mxu0 %v6125
    %v6127 = vpop.f32.mrb[0].mxu0
    %v6128 = vadd.f32 %v6054, %v6127
    %v6129 = vpop.f32.mrb[0].mxu0
    %6130 = vdwg.mxu0
    %6131 = vmatprep.subr.mxu0 0.0
    %6132 = vmatpush1.msra.mxu0 %v2528
    %6133 = vmatprep.subr.mxu0 0.0
    %6134 = vmatpush1.msra.mxu0 %v2529
    %6135 = vmatprep.subr.mxu0 0.0
    %6136 = vmatpush1.msra.mxu0 0.0
    %6137 = vmatprep.subr.mxu0 0.0
    %6138 = vmatpush1.msra.mxu0 0.0
    %6139 = vmatprep.subr.mxu0 0.0
    %6140 = vmatpush1.msra.mxu0 0.0
    %6141 = vmatprep.subr.mxu0 0.0
    %6142 = vmatpush1.msra.mxu0 0.0
    %6143 = vmatprep.subr.mxu0 0.0
    %6144 = vmatpush1.msra.mxu0 0.0
    %6145 = vmatprep.subr.mxu0 0.0
    %6146 = vmatpush1.msra.mxu0 0.0
    %6147 = vmatprep.subr.mxu0 0.0
    %6148 = vmatpush1.msra.mxu0 0.0
    %6149 = vmatprep.subr.mxu0 0.0
    %6150 = vmatpush1.msra.mxu0 0.0
    %6151 = vmatprep.subr.mxu0 0.0
    %6152 = vmatpush1.msra.mxu0 0.0
    %6153 = vmatprep.subr.mxu0 0.0
    %6154 = vmatpush1.msra.mxu0 0.0
    %6155 = vmatprep.subr.mxu0 0.0
    %6156 = vmatpush1.msra.mxu0 0.0
    %6157 = vmatprep.subr.mxu0 0.0
    %6158 = vmatpush1.msra.mxu0 0.0
    %6159 = vmatprep.subr.mxu0 0.0
    %6160 = vmatpush1.msra.mxu0 0.0
    %6161 = vmatprep.subr.mxu0 0.0
    %6162 = vmatpush1.msra.mxu0 0.0
    %6163 = vmatprep.subr.mxu0 0.0
    %6164 = vmatpush1.msra.mxu0 0.0
    %6165 = vmatprep.subr.mxu0 0.0
    %6166 = vmatpush1.msra.mxu0 0.0
    %6167 = vmatprep.subr.mxu0 0.0
    %6168 = vmatpush1.msra.mxu0 0.0
    %6169 = vmatprep.subr.mxu0 0.0
    %6170 = vmatpush1.msra.mxu0 0.0
    %6171 = vmatprep.subr.mxu0 0.0
    %6172 = vmatpush1.msra.mxu0 0.0
    %6173 = vmatprep.subr.mxu0 0.0
    %6174 = vmatpush1.msra.mxu0 0.0
    %6175 = vmatprep.subr.mxu0 0.0
    %6176 = vmatpush1.msra.mxu0 0.0
    %6177 = vmatprep.subr.mxu0 0.0
    %6178 = vmatpush1.msra.mxu0 0.0
    %6179 = vmatprep.subr.mxu0 0.0
    %6180 = vmatpush1.msra.mxu0 0.0
    %6181 = vmatprep.subr.mxu0 0.0
    %6182 = vmatpush1.msra.mxu0 0.0
    %6183 = vmatprep.subr.mxu0 0.0
    %6184 = vmatpush1.msra.mxu0 0.0
    %6185 = vmatprep.subr.mxu0 0.0
    %6186 = vmatpush1.msra.mxu0 0.0
    %6187 = vmatprep.subr.mxu0 0.0
    %6188 = vmatpush1.msra.mxu0 0.0
    %6189 = vmatprep.subr.mxu0 0.0
    %6190 = vmatpush1.msra.mxu0 0.0
    %6191 = vmatprep.subr.mxu0 0.0
    %6192 = vmatpush1.msra.mxu0 0.0
    %6193 = vmatprep.subr.mxu0 0.0
    %6194 = vmatpush1.msra.mxu0 0.0
    %6195 = vmatprep.mubr.f32.mxu0 0.0
    %v6196 = vand.u32 %v5901, 4294901760
    %v6197 = vsub.f32 %v5901, %v6196
    %v6198 = vand.u32 %v6197, 4294901760
    %6199 = vmatmul.mubr.f32.gmra.mrb[0].mxu0 %v6198
    %v6200 = vpop.f32.mrb[0].mxu0
    %v6201 = vadd.f32 %v6128, %v6200
    %v6202 = vpop.f32.mrb[0].mxu0
    %6203 = vdwg.mxu0
    %6204 = vmatprep.subr.mxu0 0.0
    %v6205 = vsub.f32 %v2528, %v2528
    %v6206 = vand.u32 %v6205, 4294901760
    %6207 = vmatpush1.msra.mxu0 %v6206
    %6208 = vmatprep.subr.mxu0 0.0
    %v6209 = vsub.f32 %v2529, %v2529
    %v6210 = vand.u32 %v6209, 4294901760
    %6211 = vmatpush1.msra.mxu0 %v6210
    %6212 = vmatprep.subr.mxu0 0.0
    %6213 = vmatpush1.msra.mxu0 0.0
    %6214 = vmatprep.subr.mxu0 0.0
    %6215 = vmatpush1.msra.mxu0 0.0
    %6216 = vmatprep.subr.mxu0 0.0
    %6217 = vmatpush1.msra.mxu0 0.0
    %6218 = vmatprep.subr.mxu0 0.0
    %6219 = vmatpush1.msra.mxu0 0.0
    %6220 = vmatprep.subr.mxu0 0.0
    %6221 = vmatpush1.msra.mxu0 0.0
    %6222 = vmatprep.subr.mxu0 0.0
    %6223 = vmatpush1.msra.mxu0 0.0
    %6224 = vmatprep.subr.mxu0 0.0
    %6225 = vmatpush1.msra.mxu0 0.0
    %6226 = vmatprep.subr.mxu0 0.0
    %6227 = vmatpush1.msra.mxu0 0.0
    %6228 = vmatprep.subr.mxu0 0.0
    %6229 = vmatpush1.msra.mxu0 0.0
    %6230 = vmatprep.subr.mxu0 0.0
    %6231 = vmatpush1.msra.mxu0 0.0
    %6232 = vmatprep.subr.mxu0 0.0
    %6233 = vmatpush1.msra.mxu0 0.0
    %6234 = vmatprep.subr.mxu0 0.0
    %6235 = vmatpush1.msra.mxu0 0.0
    %6236 = vmatprep.subr.mxu0 0.0
    %6237 = vmatpush1.msra.mxu0 0.0
    %6238 = vmatprep.subr.mxu0 0.0
    %6239 = vmatpush1.msra.mxu0 0.0
    %6240 = vmatprep.subr.mxu0 0.0
    %6241 = vmatpush1.msra.mxu0 0.0
    %6242 = vmatprep.subr.mxu0 0.0
    %6243 = vmatpush1.msra.mxu0 0.0
    %6244 = vmatprep.subr.mxu0 0.0
    %6245 = vmatpush1.msra.mxu0 0.0
    %6246 = vmatprep.subr.mxu0 0.0
    %6247 = vmatpush1.msra.mxu0 0.0
    %6248 = vmatprep.subr.mxu0 0.0
    %6249 = vmatpush1.msra.mxu0 0.0
    %6250 = vmatprep.subr.mxu0 0.0
    %6251 = vmatpush1.msra.mxu0 0.0
    %6252 = vmatprep.subr.mxu0 0.0
    %6253 = vmatpush1.msra.mxu0 0.0
    %6254 = vmatprep.subr.mxu0 0.0
    %6255 = vmatpush1.msra.mxu0 0.0
    %6256 = vmatprep.subr.mxu0 0.0
    %6257 = vmatpush1.msra.mxu0 0.0
    %6258 = vmatprep.subr.mxu0 0.0
    %6259 = vmatpush1.msra.mxu0 0.0
    %6260 = vmatprep.subr.mxu0 0.0
    %6261 = vmatpush1.msra.mxu0 0.0
    %6262 = vmatprep.subr.mxu0 0.0
    %6263 = vmatpush1.msra.mxu0 0.0
    %6264 = vmatprep.subr.mxu0 0.0
    %6265 = vmatpush1.msra.mxu0 0.0
    %6266 = vmatprep.subr.mxu0 0.0
    %6267 = vmatpush1.msra.mxu0 0.0
    %6268 = vmatprep.subr.mxu0 0.0
    %6269 = vmatpush1.msra.mxu0 0.0
    %6270 = vmatprep.subr.mxu0 0.0
    %6271 = vmatpush1.msra.mxu0 0.0
    %6272 = vmatprep.mubr.f32.mxu0 0.0
    %v6273 = vand.u32 %v5901, 4294901760
    %6274 = vmatmul.mubr.f32.gmra.mrb[0].mxu0 %v6273
    %v6275 = vpop.f32.mrb[0].mxu0
    %v6276 = vadd.f32 %v6201, %v6275
    %v6277 = vpop.f32.mrb[0].mxu0
    %6278 = vdwg.mxu0
    %6279 = vmatprep.subr.mxu0 0.0
    %6280 = vmatpush1.msra.mxu0 %v2528
    %6281 = vmatprep.subr.mxu0 0.0
    %6282 = vmatpush1.msra.mxu0 %v2529
    %6283 = vmatprep.subr.mxu0 0.0
    %6284 = vmatpush1.msra.mxu0 0.0
    %6285 = vmatprep.subr.mxu0 0.0
    %6286 = vmatpush1.msra.mxu0 0.0
    %6287 = vmatprep.subr.mxu0 0.0
    %6288 = vmatpush1.msra.mxu0 0.0
    %6289 = vmatprep.subr.mxu0 0.0
    %6290 = vmatpush1.msra.mxu0 0.0
    %6291 = vmatprep.subr.mxu0 0.0
    %6292 = vmatpush1.msra.mxu0 0.0
    %6293 = vmatprep.subr.mxu0 0.0
    %6294 = vmatpush1.msra.mxu0 0.0
    %6295 = vmatprep.subr.mxu0 0.0
    %6296 = vmatpush1.msra.mxu0 0.0
    %6297 = vmatprep.subr.mxu0 0.0
    %6298 = vmatpush1.msra.mxu0 0.0
    %6299 = vmatprep.subr.mxu0 0.0
    %6300 = vmatpush1.msra.mxu0 0.0
    %6301 = vmatprep.subr.mxu0 0.0
    %6302 = vmatpush1.msra.mxu0 0.0
    %6303 = vmatprep.subr.mxu0 0.0
    %6304 = vmatpush1.msra.mxu0 0.0
    %6305 = vmatprep.subr.mxu0 0.0
    %6306 = vmatpush1.msra.mxu0 0.0
    %6307 = vmatprep.subr.mxu0 0.0
    %6308 = vmatpush1.msra.mxu0 0.0
    %6309 = vmatprep.subr.mxu0 0.0
    %6310 = vmatpush1.msra.mxu0 0.0
    %6311 = vmatprep.subr.mxu0 0.0
    %6312 = vmatpush1.msra.mxu0 0.0
    %6313 = vmatprep.subr.mxu0 0.0
    %6314 = vmatpush1.msra.mxu0 0.0
    %6315 = vmatprep.subr.mxu0 0.0
    %6316 = vmatpush1.msra.mxu0 0.0
    %6317 = vmatprep.subr.mxu0 0.0
    %6318 = vmatpush1.msra.mxu0 0.0
    %6319 = vmatprep.subr.mxu0 0.0
    %6320 = vmatpush1.msra.mxu0 0.0
    %6321 = vmatprep.subr.mxu0 0.0
    %6322 = vmatpush1.msra.mxu0 0.0
    %6323 = vmatprep.subr.mxu0 0.0
    %6324 = vmatpush1.msra.mxu0 0.0
    %6325 = vmatprep.subr.mxu0 0.0
    %6326 = vmatpush1.msra.mxu0 0.0
    %6327 = vmatprep.subr.mxu0 0.0
    %6328 = vmatpush1.msra.mxu0 0.0
    %6329 = vmatprep.subr.mxu0 0.0
    %6330 = vmatpush1.msra.mxu0 0.0
    %6331 = vmatprep.subr.mxu0 0.0
    %6332 = vmatpush1.msra.mxu0 0.0
    %6333 = vmatprep.subr.mxu0 0.0
    %6334 = vmatpush1.msra.mxu0 0.0
    %6335 = vmatprep.subr.mxu0 0.0
    %6336 = vmatpush1.msra.mxu0 0.0
    %6337 = vmatprep.subr.mxu0 0.0
    %6338 = vmatpush1.msra.mxu0 0.0
    %6339 = vmatprep.subr.mxu0 0.0
    %6340 = vmatpush1.msra.mxu0 0.0
    %6341 = vmatprep.subr.mxu0 0.0
    %6342 = vmatpush1.msra.mxu0 0.0
    %6343 = vmatprep.mubr.f32.mxu0 0.0
    %v6344 = vand.u32 %v5901, 4294901760
    %6345 = vmatmul.mubr.f32.gmra.mrb[0].mxu0 %v6344
    %v6346 = vpop.f32.mrb[0].mxu0
    %v6347 = vadd.f32 %v6276, %v6346
    %v6348 = vpop.f32.mrb[0].mxu0
    %6349 = vdwg.mxu0
    %6350 = vmatprep.subr.mxu0 0.0
    %6351 = vmatpush1.msra.mxu0 %v2533
    %6352 = vmatprep.subr.mxu0 0.0
    %6353 = vmatpush1.msra.mxu0 %v2534
    %6354 = vmatprep.subr.mxu0 0.0
    %6355 = vmatpush1.msra.mxu0 0.0
    %6356 = vmatprep.subr.mxu0 0.0
    %6357 = vmatpush1.msra.mxu0 0.0
    %6358 = vmatprep.subr.mxu0 0.0
    %6359 = vmatpush1.msra.mxu0 0.0
    %6360 = vmatprep.subr.mxu0 0.0
    %6361 = vmatpush1.msra.mxu0 0.0
    %6362 = vmatprep.subr.mxu0 0.0
    %6363 = vmatpush1.msra.mxu0 0.0
    %6364 = vmatprep.subr.mxu0 0.0
    %6365 = vmatpush1.msra.mxu0 0.0
    %6366 = vmatprep.subr.mxu0 0.0
    %6367 = vmatpush1.msra.mxu0 0.0
    %6368 = vmatprep.subr.mxu0 0.0
    %6369 = vmatpush1.msra.mxu0 0.0
    %6370 = vmatprep.subr.mxu0 0.0
    %6371 = vmatpush1.msra.mxu0 0.0
    %6372 = vmatprep.subr.mxu0 0.0
    %6373 = vmatpush1.msra.mxu0 0.0
    %6374 = vmatprep.subr.mxu0 0.0
    %6375 = vmatpush1.msra.mxu0 0.0
    %6376 = vmatprep.subr.mxu0 0.0
    %6377 = vmatpush1.msra.mxu0 0.0
    %6378 = vmatprep.subr.mxu0 0.0
    %6379 = vmatpush1.msra.mxu0 0.0
    %6380 = vmatprep.subr.mxu0 0.0
    %6381 = vmatpush1.msra.mxu0 0.0
    %6382 = vmatprep.subr.mxu0 0.0
    %6383 = vmatpush1.msra.mxu0 0.0
    %6384 = vmatprep.subr.mxu0 0.0
    %6385 = vmatpush1.msra.mxu0 0.0
    %6386 = vmatprep.subr.mxu0 0.0
    %6387 = vmatpush1.msra.mxu0 0.0
    %6388 = vmatprep.subr.mxu0 0.0
    %6389 = vmatpush1.msra.mxu0 0.0
    %6390 = vmatprep.subr.mxu0 0.0
    %6391 = vmatpush1.msra.mxu0 0.0
    %6392 = vmatprep.subr.mxu0 0.0
    %6393 = vmatpush1.msra.mxu0 0.0
    %6394 = vmatprep.subr.mxu0 0.0
    %6395 = vmatpush1.msra.mxu0 0.0
    %6396 = vmatprep.subr.mxu0 0.0
    %6397 = vmatpush1.msra.mxu0 0.0
    %6398 = vmatprep.subr.mxu0 0.0
    %6399 = vmatpush1.msra.mxu0 0.0
    %6400 = vmatprep.subr.mxu0 0.0
    %6401 = vmatpush1.msra.mxu0 0.0
    %6402 = vmatprep.subr.mxu0 0.0
    %6403 = vmatpush1.msra.mxu0 0.0
    %6404 = vmatprep.subr.mxu0 0.0
    %6405 = vmatpush1.msra.mxu0 0.0
    %6406 = vmatprep.subr.mxu0 0.0
    %6407 = vmatpush1.msra.mxu0 0.0
    %6408 = vmatprep.subr.mxu0 0.0
    %6409 = vmatpush1.msra.mxu0 0.0
    %6410 = vmatprep.subr.mxu0 0.0
    %6411 = vmatpush1.msra.mxu0 0.0
    %6412 = vmatprep.subr.mxu0 0.0
    %6413 = vmatpush1.msra.mxu0 0.0
    %6414 = vmatprep.mubr.f32.mxu0 0.0
    %v6415 = vand.u32 %v5901, 4294901760
    %v6416 = vsub.f32 %v5901, %v6415
    %v6417 = vand.u32 %v6416, 4294901760
    %v6418 = vsub.f32 %v6416, %v6417
    %v6419 = vand.u32 %v6418, 4294901760
    %6420 = vmatmul.mubr.f32.gmra.mrb[0].mxu0 %v6419
    %v6421 = vpop.f32.mrb[0].mxu0
    %v6422 = vadd.f32 0.0, %v6421
    %v6423 = vpop.f32.mrb[0].mxu0
    %6424 = vdwg.mxu0
    %6425 = vmatprep.subr.mxu0 0.0
    %v6426 = vsub.f32 %v2533, %v2533
    %v6427 = vand.u32 %v6426, 4294901760
    %v6428 = vsub.f32 %v6426, %v6427
    %v6429 = vand.u32 %v6428, 4294901760
    %6430 = vmatpush1.msra.mxu0 %v6429
    %6431 = vmatprep.subr.mxu0 0.0
    %v6432 = vsub.f32 %v2534, %v2534
    %v6433 = vand.u32 %v6432, 4294901760
    %v6434 = vsub.f32 %v6432, %v6433
    %v6435 = vand.u32 %v6434, 4294901760
    %6436 = vmatpush1.msra.mxu0 %v6435
    %6437 = vmatprep.subr.mxu0 0.0
    %6438 = vmatpush1.msra.mxu0 0.0
    %6439 = vmatprep.subr.mxu0 0.0
    %6440 = vmatpush1.msra.mxu0 0.0
    %6441 = vmatprep.subr.mxu0 0.0
    %6442 = vmatpush1.msra.mxu0 0.0
    %6443 = vmatprep.subr.mxu0 0.0
    %6444 = vmatpush1.msra.mxu0 0.0
    %6445 = vmatprep.subr.mxu0 0.0
    %6446 = vmatpush1.msra.mxu0 0.0
    %6447 = vmatprep.subr.mxu0 0.0
    %6448 = vmatpush1.msra.mxu0 0.0
    %6449 = vmatprep.subr.mxu0 0.0
    %6450 = vmatpush1.msra.mxu0 0.0
    %6451 = vmatprep.subr.mxu0 0.0
    %6452 = vmatpush1.msra.mxu0 0.0
    %6453 = vmatprep.subr.mxu0 0.0
    %6454 = vmatpush1.msra.mxu0 0.0
    %6455 = vmatprep.subr.mxu0 0.0
    %6456 = vmatpush1.msra.mxu0 0.0
    %6457 = vmatprep.subr.mxu0 0.0
    %6458 = vmatpush1.msra.mxu0 0.0
    %6459 = vmatprep.subr.mxu0 0.0
    %6460 = vmatpush1.msra.mxu0 0.0
    %6461 = vmatprep.subr.mxu0 0.0
    %6462 = vmatpush1.msra.mxu0 0.0
    %6463 = vmatprep.subr.mxu0 0.0
    %6464 = vmatpush1.msra.mxu0 0.0
    %6465 = vmatprep.subr.mxu0 0.0
    %6466 = vmatpush1.msra.mxu0 0.0
    %6467 = vmatprep.subr.mxu0 0.0
    %6468 = vmatpush1.msra.mxu0 0.0
    %6469 = vmatprep.subr.mxu0 0.0
    %6470 = vmatpush1.msra.mxu0 0.0
    %6471 = vmatprep.subr.mxu0 0.0
    %6472 = vmatpush1.msra.mxu0 0.0
    %6473 = vmatprep.subr.mxu0 0.0
    %6474 = vmatpush1.msra.mxu0 0.0
    %6475 = vmatprep.subr.mxu0 0.0
    %6476 = vmatpush1.msra.mxu0 0.0
    %6477 = vmatprep.subr.mxu0 0.0
    %6478 = vmatpush1.msra.mxu0 0.0
    %6479 = vmatprep.subr.mxu0 0.0
    %6480 = vmatpush1.msra.mxu0 0.0
    %6481 = vmatprep.subr.mxu0 0.0
    %6482 = vmatpush1.msra.mxu0 0.0
    %6483 = vmatprep.subr.mxu0 0.0
    %6484 = vmatpush1.msra.mxu0 0.0
    %6485 = vmatprep.subr.mxu0 0.0
    %6486 = vmatpush1.msra.mxu0 0.0
    %6487 = vmatprep.subr.mxu0 0.0
    %6488 = vmatpush1.msra.mxu0 0.0
    %6489 = vmatprep.subr.mxu0 0.0
    %6490 = vmatpush1.msra.mxu0 0.0
    %6491 = vmatprep.subr.mxu0 0.0
    %6492 = vmatpush1.msra.mxu0 0.0
    %6493 = vmatprep.subr.mxu0 0.0
    %6494 = vmatpush1.msra.mxu0 0.0
    %6495 = vmatprep.subr.mxu0 0.0
    %6496 = vmatpush1.msra.mxu0 0.0
    %6497 = vmatprep.mubr.f32.mxu0 0.0
    %v6498 = vand.u32 %v5901, 4294901760
    %6499 = vmatmul.mubr.f32.gmra.mrb[0].mxu0 %v6498
    %v6500 = vpop.f32.mrb[0].mxu0
    %v6501 = vadd.f32 %v6422, %v6500
    %v6502 = vpop.f32.mrb[0].mxu0
    %6503 = vdwg.mxu0
    %6504 = vmatprep.subr.mxu0 0.0
    %v6505 = vsub.f32 %v2533, %v2533
    %6506 = vmatpush1.msra.mxu0 %v6505
    %6507 = vmatprep.subr.mxu0 0.0
    %v6508 = vsub.f32 %v2534, %v2534
    %6509 = vmatpush1.msra.mxu0 %v6508
    %6510 = vmatprep.subr.mxu0 0.0
    %6511 = vmatpush1.msra.mxu0 0.0
    %6512 = vmatprep.subr.mxu0 0.0
    %6513 = vmatpush1.msra.mxu0 0.0
    %6514 = vmatprep.subr.mxu0 0.0
    %6515 = vmatpush1.msra.mxu0 0.0
    %6516 = vmatprep.subr.mxu0 0.0
    %6517 = vmatpush1.msra.mxu0 0.0
    %6518 = vmatprep.subr.mxu0 0.0
    %6519 = vmatpush1.msra.mxu0 0.0
    %6520 = vmatprep.subr.mxu0 0.0
    %6521 = vmatpush1.msra.mxu0 0.0
    %6522 = vmatprep.subr.mxu0 0.0
    %6523 = vmatpush1.msra.mxu0 0.0
    %6524 = vmatprep.subr.mxu0 0.0
    %6525 = vmatpush1.msra.mxu0 0.0
    %6526 = vmatprep.subr.mxu0 0.0
    %6527 = vmatpush1.msra.mxu0 0.0
    %6528 = vmatprep.subr.mxu0 0.0
    %6529 = vmatpush1.msra.mxu0 0.0
    %6530 = vmatprep.subr.mxu0 0.0
    %6531 = vmatpush1.msra.mxu0 0.0
    %6532 = vmatprep.subr.mxu0 0.0
    %6533 = vmatpush1.msra.mxu0 0.0
    %6534 = vmatprep.subr.mxu0 0.0
    %6535 = vmatpush1.msra.mxu0 0.0
    %6536 = vmatprep.subr.mxu0 0.0
    %6537 = vmatpush1.msra.mxu0 0.0
    %6538 = vmatprep.subr.mxu0 0.0
    %6539 = vmatpush1.msra.mxu0 0.0
    %6540 = vmatprep.subr.mxu0 0.0
    %6541 = vmatpush1.msra.mxu0 0.0
    %6542 = vmatprep.subr.mxu0 0.0
    %6543 = vmatpush1.msra.mxu0 0.0
    %6544 = vmatprep.subr.mxu0 0.0
    %6545 = vmatpush1.msra.mxu0 0.0
    %6546 = vmatprep.subr.mxu0 0.0
    %6547 = vmatpush1.msra.mxu0 0.0
    %6548 = vmatprep.subr.mxu0 0.0
    %6549 = vmatpush1.msra.mxu0 0.0
    %6550 = vmatprep.subr.mxu0 0.0
    %6551 = vmatpush1.msra.mxu0 0.0
    %6552 = vmatprep.subr.mxu0 0.0
    %6553 = vmatpush1.msra.mxu0 0.0
    %6554 = vmatprep.subr.mxu0 0.0
    %6555 = vmatpush1.msra.mxu0 0.0
    %6556 = vmatprep.subr.mxu0 0.0
    %6557 = vmatpush1.msra.mxu0 0.0
    %6558 = vmatprep.subr.mxu0 0.0
    %6559 = vmatpush1.msra.mxu0 0.0
    %6560 = vmatprep.subr.mxu0 0.0
    %6561 = vmatpush1.msra.mxu0 0.0
    %6562 = vmatprep.subr.mxu0 0.0
    %6563 = vmatpush1.msra.mxu0 0.0
    %6564 = vmatprep.subr.mxu0 0.0
    %6565 = vmatpush1.msra.mxu0 0.0
    %6566 = vmatprep.subr.mxu0 0.0
    %6567 = vmatpush1.msra.mxu0 0.0
    %6568 = vmatprep.subr.mxu0 0.0
    %6569 = vmatpush1.msra.mxu0 0.0
    %6570 = vmatprep.mubr.f32.mxu0 0.0
    %v6571 = vand.u32 %v5901, 4294901760
    %v6572 = vsub.f32 %v5901, %v6571
    %6573 = vmatmul.mubr.f32.gmra.mrb[0].mxu0 %v6572
    %v6574 = vpop.f32.mrb[0].mxu0
    %v6575 = vadd.f32 %v6501, %v6574
    %v6576 = vpop.f32.mrb[0].mxu0
    %6577 = vdwg.mxu0
    %6578 = vmatprep.subr.mxu0 0.0
    %6579 = vmatpush1.msra.mxu0 %v2533
    %6580 = vmatprep.subr.mxu0 0.0
    %6581 = vmatpush1.msra.mxu0 %v2534
    %6582 = vmatprep.subr.mxu0 0.0
    %6583 = vmatpush1.msra.mxu0 0.0
    %6584 = vmatprep.subr.mxu0 0.0
    %6585 = vmatpush1.msra.mxu0 0.0
    %6586 = vmatprep.subr.mxu0 0.0
    %6587 = vmatpush1.msra.mxu0 0.0
    %6588 = vmatprep.subr.mxu0 0.0
    %6589 = vmatpush1.msra.mxu0 0.0
    %6590 = vmatprep.subr.mxu0 0.0
    %6591 = vmatpush1.msra.mxu0 0.0
    %6592 = vmatprep.subr.mxu0 0.0
    %6593 = vmatpush1.msra.mxu0 0.0
    %6594 = vmatprep.subr.mxu0 0.0
    %6595 = vmatpush1.msra.mxu0 0.0
    %6596 = vmatprep.subr.mxu0 0.0
    %6597 = vmatpush1.msra.mxu0 0.0
    %6598 = vmatprep.subr.mxu0 0.0
    %6599 = vmatpush1.msra.mxu0 0.0
    %6600 = vmatprep.subr.mxu0 0.0
    %6601 = vmatpush1.msra.mxu0 0.0
    %6602 = vmatprep.subr.mxu0 0.0
    %6603 = vmatpush1.msra.mxu0 0.0
    %6604 = vmatprep.subr.mxu0 0.0
    %6605 = vmatpush1.msra.mxu0 0.0
    %6606 = vmatprep.subr.mxu0 0.0
    %6607 = vmatpush1.msra.mxu0 0.0
    %6608 = vmatprep.subr.mxu0 0.0
    %6609 = vmatpush1.msra.mxu0 0.0
    %6610 = vmatprep.subr.mxu0 0.0
    %6611 = vmatpush1.msra.mxu0 0.0
    %6612 = vmatprep.subr.mxu0 0.0
    %6613 = vmatpush1.msra.mxu0 0.0
    %6614 = vmatprep.subr.mxu0 0.0
    %6615 = vmatpush1.msra.mxu0 0.0
    %6616 = vmatprep.subr.mxu0 0.0
    %6617 = vmatpush1.msra.mxu0 0.0
    %6618 = vmatprep.subr.mxu0 0.0
    %6619 = vmatpush1.msra.mxu0 0.0
    %6620 = vmatprep.subr.mxu0 0.0
    %6621 = vmatpush1.msra.mxu0 0.0
    %6622 = vmatprep.subr.mxu0 0.0
    %6623 = vmatpush1.msra.mxu0 0.0
    %6624 = vmatprep.subr.mxu0 0.0
    %6625 = vmatpush1.msra.mxu0 0.0
    %6626 = vmatprep.subr.mxu0 0.0
    %6627 = vmatpush1.msra.mxu0 0.0
    %6628 = vmatprep.subr.mxu0 0.0
    %6629 = vmatpush1.msra.mxu0 0.0
    %6630 = vmatprep.subr.mxu0 0.0
    %6631 = vmatpush1.msra.mxu0 0.0
    %6632 = vmatprep.subr.mxu0 0.0
    %6633 = vmatpush1.msra.mxu0 0.0
    %6634 = vmatprep.subr.mxu0 0.0
    %6635 = vmatpush1.msra.mxu0 0.0
    %6636 = vmatprep.subr.mxu0 0.0
    %6637 = vmatpush1.msra.mxu0 0.0
    %6638 = vmatprep.subr.mxu0 0.0
    %6639 = vmatpush1.msra.mxu0 0.0
    %6640 = vmatprep.subr.mxu0 0.0
    %6641 = vmatpush1.msra.mxu0 0.0
    %6642 = vmatprep.mubr.f32.mxu0 0.0
    %v6643 = vand.u32 %v5901, 4294901760
    %v6644 = vsub.f32 %v5901, %v6643
    %v6645 = vand.u32 %v6644, 4294901760
    %6646 = vmatmul.mubr.f32.gmra.mrb[0].mxu0 %v6645
    %v6647 = vpop.f32.mrb[0].mxu0
    %v6648 = vadd.f32 %v6575, %v6647
    %v6649 = vpop.f32.mrb[0].mxu0
    %6650 = vdwg.mxu0
    %6651 = vmatprep.subr.mxu0 0.0
    %v6652 = vsub.f32 %v2533, %v2533
    %v6653 = vand.u32 %v6652, 4294901760
    %6654 = vmatpush1.msra.mxu0 %v6653
    %6655 = vmatprep.subr.mxu0 0.0
    %v6656 = vsub.f32 %v2534, %v2534
    %v6657 = vand.u32 %v6656, 4294901760
    %6658 = vmatpush1.msra.mxu0 %v6657
    %6659 = vmatprep.subr.mxu0 0.0
    %6660 = vmatpush1.msra.mxu0 0.0
    %6661 = vmatprep.subr.mxu0 0.0
    %6662 = vmatpush1.msra.mxu0 0.0
    %6663 = vmatprep.subr.mxu0 0.0
    %6664 = vmatpush1.msra.mxu0 0.0
    %6665 = vmatprep.subr.mxu0 0.0
    %6666 = vmatpush1.msra.mxu0 0.0
    %6667 = vmatprep.subr.mxu0 0.0
    %6668 = vmatpush1.msra.mxu0 0.0
    %6669 = vmatprep.subr.mxu0 0.0
    %6670 = vmatpush1.msra.mxu0 0.0
    %6671 = vmatprep.subr.mxu0 0.0
    %6672 = vmatpush1.msra.mxu0 0.0
    %6673 = vmatprep.subr.mxu0 0.0
    %6674 = vmatpush1.msra.mxu0 0.0
    %6675 = vmatprep.subr.mxu0 0.0
    %6676 = vmatpush1.msra.mxu0 0.0
    %6677 = vmatprep.subr.mxu0 0.0
    %6678 = vmatpush1.msra.mxu0 0.0
    %6679 = vmatprep.subr.mxu0 0.0
    %6680 = vmatpush1.msra.mxu0 0.0
    %6681 = vmatprep.subr.mxu0 0.0
    %6682 = vmatpush1.msra.mxu0 0.0
    %6683 = vmatprep.subr.mxu0 0.0
    %6684 = vmatpush1.msra.mxu0 0.0
    %6685 = vmatprep.subr.mxu0 0.0
    %6686 = vmatpush1.msra.mxu0 0.0
    %6687 = vmatprep.subr.mxu0 0.0
    %6688 = vmatpush1.msra.mxu0 0.0
    %6689 = vmatprep.subr.mxu0 0.0
    %6690 = vmatpush1.msra.mxu0 0.0
    %6691 = vmatprep.subr.mxu0 0.0
    %6692 = vmatpush1.msra.mxu0 0.0
    %6693 = vmatprep.subr.mxu0 0.0
    %6694 = vmatpush1.msra.mxu0 0.0
    %6695 = vmatprep.subr.mxu0 0.0
    %6696 = vmatpush1.msra.mxu0 0.0
    %6697 = vmatprep.subr.mxu0 0.0
    %6698 = vmatpush1.msra.mxu0 0.0
    %6699 = vmatprep.subr.mxu0 0.0
    %6700 = vmatpush1.msra.mxu0 0.0
    %6701 = vmatprep.subr.mxu0 0.0
    %6702 = vmatpush1.msra.mxu0 0.0
    %6703 = vmatprep.subr.mxu0 0.0
    %6704 = vmatpush1.msra.mxu0 0.0
    %6705 = vmatprep.subr.mxu0 0.0
    %6706 = vmatpush1.msra.mxu0 0.0
    %6707 = vmatprep.subr.mxu0 0.0
    %6708 = vmatpush1.msra.mxu0 0.0
    %6709 = vmatprep.subr.mxu0 0.0
    %6710 = vmatpush1.msra.mxu0 0.0
    %6711 = vmatprep.subr.mxu0 0.0
    %6712 = vmatpush1.msra.mxu0 0.0
    %6713 = vmatprep.subr.mxu0 0.0
    %6714 = vmatpush1.msra.mxu0 0.0
    %6715 = vmatprep.subr.mxu0 0.0
    %6716 = vmatpush1.msra.mxu0 0.0
    %6717 = vmatprep.subr.mxu0 0.0
    %6718 = vmatpush1.msra.mxu0 0.0
    %6719 = vmatprep.mubr.f32.mxu0 0.0
    %v6720 = vand.u32 %v5901, 4294901760
    %6721 = vmatmul.mubr.f32.gmra.mrb[0].mxu0 %v6720
    %v6722 = vpop.f32.mrb[0].mxu0
    %v6723 = vadd.f32 %v6648, %v6722
    %v6724 = vpop.f32.mrb[0].mxu0
    %6725 = vdwg.mxu0
    %6726 = vmatprep.subr.mxu0 0.0
    %6727 = vmatpush1.msra.mxu0 %v2533
    %6728 = vmatprep.subr.mxu0 0.0
    %6729 = vmatpush1.msra.mxu0 %v2534
    %6730 = vmatprep.subr.mxu0 0.0
    %6731 = vmatpush1.msra.mxu0 0.0
    %6732 = vmatprep.subr.mxu0 0.0
    %6733 = vmatpush1.msra.mxu0 0.0
    %6734 = vmatprep.subr.mxu0 0.0
    %6735 = vmatpush1.msra.mxu0 0.0
    %6736 = vmatprep.subr.mxu0 0.0
    %6737 = vmatpush1.msra.mxu0 0.0
    %6738 = vmatprep.subr.mxu0 0.0
    %6739 = vmatpush1.msra.mxu0 0.0
    %6740 = vmatprep.subr.mxu0 0.0
    %6741 = vmatpush1.msra.mxu0 0.0
    %6742 = vmatprep.subr.mxu0 0.0
    %6743 = vmatpush1.msra.mxu0 0.0
    %6744 = vmatprep.subr.mxu0 0.0
    %6745 = vmatpush1.msra.mxu0 0.0
    %6746 = vmatprep.subr.mxu0 0.0
    %6747 = vmatpush1.msra.mxu0 0.0
    %6748 = vmatprep.subr.mxu0 0.0
    %6749 = vmatpush1.msra.mxu0 0.0
    %6750 = vmatprep.subr.mxu0 0.0
    %6751 = vmatpush1.msra.mxu0 0.0
    %6752 = vmatprep.subr.mxu0 0.0
    %6753 = vmatpush1.msra.mxu0 0.0
    %6754 = vmatprep.subr.mxu0 0.0
    %6755 = vmatpush1.msra.mxu0 0.0
    %6756 = vmatprep.subr.mxu0 0.0
    %6757 = vmatpush1.msra.mxu0 0.0
    %6758 = vmatprep.subr.mxu0 0.0
    %6759 = vmatpush1.msra.mxu0 0.0
    %6760 = vmatprep.subr.mxu0 0.0
    %6761 = vmatpush1.msra.mxu0 0.0
    %6762 = vmatprep.subr.mxu0 0.0
    %6763 = vmatpush1.msra.mxu0 0.0
    %6764 = vmatprep.subr.mxu0 0.0
    %6765 = vmatpush1.msra.mxu0 0.0
    %6766 = vmatprep.subr.mxu0 0.0
    %6767 = vmatpush1.msra.mxu0 0.0
    %6768 = vmatprep.subr.mxu0 0.0
    %6769 = vmatpush1.msra.mxu0 0.0
    %6770 = vmatprep.subr.mxu0 0.0
    %6771 = vmatpush1.msra.mxu0 0.0
    %6772 = vmatprep.subr.mxu0 0.0
    %6773 = vmatpush1.msra.mxu0 0.0
    %6774 = vmatprep.subr.mxu0 0.0
    %6775 = vmatpush1.msra.mxu0 0.0
    %6776 = vmatprep.subr.mxu0 0.0
    %6777 = vmatpush1.msra.mxu0 0.0
    %6778 = vmatprep.subr.mxu0 0.0
    %6779 = vmatpush1.msra.mxu0 0.0
    %6780 = vmatprep.subr.mxu0 0.0
    %6781 = vmatpush1.msra.mxu0 0.0
    %6782 = vmatprep.subr.mxu0 0.0
    %6783 = vmatpush1.msra.mxu0 0.0
    %6784 = vmatprep.subr.mxu0 0.0
    %6785 = vmatpush1.msra.mxu0 0.0
    %6786 = vmatprep.subr.mxu0 0.0
    %6787 = vmatpush1.msra.mxu0 0.0
    %6788 = vmatprep.subr.mxu0 0.0
    %6789 = vmatpush1.msra.mxu0 0.0
    %6790 = vmatprep.mubr.f32.mxu0 0.0
    %v6791 = vand.u32 %v5901, 4294901760
    %6792 = vmatmul.mubr.f32.gmra.mrb[0].mxu0 %v6791
    %v6793 = vpop.f32.mrb[0].mxu0
    %v6794 = vadd.f32 %v6723, %v6793
    %v6795 = vpop.f32.mrb[0].mxu0
    %6796 = vdwg.mxu0
    %v6797 = vmax.f32 %v6347, %v6794
    %v6800 = vunpack.c.l.s4 1966171168
    %v6801 = vunpack.c.0.s8 %v6800
    %v6802 = vlaneseq
    %v6803 = vshrl.u32 %v6802, 7
    %v6804 = vsub.s32 %v6801, %v6803
    %v6805 = vrot.slane %v6797, %v6804
    %v6806 = vcombine.high %v6805, %v6805
    %v6808 = vunpack.c.l.s4 1966171168
    %v6809 = vunpack.c.0.s8 %v6808
    %v6810 = vlaneseq
    %v6811 = vshrl.u32 %v6810, 7
    %v6812 = vsub.s32 %v6809, %v6811
    %v6813 = vrot.slane %v6805, %v6812
    %v6815 = vunpack.c.l.s4 1966171168
    %v6816 = vunpack.c.0.s8 %v6815
    %v6817 = vlaneseq
    %v6818 = vshrl.u32 %v6817, 7
    %v6819 = vsub.s32 %v6816, %v6818
    %v6820 = vrot.slane %v6806, %v6819
    %6823 = vst.msk [vmem:[#allocation13 + $0x3] sm:$0x1] %vm3609, %v6813
    %6824 = vst.msk [vmem:[#allocation13 + $0x7] sm:$0x1] %vm3609, %v6820
    // Predicated region
    $region42: #{tpu_custom_call.1} parent=1 // pred_check
      _
    $region43: #{tpu_custom_call.1} parent=1 // pred_check_branch
      %6826 = sbr.rel (0) target = $region45
    $region44: #{tpu_custom_call.1} parent=1 // pred_region
      %s6828 = ssub.s32 128, 128
      %6829 = vsyncadd [#allocation5], %s6828
      %s6830 = sshll.u32 [#allocation13], 4
      %s6831 = int_to_ptr.vmem [resolvable:$true] %s6830
      %6836 = dma.vmem_to_hbm [thread:$0]  %s6831, 128, %s5, [#allocation5], 64, 64, 4
    $region45: #{tpu_custom_call.1} parent=1 // pred_fallthru
      _
    // Predicated region
    $region46: #{tpu_custom_call.1} parent=1 // pred_check
      _
    $region47: #{tpu_custom_call.1} parent=1 // pred_check_branch
      %6838 = sbr.rel (0) target = $region49
    $region48: #{tpu_custom_call.1} parent=1 // pred_region
      %s6840 = ssub.s32 128, 128
      %6841 = vsyncadd [#allocation15], %s6840
      %s6842 = sshll.u32 [#allocation14], 4
      %s6843 = int_to_ptr.vmem [resolvable:$true] %s6842
      %6848 = dma.vmem_to_hbm [thread:$0]  %s6843, 128, %s6, [#allocation15], 64, 64, 4
    $region49: #{tpu_custom_call.1} parent=1 // pred_fallthru
      _
    // Predicated region
    $region50: #{tpu_custom_call.1} parent=1 // pred_check
      _
    $region51: #{tpu_custom_call.1} parent=1 // pred_check_branch
      %6850 = sbr.rel (0) target = $region53
    $region52: #{tpu_custom_call.1} parent=1 // pred_region
      %6851 = dma.done [#allocation5], 128
    $region53: #{tpu_custom_call.1} parent=1 // pred_fallthru
      _
    // Predicated region
    $region54: #{tpu_custom_call.1} parent=1 // pred_check
      _
    $region55: #{tpu_custom_call.1} parent=1 // pred_check_branch
      %6853 = sbr.rel (0) target = $region57
    $region56: #{tpu_custom_call.1} parent=1 // pred_region
      %6854 = dma.done [#allocation15], 128
    $region57: #{tpu_custom_call.1} parent=1 // pred_fallthru
      _
    %6855 = vsyncpa [#allocation4], 1
    %6856 = vsyncpa [#allocation5], 1
    %6857 = vsyncpa [#allocation15], 1
    %6858 = vsyncpa [#allocation6], 1
    %6859 = vsyncpa [#allocation9], 1
    %6860 = vsyncpa [#allocation12], 1

</llo_original>
